<compile_context>
chip_gen: v6e
topology: v6e:2x2x1
jax: 0.10.0
libtpu: 0.0.40
codegen_flags: <defaults>
</compile_context>

<pallas_src>
import functools

import numpy as np

import jax
import jax.numpy as jnp
from jax.experimental import pallas as pl
from jax.experimental.pallas import tpu as pltpu


DEFAULT_BLOCK_B = 8   # images per grid step; must be a multiple of 8


# ---------------------------------------------------------------------------
# Fused kernel: one grid step == block_b images.
# ---------------------------------------------------------------------------
def _mnist_fused_kernel(
    l6_ref,       # (12*Bt, 168) bf16 : conv1 LHS, row = ph*Bt + b
    w1q_ref,      # (4, 168, 384) bf16: conv1 weights, one slab per pool quadrant
    b1_ref,       # (1, 384)  f32     : conv1 bias tiled over pw
    w2b_ref,      # (5, 384, 512) bf16: banded conv2 weights (one per kernel row)
    b2_ref,       # (1, 256)  f32     : conv2 bias tiled over ow2
    wfc1_ref,     # (4, 256, 128) bf16: fc1 weights banded over oh2
    bfc1_ref,     # (1, 128)  f32
    wfc2_ref,     # (128, 128) bf16   : fc2 weights (zero-padded, 1/T pre-folded)
    bfc2_ref,     # (1, 128)  f32     : fc2 bias zero-padded
    out_ref,      # (Bt, 256) f32 out : [:, :128] = e1, [:, 128:] = y
    pooled1_ref,  # (12*Bt, 384) f32 scratch (f32 keeps all band loads 8-row aligned)
    *,
    block_b,
):
    f32 = jnp.float32
    bf16 = jnp.bfloat16
    bt = block_b

    # -------- conv1 (5x5, 1->32) + maxpool 2x2 + ReLU -------------------------
    # One matmul per pool quadrant; running max avoids a (12Bt,1536) live value.
    l6 = l6_ref[...]                                              # (12*Bt, 168)
    p = jnp.dot(l6, w1q_ref[0], preferred_element_type=f32)       # (12*Bt, 384)
    p = jnp.maximum(p, jnp.dot(l6, w1q_ref[1], preferred_element_type=f32))
    p = jnp.maximum(p, jnp.dot(l6, w1q_ref[2], preferred_element_type=f32))
    p = jnp.maximum(p, jnp.dot(l6, w1q_ref[3], preferred_element_type=f32))
    # pooled1[ph*Bt + b, pw*32 + c] == relu(maxpool(conv1))[b, c, ph, pw]
    pooled1_ref[...] = jnp.maximum(p + b1_ref[...], 0.0)

    # -------- conv2 (5x5, 32->64), banded over kernel rows ---------------------
    # Band i's LHS is the contiguous, aligned slice pooled1[i*Bt : i*Bt + 8*Bt]
    # (rows oh*Bt + b with ph = oh + i).  Single chained f32 accumulator.
    m2 = 8 * bt
    acc = jnp.dot(pooled1_ref[0:m2, :].astype(bf16), w2b_ref[0],
                  preferred_element_type=f32)                      # (8*Bt, 512)
    for i in range(1, 5):
        acc = acc + jnp.dot(pooled1_ref[i * bt:i * bt + m2, :].astype(bf16),
                            w2b_ref[i], preferred_element_type=f32)
    # acc[oh*Bt + b, dw*256 + ow2*64 + c] == conv2 (no bias) at [b, c, oh, 2*ow2+dw]

    # -------- maxpool 2x2 + ReLU + fc1 (banded over oh2, no flatten scratch) ---
    e1 = jnp.zeros((bt, 128), f32)
    for oh2 in range(4):
        lo = 2 * oh2 * bt
        hp = jnp.maximum(acc[lo:lo + bt, :], acc[lo + bt:lo + 2 * bt, :])  # (Bt,512)
        wp = jnp.maximum(hp[:, 0:256], hp[:, 256:512])                     # (Bt,256)
        blk = jnp.maximum(wp + b2_ref[...], 0.0)
        # blk[b, ow2*64 + c] == relu(maxpool(conv2))[b, c, oh2, ow2]
        e1 = e1 + jnp.dot(blk.astype(bf16), wfc1_ref[oh2],
                          preferred_element_type=f32)
    e1 = e1 + bfc1_ref[...]                                        # (Bt, 128)
    out_ref[:, 0:128] = e1

    # -------- fc2 (temperature already folded into wfc2) -----------------------
    y = jnp.dot(e1.astype(bf16), wfc2_ref[...],
                preferred_element_type=f32) + bfc2_ref[...]        # (Bt, 128)
    out_ref[:, 128:256] = y


# ---------------------------------------------------------------------------
# Parameter prep: torch-layout weights -> kernel-friendly lane-dense matrices.
# (Done once at init; pure host-side packing.)
# ---------------------------------------------------------------------------
def prep_params(params):
    w1 = np.asarray(params["conv1_w"], np.float32)   # (32, 1, 5, 5)
    b1 = np.asarray(params["conv1_b"], np.float32)   # (32,)
    w2 = np.asarray(params["conv2_w"], np.float32)   # (64, 32, 5, 5)
    b2 = np.asarray(params["conv2_b"], np.float32)   # (64,)
    fc1w = np.asarray(params["fc1_w"], np.float32)   # (128, 1024)  torch (out, in)
    fc1b = np.asarray(params["fc1_b"], np.float32)   # (128,)
    fc2w = np.asarray(params["fc2_w"], np.float32)   # (10, 128)
    fc2b = np.asarray(params["fc2_b"], np.float32)   # (10,)

    # conv1: K = dr*28 + wcol covers the 6 input rows of one pooled row; one
    # (168, 384) slab per pool quadrant q=(dh,dw); N = pw*32 + c.
    wall1 = np.zeros((6, 28, 4, 12, 32), np.float32)
    for dh in range(2):
        for dw in range(2):
            q = 2 * dh + dw
            for i in range(5):
                for j in range(5):
                    for pw in range(12):
                        wall1[dh + i, 2 * pw + dw + j, q, pw, :] = w1[:, 0, i, j]
    w1q = wall1.reshape(168, 4, 384).transpose(1, 0, 2)            # (4, 168, 384)

    # conv2: one banded matrix per kernel row i. K = pw*32 + ci over a full
    # pooled1 row; N = dw*256 + ow2*64 + co with ow = 2*ow2 + dw.
    w2band = np.zeros((5, 12, 32, 2, 4, 64), np.float32)
    for i in range(5):
        for j in range(5):
            for dw in range(2):
                for ow2 in range(4):
                    pw = 2 * ow2 + dw + j
                    w2band[i, pw, :, dw, ow2, :] = w2[:, :, i, j].T  # (ci, co)
    w2band = w2band.reshape(5, 12 * 32, 2 * 4 * 64)                # (5, 384, 512)

    # fc1: banded over oh2 so the kernel never has to flatten.  Column order in
    # the kernel is ow2*64 + c; torch's x.view(-1,1024) index is c*16+oh2*4+ow2.
    wfc1b = np.zeros((4, 4, 64, 128), np.float32)
    for oh2 in range(4):
        for ow2 in range(4):
            wfc1b[oh2, ow2, :, :] = fc1w[:, oh2 * 4 + ow2::16].T    # (c, out)
    wfc1b = wfc1b.reshape(4, 256, 128)

    # fc2: transpose and zero-pad the 10 outputs to 128 lanes (unmasked stores).
    wfc2 = np.zeros((128, 128), np.float32)
    wfc2[:, :10] = fc2w.T
    bfc2 = np.zeros((1, 128), np.float32)
    bfc2[0, :10] = fc2b

    bf16 = jnp.bfloat16
    return {
        "w1q": jnp.asarray(w1q, bf16),
        "b1t": jnp.asarray(np.tile(b1, 12)[None, :], jnp.float32),   # (1, 384)
        "w2band": jnp.asarray(w2band, bf16),
        "b2t": jnp.asarray(np.tile(b2, 4)[None, :], jnp.float32),    # (1, 256)
        "wfc1b": jnp.asarray(wfc1b, bf16),
        "bfc1": jnp.asarray(fc1b[None, :], jnp.float32),             # (1, 128)
        "wfc2": jnp.asarray(wfc2, bf16),
        "bfc2": jnp.asarray(bfc2, jnp.float32),                      # (1, 128)
    }


def init_params(key):
    ks = jax.random.split(key, 8)
    s = 0.05
    return {
        "conv1_w": jax.random.normal(ks[0], (32, 1, 5, 5), jnp.float32) * s,
        "conv1_b": jax.random.normal(ks[1], (32,), jnp.float32) * s,
        "conv2_w": jax.random.normal(ks[2], (64, 32, 5, 5), jnp.float32) * s,
        "conv2_b": jax.random.normal(ks[3], (64,), jnp.float32) * s,
        "fc1_w": jax.random.normal(ks[4], (128, 1024), jnp.float32) * s,  # (out, in)
        "fc1_b": jax.random.normal(ks[5], (128,), jnp.float32) * s,
        "fc2_w": jax.random.normal(ks[6], (10, 128), jnp.float32) * s,    # (out, in)
        "fc2_b": jax.random.normal(ks[7], (128,), jnp.float32)[:10] * s,
    }


# ---------------------------------------------------------------------------
# Forward pass (matches MNIST_Net.forward; dropout = identity / eval mode)
# ---------------------------------------------------------------------------
@functools.partial(jax.jit, static_argnames=("block_b",))
def mnist_net_forward(prepped, x_nchw, temperature=1.0, block_b=DEFAULT_BLOCK_B):
    assert block_b % 8 == 0
    B = x_nchw.shape[0]
    G = -(-B // block_b)          # ceil-div
    Bp = G * block_b

    # Build the conv1 LHS slab in the wrapper (bf16, layout plumbing only):
    #   l6[b, ph, dr*28 + w] = img[b, 2*ph + dr, w]
    img = x_nchw.astype(jnp.bfloat16).reshape(B, 28, 28)
    if Bp != B:
        img = jnp.pad(img, ((0, Bp - B), (0, 0), (0, 0)))
    row_idx = np.arange(12)[:, None] * 2 + np.arange(6)[None, :]      # (12, 6)
    l6 = img[:, row_idx, :].reshape(Bp, 12, 168)
    # ph-major row order within each chunk: row = ph*Bt + b  -> every conv2
    # band slice in the kernel is a contiguous sublane-aligned window.
    l6 = (l6.reshape(G, block_b, 12, 168)
            .transpose(0, 2, 1, 3)
            .reshape(G * 12 * block_b, 168))

    # Fold 1/temperature into the fc2 weights (traced -> no recompile per T).
    inv_t = 1.0 / jnp.asarray(temperature, jnp.float32)
    wfc2 = (prepped["wfc2"].astype(jnp.float32) * inv_t).astype(jnp.bfloat16)

    kernel = functools.partial(_mnist_fused_kernel, block_b=block_b)

    out = pl.pallas_call(
        kernel,
        grid=(G,),
        in_specs=[
            pl.BlockSpec((12 * block_b, 168), lambda g: (g, 0)),
            pl.BlockSpec((4, 168, 384), lambda g: (0, 0, 0)),
            pl.BlockSpec((1, 384), lambda g: (0, 0)),
            pl.BlockSpec((5, 384, 512), lambda g: (0, 0, 0)),
            pl.BlockSpec((1, 256), lambda g: (0, 0)),
            pl.BlockSpec((4, 256, 128), lambda g: (0, 0, 0)),
            pl.BlockSpec((1, 128), lambda g: (0, 0)),
            pl.BlockSpec((128, 128), lambda g: (0, 0)),
            pl.BlockSpec((1, 128), lambda g: (0, 0)),
        ],
        out_specs=pl.BlockSpec((block_b, 256), lambda g: (g, 0)),
        out_shape=jax.ShapeDtypeStruct((Bp, 256), jnp.float32),
        scratch_shapes=[pltpu.VMEM((12 * block_b, 384), jnp.float32)],
        compiler_params=pltpu.CompilerParams(
            dimension_semantics=("parallel",),
        ),
    )(l6,
      prepped["w1q"], prepped["b1t"],
      prepped["w2band"], prepped["b2t"],
      prepped["wfc1b"], prepped["bfc1"],
      wfc2, prepped["bfc2"])

    e1 = out[:B, 0:128]          # (B, 128)
    y = out[:B, 128:138]         # (B, 10)  (padded lanes dropped)
    return y, e1


# ---------------------------------------------------------------------------
# Pure-JAX float32 reference (mirrors the torch module) for a sanity check.
# ---------------------------------------------------------------------------
def mnist_ref(params, x, temperature=1.0):
    x1 = jax.lax.conv_general_dilated(
        x, params["conv1_w"], (1, 1), "VALID",
        dimension_numbers=("NCHW", "OIHW", "NCHW"))
    x1 = x1 + params["conv1_b"][None, :, None, None]
    x1 = jax.lax.reduce_window(x1, -jnp.inf, jax.lax.max,
                               (1, 1, 2, 2), (1, 1, 2, 2), "VALID")
    x1 = jnp.maximum(x1, 0.0)
    x2 = jax.lax.conv_general_dilated(
        x1, params["conv2_w"], (1, 1), "VALID",
        dimension_numbers=("NCHW", "OIHW", "NCHW"))
    x2 = x2 + params["conv2_b"][None, :, None, None]
    x2 = jax.lax.reduce_window(x2, -jnp.inf, jax.lax.max,
                               (1, 1, 2, 2), (1, 1, 2, 2), "VALID")
    x2 = jnp.maximum(x2, 0.0)
    xf = x2.reshape(x.shape[0], 1024)
    e1 = xf @ params["fc1_w"].T + params["fc1_b"]
    y = (e1 / temperature) @ params["fc2_w"].T + params["fc2_b"]
    return y, e1


if __name__ == "__main__":
    key = jax.random.PRNGKey(0)
    pkey, xkey = jax.random.split(key)
    params = init_params(pkey)
    prepped = prep_params(params)

    # MNIST-shaped input (28x28 is required by fc1's 1024 = 64*4*4), batch=2
    # (padded up to the block_b=8 tile inside the wrapper).
    x = jax.random.normal(xkey, (2, 1, 28, 28), jnp.float32)
    T = 2.0

    y, e1 = mnist_net_forward(prepped, x, temperature=T)
    jax.block_until_ready((y, e1))

    assert y.shape == (2, 10) and e1.shape == (2, 128)
    assert jnp.all(jnp.isfinite(y)) and jnp.all(jnp.isfinite(e1))

    # bf16 weights/activations with f32 accumulation: loose tolerance vs f32 ref.
    y_ref, e1_ref = mnist_ref(params, x, temperature=T)
    np.testing.assert_allclose(np.asarray(y), np.asarray(y_ref),
                               rtol=5e-2, atol=5e-2)
    np.testing.assert_allclose(np.asarray(e1), np.asarray(e1_ref),
                               rtol=5e-2, atol=5e-2)

    print("KERNEL_OK")
</pallas_src>

<mosaic_0001>
module attributes {stable_mosaic.version = 11 : i64} {
  func.func @_mnist_fused_kernel(%arg0: i32, %arg1: memref<96x168xbf16, #tpu.memory_space<vmem>>, %arg2: memref<4x168x384xbf16, #tpu.memory_space<vmem>>, %arg3: memref<1x384xf32, #tpu.memory_space<vmem>>, %arg4: memref<5x384x512xbf16, #tpu.memory_space<vmem>>, %arg5: memref<1x256xf32, #tpu.memory_space<vmem>>, %arg6: memref<4x256x128xbf16, #tpu.memory_space<vmem>>, %arg7: memref<1x128xf32, #tpu.memory_space<vmem>>, %arg8: memref<128x128xbf16, #tpu.memory_space<vmem>>, %arg9: memref<1x128xf32, #tpu.memory_space<vmem>>, %arg10: memref<8x256xf32, #tpu.memory_space<vmem>>, %arg11: memref<96x384xf32, #tpu.memory_space<vmem>>) attributes {dimension_semantics = [#tpu.dimension_semantics<parallel>], iteration_bounds = array<i64: 1>, scalar_prefetch = 0 : i64, scratch_operands = 1 : i64, tpu.core_type = #tpu.core_type<tc>, window_params = [{transform_indices = @transform_0, window_bounds = array<i64: 96, 168>}, {pipeline_mode = #tpu.pipeline_mode<synchronous>, transform_indices = @transform_1, window_bounds = array<i64: 4, 168, 384>}, {pipeline_mode = #tpu.pipeline_mode<synchronous>, transform_indices = @transform_2, window_bounds = array<i64: 1, 384>}, {pipeline_mode = #tpu.pipeline_mode<synchronous>, transform_indices = @transform_3, window_bounds = array<i64: 5, 384, 512>}, {pipeline_mode = #tpu.pipeline_mode<synchronous>, transform_indices = @transform_4, window_bounds = array<i64: 1, 256>}, {pipeline_mode = #tpu.pipeline_mode<synchronous>, transform_indices = @transform_5, window_bounds = array<i64: 4, 256, 128>}, {pipeline_mode = #tpu.pipeline_mode<synchronous>, transform_indices = @transform_6, window_bounds = array<i64: 1, 128>}, {pipeline_mode = #tpu.pipeline_mode<synchronous>, transform_indices = @transform_7, window_bounds = array<i64: 128, 128>}, {pipeline_mode = #tpu.pipeline_mode<synchronous>, transform_indices = @transform_8, window_bounds = array<i64: 1, 128>}, {transform_indices = @transform_9, window_bounds = array<i64: 8, 256>}]} {
    %c0 = arith.constant 0 : index
    %c0_0 = arith.constant 0 : index
    %0 = vector.load %arg1[%c0, %c0_0] : memref<96x168xbf16, #tpu.memory_space<vmem>>, vector<96x168xbf16>
    %c0_1 = arith.constant 0 : index
    %c0_2 = arith.constant 0 : index
    %c0_3 = arith.constant 0 : index
    %1 = vector.load %arg2[%c0_1, %c0_2, %c0_3] : memref<4x168x384xbf16, #tpu.memory_space<vmem>>, vector<1x168x384xbf16>
    %2 = vector.shape_cast %1 : vector<1x168x384xbf16> to vector<168x384xbf16>
    %cst = arith.constant dense<0.000000e+00> : vector<96x384xf32>
    %3 = tpu.matmul %0, %2, %cst {dimension_numbers = #tpu.dot_dimension_numbers<[1], [0], [0], [1], [0, 0, 1, 1], [], []>} : vector<96x168xbf16>, vector<168x384xbf16>, vector<96x384xf32> -> vector<96x384xf32>
    %c1 = arith.constant 1 : index
    %c0_4 = arith.constant 0 : index
    %c0_5 = arith.constant 0 : index
    %4 = vector.load %arg2[%c1, %c0_4, %c0_5] : memref<4x168x384xbf16, #tpu.memory_space<vmem>>, vector<1x168x384xbf16>
    %5 = vector.shape_cast %4 : vector<1x168x384xbf16> to vector<168x384xbf16>
    %cst_6 = arith.constant dense<0.000000e+00> : vector<96x384xf32>
    %6 = tpu.matmul %0, %5, %cst_6 {dimension_numbers = #tpu.dot_dimension_numbers<[1], [0], [0], [1], [0, 0, 1, 1], [], []>} : vector<96x168xbf16>, vector<168x384xbf16>, vector<96x384xf32> -> vector<96x384xf32>
    %7 = arith.maximumf %3, %6 : vector<96x384xf32>
    %c2 = arith.constant 2 : index
    %c0_7 = arith.constant 0 : index
    %c0_8 = arith.constant 0 : index
    %8 = vector.load %arg2[%c2, %c0_7, %c0_8] : memref<4x168x384xbf16, #tpu.memory_space<vmem>>, vector<1x168x384xbf16>
    %9 = vector.shape_cast %8 : vector<1x168x384xbf16> to vector<168x384xbf16>
    %cst_9 = arith.constant dense<0.000000e+00> : vector<96x384xf32>
    %10 = tpu.matmul %0, %9, %cst_9 {dimension_numbers = #tpu.dot_dimension_numbers<[1], [0], [0], [1], [0, 0, 1, 1], [], []>} : vector<96x168xbf16>, vector<168x384xbf16>, vector<96x384xf32> -> vector<96x384xf32>
    %11 = arith.maximumf %7, %10 : vector<96x384xf32>
    %c3 = arith.constant 3 : index
    %c0_10 = arith.constant 0 : index
    %c0_11 = arith.constant 0 : index
    %12 = vector.load %arg2[%c3, %c0_10, %c0_11] : memref<4x168x384xbf16, #tpu.memory_space<vmem>>, vector<1x168x384xbf16>
    %13 = vector.shape_cast %12 : vector<1x168x384xbf16> to vector<168x384xbf16>
    %cst_12 = arith.constant dense<0.000000e+00> : vector<96x384xf32>
    %14 = tpu.matmul %0, %13, %cst_12 {dimension_numbers = #tpu.dot_dimension_numbers<[1], [0], [0], [1], [0, 0, 1, 1], [], []>} : vector<96x168xbf16>, vector<168x384xbf16>, vector<96x384xf32> -> vector<96x384xf32>
    %15 = arith.maximumf %11, %14 : vector<96x384xf32>
    %c0_13 = arith.constant 0 : index
    %c0_14 = arith.constant 0 : index
    %16 = vector.load %arg3[%c0_13, %c0_14] : memref<1x384xf32, #tpu.memory_space<vmem>>, vector<1x384xf32>
    %17 = vector.broadcast %16 : vector<1x384xf32> to vector<96x384xf32>
    %18 = arith.addf %15, %17 : vector<96x384xf32>
    %cst_15 = arith.constant 0.000000e+00 : f32
    %19 = vector.broadcast %cst_15 : f32 to vector<96x384xf32>
    %20 = arith.maximumf %18, %19 : vector<96x384xf32>
    %c0_16 = arith.constant 0 : index
    %c0_17 = arith.constant 0 : index
    %21 = vector.load %arg11[%c0_16, %c0_17] : memref<96x384xf32, #tpu.memory_space<vmem>>, vector<96x384xf32>
    tpu.vector_store %arg11[%c0_16, %c0_17], %20 {strides = array<i32>} : memref<96x384xf32, #tpu.memory_space<vmem>>, vector<96x384xf32>,
    %c0_18 = arith.constant 0 : index
    %c0_19 = arith.constant 0 : index
    %22 = vector.load %arg11[%c0_18, %c0_19] : memref<96x384xf32, #tpu.memory_space<vmem>>, vector<64x384xf32>
    %23 = arith.truncf %22 : vector<64x384xf32> to vector<64x384xbf16>
    %c0_20 = arith.constant 0 : index
    %c0_21 = arith.constant 0 : index
    %c0_22 = arith.constant 0 : index
    %24 = vector.load %arg4[%c0_20, %c0_21, %c0_22] : memref<5x384x512xbf16, #tpu.memory_space<vmem>>, vector<1x384x512xbf16>
    %25 = vector.shape_cast %24 : vector<1x384x512xbf16> to vector<384x512xbf16>
    %cst_23 = arith.constant dense<0.000000e+00> : vector<64x512xf32>
    %26 = tpu.matmul %23, %25, %cst_23 {dimension_numbers = #tpu.dot_dimension_numbers<[1], [0], [0], [1], [0, 0, 1, 1], [], []>} : vector<64x384xbf16>, vector<384x512xbf16>, vector<64x512xf32> -> vector<64x512xf32>
    %c8 = arith.constant 8 : index
    %c0_24 = arith.constant 0 : index
    %27 = vector.load %arg11[%c8, %c0_24] : memref<96x384xf32, #tpu.memory_space<vmem>>, vector<64x384xf32>
    %28 = arith.truncf %27 : vector<64x384xf32> to vector<64x384xbf16>
    %c1_25 = arith.constant 1 : index
    %c0_26 = arith.constant 0 : index
    %c0_27 = arith.constant 0 : index
    %29 = vector.load %arg4[%c1_25, %c0_26, %c0_27] : memref<5x384x512xbf16, #tpu.memory_space<vmem>>, vector<1x384x512xbf16>
    %30 = vector.shape_cast %29 : vector<1x384x512xbf16> to vector<384x512xbf16>
    %cst_28 = arith.constant dense<0.000000e+00> : vector<64x512xf32>
    %31 = tpu.matmul %28, %30, %cst_28 {dimension_numbers = #tpu.dot_dimension_numbers<[1], [0], [0], [1], [0, 0, 1, 1], [], []>} : vector<64x384xbf16>, vector<384x512xbf16>, vector<64x512xf32> -> vector<64x512xf32>
    %32 = arith.addf %26, %31 : vector<64x512xf32>
    %c16 = arith.constant 16 : index
    %c0_29 = arith.constant 0 : index
    %33 = vector.load %arg11[%c16, %c0_29] : memref<96x384xf32, #tpu.memory_space<vmem>>, vector<64x384xf32>
    %34 = arith.truncf %33 : vector<64x384xf32> to vector<64x384xbf16>
    %c2_30 = arith.constant 2 : index
    %c0_31 = arith.constant 0 : index
    %c0_32 = arith.constant 0 : index
    %35 = vector.load %arg4[%c2_30, %c0_31, %c0_32] : memref<5x384x512xbf16, #tpu.memory_space<vmem>>, vector<1x384x512xbf16>
    %36 = vector.shape_cast %35 : vector<1x384x512xbf16> to vector<384x512xbf16>
    %cst_33 = arith.constant dense<0.000000e+00> : vector<64x512xf32>
    %37 = tpu.matmul %34, %36, %cst_33 {dimension_numbers = #tpu.dot_dimension_numbers<[1], [0], [0], [1], [0, 0, 1, 1], [], []>} : vector<64x384xbf16>, vector<384x512xbf16>, vector<64x512xf32> -> vector<64x512xf32>
    %38 = arith.addf %32, %37 : vector<64x512xf32>
    %c24 = arith.constant 24 : index
    %c0_34 = arith.constant 0 : index
    %39 = vector.load %arg11[%c24, %c0_34] : memref<96x384xf32, #tpu.memory_space<vmem>>, vector<64x384xf32>
    %40 = arith.truncf %39 : vector<64x384xf32> to vector<64x384xbf16>
    %c3_35 = arith.constant 3 : index
    %c0_36 = arith.constant 0 : index
    %c0_37 = arith.constant 0 : index
    %41 = vector.load %arg4[%c3_35, %c0_36, %c0_37] : memref<5x384x512xbf16, #tpu.memory_space<vmem>>, vector<1x384x512xbf16>
    %42 = vector.shape_cast %41 : vector<1x384x512xbf16> to vector<384x512xbf16>
    %cst_38 = arith.constant dense<0.000000e+00> : vector<64x512xf32>
    %43 = tpu.matmul %40, %42, %cst_38 {dimension_numbers = #tpu.dot_dimension_numbers<[1], [0], [0], [1], [0, 0, 1, 1], [], []>} : vector<64x384xbf16>, vector<384x512xbf16>, vector<64x512xf32> -> vector<64x512xf32>
    %44 = arith.addf %38, %43 : vector<64x512xf32>
    %c32 = arith.constant 32 : index
    %c0_39 = arith.constant 0 : index
    %45 = vector.load %arg11[%c32, %c0_39] : memref<96x384xf32, #tpu.memory_space<vmem>>, vector<64x384xf32>
    %46 = arith.truncf %45 : vector<64x384xf32> to vector<64x384xbf16>
    %c4 = arith.constant 4 : index
    %c0_40 = arith.constant 0 : index
    %c0_41 = arith.constant 0 : index
    %47 = vector.load %arg4[%c4, %c0_40, %c0_41] : memref<5x384x512xbf16, #tpu.memory_space<vmem>>, vector<1x384x512xbf16>
    %48 = vector.shape_cast %47 : vector<1x384x512xbf16> to vector<384x512xbf16>
    %cst_42 = arith.constant dense<0.000000e+00> : vector<64x512xf32>
    %49 = tpu.matmul %46, %48, %cst_42 {dimension_numbers = #tpu.dot_dimension_numbers<[1], [0], [0], [1], [0, 0, 1, 1], [], []>} : vector<64x384xbf16>, vector<384x512xbf16>, vector<64x512xf32> -> vector<64x512xf32>
    %50 = arith.addf %44, %49 : vector<64x512xf32>
    %cst_43 = arith.constant 0.000000e+00 : f32
    %51 = vector.broadcast %cst_43 : f32 to vector<8x128xf32>
    %52 = vector.extract_strided_slice %50 {offsets = [0, 0], sizes = [8, 512], strides = [1, 1]} : vector<64x512xf32> to vector<8x512xf32>
    %53 = vector.extract_strided_slice %50 {offsets = [8, 0], sizes = [8, 512], strides = [1, 1]} : vector<64x512xf32> to vector<8x512xf32>
    %54 = arith.maximumf %52, %53 : vector<8x512xf32>
    %55 = vector.extract_strided_slice %54 {offsets = [0, 0], sizes = [8, 256], strides = [1, 1]} : vector<8x512xf32> to vector<8x256xf32>
    %56 = vector.extract_strided_slice %54 {offsets = [0, 256], sizes = [8, 256], strides = [1, 1]} : vector<8x512xf32> to vector<8x256xf32>
    %57 = arith.maximumf %55, %56 : vector<8x256xf32>
    %c0_44 = arith.constant 0 : index
    %c0_45 = arith.constant 0 : index
    %58 = vector.load %arg5[%c0_44, %c0_45] : memref<1x256xf32, #tpu.memory_space<vmem>>, vector<1x256xf32>
    %59 = vector.broadcast %58 : vector<1x256xf32> to vector<8x256xf32>
    %60 = arith.addf %57, %59 : vector<8x256xf32>
    %cst_46 = arith.constant 0.000000e+00 : f32
    %61 = vector.broadcast %cst_46 : f32 to vector<8x256xf32>
    %62 = arith.maximumf %60, %61 : vector<8x256xf32>
    %63 = arith.truncf %62 : vector<8x256xf32> to vector<8x256xbf16>
    %c0_47 = arith.constant 0 : index
    %c0_48 = arith.constant 0 : index
    %c0_49 = arith.constant 0 : index
    %64 = vector.load %arg6[%c0_47, %c0_48, %c0_49] : memref<4x256x128xbf16, #tpu.memory_space<vmem>>, vector<1x256x128xbf16>
    %65 = vector.shape_cast %64 : vector<1x256x128xbf16> to vector<256x128xbf16>
    %cst_50 = arith.constant dense<0.000000e+00> : vector<8x128xf32>
    %66 = tpu.matmul %63, %65, %cst_50 {dimension_numbers = #tpu.dot_dimension_numbers<[1], [0], [0], [1], [0, 0, 1, 1], [], []>} : vector<8x256xbf16>, vector<256x128xbf16>, vector<8x128xf32> -> vector<8x128xf32>
    %67 = arith.addf %51, %66 : vector<8x128xf32>
    %68 = vector.extract_strided_slice %50 {offsets = [16, 0], sizes = [8, 512], strides = [1, 1]} : vector<64x512xf32> to vector<8x512xf32>
    %69 = vector.extract_strided_slice %50 {offsets = [24, 0], sizes = [8, 512], strides = [1, 1]} : vector<64x512xf32> to vector<8x512xf32>
    %70 = arith.maximumf %68, %69 : vector<8x512xf32>
    %71 = vector.extract_strided_slice %70 {offsets = [0, 0], sizes = [8, 256], strides = [1, 1]} : vector<8x512xf32> to vector<8x256xf32>
    %72 = vector.extract_strided_slice %70 {offsets = [0, 256], sizes = [8, 256], strides = [1, 1]} : vector<8x512xf32> to vector<8x256xf32>
    %73 = arith.maximumf %71, %72 : vector<8x256xf32>
    %c0_51 = arith.constant 0 : index
    %c0_52 = arith.constant 0 : index
    %74 = vector.load %arg5[%c0_51, %c0_52] : memref<1x256xf32, #tpu.memory_space<vmem>>, vector<1x256xf32>
    %75 = vector.broadcast %74 : vector<1x256xf32> to vector<8x256xf32>
    %76 = arith.addf %73, %75 : vector<8x256xf32>
    %cst_53 = arith.constant 0.000000e+00 : f32
    %77 = vector.broadcast %cst_53 : f32 to vector<8x256xf32>
    %78 = arith.maximumf %76, %77 : vector<8x256xf32>
    %79 = arith.truncf %78 : vector<8x256xf32> to vector<8x256xbf16>
    %c1_54 = arith.constant 1 : index
    %c0_55 = arith.constant 0 : index
    %c0_56 = arith.constant 0 : index
    %80 = vector.load %arg6[%c1_54, %c0_55, %c0_56] : memref<4x256x128xbf16, #tpu.memory_space<vmem>>, vector<1x256x128xbf16>
    %81 = vector.shape_cast %80 : vector<1x256x128xbf16> to vector<256x128xbf16>
    %cst_57 = arith.constant dense<0.000000e+00> : vector<8x128xf32>
    %82 = tpu.matmul %79, %81, %cst_57 {dimension_numbers = #tpu.dot_dimension_numbers<[1], [0], [0], [1], [0, 0, 1, 1], [], []>} : vector<8x256xbf16>, vector<256x128xbf16>, vector<8x128xf32> -> vector<8x128xf32>
    %83 = arith.addf %67, %82 : vector<8x128xf32>
    %84 = vector.extract_strided_slice %50 {offsets = [32, 0], sizes = [8, 512], strides = [1, 1]} : vector<64x512xf32> to vector<8x512xf32>
    %85 = vector.extract_strided_slice %50 {offsets = [40, 0], sizes = [8, 512], strides = [1, 1]} : vector<64x512xf32> to vector<8x512xf32>
    %86 = arith.maximumf %84, %85 : vector<8x512xf32>
    %87 = vector.extract_strided_slice %86 {offsets = [0, 0], sizes = [8, 256], strides = [1, 1]} : vector<8x512xf32> to vector<8x256xf32>
    %88 = vector.extract_strided_slice %86 {offsets = [0, 256], sizes = [8, 256], strides = [1, 1]} : vector<8x512xf32> to vector<8x256xf32>
    %89 = arith.maximumf %87, %88 : vector<8x256xf32>
    %c0_58 = arith.constant 0 : index
    %c0_59 = arith.constant 0 : index
    %90 = vector.load %arg5[%c0_58, %c0_59] : memref<1x256xf32, #tpu.memory_space<vmem>>, vector<1x256xf32>
    %91 = vector.broadcast %90 : vector<1x256xf32> to vector<8x256xf32>
    %92 = arith.addf %89, %91 : vector<8x256xf32>
    %cst_60 = arith.constant 0.000000e+00 : f32
    %93 = vector.broadcast %cst_60 : f32 to vector<8x256xf32>
    %94 = arith.maximumf %92, %93 : vector<8x256xf32>
    %95 = arith.truncf %94 : vector<8x256xf32> to vector<8x256xbf16>
    %c2_61 = arith.constant 2 : index
    %c0_62 = arith.constant 0 : index
    %c0_63 = arith.constant 0 : index
    %96 = vector.load %arg6[%c2_61, %c0_62, %c0_63] : memref<4x256x128xbf16, #tpu.memory_space<vmem>>, vector<1x256x128xbf16>
    %97 = vector.shape_cast %96 : vector<1x256x128xbf16> to vector<256x128xbf16>
    %cst_64 = arith.constant dense<0.000000e+00> : vector<8x128xf32>
    %98 = tpu.matmul %95, %97, %cst_64 {dimension_numbers = #tpu.dot_dimension_numbers<[1], [0], [0], [1], [0, 0, 1, 1], [], []>} : vector<8x256xbf16>, vector<256x128xbf16>, vector<8x128xf32> -> vector<8x128xf32>
    %99 = arith.addf %83, %98 : vector<8x128xf32>
    %100 = vector.extract_strided_slice %50 {offsets = [48, 0], sizes = [8, 512], strides = [1, 1]} : vector<64x512xf32> to vector<8x512xf32>
    %101 = vector.extract_strided_slice %50 {offsets = [56, 0], sizes = [8, 512], strides = [1, 1]} : vector<64x512xf32> to vector<8x512xf32>
    %102 = arith.maximumf %100, %101 : vector<8x512xf32>
    %103 = vector.extract_strided_slice %102 {offsets = [0, 0], sizes = [8, 256], strides = [1, 1]} : vector<8x512xf32> to vector<8x256xf32>
    %104 = vector.extract_strided_slice %102 {offsets = [0, 256], sizes = [8, 256], strides = [1, 1]} : vector<8x512xf32> to vector<8x256xf32>
    %105 = arith.maximumf %103, %104 : vector<8x256xf32>
    %c0_65 = arith.constant 0 : index
    %c0_66 = arith.constant 0 : index
    %106 = vector.load %arg5[%c0_65, %c0_66] : memref<1x256xf32, #tpu.memory_space<vmem>>, vector<1x256xf32>
    %107 = vector.broadcast %106 : vector<1x256xf32> to vector<8x256xf32>
    %108 = arith.addf %105, %107 : vector<8x256xf32>
    %cst_67 = arith.constant 0.000000e+00 : f32
    %109 = vector.broadcast %cst_67 : f32 to vector<8x256xf32>
    %110 = arith.maximumf %108, %109 : vector<8x256xf32>
    %111 = arith.truncf %110 : vector<8x256xf32> to vector<8x256xbf16>
    %c3_68 = arith.constant 3 : index
    %c0_69 = arith.constant 0 : index
    %c0_70 = arith.constant 0 : index
    %112 = vector.load %arg6[%c3_68, %c0_69, %c0_70] : memref<4x256x128xbf16, #tpu.memory_space<vmem>>, vector<1x256x128xbf16>
    %113 = vector.shape_cast %112 : vector<1x256x128xbf16> to vector<256x128xbf16>
    %cst_71 = arith.constant dense<0.000000e+00> : vector<8x128xf32>
    %114 = tpu.matmul %111, %113, %cst_71 {dimension_numbers = #tpu.dot_dimension_numbers<[1], [0], [0], [1], [0, 0, 1, 1], [], []>} : vector<8x256xbf16>, vector<256x128xbf16>, vector<8x128xf32> -> vector<8x128xf32>
    %115 = arith.addf %99, %114 : vector<8x128xf32>
    %c0_72 = arith.constant 0 : index
    %c0_73 = arith.constant 0 : index
    %116 = vector.load %arg7[%c0_72, %c0_73] : memref<1x128xf32, #tpu.memory_space<vmem>>, vector<1x128xf32>
    %117 = vector.broadcast %116 : vector<1x128xf32> to vector<8x128xf32>
    %118 = arith.addf %115, %117 : vector<8x128xf32>
    %c0_74 = arith.constant 0 : index
    %c0_75 = arith.constant 0 : index
    %119 = vector.load %arg10[%c0_74, %c0_75] : memref<8x256xf32, #tpu.memory_space<vmem>>, vector<8x128xf32>
    tpu.vector_store %arg10[%c0_74, %c0_75], %118 {strides = array<i32>} : memref<8x256xf32, #tpu.memory_space<vmem>>, vector<8x128xf32>,
    %120 = arith.truncf %118 : vector<8x128xf32> to vector<8x128xbf16>
    %c0_76 = arith.constant 0 : index
    %c0_77 = arith.constant 0 : index
    %121 = vector.load %arg8[%c0_76, %c0_77] : memref<128x128xbf16, #tpu.memory_space<vmem>>, vector<128x128xbf16>
    %cst_78 = arith.constant dense<0.000000e+00> : vector<8x128xf32>
    %122 = tpu.matmul %120, %121, %cst_78 {dimension_numbers = #tpu.dot_dimension_numbers<[1], [0], [0], [1], [0, 0, 1, 1], [], []>} : vector<8x128xbf16>, vector<128x128xbf16>, vector<8x128xf32> -> vector<8x128xf32>
    %c0_79 = arith.constant 0 : index
    %c0_80 = arith.constant 0 : index
    %123 = vector.load %arg9[%c0_79, %c0_80] : memref<1x128xf32, #tpu.memory_space<vmem>>, vector<1x128xf32>
    %124 = vector.broadcast %123 : vector<1x128xf32> to vector<8x128xf32>
    %125 = arith.addf %122, %124 : vector<8x128xf32>
    %c0_81 = arith.constant 0 : index
    %c128 = arith.constant 128 : index
    %126 = vector.load %arg10[%c0_81, %c128] : memref<8x256xf32, #tpu.memory_space<vmem>>, vector<8x128xf32>
    tpu.vector_store %arg10[%c0_81, %c128], %125 {strides = array<i32>} : memref<8x256xf32, #tpu.memory_space<vmem>>, vector<8x128xf32>,
    return
  }
  func.func @transform_0(%arg0: i32) -> (i32, i32) {
    %c0_i32 = arith.constant 0 : i32
    %c0_i32_0 = arith.constant 0 : i32
    return %arg0, %c0_i32 : i32, i32
  }
  func.func @transform_1(%arg0: i32) -> (i32, i32, i32) {
    %c0_i32 = arith.constant 0 : i32
    %c0_i32_0 = arith.constant 0 : i32
    %c0_i32_1 = arith.constant 0 : i32
    %c0_i32_2 = arith.constant 0 : i32
    return %c0_i32, %c0_i32_0, %c0_i32_1 : i32, i32, i32
  }
  func.func @transform_2(%arg0: i32) -> (i32, i32) {
    %c0_i32 = arith.constant 0 : i32
    %c0_i32_0 = arith.constant 0 : i32
    %c0_i32_1 = arith.constant 0 : i32
    return %c0_i32, %c0_i32_0 : i32, i32
  }
  func.func @transform_3(%arg0: i32) -> (i32, i32, i32) {
    %c0_i32 = arith.constant 0 : i32
    %c0_i32_0 = arith.constant 0 : i32
    %c0_i32_1 = arith.constant 0 : i32
    %c0_i32_2 = arith.constant 0 : i32
    return %c0_i32, %c0_i32_0, %c0_i32_1 : i32, i32, i32
  }
  func.func @transform_4(%arg0: i32) -> (i32, i32) {
    %c0_i32 = arith.constant 0 : i32
    %c0_i32_0 = arith.constant 0 : i32
    %c0_i32_1 = arith.constant 0 : i32
    return %c0_i32, %c0_i32_0 : i32, i32
  }
  func.func @transform_5(%arg0: i32) -> (i32, i32, i32) {
    %c0_i32 = arith.constant 0 : i32
    %c0_i32_0 = arith.constant 0 : i32
    %c0_i32_1 = arith.constant 0 : i32
    %c0_i32_2 = arith.constant 0 : i32
    return %c0_i32, %c0_i32_0, %c0_i32_1 : i32, i32, i32
  }
  func.func @transform_6(%arg0: i32) -> (i32, i32) {
    %c0_i32 = arith.constant 0 : i32
    %c0_i32_0 = arith.constant 0 : i32
    %c0_i32_1 = arith.constant 0 : i32
    return %c0_i32, %c0_i32_0 : i32, i32
  }
  func.func @transform_7(%arg0: i32) -> (i32, i32) {
    %c0_i32 = arith.constant 0 : i32
    %c0_i32_0 = arith.constant 0 : i32
    %c0_i32_1 = arith.constant 0 : i32
    return %c0_i32, %c0_i32_0 : i32, i32
  }
  func.func @transform_8(%arg0: i32) -> (i32, i32) {
    %c0_i32 = arith.constant 0 : i32
    %c0_i32_0 = arith.constant 0 : i32
    %c0_i32_1 = arith.constant 0 : i32
    return %c0_i32, %c0_i32_0 : i32, i32
  }
  func.func @transform_9(%arg0: i32) -> (i32, i32) {
    %c0_i32 = arith.constant 0 : i32
    %c0_i32_0 = arith.constant 0 : i32
    return %arg0, %c0_i32 : i32, i32
  }
}

</mosaic_0001>

<llo_original>
// kernel: mnist_net_forward.1
$region0: #{mnist_net_forward.1}
  #allocation0 [shape = 'u32[]', space=smem, size = 0x4, offset = 0x4, fixed_abs, tag = 'smem constant byte address 0x4 - core index']
  #allocation1 [shape = 'u32[144,128]{1,0:T(1,128)}', space=vmem, size = 0x12000, scoped, tag = 'internal scratch']
  #allocation2 [shape = 'f32[96,384]{1,0:T(8,128)}', space=vmem, size = 0x24000, scoped, tag = 'scratch operand']
  %s0 = inlined_call_operand.vmem [shape: bf16[96,168], index: 0, kind: input, shape index: {}]
  %s1 = inlined_call_operand.hbm [shape: bf16[4,168,384], index: 1, kind: input, shape index: {}]
  %s2 = inlined_call_operand.hbm [shape: f32[1,384], index: 2, kind: input, shape index: {}]
  %s3 = inlined_call_operand.hbm [shape: bf16[5,384,512], index: 3, kind: input, shape index: {}]
  %s4 = inlined_call_operand.hbm [shape: f32[1,256], index: 4, kind: input, shape index: {}]
  %s5 = inlined_call_operand.hbm [shape: bf16[4,256,128], index: 5, kind: input, shape index: {}]
  %s6 = inlined_call_operand.hbm [shape: f32[1,128], index: 6, kind: input, shape index: {}]
  %s7 = inlined_call_operand.vmem [shape: bf16[128,128], index: 7, kind: input, shape index: {}]
  %s8 = inlined_call_operand.hbm [shape: f32[1,128], index: 8, kind: input, shape index: {}]
  %s9 = inlined_call_operand.vmem [shape: f32[8,256], index: 9, kind: output, shape index: {}]
  %s10 = sld [smem:[#allocation0]]
  $region74: #{mnist_net_forward.1} parent=0
    _
  %s12 = ssub.s32 1, %s10
  %s13 = scalar_select 0, %s12, %s10
  $region1: #{mnist_net_forward.1} parent=0
    #allocation3 [shape = 'u8[516096]{0}', space=vmem, size = 0x7e000, scoped, tag = 'input window, operand 1, single buffered']
    #allocation4 [shape = 's32[1]{0}', space=sflag, size = 0x4, scoped, tag = 'scoped memory for mnist_net_forward.1']
    #allocation5 [shape = 'u8[1536]{0}', space=vmem, size = 0x800, scoped, tag = 'input window, operand 2, single buffered']
    #allocation6 [shape = 's32[1]{0}', space=sflag, size = 0x4, scoped, tag = 'scoped memory for mnist_net_forward.1']
    #allocation7 [shape = 'u8[1966080]{0}', space=vmem, size = 0x1e0000, scoped, tag = 'input window, operand 3, single buffered']
    #allocation8 [shape = 'u8[1024]{0}', space=vmem, size = 0x400, scoped, tag = 'input window, operand 4, single buffered']
    #allocation9 [shape = 's32[1]{0}', space=sflag, size = 0x4, scoped, tag = 'scoped memory for mnist_net_forward.1']
    #allocation10 [shape = 'u8[262144]{0}', space=vmem, size = 0x40000, scoped, tag = 'input window, operand 5, single buffered']
    #allocation11 [shape = 'u8[512]{0}', space=vmem, size = 0x400, scoped, tag = 'input window, operand 6, single buffered']
    #allocation12 [shape = 's32[1]{0}', space=sflag, size = 0x4, scoped, tag = 'scoped memory for mnist_net_forward.1']
    #allocation13 [shape = 'u8[512]{0}', space=vmem, size = 0x400, scoped, tag = 'input window, operand 8, single buffered']
    %14 = vsyncpa [#allocation4], 0
    %15 = vsyncpa [#allocation6], 0
    %16 = vsyncpa [#allocation9], 0
    %17 = vsyncpa [#allocation12], 0
    // Predicated region
    $region2: #{mnist_net_forward.1} parent=1 // pred_check
      _
    $region3: #{mnist_net_forward.1} parent=1 // pred_check_branch
      %19 = sbr.rel (0) target = $region5
    $region4: #{mnist_net_forward.1} parent=1 // pred_region
      _
    $region5: #{mnist_net_forward.1} parent=1 // pred_fallthru
      _
    // Predicated region
    $region6: #{mnist_net_forward.1} parent=1 // pred_check
      _
    $region7: #{mnist_net_forward.1} parent=1 // pred_check_branch
      %21 = sbr.rel (0) target = $region9
    $region8: #{mnist_net_forward.1} parent=1 // pred_region
      %s23 = ssub.s32 16128, 16128
      %24 = vsyncadd [#allocation4], %s23
      %s25 = sshll.u32 [#allocation3], 4
      %s26 = int_to_ptr.vmem [resolvable:$true] %s25
      %31 = dma.hbm_to_vmem [thread:$0]  %s1, 16128, %s26, [#allocation4], 192, 192, 12
    $region9: #{mnist_net_forward.1} parent=1 // pred_fallthru
      _
    // Predicated region
    $region10: #{mnist_net_forward.1} parent=1 // pred_check
      _
    $region11: #{mnist_net_forward.1} parent=1 // pred_check_branch
      %33 = sbr.rel (0) target = $region13
    $region12: #{mnist_net_forward.1} parent=1 // pred_region
      %s35 = ssub.s32 48, 48
      %36 = vsyncadd [#allocation6], %s35
      %s38 = sshll.u32 [#allocation5], 4
      %s39 = int_to_ptr.vmem [resolvable:$true] %s38
      %41 = dma.hbm_to_vmem [thread:$0]  %s2, 48, %s39, [#allocation6]
    $region13: #{mnist_net_forward.1} parent=1 // pred_fallthru
      _
    // Predicated region
    $region14: #{mnist_net_forward.1} parent=1 // pred_check
      _
    $region15: #{mnist_net_forward.1} parent=1 // pred_check_branch
      %43 = sbr.rel (0) target = $region17
    $region16: #{mnist_net_forward.1} parent=1 // pred_region
      %s45 = ssub.s32 61440, 61440
      %46 = vsyncadd [#allocation6], %s45
      %s47 = sshll.u32 [#allocation7], 4
      %s48 = int_to_ptr.vmem [resolvable:$true] %s47
      %53 = dma.hbm_to_vmem [thread:$0]  %s3, 61440, %s48, [#allocation6], 256, 256, 16
    $region17: #{mnist_net_forward.1} parent=1 // pred_fallthru
      _
    // Predicated region
    $region18: #{mnist_net_forward.1} parent=1 // pred_check
      _
    $region19: #{mnist_net_forward.1} parent=1 // pred_check_branch
      %55 = sbr.rel (0) target = $region21
    $region20: #{mnist_net_forward.1} parent=1 // pred_region
      %s57 = ssub.s32 32, 32
      %58 = vsyncadd [#allocation9], %s57
      %s60 = sshll.u32 [#allocation8], 4
      %s61 = int_to_ptr.vmem [resolvable:$true] %s60
      %63 = dma.hbm_to_vmem [thread:$0]  %s4, 32, %s61, [#allocation9]
    $region21: #{mnist_net_forward.1} parent=1 // pred_fallthru
      _
    // Predicated region
    $region22: #{mnist_net_forward.1} parent=1 // pred_check
      _
    $region23: #{mnist_net_forward.1} parent=1 // pred_check_branch
      %65 = sbr.rel (0) target = $region25
    $region24: #{mnist_net_forward.1} parent=1 // pred_region
      %s67 = ssub.s32 8192, 8192
      %68 = vsyncadd [#allocation9], %s67
      %s69 = sshll.u32 [#allocation10], 4
      %s70 = int_to_ptr.vmem [resolvable:$true] %s69
      %75 = dma.hbm_to_vmem [thread:$0]  %s5, 8192, %s70, [#allocation9], 64, 64, 4
    $region25: #{mnist_net_forward.1} parent=1 // pred_fallthru
      _
    // Predicated region
    $region26: #{mnist_net_forward.1} parent=1 // pred_check
      _
    $region27: #{mnist_net_forward.1} parent=1 // pred_check_branch
      %77 = sbr.rel (0) target = $region29
    $region28: #{mnist_net_forward.1} parent=1 // pred_region
      %s79 = ssub.s32 16, 16
      %80 = vsyncadd [#allocation12], %s79
      %s82 = sshll.u32 [#allocation11], 4
      %s83 = int_to_ptr.vmem [resolvable:$true] %s82
      %85 = dma.hbm_to_vmem [thread:$0]  %s6, 16, %s83, [#allocation12]
    $region29: #{mnist_net_forward.1} parent=1 // pred_fallthru
      _
    // Predicated region
    $region30: #{mnist_net_forward.1} parent=1 // pred_check
      _
    $region31: #{mnist_net_forward.1} parent=1 // pred_check_branch
      %87 = sbr.rel (0) target = $region33
    $region32: #{mnist_net_forward.1} parent=1 // pred_region
      _
    $region33: #{mnist_net_forward.1} parent=1 // pred_fallthru
      _
    // Predicated region
    $region34: #{mnist_net_forward.1} parent=1 // pred_check
      _
    $region35: #{mnist_net_forward.1} parent=1 // pred_check_branch
      %89 = sbr.rel (0) target = $region37
    $region36: #{mnist_net_forward.1} parent=1 // pred_region
      %s91 = ssub.s32 16, 16
      %92 = vsyncadd [#allocation12], %s91
      %s94 = sshll.u32 [#allocation13], 4
      %s95 = int_to_ptr.vmem [resolvable:$true] %s94
      %97 = dma.hbm_to_vmem [thread:$0]  %s8, 16, %s95, [#allocation12]
    $region37: #{mnist_net_forward.1} parent=1 // pred_fallthru
      _
    // Predicated region
    $region38: #{mnist_net_forward.1} parent=1 // pred_check
      _
    $region39: #{mnist_net_forward.1} parent=1 // pred_check_branch
      %99 = sbr.rel (0) target = $region41
    $region40: #{mnist_net_forward.1} parent=1 // pred_region
      %100 = dma.done [#allocation4], 16128
    $region41: #{mnist_net_forward.1} parent=1 // pred_fallthru
      _
    // Predicated region
    $region42: #{mnist_net_forward.1} parent=1 // pred_check
      _
    $region43: #{mnist_net_forward.1} parent=1 // pred_check_branch
      %102 = sbr.rel (0) target = $region45
    $region44: #{mnist_net_forward.1} parent=1 // pred_region
      %103 = dma.done [#allocation6], 48
    $region45: #{mnist_net_forward.1} parent=1 // pred_fallthru
      _
    // Predicated region
    $region46: #{mnist_net_forward.1} parent=1 // pred_check
      _
    $region47: #{mnist_net_forward.1} parent=1 // pred_check_branch
      %105 = sbr.rel (0) target = $region49
    $region48: #{mnist_net_forward.1} parent=1 // pred_region
      %106 = dma.done [#allocation6], 61440
    $region49: #{mnist_net_forward.1} parent=1 // pred_fallthru
      _
    // Predicated region
    $region50: #{mnist_net_forward.1} parent=1 // pred_check
      _
    $region51: #{mnist_net_forward.1} parent=1 // pred_check_branch
      %108 = sbr.rel (0) target = $region53
    $region52: #{mnist_net_forward.1} parent=1 // pred_region
      %109 = dma.done [#allocation9], 32
    $region53: #{mnist_net_forward.1} parent=1 // pred_fallthru
      _
    // Predicated region
    $region54: #{mnist_net_forward.1} parent=1 // pred_check
      _
    $region55: #{mnist_net_forward.1} parent=1 // pred_check_branch
      %111 = sbr.rel (0) target = $region57
    $region56: #{mnist_net_forward.1} parent=1 // pred_region
      %112 = dma.done [#allocation9], 8192
    $region57: #{mnist_net_forward.1} parent=1 // pred_fallthru
      _
    // Predicated region
    $region58: #{mnist_net_forward.1} parent=1 // pred_check
      _
    $region59: #{mnist_net_forward.1} parent=1 // pred_check_branch
      %114 = sbr.rel (0) target = $region61
    $region60: #{mnist_net_forward.1} parent=1 // pred_region
      %115 = dma.done [#allocation12], 16
    $region61: #{mnist_net_forward.1} parent=1 // pred_fallthru
      _
    // Predicated region
    $region62: #{mnist_net_forward.1} parent=1 // pred_check
      _
    $region63: #{mnist_net_forward.1} parent=1 // pred_check_branch
      %117 = sbr.rel (0) target = $region65
    $region64: #{mnist_net_forward.1} parent=1 // pred_region
      %118 = dma.done [#allocation12], 16
    $region65: #{mnist_net_forward.1} parent=1 // pred_fallthru
      _
    %v120 = vld [vmem:[%s0] sm:$0xff]
    %v121 = vld [vmem:[%s0 + $0x8] sm:$0xff]
    %v122 = vld [vmem:[%s0 + $0x10] sm:$0xff]
    %v123 = vld [vmem:[%s0 + $0x18] sm:$0xff]
    %v124 = vld [vmem:[%s0 + $0x20] sm:$0xff]
    %v125 = vld [vmem:[%s0 + $0x28] sm:$0xff]
    %v126 = vld [vmem:[%s0 + $0x30] sm:$0xff]
    %v127 = vld [vmem:[%s0 + $0x38] sm:$0xff]
    %v128 = vld [vmem:[%s0 + $0x40] sm:$0xff]
    %v129 = vld [vmem:[%s0 + $0x48] sm:$0xff]
    %v130 = vld [vmem:[%s0 + $0x50] sm:$0xff]
    %v131 = vld [vmem:[%s0 + $0x58] sm:$0xff]
    %v132 = vld [vmem:[#allocation3] sm:$0xff]
    %v133 = vld [vmem:[#allocation3 + $0x8] sm:$0xf]
    %v134 = vld [vmem:[#allocation3 + $0xc] sm:$0xff]
    %v135 = vld [vmem:[#allocation3 + $0x14] sm:$0xf]
    %v136 = vld [vmem:[#allocation3 + $0x18] sm:$0xff]
    %v137 = vld [vmem:[#allocation3 + $0x20] sm:$0xf]
    %v138 = vld [vmem:[#allocation3 + $0x24] sm:$0xff]
    %v139 = vld [vmem:[#allocation3 + $0x2c] sm:$0xf]
    %v140 = vld [vmem:[#allocation3 + $0x30] sm:$0xff]
    %v141 = vld [vmem:[#allocation3 + $0x38] sm:$0xf]
    %v142 = vld [vmem:[#allocation3 + $0x3c] sm:$0xff]
    %v143 = vld [vmem:[#allocation3 + $0x44] sm:$0xf]
    %v144 = vld [vmem:[#allocation3 + $0x48] sm:$0xff]
    %v145 = vld [vmem:[#allocation3 + $0x50] sm:$0xf]
    %v146 = vld [vmem:[#allocation3 + $0x54] sm:$0xff]
    %v147 = vld [vmem:[#allocation3 + $0x5c] sm:$0xf]
    %v148 = vld [vmem:[#allocation3 + $0x60] sm:$0xff]
    %v149 = vld [vmem:[#allocation3 + $0x68] sm:$0xf]
    %v150 = vld [vmem:[#allocation3 + $0x6c] sm:$0xff]
    %v151 = vld [vmem:[#allocation3 + $0x74] sm:$0xf]
    %v152 = vld [vmem:[#allocation3 + $0x78] sm:$0xff]
    %v153 = vld [vmem:[#allocation3 + $0x80] sm:$0xf]
    %v154 = vld [vmem:[#allocation3 + $0x84] sm:$0xff]
    %v155 = vld [vmem:[#allocation3 + $0x8c] sm:$0xf]
    %v156 = vld [vmem:[#allocation3 + $0x90] sm:$0xff]
    %v157 = vld [vmem:[#allocation3 + $0x98] sm:$0xf]
    %v158 = vld [vmem:[#allocation3 + $0x9c] sm:$0xff]
    %v159 = vld [vmem:[#allocation3 + $0xa4] sm:$0xf]
    %v160 = vld [vmem:[#allocation3 + $0xa8] sm:$0xff]
    %v161 = vld [vmem:[#allocation3 + $0xb0] sm:$0xf]
    %v162 = vld [vmem:[#allocation3 + $0xb4] sm:$0xff]
    %v163 = vld [vmem:[#allocation3 + $0xbc] sm:$0xf]
    %v164 = vld [vmem:[#allocation3 + $0xc0] sm:$0xff]
    %v165 = vld [vmem:[#allocation3 + $0xc8] sm:$0xf]
    %v166 = vld [vmem:[#allocation3 + $0xcc] sm:$0xff]
    %v167 = vld [vmem:[#allocation3 + $0xd4] sm:$0xf]
    %v168 = vld [vmem:[#allocation3 + $0xd8] sm:$0xff]
    %v169 = vld [vmem:[#allocation3 + $0xe0] sm:$0xf]
    %v170 = vld [vmem:[#allocation3 + $0xe4] sm:$0xff]
    %v171 = vld [vmem:[#allocation3 + $0xec] sm:$0xf]
    %v172 = vld [vmem:[#allocation3 + $0xf0] sm:$0xff]
    %v173 = vld [vmem:[#allocation3 + $0xf8] sm:$0xf]
    %v186 = vunpack.c.l.b16 %v120
    %v187 = vunpack.c.h.b16 %v120
    %v188 = vunpack.c.l.b16 %v121
    %v189 = vunpack.c.h.b16 %v121
    %v190 = vunpack.c.l.b16 %v122
    %v191 = vunpack.c.h.b16 %v122
    %v192 = vunpack.c.l.b16 %v123
    %v193 = vunpack.c.h.b16 %v123
    %v194 = vunpack.c.l.b16 %v124
    %v195 = vunpack.c.h.b16 %v124
    %v196 = vunpack.c.l.b16 %v125
    %v197 = vunpack.c.h.b16 %v125
    %v198 = vunpack.c.l.b16 %v126
    %v199 = vunpack.c.h.b16 %v126
    %v200 = vunpack.c.l.b16 %v127
    %v201 = vunpack.c.h.b16 %v127
    %v202 = vunpack.c.l.b16 %v128
    %v203 = vunpack.c.h.b16 %v128
    %v204 = vunpack.c.l.b16 %v129
    %v205 = vunpack.c.h.b16 %v129
    %v206 = vunpack.c.l.b16 %v130
    %v207 = vunpack.c.h.b16 %v130
    %v208 = vunpack.c.l.b16 %v131
    %v209 = vunpack.c.h.b16 %v131
    %v210 = vpack.c.b16 %v188, %v186
    %v211 = vpack.c.b16 %v189, %v187
    %v212 = vpack.c.b16 %v192, %v190
    %v213 = vpack.c.b16 %v193, %v191
    %v214 = vpack.c.b16 %v196, %v194
    %v215 = vpack.c.b16 %v197, %v195
    %v216 = vpack.c.b16 %v200, %v198
    %v217 = vpack.c.b16 %v201, %v199
    %v218 = vpack.c.b16 %v204, %v202
    %v219 = vpack.c.b16 %v205, %v203
    %v220 = vpack.c.b16 %v208, %v206
    %v221 = vpack.c.b16 %v209, %v207
    %v270 = vunpack.c.l.b16 %v132
    %v271 = vunpack.c.h.b16 %v132
    %v272 = vunpack.c.l.b16 %v133
    %v273 = vunpack.c.l.b16 %v134
    %v274 = vunpack.c.h.b16 %v134
    %v275 = vunpack.c.l.b16 %v135
    %v276 = vunpack.c.l.b16 %v136
    %v277 = vunpack.c.h.b16 %v136
    %v278 = vunpack.c.l.b16 %v137
    %v279 = vunpack.c.l.b16 %v138
    %v280 = vunpack.c.h.b16 %v138
    %v281 = vunpack.c.l.b16 %v139
    %v282 = vunpack.c.l.b16 %v140
    %v283 = vunpack.c.h.b16 %v140
    %v284 = vunpack.c.l.b16 %v141
    %v285 = vunpack.c.l.b16 %v142
    %v286 = vunpack.c.h.b16 %v142
    %v287 = vunpack.c.l.b16 %v143
    %v288 = vunpack.c.l.b16 %v144
    %v289 = vunpack.c.h.b16 %v144
    %v290 = vunpack.c.l.b16 %v145
    %v291 = vunpack.c.l.b16 %v146
    %v292 = vunpack.c.h.b16 %v146
    %v293 = vunpack.c.l.b16 %v147
    %v294 = vunpack.c.l.b16 %v148
    %v295 = vunpack.c.h.b16 %v148
    %v296 = vunpack.c.l.b16 %v149
    %v297 = vunpack.c.l.b16 %v150
    %v298 = vunpack.c.h.b16 %v150
    %v299 = vunpack.c.l.b16 %v151
    %v300 = vunpack.c.l.b16 %v152
    %v301 = vunpack.c.h.b16 %v152
    %v302 = vunpack.c.l.b16 %v153
    %v303 = vunpack.c.l.b16 %v154
    %v304 = vunpack.c.h.b16 %v154
    %v305 = vunpack.c.l.b16 %v155
    %v306 = vunpack.c.l.b16 %v156
    %v307 = vunpack.c.h.b16 %v156
    %v308 = vunpack.c.l.b16 %v157
    %v309 = vunpack.c.l.b16 %v158
    %v310 = vunpack.c.h.b16 %v158
    %v311 = vunpack.c.l.b16 %v159
    %v312 = vunpack.c.l.b16 %v160
    %v313 = vunpack.c.h.b16 %v160
    %v314 = vunpack.c.l.b16 %v161
    %v315 = vunpack.c.l.b16 %v162
    %v316 = vunpack.c.h.b16 %v162
    %v317 = vunpack.c.l.b16 %v163
    %v318 = vunpack.c.l.b16 %v164
    %v319 = vunpack.c.h.b16 %v164
    %v320 = vunpack.c.l.b16 %v165
    %v321 = vunpack.c.l.b16 %v166
    %v322 = vunpack.c.h.b16 %v166
    %v323 = vunpack.c.l.b16 %v167
    %v324 = vunpack.c.l.b16 %v168
    %v325 = vunpack.c.h.b16 %v168
    %v326 = vunpack.c.l.b16 %v169
    %v327 = vunpack.c.l.b16 %v170
    %v328 = vunpack.c.h.b16 %v170
    %v329 = vunpack.c.l.b16 %v171
    %v330 = vunpack.c.l.b16 %v172
    %v331 = vunpack.c.h.b16 %v172
    %v332 = vunpack.c.l.b16 %v173
    %v333 = vpack.c.b16 %v273, %v270
    %v334 = vpack.c.b16 %v274, %v271
    %v335 = vpack.c.b16 %v275, %v272
    %v336 = vpack.c.b16 %v279, %v276
    %v337 = vpack.c.b16 %v280, %v277
    %v338 = vpack.c.b16 %v281, %v278
    %v339 = vpack.c.b16 %v285, %v282
    %v340 = vpack.c.b16 %v286, %v283
    %v341 = vpack.c.b16 %v287, %v284
    %v342 = vpack.c.b16 %v291, %v288
    %v343 = vpack.c.b16 %v292, %v289
    %v344 = vpack.c.b16 %v293, %v290
    %v345 = vpack.c.b16 %v297, %v294
    %v346 = vpack.c.b16 %v298, %v295
    %v347 = vpack.c.b16 %v299, %v296
    %v348 = vpack.c.b16 %v303, %v300
    %v349 = vpack.c.b16 %v304, %v301
    %v350 = vpack.c.b16 %v305, %v302
    %v351 = vpack.c.b16 %v309, %v306
    %v352 = vpack.c.b16 %v310, %v307
    %v353 = vpack.c.b16 %v311, %v308
    %v354 = vpack.c.b16 %v315, %v312
    %v355 = vpack.c.b16 %v316, %v313
    %v356 = vpack.c.b16 %v317, %v314
    %v357 = vpack.c.b16 %v321, %v318
    %v358 = vpack.c.b16 %v322, %v319
    %v359 = vpack.c.b16 %v323, %v320
    %v360 = vpack.c.b16 %v327, %v324
    %v361 = vpack.c.b16 %v328, %v325
    %v362 = vpack.c.b16 %v329, %v326
    %v363 = vpack.c.b16 %v330, %v330
    %v364 = vpack.c.b16 %v331, %v331
    %v365 = vpack.c.b16 %v332, %v332
    %vm396 = vcmask 326656
    %v398 = vsel %vm396, %v211, 0
    %v401 = vsel %vm396, %v213, 0
    %v404 = vsel %vm396, %v215, 0
    %v407 = vsel %vm396, %v217, 0
    %v410 = vsel %vm396, %v219, 0
    %v413 = vsel %vm396, %v221, 0
    %vm415 = vcmask 1043456
    %v417 = vsel %vm415, %v363, 0
    %v420 = vsel %vm415, %v364, 0
    %v423 = vsel %vm415, %v365, 0
    %425 = vmatprep.subr.bf16.mxu0 %v355
    %426 = vmatpush1.bf16.msra.mxu0 %v354
    %427 = vmatprep.subr.bf16.mxu0 %v352
    %428 = vmatpush1.bf16.msra.mxu0 %v351
    %429 = vmatprep.subr.bf16.mxu0 %v349
    %430 = vmatpush1.bf16.msra.mxu0 %v348
    %431 = vmatprep.subr.bf16.mxu0 %v346
    %432 = vmatpush1.bf16.msra.mxu0 %v345
    %433 = vmatprep.subr.bf16.mxu0 %v343
    %434 = vmatpush1.bf16.msra.mxu0 %v342
    %435 = vmatprep.subr.bf16.mxu0 %v340
    %436 = vmatpush1.bf16.msra.mxu0 %v339
    %437 = vmatprep.subr.bf16.mxu0 %v337
    %438 = vmatpush1.bf16.msra.mxu0 %v336
    %439 = vmatprep.subr.bf16.mxu0 %v334
    %440 = vmatpush1.bf16.msra.mxu0 %v333
    %441 = vmatprep.subr.bf16.mxu0 0
    %442 = vmatpush2.bf16.msra.mxu0 0
    %443 = vmatprep.subr.bf16.mxu0 0
    %444 = vmatpush2.bf16.msra.mxu0 0
    %445 = vmatprep.subr.bf16.mxu0 0
    %446 = vmatpush2.bf16.msra.mxu0 0
    %447 = vmatprep.subr.bf16.mxu0 0
    %448 = vmatpush2.bf16.msra.mxu0 0
    %449 = vmatprep.subr.bf16.mxu0 0
    %450 = vmatpush2.bf16.msra.mxu0 0
    %451 = vmatprep.subr.bf16.mxu0 %v420
    %452 = vmatpush2.bf16.msra.mxu0 %v417
    %453 = vmatprep.subr.bf16.mxu0 %v361
    %454 = vmatpush2.bf16.msra.mxu0 %v360
    %455 = vmatprep.subr.bf16.mxu0 %v358
    %456 = vmatpush2.bf16.msra.mxu0 %v357
    %457 = vmatprep.mubr.bf16.mxu0 %v398
    %458 = vmatmul.mubr.bf16.gmra.mxu0 %v210
    %v459 = vpop.f32.mrf.mxu0
    %v460 = vadd.f32 0.0, %v459
    %v461 = vpop.f32.mrf.mxu0
    %v462 = vadd.f32 0.0, %v461
    %v463 = vpop.f32.mrf.mxu0
    %v464 = vadd.f32 0.0, %v463
    %v465 = vpop.f32.mrf.mxu0
    %v466 = vadd.f32 0.0, %v465
    %467 = vmatprep.mubr.bf16.mxu0 %v401
    %468 = vmatmul.mubr.bf16.gmra.mxu0 %v212
    %v469 = vpop.f32.mrf.mxu0
    %v470 = vadd.f32 0.0, %v469
    %v471 = vpop.f32.mrf.mxu0
    %v472 = vadd.f32 0.0, %v471
    %v473 = vpop.f32.mrf.mxu0
    %v474 = vadd.f32 0.0, %v473
    %v475 = vpop.f32.mrf.mxu0
    %v476 = vadd.f32 0.0, %v475
    %477 = vmatprep.mubr.bf16.mxu0 %v404
    %478 = vmatmul.mubr.bf16.gmra.mxu0 %v214
    %v479 = vpop.f32.mrf.mxu0
    %v480 = vadd.f32 0.0, %v479
    %v481 = vpop.f32.mrf.mxu0
    %v482 = vadd.f32 0.0, %v481
    %v483 = vpop.f32.mrf.mxu0
    %v484 = vadd.f32 0.0, %v483
    %v485 = vpop.f32.mrf.mxu0
    %v486 = vadd.f32 0.0, %v485
    %487 = vmatprep.mubr.bf16.mxu0 %v407
    %488 = vmatmul.mubr.bf16.gmra.mxu0 %v216
    %v489 = vpop.f32.mrf.mxu0
    %v490 = vadd.f32 0.0, %v489
    %v491 = vpop.f32.mrf.mxu0
    %v492 = vadd.f32 0.0, %v491
    %v493 = vpop.f32.mrf.mxu0
    %v494 = vadd.f32 0.0, %v493
    %v495 = vpop.f32.mrf.mxu0
    %v496 = vadd.f32 0.0, %v495
    %497 = vmatprep.mubr.bf16.mxu0 %v410
    %498 = vmatmul.mubr.bf16.gmra.mxu0 %v218
    %v499 = vpop.f32.mrf.mxu0
    %v500 = vadd.f32 0.0, %v499
    %v501 = vpop.f32.mrf.mxu0
    %v502 = vadd.f32 0.0, %v501
    %v503 = vpop.f32.mrf.mxu0
    %v504 = vadd.f32 0.0, %v503
    %v505 = vpop.f32.mrf.mxu0
    %v506 = vadd.f32 0.0, %v505
    %507 = vmatprep.mubr.bf16.mxu0 %v413
    %508 = vmatmul.mubr.bf16.gmra.mxu0 %v220
    %v509 = vpop.f32.mrf.mxu0
    %v510 = vadd.f32 0.0, %v509
    %v511 = vpop.f32.mrf.mxu0
    %v512 = vadd.f32 0.0, %v511
    %v513 = vpop.f32.mrf.mxu0
    %v514 = vadd.f32 0.0, %v513
    %v515 = vpop.f32.mrf.mxu0
    %v516 = vadd.f32 0.0, %v515
    %517 = vdwg.mxu0
    %518 = vmatprep.subr.bf16.mxu0 0
    %519 = vmatpush1.bf16.msra.mxu0 %v356
    %520 = vmatprep.subr.bf16.mxu0 0
    %521 = vmatpush1.bf16.msra.mxu0 %v353
    %522 = vmatprep.subr.bf16.mxu0 0
    %523 = vmatpush1.bf16.msra.mxu0 %v350
    %524 = vmatprep.subr.bf16.mxu0 0
    %525 = vmatpush1.bf16.msra.mxu0 %v347
    %526 = vmatprep.subr.bf16.mxu0 0
    %527 = vmatpush1.bf16.msra.mxu0 %v344
    %528 = vmatprep.subr.bf16.mxu0 0
    %529 = vmatpush1.bf16.msra.mxu0 %v341
    %530 = vmatprep.subr.bf16.mxu0 0
    %531 = vmatpush1.bf16.msra.mxu0 %v338
    %532 = vmatprep.subr.bf16.mxu0 0
    %533 = vmatpush1.bf16.msra.mxu0 %v335
    %534 = vmatprep.subr.bf16.mxu0 0
    %535 = vmatpush2.bf16.msra.mxu0 0
    %536 = vmatprep.subr.bf16.mxu0 0
    %537 = vmatpush2.bf16.msra.mxu0 0
    %538 = vmatprep.subr.bf16.mxu0 0
    %539 = vmatpush2.bf16.msra.mxu0 0
    %540 = vmatprep.subr.bf16.mxu0 0
    %541 = vmatpush2.bf16.msra.mxu0 0
    %542 = vmatprep.subr.bf16.mxu0 0
    %543 = vmatpush2.bf16.msra.mxu0 0
    %544 = vmatprep.subr.bf16.mxu0 0
    %545 = vmatpush2.bf16.msra.mxu0 %v423
    %546 = vmatprep.subr.bf16.mxu0 0
    %547 = vmatpush2.bf16.msra.mxu0 %v362
    %548 = vmatprep.subr.bf16.mxu0 0
    %549 = vmatpush2.bf16.msra.mxu0 %v359
    %550 = vmatprep.mubr.bf16.mxu0 %v398
    %551 = vmatmul.mubr.bf16.gmra.mxu0 %v210
    %v552 = vpop.f32.mrf.mxu0
    %v553 = vadd.f32 0.0, %v552
    %v554 = vpop.f32.mrf.mxu0
    %v555 = vpop.f32.mrf.mxu0
    %v556 = vadd.f32 0.0, %v555
    %v557 = vpop.f32.mrf.mxu0
    %558 = vmatprep.mubr.bf16.mxu0 %v401
    %559 = vmatmul.mubr.bf16.gmra.mxu0 %v212
    %v560 = vpop.f32.mrf.mxu0
    %v561 = vadd.f32 0.0, %v560
    %v562 = vpop.f32.mrf.mxu0
    %v563 = vpop.f32.mrf.mxu0
    %v564 = vadd.f32 0.0, %v563
    %v565 = vpop.f32.mrf.mxu0
    %566 = vmatprep.mubr.bf16.mxu0 %v404
    %567 = vmatmul.mubr.bf16.gmra.mxu0 %v214
    %v568 = vpop.f32.mrf.mxu0
    %v569 = vadd.f32 0.0, %v568
    %v570 = vpop.f32.mrf.mxu0
    %v571 = vpop.f32.mrf.mxu0
    %v572 = vadd.f32 0.0, %v571
    %v573 = vpop.f32.mrf.mxu0
    %574 = vmatprep.mubr.bf16.mxu0 %v407
    %575 = vmatmul.mubr.bf16.gmra.mxu0 %v216
    %v576 = vpop.f32.mrf.mxu0
    %v577 = vadd.f32 0.0, %v576
    %v578 = vpop.f32.mrf.mxu0
    %v579 = vpop.f32.mrf.mxu0
    %v580 = vadd.f32 0.0, %v579
    %v581 = vpop.f32.mrf.mxu0
    %582 = vmatprep.mubr.bf16.mxu0 %v410
    %583 = vmatmul.mubr.bf16.gmra.mxu0 %v218
    %v584 = vpop.f32.mrf.mxu0
    %v585 = vadd.f32 0.0, %v584
    %v586 = vpop.f32.mrf.mxu0
    %v587 = vpop.f32.mrf.mxu0
    %v588 = vadd.f32 0.0, %v587
    %v589 = vpop.f32.mrf.mxu0
    %590 = vmatprep.mubr.bf16.mxu0 %v413
    %591 = vmatmul.mubr.bf16.gmra.mxu0 %v220
    %v592 = vpop.f32.mrf.mxu0
    %v593 = vadd.f32 0.0, %v592
    %v594 = vpop.f32.mrf.mxu0
    %v595 = vpop.f32.mrf.mxu0
    %v596 = vadd.f32 0.0, %v595
    %v597 = vpop.f32.mrf.mxu0
    %598 = vdwg.mxu0
    %s599 = scalar_lea.vmem [#allocation3], 252
    %v600 = vld [vmem:[%s599] sm:$0xff]
    %v601 = vld [vmem:[%s599 + $0x8] sm:$0xf]
    %v602 = vld [vmem:[%s599 + $0xc] sm:$0xff]
    %v603 = vld [vmem:[%s599 + $0x14] sm:$0xf]
    %v604 = vld [vmem:[%s599 + $0x18] sm:$0xff]
    %v605 = vld [vmem:[%s599 + $0x20] sm:$0xf]
    %v606 = vld [vmem:[%s599 + $0x24] sm:$0xff]
    %v607 = vld [vmem:[%s599 + $0x2c] sm:$0xf]
    %v608 = vld [vmem:[%s599 + $0x30] sm:$0xff]
    %v609 = vld [vmem:[%s599 + $0x38] sm:$0xf]
    %v610 = vld [vmem:[%s599 + $0x3c] sm:$0xff]
    %v611 = vld [vmem:[%s599 + $0x44] sm:$0xf]
    %v612 = vld [vmem:[%s599 + $0x48] sm:$0xff]
    %v613 = vld [vmem:[%s599 + $0x50] sm:$0xf]
    %v614 = vld [vmem:[%s599 + $0x54] sm:$0xff]
    %v615 = vld [vmem:[%s599 + $0x5c] sm:$0xf]
    %v616 = vld [vmem:[%s599 + $0x60] sm:$0xff]
    %v617 = vld [vmem:[%s599 + $0x68] sm:$0xf]
    %v618 = vld [vmem:[%s599 + $0x6c] sm:$0xff]
    %v619 = vld [vmem:[%s599 + $0x74] sm:$0xf]
    %v620 = vld [vmem:[%s599 + $0x78] sm:$0xff]
    %v621 = vld [vmem:[%s599 + $0x80] sm:$0xf]
    %v622 = vld [vmem:[%s599 + $0x84] sm:$0xff]
    %v623 = vld [vmem:[%s599 + $0x8c] sm:$0xf]
    %v624 = vld [vmem:[%s599 + $0x90] sm:$0xff]
    %v625 = vld [vmem:[%s599 + $0x98] sm:$0xf]
    %v626 = vld [vmem:[%s599 + $0x9c] sm:$0xff]
    %v627 = vld [vmem:[%s599 + $0xa4] sm:$0xf]
    %v628 = vld [vmem:[%s599 + $0xa8] sm:$0xff]
    %v629 = vld [vmem:[%s599 + $0xb0] sm:$0xf]
    %v630 = vld [vmem:[%s599 + $0xb4] sm:$0xff]
    %v631 = vld [vmem:[%s599 + $0xbc] sm:$0xf]
    %v632 = vld [vmem:[%s599 + $0xc0] sm:$0xff]
    %v633 = vld [vmem:[%s599 + $0xc8] sm:$0xf]
    %v634 = vld [vmem:[%s599 + $0xcc] sm:$0xff]
    %v635 = vld [vmem:[%s599 + $0xd4] sm:$0xf]
    %v636 = vld [vmem:[%s599 + $0xd8] sm:$0xff]
    %v637 = vld [vmem:[%s599 + $0xe0] sm:$0xf]
    %v638 = vld [vmem:[%s599 + $0xe4] sm:$0xff]
    %v639 = vld [vmem:[%s599 + $0xec] sm:$0xf]
    %v640 = vld [vmem:[%s599 + $0xf0] sm:$0xff]
    %v641 = vld [vmem:[%s599 + $0xf8] sm:$0xf]
    %v684 = vunpack.c.l.b16 %v600
    %v685 = vunpack.c.h.b16 %v600
    %v686 = vunpack.c.l.b16 %v601
    %v687 = vunpack.c.l.b16 %v602
    %v688 = vunpack.c.h.b16 %v602
    %v689 = vunpack.c.l.b16 %v603
    %v690 = vunpack.c.l.b16 %v604
    %v691 = vunpack.c.h.b16 %v604
    %v692 = vunpack.c.l.b16 %v605
    %v693 = vunpack.c.l.b16 %v606
    %v694 = vunpack.c.h.b16 %v606
    %v695 = vunpack.c.l.b16 %v607
    %v696 = vunpack.c.l.b16 %v608
    %v697 = vunpack.c.h.b16 %v608
    %v698 = vunpack.c.l.b16 %v609
    %v699 = vunpack.c.l.b16 %v610
    %v700 = vunpack.c.h.b16 %v610
    %v701 = vunpack.c.l.b16 %v611
    %v702 = vunpack.c.l.b16 %v612
    %v703 = vunpack.c.h.b16 %v612
    %v704 = vunpack.c.l.b16 %v613
    %v705 = vunpack.c.l.b16 %v614
    %v706 = vunpack.c.h.b16 %v614
    %v707 = vunpack.c.l.b16 %v615
    %v708 = vunpack.c.l.b16 %v616
    %v709 = vunpack.c.h.b16 %v616
    %v710 = vunpack.c.l.b16 %v617
    %v711 = vunpack.c.l.b16 %v618
    %v712 = vunpack.c.h.b16 %v618
    %v713 = vunpack.c.l.b16 %v619
    %v714 = vunpack.c.l.b16 %v620
    %v715 = vunpack.c.h.b16 %v620
    %v716 = vunpack.c.l.b16 %v621
    %v717 = vunpack.c.l.b16 %v622
    %v718 = vunpack.c.h.b16 %v622
    %v719 = vunpack.c.l.b16 %v623
    %v720 = vunpack.c.l.b16 %v624
    %v721 = vunpack.c.h.b16 %v624
    %v722 = vunpack.c.l.b16 %v625
    %v723 = vunpack.c.l.b16 %v626
    %v724 = vunpack.c.h.b16 %v626
    %v725 = vunpack.c.l.b16 %v627
    %v726 = vunpack.c.l.b16 %v628
    %v727 = vunpack.c.h.b16 %v628
    %v728 = vunpack.c.l.b16 %v629
    %v729 = vunpack.c.l.b16 %v630
    %v730 = vunpack.c.h.b16 %v630
    %v731 = vunpack.c.l.b16 %v631
    %v732 = vunpack.c.l.b16 %v632
    %v733 = vunpack.c.h.b16 %v632
    %v734 = vunpack.c.l.b16 %v633
    %v735 = vunpack.c.l.b16 %v634
    %v736 = vunpack.c.h.b16 %v634
    %v737 = vunpack.c.l.b16 %v635
    %v738 = vunpack.c.l.b16 %v636
    %v739 = vunpack.c.h.b16 %v636
    %v740 = vunpack.c.l.b16 %v637
    %v741 = vunpack.c.l.b16 %v638
    %v742 = vunpack.c.h.b16 %v638
    %v743 = vunpack.c.l.b16 %v639
    %v744 = vunpack.c.l.b16 %v640
    %v745 = vunpack.c.h.b16 %v640
    %v746 = vunpack.c.l.b16 %v641
    %v747 = vpack.c.b16 %v687, %v684
    %v748 = vpack.c.b16 %v688, %v685
    %v749 = vpack.c.b16 %v689, %v686
    %v750 = vpack.c.b16 %v693, %v690
    %v751 = vpack.c.b16 %v694, %v691
    %v752 = vpack.c.b16 %v695, %v692
    %v753 = vpack.c.b16 %v699, %v696
    %v754 = vpack.c.b16 %v700, %v697
    %v755 = vpack.c.b16 %v701, %v698
    %v756 = vpack.c.b16 %v705, %v702
    %v757 = vpack.c.b16 %v706, %v703
    %v758 = vpack.c.b16 %v707, %v704
    %v759 = vpack.c.b16 %v711, %v708
    %v760 = vpack.c.b16 %v712, %v709
    %v761 = vpack.c.b16 %v713, %v710
    %v762 = vpack.c.b16 %v717, %v714
    %v763 = vpack.c.b16 %v718, %v715
    %v764 = vpack.c.b16 %v719, %v716
    %v765 = vpack.c.b16 %v723, %v720
    %v766 = vpack.c.b16 %v724, %v721
    %v767 = vpack.c.b16 %v725, %v722
    %v768 = vpack.c.b16 %v729, %v726
    %v769 = vpack.c.b16 %v730, %v727
    %v770 = vpack.c.b16 %v731, %v728
    %v771 = vpack.c.b16 %v735, %v732
    %v772 = vpack.c.b16 %v736, %v733
    %v773 = vpack.c.b16 %v737, %v734
    %v774 = vpack.c.b16 %v741, %v738
    %v775 = vpack.c.b16 %v742, %v739
    %v776 = vpack.c.b16 %v743, %v740
    %v777 = vpack.c.b16 %v744, %v744
    %v778 = vpack.c.b16 %v745, %v745
    %v779 = vpack.c.b16 %v746, %v746
    %v811 = vsel %vm415, %v777, 0
    %v814 = vsel %vm415, %v778, 0
    %v817 = vsel %vm415, %v779, 0
    %819 = vmatprep.subr.bf16.mxu0 %v769
    %820 = vmatpush1.bf16.msra.mxu0 %v768
    %821 = vmatprep.subr.bf16.mxu0 %v766
    %822 = vmatpush1.bf16.msra.mxu0 %v765
    %823 = vmatprep.subr.bf16.mxu0 %v763
    %824 = vmatpush1.bf16.msra.mxu0 %v762
    %825 = vmatprep.subr.bf16.mxu0 %v760
    %826 = vmatpush1.bf16.msra.mxu0 %v759
    %827 = vmatprep.subr.bf16.mxu0 %v757
    %828 = vmatpush1.bf16.msra.mxu0 %v756
    %829 = vmatprep.subr.bf16.mxu0 %v754
    %830 = vmatpush1.bf16.msra.mxu0 %v753
    %831 = vmatprep.subr.bf16.mxu0 %v751
    %832 = vmatpush1.bf16.msra.mxu0 %v750
    %833 = vmatprep.subr.bf16.mxu0 %v748
    %834 = vmatpush1.bf16.msra.mxu0 %v747
    %835 = vmatprep.subr.bf16.mxu0 0
    %836 = vmatpush2.bf16.msra.mxu0 0
    %837 = vmatprep.subr.bf16.mxu0 0
    %838 = vmatpush2.bf16.msra.mxu0 0
    %839 = vmatprep.subr.bf16.mxu0 0
    %840 = vmatpush2.bf16.msra.mxu0 0
    %841 = vmatprep.subr.bf16.mxu0 0
    %842 = vmatpush2.bf16.msra.mxu0 0
    %843 = vmatprep.subr.bf16.mxu0 0
    %844 = vmatpush2.bf16.msra.mxu0 0
    %845 = vmatprep.subr.bf16.mxu0 %v814
    %846 = vmatpush2.bf16.msra.mxu0 %v811
    %847 = vmatprep.subr.bf16.mxu0 %v775
    %848 = vmatpush2.bf16.msra.mxu0 %v774
    %849 = vmatprep.subr.bf16.mxu0 %v772
    %850 = vmatpush2.bf16.msra.mxu0 %v771
    %851 = vmatprep.mubr.bf16.mxu0 %v398
    %852 = vmatmul.mubr.bf16.gmra.mxu0 %v210
    %v853 = vpop.f32.mrf.mxu0
    %v854 = vadd.f32 0.0, %v853
    %v855 = vpop.f32.mrf.mxu0
    %v856 = vadd.f32 0.0, %v855
    %v857 = vpop.f32.mrf.mxu0
    %v858 = vadd.f32 0.0, %v857
    %v859 = vpop.f32.mrf.mxu0
    %v860 = vadd.f32 0.0, %v859
    %861 = vmatprep.mubr.bf16.mxu0 %v401
    %862 = vmatmul.mubr.bf16.gmra.mxu0 %v212
    %v863 = vpop.f32.mrf.mxu0
    %v864 = vadd.f32 0.0, %v863
    %v865 = vpop.f32.mrf.mxu0
    %v866 = vadd.f32 0.0, %v865
    %v867 = vpop.f32.mrf.mxu0
    %v868 = vadd.f32 0.0, %v867
    %v869 = vpop.f32.mrf.mxu0
    %v870 = vadd.f32 0.0, %v869
    %871 = vmatprep.mubr.bf16.mxu0 %v404
    %872 = vmatmul.mubr.bf16.gmra.mxu0 %v214
    %v873 = vpop.f32.mrf.mxu0
    %v874 = vadd.f32 0.0, %v873
    %v875 = vpop.f32.mrf.mxu0
    %v876 = vadd.f32 0.0, %v875
    %v877 = vpop.f32.mrf.mxu0
    %v878 = vadd.f32 0.0, %v877
    %v879 = vpop.f32.mrf.mxu0
    %v880 = vadd.f32 0.0, %v879
    %881 = vmatprep.mubr.bf16.mxu0 %v407
    %882 = vmatmul.mubr.bf16.gmra.mxu0 %v216
    %v883 = vpop.f32.mrf.mxu0
    %v884 = vadd.f32 0.0, %v883
    %v885 = vpop.f32.mrf.mxu0
    %v886 = vadd.f32 0.0, %v885
    %v887 = vpop.f32.mrf.mxu0
    %v888 = vadd.f32 0.0, %v887
    %v889 = vpop.f32.mrf.mxu0
    %v890 = vadd.f32 0.0, %v889
    %891 = vmatprep.mubr.bf16.mxu0 %v410
    %892 = vmatmul.mubr.bf16.gmra.mxu0 %v218
    %v893 = vpop.f32.mrf.mxu0
    %v894 = vadd.f32 0.0, %v893
    %v895 = vpop.f32.mrf.mxu0
    %v896 = vadd.f32 0.0, %v895
    %v897 = vpop.f32.mrf.mxu0
    %v898 = vadd.f32 0.0, %v897
    %v899 = vpop.f32.mrf.mxu0
    %v900 = vadd.f32 0.0, %v899
    %901 = vmatprep.mubr.bf16.mxu0 %v413
    %902 = vmatmul.mubr.bf16.gmra.mxu0 %v220
    %v903 = vpop.f32.mrf.mxu0
    %v904 = vadd.f32 0.0, %v903
    %v905 = vpop.f32.mrf.mxu0
    %v906 = vadd.f32 0.0, %v905
    %v907 = vpop.f32.mrf.mxu0
    %v908 = vadd.f32 0.0, %v907
    %v909 = vpop.f32.mrf.mxu0
    %v910 = vadd.f32 0.0, %v909
    %911 = vdwg.mxu0
    %912 = vmatprep.subr.bf16.mxu0 0
    %913 = vmatpush1.bf16.msra.mxu0 %v770
    %914 = vmatprep.subr.bf16.mxu0 0
    %915 = vmatpush1.bf16.msra.mxu0 %v767
    %916 = vmatprep.subr.bf16.mxu0 0
    %917 = vmatpush1.bf16.msra.mxu0 %v764
    %918 = vmatprep.subr.bf16.mxu0 0
    %919 = vmatpush1.bf16.msra.mxu0 %v761
    %920 = vmatprep.subr.bf16.mxu0 0
    %921 = vmatpush1.bf16.msra.mxu0 %v758
    %922 = vmatprep.subr.bf16.mxu0 0
    %923 = vmatpush1.bf16.msra.mxu0 %v755
    %924 = vmatprep.subr.bf16.mxu0 0
    %925 = vmatpush1.bf16.msra.mxu0 %v752
    %926 = vmatprep.subr.bf16.mxu0 0
    %927 = vmatpush1.bf16.msra.mxu0 %v749
    %928 = vmatprep.subr.bf16.mxu0 0
    %929 = vmatpush2.bf16.msra.mxu0 0
    %930 = vmatprep.subr.bf16.mxu0 0
    %931 = vmatpush2.bf16.msra.mxu0 0
    %932 = vmatprep.subr.bf16.mxu0 0
    %933 = vmatpush2.bf16.msra.mxu0 0
    %934 = vmatprep.subr.bf16.mxu0 0
    %935 = vmatpush2.bf16.msra.mxu0 0
    %936 = vmatprep.subr.bf16.mxu0 0
    %937 = vmatpush2.bf16.msra.mxu0 0
    %938 = vmatprep.subr.bf16.mxu0 0
    %939 = vmatpush2.bf16.msra.mxu0 %v817
    %940 = vmatprep.subr.bf16.mxu0 0
    %941 = vmatpush2.bf16.msra.mxu0 %v776
    %942 = vmatprep.subr.bf16.mxu0 0
    %943 = vmatpush2.bf16.msra.mxu0 %v773
    %944 = vmatprep.mubr.bf16.mxu0 %v398
    %945 = vmatmul.mubr.bf16.gmra.mxu0 %v210
    %v946 = vpop.f32.mrf.mxu0
    %v947 = vadd.f32 0.0, %v946
    %v948 = vpop.f32.mrf.mxu0
    %v949 = vpop.f32.mrf.mxu0
    %v950 = vadd.f32 0.0, %v949
    %v951 = vpop.f32.mrf.mxu0
    %952 = vmatprep.mubr.bf16.mxu0 %v401
    %953 = vmatmul.mubr.bf16.gmra.mxu0 %v212
    %v954 = vpop.f32.mrf.mxu0
    %v955 = vadd.f32 0.0, %v954
    %v956 = vpop.f32.mrf.mxu0
    %v957 = vpop.f32.mrf.mxu0
    %v958 = vadd.f32 0.0, %v957
    %v959 = vpop.f32.mrf.mxu0
    %960 = vmatprep.mubr.bf16.mxu0 %v404
    %961 = vmatmul.mubr.bf16.gmra.mxu0 %v214
    %v962 = vpop.f32.mrf.mxu0
    %v963 = vadd.f32 0.0, %v962
    %v964 = vpop.f32.mrf.mxu0
    %v965 = vpop.f32.mrf.mxu0
    %v966 = vadd.f32 0.0, %v965
    %v967 = vpop.f32.mrf.mxu0
    %968 = vmatprep.mubr.bf16.mxu0 %v407
    %969 = vmatmul.mubr.bf16.gmra.mxu0 %v216
    %v970 = vpop.f32.mrf.mxu0
    %v971 = vadd.f32 0.0, %v970
    %v972 = vpop.f32.mrf.mxu0
    %v973 = vpop.f32.mrf.mxu0
    %v974 = vadd.f32 0.0, %v973
    %v975 = vpop.f32.mrf.mxu0
    %976 = vmatprep.mubr.bf16.mxu0 %v410
    %977 = vmatmul.mubr.bf16.gmra.mxu0 %v218
    %v978 = vpop.f32.mrf.mxu0
    %v979 = vadd.f32 0.0, %v978
    %v980 = vpop.f32.mrf.mxu0
    %v981 = vpop.f32.mrf.mxu0
    %v982 = vadd.f32 0.0, %v981
    %v983 = vpop.f32.mrf.mxu0
    %984 = vmatprep.mubr.bf16.mxu0 %v413
    %985 = vmatmul.mubr.bf16.gmra.mxu0 %v220
    %v986 = vpop.f32.mrf.mxu0
    %v987 = vadd.f32 0.0, %v986
    %v988 = vpop.f32.mrf.mxu0
    %v989 = vpop.f32.mrf.mxu0
    %v990 = vadd.f32 0.0, %v989
    %v991 = vpop.f32.mrf.mxu0
    %992 = vdwg.mxu0
    %v993 = vmax.f32 %v460, %v854
    %v994 = vmax.f32 %v462, %v856
    %v995 = vmax.f32 %v553, %v947
    %v996 = vmax.f32 %v464, %v858
    %v997 = vmax.f32 %v466, %v860
    %v998 = vmax.f32 %v556, %v950
    %v999 = vmax.f32 %v470, %v864
    %v1000 = vmax.f32 %v472, %v866
    %v1001 = vmax.f32 %v561, %v955
    %v1002 = vmax.f32 %v474, %v868
    %v1003 = vmax.f32 %v476, %v870
    %v1004 = vmax.f32 %v564, %v958
    %v1005 = vmax.f32 %v480, %v874
    %v1006 = vmax.f32 %v482, %v876
    %v1007 = vmax.f32 %v569, %v963
    %v1008 = vmax.f32 %v484, %v878
    %v1009 = vmax.f32 %v486, %v880
    %v1010 = vmax.f32 %v572, %v966
    %v1011 = vmax.f32 %v490, %v884
    %v1012 = vmax.f32 %v492, %v886
    %v1013 = vmax.f32 %v577, %v971
    %v1014 = vmax.f32 %v494, %v888
    %v1015 = vmax.f32 %v496, %v890
    %v1016 = vmax.f32 %v580, %v974
    %v1017 = vmax.f32 %v500, %v894
    %v1018 = vmax.f32 %v502, %v896
    %v1019 = vmax.f32 %v585, %v979
    %v1020 = vmax.f32 %v504, %v898
    %v1021 = vmax.f32 %v506, %v900
    %v1022 = vmax.f32 %v588, %v982
    %v1023 = vmax.f32 %v510, %v904
    %v1024 = vmax.f32 %v512, %v906
    %v1025 = vmax.f32 %v593, %v987
    %v1026 = vmax.f32 %v514, %v908
    %v1027 = vmax.f32 %v516, %v910
    %v1028 = vmax.f32 %v596, %v990
    %s1029 = scalar_lea.vmem [#allocation3], 504
    %v1030 = vld [vmem:[%s1029] sm:$0xff]
    %v1031 = vld [vmem:[%s1029 + $0x8] sm:$0xf]
    %v1032 = vld [vmem:[%s1029 + $0xc] sm:$0xff]
    %v1033 = vld [vmem:[%s1029 + $0x14] sm:$0xf]
    %v1034 = vld [vmem:[%s1029 + $0x18] sm:$0xff]
    %v1035 = vld [vmem:[%s1029 + $0x20] sm:$0xf]
    %v1036 = vld [vmem:[%s1029 + $0x24] sm:$0xff]
    %v1037 = vld [vmem:[%s1029 + $0x2c] sm:$0xf]
    %v1038 = vld [vmem:[%s1029 + $0x30] sm:$0xff]
    %v1039 = vld [vmem:[%s1029 + $0x38] sm:$0xf]
    %v1040 = vld [vmem:[%s1029 + $0x3c] sm:$0xff]
    %v1041 = vld [vmem:[%s1029 + $0x44] sm:$0xf]
    %v1042 = vld [vmem:[%s1029 + $0x48] sm:$0xff]
    %v1043 = vld [vmem:[%s1029 + $0x50] sm:$0xf]
    %v1044 = vld [vmem:[%s1029 + $0x54] sm:$0xff]
    %v1045 = vld [vmem:[%s1029 + $0x5c] sm:$0xf]
    %v1046 = vld [vmem:[%s1029 + $0x60] sm:$0xff]
    %v1047 = vld [vmem:[%s1029 + $0x68] sm:$0xf]
    %v1048 = vld [vmem:[%s1029 + $0x6c] sm:$0xff]
    %v1049 = vld [vmem:[%s1029 + $0x74] sm:$0xf]
    %v1050 = vld [vmem:[%s1029 + $0x78] sm:$0xff]
    %v1051 = vld [vmem:[%s1029 + $0x80] sm:$0xf]
    %v1052 = vld [vmem:[%s1029 + $0x84] sm:$0xff]
    %v1053 = vld [vmem:[%s1029 + $0x8c] sm:$0xf]
    %v1054 = vld [vmem:[%s1029 + $0x90] sm:$0xff]
    %v1055 = vld [vmem:[%s1029 + $0x98] sm:$0xf]
    %v1056 = vld [vmem:[%s1029 + $0x9c] sm:$0xff]
    %v1057 = vld [vmem:[%s1029 + $0xa4] sm:$0xf]
    %v1058 = vld [vmem:[%s1029 + $0xa8] sm:$0xff]
    %v1059 = vld [vmem:[%s1029 + $0xb0] sm:$0xf]
    %v1060 = vld [vmem:[%s1029 + $0xb4] sm:$0xff]
    %v1061 = vld [vmem:[%s1029 + $0xbc] sm:$0xf]
    %v1062 = vld [vmem:[%s1029 + $0xc0] sm:$0xff]
    %v1063 = vld [vmem:[%s1029 + $0xc8] sm:$0xf]
    %v1064 = vld [vmem:[%s1029 + $0xcc] sm:$0xff]
    %v1065 = vld [vmem:[%s1029 + $0xd4] sm:$0xf]
    %v1066 = vld [vmem:[%s1029 + $0xd8] sm:$0xff]
    %v1067 = vld [vmem:[%s1029 + $0xe0] sm:$0xf]
    %v1068 = vld [vmem:[%s1029 + $0xe4] sm:$0xff]
    %v1069 = vld [vmem:[%s1029 + $0xec] sm:$0xf]
    %v1070 = vld [vmem:[%s1029 + $0xf0] sm:$0xff]
    %v1071 = vld [vmem:[%s1029 + $0xf8] sm:$0xf]
    %v1114 = vunpack.c.l.b16 %v1030
    %v1115 = vunpack.c.h.b16 %v1030
    %v1116 = vunpack.c.l.b16 %v1031
    %v1117 = vunpack.c.l.b16 %v1032
    %v1118 = vunpack.c.h.b16 %v1032
    %v1119 = vunpack.c.l.b16 %v1033
    %v1120 = vunpack.c.l.b16 %v1034
    %v1121 = vunpack.c.h.b16 %v1034
    %v1122 = vunpack.c.l.b16 %v1035
    %v1123 = vunpack.c.l.b16 %v1036
    %v1124 = vunpack.c.h.b16 %v1036
    %v1125 = vunpack.c.l.b16 %v1037
    %v1126 = vunpack.c.l.b16 %v1038
    %v1127 = vunpack.c.h.b16 %v1038
    %v1128 = vunpack.c.l.b16 %v1039
    %v1129 = vunpack.c.l.b16 %v1040
    %v1130 = vunpack.c.h.b16 %v1040
    %v1131 = vunpack.c.l.b16 %v1041
    %v1132 = vunpack.c.l.b16 %v1042
    %v1133 = vunpack.c.h.b16 %v1042
    %v1134 = vunpack.c.l.b16 %v1043
    %v1135 = vunpack.c.l.b16 %v1044
    %v1136 = vunpack.c.h.b16 %v1044
    %v1137 = vunpack.c.l.b16 %v1045
    %v1138 = vunpack.c.l.b16 %v1046
    %v1139 = vunpack.c.h.b16 %v1046
    %v1140 = vunpack.c.l.b16 %v1047
    %v1141 = vunpack.c.l.b16 %v1048
    %v1142 = vunpack.c.h.b16 %v1048
    %v1143 = vunpack.c.l.b16 %v1049
    %v1144 = vunpack.c.l.b16 %v1050
    %v1145 = vunpack.c.h.b16 %v1050
    %v1146 = vunpack.c.l.b16 %v1051
    %v1147 = vunpack.c.l.b16 %v1052
    %v1148 = vunpack.c.h.b16 %v1052
    %v1149 = vunpack.c.l.b16 %v1053
    %v1150 = vunpack.c.l.b16 %v1054
    %v1151 = vunpack.c.h.b16 %v1054
    %v1152 = vunpack.c.l.b16 %v1055
    %v1153 = vunpack.c.l.b16 %v1056
    %v1154 = vunpack.c.h.b16 %v1056
    %v1155 = vunpack.c.l.b16 %v1057
    %v1156 = vunpack.c.l.b16 %v1058
    %v1157 = vunpack.c.h.b16 %v1058
    %v1158 = vunpack.c.l.b16 %v1059
    %v1159 = vunpack.c.l.b16 %v1060
    %v1160 = vunpack.c.h.b16 %v1060
    %v1161 = vunpack.c.l.b16 %v1061
    %v1162 = vunpack.c.l.b16 %v1062
    %v1163 = vunpack.c.h.b16 %v1062
    %v1164 = vunpack.c.l.b16 %v1063
    %v1165 = vunpack.c.l.b16 %v1064
    %v1166 = vunpack.c.h.b16 %v1064
    %v1167 = vunpack.c.l.b16 %v1065
    %v1168 = vunpack.c.l.b16 %v1066
    %v1169 = vunpack.c.h.b16 %v1066
    %v1170 = vunpack.c.l.b16 %v1067
    %v1171 = vunpack.c.l.b16 %v1068
    %v1172 = vunpack.c.h.b16 %v1068
    %v1173 = vunpack.c.l.b16 %v1069
    %v1174 = vunpack.c.l.b16 %v1070
    %v1175 = vunpack.c.h.b16 %v1070
    %v1176 = vunpack.c.l.b16 %v1071
    %v1177 = vpack.c.b16 %v1117, %v1114
    %v1178 = vpack.c.b16 %v1118, %v1115
    %v1179 = vpack.c.b16 %v1119, %v1116
    %v1180 = vpack.c.b16 %v1123, %v1120
    %v1181 = vpack.c.b16 %v1124, %v1121
    %v1182 = vpack.c.b16 %v1125, %v1122
    %v1183 = vpack.c.b16 %v1129, %v1126
    %v1184 = vpack.c.b16 %v1130, %v1127
    %v1185 = vpack.c.b16 %v1131, %v1128
    %v1186 = vpack.c.b16 %v1135, %v1132
    %v1187 = vpack.c.b16 %v1136, %v1133
    %v1188 = vpack.c.b16 %v1137, %v1134
    %v1189 = vpack.c.b16 %v1141, %v1138
    %v1190 = vpack.c.b16 %v1142, %v1139
    %v1191 = vpack.c.b16 %v1143, %v1140
    %v1192 = vpack.c.b16 %v1147, %v1144
    %v1193 = vpack.c.b16 %v1148, %v1145
    %v1194 = vpack.c.b16 %v1149, %v1146
    %v1195 = vpack.c.b16 %v1153, %v1150
    %v1196 = vpack.c.b16 %v1154, %v1151
    %v1197 = vpack.c.b16 %v1155, %v1152
    %v1198 = vpack.c.b16 %v1159, %v1156
    %v1199 = vpack.c.b16 %v1160, %v1157
    %v1200 = vpack.c.b16 %v1161, %v1158
    %v1201 = vpack.c.b16 %v1165, %v1162
    %v1202 = vpack.c.b16 %v1166, %v1163
    %v1203 = vpack.c.b16 %v1167, %v1164
    %v1204 = vpack.c.b16 %v1171, %v1168
    %v1205 = vpack.c.b16 %v1172, %v1169
    %v1206 = vpack.c.b16 %v1173, %v1170
    %v1207 = vpack.c.b16 %v1174, %v1174
    %v1208 = vpack.c.b16 %v1175, %v1175
    %v1209 = vpack.c.b16 %v1176, %v1176
    %v1241 = vsel %vm415, %v1207, 0
    %v1244 = vsel %vm415, %v1208, 0
    %v1247 = vsel %vm415, %v1209, 0
    %1249 = vmatprep.subr.bf16.mxu0 %v1199
    %1250 = vmatpush1.bf16.msra.mxu0 %v1198
    %1251 = vmatprep.subr.bf16.mxu0 %v1196
    %1252 = vmatpush1.bf16.msra.mxu0 %v1195
    %1253 = vmatprep.subr.bf16.mxu0 %v1193
    %1254 = vmatpush1.bf16.msra.mxu0 %v1192
    %1255 = vmatprep.subr.bf16.mxu0 %v1190
    %1256 = vmatpush1.bf16.msra.mxu0 %v1189
    %1257 = vmatprep.subr.bf16.mxu0 %v1187
    %1258 = vmatpush1.bf16.msra.mxu0 %v1186
    %1259 = vmatprep.subr.bf16.mxu0 %v1184
    %1260 = vmatpush1.bf16.msra.mxu0 %v1183
    %1261 = vmatprep.subr.bf16.mxu0 %v1181
    %1262 = vmatpush1.bf16.msra.mxu0 %v1180
    %1263 = vmatprep.subr.bf16.mxu0 %v1178
    %1264 = vmatpush1.bf16.msra.mxu0 %v1177
    %1265 = vmatprep.subr.bf16.mxu0 0
    %1266 = vmatpush2.bf16.msra.mxu0 0
    %1267 = vmatprep.subr.bf16.mxu0 0
    %1268 = vmatpush2.bf16.msra.mxu0 0
    %1269 = vmatprep.subr.bf16.mxu0 0
    %1270 = vmatpush2.bf16.msra.mxu0 0
    %1271 = vmatprep.subr.bf16.mxu0 0
    %1272 = vmatpush2.bf16.msra.mxu0 0
    %1273 = vmatprep.subr.bf16.mxu0 0
    %1274 = vmatpush2.bf16.msra.mxu0 0
    %1275 = vmatprep.subr.bf16.mxu0 %v1244
    %1276 = vmatpush2.bf16.msra.mxu0 %v1241
    %1277 = vmatprep.subr.bf16.mxu0 %v1205
    %1278 = vmatpush2.bf16.msra.mxu0 %v1204
    %1279 = vmatprep.subr.bf16.mxu0 %v1202
    %1280 = vmatpush2.bf16.msra.mxu0 %v1201
    %1281 = vmatprep.mubr.bf16.mxu0 %v398
    %1282 = vmatmul.mubr.bf16.gmra.mxu0 %v210
    %v1283 = vpop.f32.mrf.mxu0
    %v1284 = vadd.f32 0.0, %v1283
    %v1285 = vpop.f32.mrf.mxu0
    %v1286 = vadd.f32 0.0, %v1285
    %v1287 = vpop.f32.mrf.mxu0
    %v1288 = vadd.f32 0.0, %v1287
    %v1289 = vpop.f32.mrf.mxu0
    %v1290 = vadd.f32 0.0, %v1289
    %1291 = vmatprep.mubr.bf16.mxu0 %v401
    %1292 = vmatmul.mubr.bf16.gmra.mxu0 %v212
    %v1293 = vpop.f32.mrf.mxu0
    %v1294 = vadd.f32 0.0, %v1293
    %v1295 = vpop.f32.mrf.mxu0
    %v1296 = vadd.f32 0.0, %v1295
    %v1297 = vpop.f32.mrf.mxu0
    %v1298 = vadd.f32 0.0, %v1297
    %v1299 = vpop.f32.mrf.mxu0
    %v1300 = vadd.f32 0.0, %v1299
    %1301 = vmatprep.mubr.bf16.mxu0 %v404
    %1302 = vmatmul.mubr.bf16.gmra.mxu0 %v214
    %v1303 = vpop.f32.mrf.mxu0
    %v1304 = vadd.f32 0.0, %v1303
    %v1305 = vpop.f32.mrf.mxu0
    %v1306 = vadd.f32 0.0, %v1305
    %v1307 = vpop.f32.mrf.mxu0
    %v1308 = vadd.f32 0.0, %v1307
    %v1309 = vpop.f32.mrf.mxu0
    %v1310 = vadd.f32 0.0, %v1309
    %1311 = vmatprep.mubr.bf16.mxu0 %v407
    %1312 = vmatmul.mubr.bf16.gmra.mxu0 %v216
    %v1313 = vpop.f32.mrf.mxu0
    %v1314 = vadd.f32 0.0, %v1313
    %v1315 = vpop.f32.mrf.mxu0
    %v1316 = vadd.f32 0.0, %v1315
    %v1317 = vpop.f32.mrf.mxu0
    %v1318 = vadd.f32 0.0, %v1317
    %v1319 = vpop.f32.mrf.mxu0
    %v1320 = vadd.f32 0.0, %v1319
    %1321 = vmatprep.mubr.bf16.mxu0 %v410
    %1322 = vmatmul.mubr.bf16.gmra.mxu0 %v218
    %v1323 = vpop.f32.mrf.mxu0
    %v1324 = vadd.f32 0.0, %v1323
    %v1325 = vpop.f32.mrf.mxu0
    %v1326 = vadd.f32 0.0, %v1325
    %v1327 = vpop.f32.mrf.mxu0
    %v1328 = vadd.f32 0.0, %v1327
    %v1329 = vpop.f32.mrf.mxu0
    %v1330 = vadd.f32 0.0, %v1329
    %1331 = vmatprep.mubr.bf16.mxu0 %v413
    %1332 = vmatmul.mubr.bf16.gmra.mxu0 %v220
    %v1333 = vpop.f32.mrf.mxu0
    %v1334 = vadd.f32 0.0, %v1333
    %v1335 = vpop.f32.mrf.mxu0
    %v1336 = vadd.f32 0.0, %v1335
    %v1337 = vpop.f32.mrf.mxu0
    %v1338 = vadd.f32 0.0, %v1337
    %v1339 = vpop.f32.mrf.mxu0
    %v1340 = vadd.f32 0.0, %v1339
    %1341 = vdwg.mxu0
    %1342 = vmatprep.subr.bf16.mxu0 0
    %1343 = vmatpush1.bf16.msra.mxu0 %v1200
    %1344 = vmatprep.subr.bf16.mxu0 0
    %1345 = vmatpush1.bf16.msra.mxu0 %v1197
    %1346 = vmatprep.subr.bf16.mxu0 0
    %1347 = vmatpush1.bf16.msra.mxu0 %v1194
    %1348 = vmatprep.subr.bf16.mxu0 0
    %1349 = vmatpush1.bf16.msra.mxu0 %v1191
    %1350 = vmatprep.subr.bf16.mxu0 0
    %1351 = vmatpush1.bf16.msra.mxu0 %v1188
    %1352 = vmatprep.subr.bf16.mxu0 0
    %1353 = vmatpush1.bf16.msra.mxu0 %v1185
    %1354 = vmatprep.subr.bf16.mxu0 0
    %1355 = vmatpush1.bf16.msra.mxu0 %v1182
    %1356 = vmatprep.subr.bf16.mxu0 0
    %1357 = vmatpush1.bf16.msra.mxu0 %v1179
    %1358 = vmatprep.subr.bf16.mxu0 0
    %1359 = vmatpush2.bf16.msra.mxu0 0
    %1360 = vmatprep.subr.bf16.mxu0 0
    %1361 = vmatpush2.bf16.msra.mxu0 0
    %1362 = vmatprep.subr.bf16.mxu0 0
    %1363 = vmatpush2.bf16.msra.mxu0 0
    %1364 = vmatprep.subr.bf16.mxu0 0
    %1365 = vmatpush2.bf16.msra.mxu0 0
    %1366 = vmatprep.subr.bf16.mxu0 0
    %1367 = vmatpush2.bf16.msra.mxu0 0
    %1368 = vmatprep.subr.bf16.mxu0 0
    %1369 = vmatpush2.bf16.msra.mxu0 %v1247
    %1370 = vmatprep.subr.bf16.mxu0 0
    %1371 = vmatpush2.bf16.msra.mxu0 %v1206
    %1372 = vmatprep.subr.bf16.mxu0 0
    %1373 = vmatpush2.bf16.msra.mxu0 %v1203
    %1374 = vmatprep.mubr.bf16.mxu0 %v398
    %1375 = vmatmul.mubr.bf16.gmra.mxu0 %v210
    %v1376 = vpop.f32.mrf.mxu0
    %v1377 = vadd.f32 0.0, %v1376
    %v1378 = vpop.f32.mrf.mxu0
    %v1379 = vpop.f32.mrf.mxu0
    %v1380 = vadd.f32 0.0, %v1379
    %v1381 = vpop.f32.mrf.mxu0
    %1382 = vmatprep.mubr.bf16.mxu0 %v401
    %1383 = vmatmul.mubr.bf16.gmra.mxu0 %v212
    %v1384 = vpop.f32.mrf.mxu0
    %v1385 = vadd.f32 0.0, %v1384
    %v1386 = vpop.f32.mrf.mxu0
    %v1387 = vpop.f32.mrf.mxu0
    %v1388 = vadd.f32 0.0, %v1387
    %v1389 = vpop.f32.mrf.mxu0
    %1390 = vmatprep.mubr.bf16.mxu0 %v404
    %1391 = vmatmul.mubr.bf16.gmra.mxu0 %v214
    %v1392 = vpop.f32.mrf.mxu0
    %v1393 = vadd.f32 0.0, %v1392
    %v1394 = vpop.f32.mrf.mxu0
    %v1395 = vpop.f32.mrf.mxu0
    %v1396 = vadd.f32 0.0, %v1395
    %v1397 = vpop.f32.mrf.mxu0
    %1398 = vmatprep.mubr.bf16.mxu0 %v407
    %1399 = vmatmul.mubr.bf16.gmra.mxu0 %v216
    %v1400 = vpop.f32.mrf.mxu0
    %v1401 = vadd.f32 0.0, %v1400
    %v1402 = vpop.f32.mrf.mxu0
    %v1403 = vpop.f32.mrf.mxu0
    %v1404 = vadd.f32 0.0, %v1403
    %v1405 = vpop.f32.mrf.mxu0
    %1406 = vmatprep.mubr.bf16.mxu0 %v410
    %1407 = vmatmul.mubr.bf16.gmra.mxu0 %v218
    %v1408 = vpop.f32.mrf.mxu0
    %v1409 = vadd.f32 0.0, %v1408
    %v1410 = vpop.f32.mrf.mxu0
    %v1411 = vpop.f32.mrf.mxu0
    %v1412 = vadd.f32 0.0, %v1411
    %v1413 = vpop.f32.mrf.mxu0
    %1414 = vmatprep.mubr.bf16.mxu0 %v413
    %1415 = vmatmul.mubr.bf16.gmra.mxu0 %v220
    %v1416 = vpop.f32.mrf.mxu0
    %v1417 = vadd.f32 0.0, %v1416
    %v1418 = vpop.f32.mrf.mxu0
    %v1419 = vpop.f32.mrf.mxu0
    %v1420 = vadd.f32 0.0, %v1419
    %v1421 = vpop.f32.mrf.mxu0
    %1422 = vdwg.mxu0
    %v1423 = vmax.f32 %v993, %v1284
    %v1424 = vmax.f32 %v994, %v1286
    %v1425 = vmax.f32 %v995, %v1377
    %v1426 = vmax.f32 %v996, %v1288
    %v1427 = vmax.f32 %v997, %v1290
    %v1428 = vmax.f32 %v998, %v1380
    %v1429 = vmax.f32 %v999, %v1294
    %v1430 = vmax.f32 %v1000, %v1296
    %v1431 = vmax.f32 %v1001, %v1385
    %v1432 = vmax.f32 %v1002, %v1298
    %v1433 = vmax.f32 %v1003, %v1300
    %v1434 = vmax.f32 %v1004, %v1388
    %v1435 = vmax.f32 %v1005, %v1304
    %v1436 = vmax.f32 %v1006, %v1306
    %v1437 = vmax.f32 %v1007, %v1393
    %v1438 = vmax.f32 %v1008, %v1308
    %v1439 = vmax.f32 %v1009, %v1310
    %v1440 = vmax.f32 %v1010, %v1396
    %v1441 = vmax.f32 %v1011, %v1314
    %v1442 = vmax.f32 %v1012, %v1316
    %v1443 = vmax.f32 %v1013, %v1401
    %v1444 = vmax.f32 %v1014, %v1318
    %v1445 = vmax.f32 %v1015, %v1320
    %v1446 = vmax.f32 %v1016, %v1404
    %v1447 = vmax.f32 %v1017, %v1324
    %v1448 = vmax.f32 %v1018, %v1326
    %v1449 = vmax.f32 %v1019, %v1409
    %v1450 = vmax.f32 %v1020, %v1328
    %v1451 = vmax.f32 %v1021, %v1330
    %v1452 = vmax.f32 %v1022, %v1412
    %v1453 = vmax.f32 %v1023, %v1334
    %v1454 = vmax.f32 %v1024, %v1336
    %v1455 = vmax.f32 %v1025, %v1417
    %v1456 = vmax.f32 %v1026, %v1338
    %v1457 = vmax.f32 %v1027, %v1340
    %v1458 = vmax.f32 %v1028, %v1420
    %s1459 = scalar_lea.vmem [#allocation3], 756
    %v1460 = vld [vmem:[%s1459] sm:$0xff]
    %v1461 = vld [vmem:[%s1459 + $0x8] sm:$0xf]
    %v1462 = vld [vmem:[%s1459 + $0xc] sm:$0xff]
    %v1463 = vld [vmem:[%s1459 + $0x14] sm:$0xf]
    %v1464 = vld [vmem:[%s1459 + $0x18] sm:$0xff]
    %v1465 = vld [vmem:[%s1459 + $0x20] sm:$0xf]
    %v1466 = vld [vmem:[%s1459 + $0x24] sm:$0xff]
    %v1467 = vld [vmem:[%s1459 + $0x2c] sm:$0xf]
    %v1468 = vld [vmem:[%s1459 + $0x30] sm:$0xff]
    %v1469 = vld [vmem:[%s1459 + $0x38] sm:$0xf]
    %v1470 = vld [vmem:[%s1459 + $0x3c] sm:$0xff]
    %v1471 = vld [vmem:[%s1459 + $0x44] sm:$0xf]
    %v1472 = vld [vmem:[%s1459 + $0x48] sm:$0xff]
    %v1473 = vld [vmem:[%s1459 + $0x50] sm:$0xf]
    %v1474 = vld [vmem:[%s1459 + $0x54] sm:$0xff]
    %v1475 = vld [vmem:[%s1459 + $0x5c] sm:$0xf]
    %v1476 = vld [vmem:[%s1459 + $0x60] sm:$0xff]
    %v1477 = vld [vmem:[%s1459 + $0x68] sm:$0xf]
    %v1478 = vld [vmem:[%s1459 + $0x6c] sm:$0xff]
    %v1479 = vld [vmem:[%s1459 + $0x74] sm:$0xf]
    %v1480 = vld [vmem:[%s1459 + $0x78] sm:$0xff]
    %v1481 = vld [vmem:[%s1459 + $0x80] sm:$0xf]
    %v1482 = vld [vmem:[%s1459 + $0x84] sm:$0xff]
    %v1483 = vld [vmem:[%s1459 + $0x8c] sm:$0xf]
    %v1484 = vld [vmem:[%s1459 + $0x90] sm:$0xff]
    %v1485 = vld [vmem:[%s1459 + $0x98] sm:$0xf]
    %v1486 = vld [vmem:[%s1459 + $0x9c] sm:$0xff]
    %v1487 = vld [vmem:[%s1459 + $0xa4] sm:$0xf]
    %v1488 = vld [vmem:[%s1459 + $0xa8] sm:$0xff]
    %v1489 = vld [vmem:[%s1459 + $0xb0] sm:$0xf]
    %v1490 = vld [vmem:[%s1459 + $0xb4] sm:$0xff]
    %v1491 = vld [vmem:[%s1459 + $0xbc] sm:$0xf]
    %v1492 = vld [vmem:[%s1459 + $0xc0] sm:$0xff]
    %v1493 = vld [vmem:[%s1459 + $0xc8] sm:$0xf]
    %v1494 = vld [vmem:[%s1459 + $0xcc] sm:$0xff]
    %v1495 = vld [vmem:[%s1459 + $0xd4] sm:$0xf]
    %v1496 = vld [vmem:[%s1459 + $0xd8] sm:$0xff]
    %v1497 = vld [vmem:[%s1459 + $0xe0] sm:$0xf]
    %v1498 = vld [vmem:[%s1459 + $0xe4] sm:$0xff]
    %v1499 = vld [vmem:[%s1459 + $0xec] sm:$0xf]
    %v1500 = vld [vmem:[%s1459 + $0xf0] sm:$0xff]
    %v1501 = vld [vmem:[%s1459 + $0xf8] sm:$0xf]
    %v1544 = vunpack.c.l.b16 %v1460
    %v1545 = vunpack.c.h.b16 %v1460
    %v1546 = vunpack.c.l.b16 %v1461
    %v1547 = vunpack.c.l.b16 %v1462
    %v1548 = vunpack.c.h.b16 %v1462
    %v1549 = vunpack.c.l.b16 %v1463
    %v1550 = vunpack.c.l.b16 %v1464
    %v1551 = vunpack.c.h.b16 %v1464
    %v1552 = vunpack.c.l.b16 %v1465
    %v1553 = vunpack.c.l.b16 %v1466
    %v1554 = vunpack.c.h.b16 %v1466
    %v1555 = vunpack.c.l.b16 %v1467
    %v1556 = vunpack.c.l.b16 %v1468
    %v1557 = vunpack.c.h.b16 %v1468
    %v1558 = vunpack.c.l.b16 %v1469
    %v1559 = vunpack.c.l.b16 %v1470
    %v1560 = vunpack.c.h.b16 %v1470
    %v1561 = vunpack.c.l.b16 %v1471
    %v1562 = vunpack.c.l.b16 %v1472
    %v1563 = vunpack.c.h.b16 %v1472
    %v1564 = vunpack.c.l.b16 %v1473
    %v1565 = vunpack.c.l.b16 %v1474
    %v1566 = vunpack.c.h.b16 %v1474
    %v1567 = vunpack.c.l.b16 %v1475
    %v1568 = vunpack.c.l.b16 %v1476
    %v1569 = vunpack.c.h.b16 %v1476
    %v1570 = vunpack.c.l.b16 %v1477
    %v1571 = vunpack.c.l.b16 %v1478
    %v1572 = vunpack.c.h.b16 %v1478
    %v1573 = vunpack.c.l.b16 %v1479
    %v1574 = vunpack.c.l.b16 %v1480
    %v1575 = vunpack.c.h.b16 %v1480
    %v1576 = vunpack.c.l.b16 %v1481
    %v1577 = vunpack.c.l.b16 %v1482
    %v1578 = vunpack.c.h.b16 %v1482
    %v1579 = vunpack.c.l.b16 %v1483
    %v1580 = vunpack.c.l.b16 %v1484
    %v1581 = vunpack.c.h.b16 %v1484
    %v1582 = vunpack.c.l.b16 %v1485
    %v1583 = vunpack.c.l.b16 %v1486
    %v1584 = vunpack.c.h.b16 %v1486
    %v1585 = vunpack.c.l.b16 %v1487
    %v1586 = vunpack.c.l.b16 %v1488
    %v1587 = vunpack.c.h.b16 %v1488
    %v1588 = vunpack.c.l.b16 %v1489
    %v1589 = vunpack.c.l.b16 %v1490
    %v1590 = vunpack.c.h.b16 %v1490
    %v1591 = vunpack.c.l.b16 %v1491
    %v1592 = vunpack.c.l.b16 %v1492
    %v1593 = vunpack.c.h.b16 %v1492
    %v1594 = vunpack.c.l.b16 %v1493
    %v1595 = vunpack.c.l.b16 %v1494
    %v1596 = vunpack.c.h.b16 %v1494
    %v1597 = vunpack.c.l.b16 %v1495
    %v1598 = vunpack.c.l.b16 %v1496
    %v1599 = vunpack.c.h.b16 %v1496
    %v1600 = vunpack.c.l.b16 %v1497
    %v1601 = vunpack.c.l.b16 %v1498
    %v1602 = vunpack.c.h.b16 %v1498
    %v1603 = vunpack.c.l.b16 %v1499
    %v1604 = vunpack.c.l.b16 %v1500
    %v1605 = vunpack.c.h.b16 %v1500
    %v1606 = vunpack.c.l.b16 %v1501
    %v1607 = vpack.c.b16 %v1547, %v1544
    %v1608 = vpack.c.b16 %v1548, %v1545
    %v1609 = vpack.c.b16 %v1549, %v1546
    %v1610 = vpack.c.b16 %v1553, %v1550
    %v1611 = vpack.c.b16 %v1554, %v1551
    %v1612 = vpack.c.b16 %v1555, %v1552
    %v1613 = vpack.c.b16 %v1559, %v1556
    %v1614 = vpack.c.b16 %v1560, %v1557
    %v1615 = vpack.c.b16 %v1561, %v1558
    %v1616 = vpack.c.b16 %v1565, %v1562
    %v1617 = vpack.c.b16 %v1566, %v1563
    %v1618 = vpack.c.b16 %v1567, %v1564
    %v1619 = vpack.c.b16 %v1571, %v1568
    %v1620 = vpack.c.b16 %v1572, %v1569
    %v1621 = vpack.c.b16 %v1573, %v1570
    %v1622 = vpack.c.b16 %v1577, %v1574
    %v1623 = vpack.c.b16 %v1578, %v1575
    %v1624 = vpack.c.b16 %v1579, %v1576
    %v1625 = vpack.c.b16 %v1583, %v1580
    %v1626 = vpack.c.b16 %v1584, %v1581
    %v1627 = vpack.c.b16 %v1585, %v1582
    %v1628 = vpack.c.b16 %v1589, %v1586
    %v1629 = vpack.c.b16 %v1590, %v1587
    %v1630 = vpack.c.b16 %v1591, %v1588
    %v1631 = vpack.c.b16 %v1595, %v1592
    %v1632 = vpack.c.b16 %v1596, %v1593
    %v1633 = vpack.c.b16 %v1597, %v1594
    %v1634 = vpack.c.b16 %v1601, %v1598
    %v1635 = vpack.c.b16 %v1602, %v1599
    %v1636 = vpack.c.b16 %v1603, %v1600
    %v1637 = vpack.c.b16 %v1604, %v1604
    %v1638 = vpack.c.b16 %v1605, %v1605
    %v1639 = vpack.c.b16 %v1606, %v1606
    %v1671 = vsel %vm415, %v1637, 0
    %v1674 = vsel %vm415, %v1638, 0
    %v1677 = vsel %vm415, %v1639, 0
    %1679 = vmatprep.subr.bf16.mxu0 %v1629
    %1680 = vmatpush1.bf16.msra.mxu0 %v1628
    %1681 = vmatprep.subr.bf16.mxu0 %v1626
    %1682 = vmatpush1.bf16.msra.mxu0 %v1625
    %1683 = vmatprep.subr.bf16.mxu0 %v1623
    %1684 = vmatpush1.bf16.msra.mxu0 %v1622
    %1685 = vmatprep.subr.bf16.mxu0 %v1620
    %1686 = vmatpush1.bf16.msra.mxu0 %v1619
    %1687 = vmatprep.subr.bf16.mxu0 %v1617
    %1688 = vmatpush1.bf16.msra.mxu0 %v1616
    %1689 = vmatprep.subr.bf16.mxu0 %v1614
    %1690 = vmatpush1.bf16.msra.mxu0 %v1613
    %1691 = vmatprep.subr.bf16.mxu0 %v1611
    %1692 = vmatpush1.bf16.msra.mxu0 %v1610
    %1693 = vmatprep.subr.bf16.mxu0 %v1608
    %1694 = vmatpush1.bf16.msra.mxu0 %v1607
    %1695 = vmatprep.subr.bf16.mxu0 0
    %1696 = vmatpush2.bf16.msra.mxu0 0
    %1697 = vmatprep.subr.bf16.mxu0 0
    %1698 = vmatpush2.bf16.msra.mxu0 0
    %1699 = vmatprep.subr.bf16.mxu0 0
    %1700 = vmatpush2.bf16.msra.mxu0 0
    %1701 = vmatprep.subr.bf16.mxu0 0
    %1702 = vmatpush2.bf16.msra.mxu0 0
    %1703 = vmatprep.subr.bf16.mxu0 0
    %1704 = vmatpush2.bf16.msra.mxu0 0
    %1705 = vmatprep.subr.bf16.mxu0 %v1674
    %1706 = vmatpush2.bf16.msra.mxu0 %v1671
    %1707 = vmatprep.subr.bf16.mxu0 %v1635
    %1708 = vmatpush2.bf16.msra.mxu0 %v1634
    %1709 = vmatprep.subr.bf16.mxu0 %v1632
    %1710 = vmatpush2.bf16.msra.mxu0 %v1631
    %1711 = vmatprep.mubr.bf16.mxu0 %v398
    %1712 = vmatmul.mubr.bf16.gmra.mxu0 %v210
    %v1713 = vpop.f32.mrf.mxu0
    %v1714 = vadd.f32 0.0, %v1713
    %v1715 = vpop.f32.mrf.mxu0
    %v1716 = vadd.f32 0.0, %v1715
    %v1717 = vpop.f32.mrf.mxu0
    %v1718 = vadd.f32 0.0, %v1717
    %v1719 = vpop.f32.mrf.mxu0
    %v1720 = vadd.f32 0.0, %v1719
    %1721 = vmatprep.mubr.bf16.mxu0 %v401
    %1722 = vmatmul.mubr.bf16.gmra.mxu0 %v212
    %v1723 = vpop.f32.mrf.mxu0
    %v1724 = vadd.f32 0.0, %v1723
    %v1725 = vpop.f32.mrf.mxu0
    %v1726 = vadd.f32 0.0, %v1725
    %v1727 = vpop.f32.mrf.mxu0
    %v1728 = vadd.f32 0.0, %v1727
    %v1729 = vpop.f32.mrf.mxu0
    %v1730 = vadd.f32 0.0, %v1729
    %1731 = vmatprep.mubr.bf16.mxu0 %v404
    %1732 = vmatmul.mubr.bf16.gmra.mxu0 %v214
    %v1733 = vpop.f32.mrf.mxu0
    %v1734 = vadd.f32 0.0, %v1733
    %v1735 = vpop.f32.mrf.mxu0
    %v1736 = vadd.f32 0.0, %v1735
    %v1737 = vpop.f32.mrf.mxu0
    %v1738 = vadd.f32 0.0, %v1737
    %v1739 = vpop.f32.mrf.mxu0
    %v1740 = vadd.f32 0.0, %v1739
    %1741 = vmatprep.mubr.bf16.mxu0 %v407
    %1742 = vmatmul.mubr.bf16.gmra.mxu0 %v216
    %v1743 = vpop.f32.mrf.mxu0
    %v1744 = vadd.f32 0.0, %v1743
    %v1745 = vpop.f32.mrf.mxu0
    %v1746 = vadd.f32 0.0, %v1745
    %v1747 = vpop.f32.mrf.mxu0
    %v1748 = vadd.f32 0.0, %v1747
    %v1749 = vpop.f32.mrf.mxu0
    %v1750 = vadd.f32 0.0, %v1749
    %1751 = vmatprep.mubr.bf16.mxu0 %v410
    %1752 = vmatmul.mubr.bf16.gmra.mxu0 %v218
    %v1753 = vpop.f32.mrf.mxu0
    %v1754 = vadd.f32 0.0, %v1753
    %v1755 = vpop.f32.mrf.mxu0
    %v1756 = vadd.f32 0.0, %v1755
    %v1757 = vpop.f32.mrf.mxu0
    %v1758 = vadd.f32 0.0, %v1757
    %v1759 = vpop.f32.mrf.mxu0
    %v1760 = vadd.f32 0.0, %v1759
    %1761 = vmatprep.mubr.bf16.mxu0 %v413
    %1762 = vmatmul.mubr.bf16.gmra.mxu0 %v220
    %v1763 = vpop.f32.mrf.mxu0
    %v1764 = vadd.f32 0.0, %v1763
    %v1765 = vpop.f32.mrf.mxu0
    %v1766 = vadd.f32 0.0, %v1765
    %v1767 = vpop.f32.mrf.mxu0
    %v1768 = vadd.f32 0.0, %v1767
    %v1769 = vpop.f32.mrf.mxu0
    %v1770 = vadd.f32 0.0, %v1769
    %1771 = vdwg.mxu0
    %1772 = vmatprep.subr.bf16.mxu0 0
    %1773 = vmatpush1.bf16.msra.mxu0 %v1630
    %1774 = vmatprep.subr.bf16.mxu0 0
    %1775 = vmatpush1.bf16.msra.mxu0 %v1627
    %1776 = vmatprep.subr.bf16.mxu0 0
    %1777 = vmatpush1.bf16.msra.mxu0 %v1624
    %1778 = vmatprep.subr.bf16.mxu0 0
    %1779 = vmatpush1.bf16.msra.mxu0 %v1621
    %1780 = vmatprep.subr.bf16.mxu0 0
    %1781 = vmatpush1.bf16.msra.mxu0 %v1618
    %1782 = vmatprep.subr.bf16.mxu0 0
    %1783 = vmatpush1.bf16.msra.mxu0 %v1615
    %1784 = vmatprep.subr.bf16.mxu0 0
    %1785 = vmatpush1.bf16.msra.mxu0 %v1612
    %1786 = vmatprep.subr.bf16.mxu0 0
    %1787 = vmatpush1.bf16.msra.mxu0 %v1609
    %1788 = vmatprep.subr.bf16.mxu0 0
    %1789 = vmatpush2.bf16.msra.mxu0 0
    %1790 = vmatprep.subr.bf16.mxu0 0
    %1791 = vmatpush2.bf16.msra.mxu0 0
    %1792 = vmatprep.subr.bf16.mxu0 0
    %1793 = vmatpush2.bf16.msra.mxu0 0
    %1794 = vmatprep.subr.bf16.mxu0 0
    %1795 = vmatpush2.bf16.msra.mxu0 0
    %1796 = vmatprep.subr.bf16.mxu0 0
    %1797 = vmatpush2.bf16.msra.mxu0 0
    %1798 = vmatprep.subr.bf16.mxu0 0
    %1799 = vmatpush2.bf16.msra.mxu0 %v1677
    %1800 = vmatprep.subr.bf16.mxu0 0
    %1801 = vmatpush2.bf16.msra.mxu0 %v1636
    %1802 = vmatprep.subr.bf16.mxu0 0
    %1803 = vmatpush2.bf16.msra.mxu0 %v1633
    %1804 = vmatprep.mubr.bf16.mxu0 %v398
    %1805 = vmatmul.mubr.bf16.gmra.mxu0 %v210
    %v1806 = vpop.f32.mrf.mxu0
    %v1807 = vadd.f32 0.0, %v1806
    %v1808 = vpop.f32.mrf.mxu0
    %v1809 = vpop.f32.mrf.mxu0
    %v1810 = vadd.f32 0.0, %v1809
    %v1811 = vpop.f32.mrf.mxu0
    %1812 = vmatprep.mubr.bf16.mxu0 %v401
    %1813 = vmatmul.mubr.bf16.gmra.mxu0 %v212
    %v1814 = vpop.f32.mrf.mxu0
    %v1815 = vadd.f32 0.0, %v1814
    %v1816 = vpop.f32.mrf.mxu0
    %v1817 = vpop.f32.mrf.mxu0
    %v1818 = vadd.f32 0.0, %v1817
    %v1819 = vpop.f32.mrf.mxu0
    %1820 = vmatprep.mubr.bf16.mxu0 %v404
    %1821 = vmatmul.mubr.bf16.gmra.mxu0 %v214
    %v1822 = vpop.f32.mrf.mxu0
    %v1823 = vadd.f32 0.0, %v1822
    %v1824 = vpop.f32.mrf.mxu0
    %v1825 = vpop.f32.mrf.mxu0
    %v1826 = vadd.f32 0.0, %v1825
    %v1827 = vpop.f32.mrf.mxu0
    %1828 = vmatprep.mubr.bf16.mxu0 %v407
    %1829 = vmatmul.mubr.bf16.gmra.mxu0 %v216
    %v1830 = vpop.f32.mrf.mxu0
    %v1831 = vadd.f32 0.0, %v1830
    %v1832 = vpop.f32.mrf.mxu0
    %v1833 = vpop.f32.mrf.mxu0
    %v1834 = vadd.f32 0.0, %v1833
    %v1835 = vpop.f32.mrf.mxu0
    %1836 = vmatprep.mubr.bf16.mxu0 %v410
    %1837 = vmatmul.mubr.bf16.gmra.mxu0 %v218
    %v1838 = vpop.f32.mrf.mxu0
    %v1839 = vadd.f32 0.0, %v1838
    %v1840 = vpop.f32.mrf.mxu0
    %v1841 = vpop.f32.mrf.mxu0
    %v1842 = vadd.f32 0.0, %v1841
    %v1843 = vpop.f32.mrf.mxu0
    %1844 = vmatprep.mubr.bf16.mxu0 %v413
    %1845 = vmatmul.mubr.bf16.gmra.mxu0 %v220
    %v1846 = vpop.f32.mrf.mxu0
    %v1847 = vadd.f32 0.0, %v1846
    %v1848 = vpop.f32.mrf.mxu0
    %v1849 = vpop.f32.mrf.mxu0
    %v1850 = vadd.f32 0.0, %v1849
    %v1851 = vpop.f32.mrf.mxu0
    %1852 = vdwg.mxu0
    %v1853 = vmax.f32 %v1423, %v1714
    %v1854 = vmax.f32 %v1424, %v1716
    %v1855 = vmax.f32 %v1425, %v1807
    %v1856 = vmax.f32 %v1426, %v1718
    %v1857 = vmax.f32 %v1427, %v1720
    %v1858 = vmax.f32 %v1428, %v1810
    %v1859 = vmax.f32 %v1429, %v1724
    %v1860 = vmax.f32 %v1430, %v1726
    %v1861 = vmax.f32 %v1431, %v1815
    %v1862 = vmax.f32 %v1432, %v1728
    %v1863 = vmax.f32 %v1433, %v1730
    %v1864 = vmax.f32 %v1434, %v1818
    %v1865 = vmax.f32 %v1435, %v1734
    %v1866 = vmax.f32 %v1436, %v1736
    %v1867 = vmax.f32 %v1437, %v1823
    %v1868 = vmax.f32 %v1438, %v1738
    %v1869 = vmax.f32 %v1439, %v1740
    %v1870 = vmax.f32 %v1440, %v1826
    %v1871 = vmax.f32 %v1441, %v1744
    %v1872 = vmax.f32 %v1442, %v1746
    %v1873 = vmax.f32 %v1443, %v1831
    %v1874 = vmax.f32 %v1444, %v1748
    %v1875 = vmax.f32 %v1445, %v1750
    %v1876 = vmax.f32 %v1446, %v1834
    %v1877 = vmax.f32 %v1447, %v1754
    %v1878 = vmax.f32 %v1448, %v1756
    %v1879 = vmax.f32 %v1449, %v1839
    %v1880 = vmax.f32 %v1450, %v1758
    %v1881 = vmax.f32 %v1451, %v1760
    %v1882 = vmax.f32 %v1452, %v1842
    %v1883 = vmax.f32 %v1453, %v1764
    %v1884 = vmax.f32 %v1454, %v1766
    %v1885 = vmax.f32 %v1455, %v1847
    %v1886 = vmax.f32 %v1456, %v1768
    %v1887 = vmax.f32 %v1457, %v1770
    %v1888 = vmax.f32 %v1458, %v1850
    %v1889 = vld [vmem:[#allocation5] sm:$0x7]
    %v1891 = vlaneseq
    %v1892 = vshrl.u32 %v1891, 7
    %v1893 = vsub.s32 0, %v1892
    %v1894 = vrot.slane %v1889, %v1893
    %v1895 = vlaneseq
    %v1896 = vshrl.u32 %v1895, 7
    %v1897 = vsub.s32 1, %v1896
    %v1898 = vrot.slane %v1889, %v1897
    %v1899 = vlaneseq
    %v1900 = vshrl.u32 %v1899, 7
    %v1901 = vsub.s32 2, %v1900
    %v1902 = vrot.slane %v1889, %v1901
    %v1906 = vadd.f32 %v1853, %v1894
    %v1907 = vadd.f32 %v1854, %v1898
    %v1908 = vadd.f32 %v1855, %v1902
    %v1909 = vadd.f32 %v1856, %v1894
    %v1910 = vadd.f32 %v1857, %v1898
    %v1911 = vadd.f32 %v1858, %v1902
    %v1912 = vadd.f32 %v1859, %v1894
    %v1913 = vadd.f32 %v1860, %v1898
    %v1914 = vadd.f32 %v1861, %v1902
    %v1915 = vadd.f32 %v1862, %v1894
    %v1916 = vadd.f32 %v1863, %v1898
    %v1917 = vadd.f32 %v1864, %v1902
    %v1918 = vadd.f32 %v1865, %v1894
    %v1919 = vadd.f32 %v1866, %v1898
    %v1920 = vadd.f32 %v1867, %v1902
    %v1921 = vadd.f32 %v1868, %v1894
    %v1922 = vadd.f32 %v1869, %v1898
    %v1923 = vadd.f32 %v1870, %v1902
    %v1924 = vadd.f32 %v1871, %v1894
    %v1925 = vadd.f32 %v1872, %v1898
    %v1926 = vadd.f32 %v1873, %v1902
    %v1927 = vadd.f32 %v1874, %v1894
    %v1928 = vadd.f32 %v1875, %v1898
    %v1929 = vadd.f32 %v1876, %v1902
    %v1930 = vadd.f32 %v1877, %v1894
    %v1931 = vadd.f32 %v1878, %v1898
    %v1932 = vadd.f32 %v1879, %v1902
    %v1933 = vadd.f32 %v1880, %v1894
    %v1934 = vadd.f32 %v1881, %v1898
    %v1935 = vadd.f32 %v1882, %v1902
    %v1936 = vadd.f32 %v1883, %v1894
    %v1937 = vadd.f32 %v1884, %v1898
    %v1938 = vadd.f32 %v1885, %v1902
    %v1939 = vadd.f32 %v1886, %v1894
    %v1940 = vadd.f32 %v1887, %v1898
    %v1941 = vadd.f32 %v1888, %v1902
    %v1942 = vmax.f32 %v1906, 0.0
    %v1943 = vmax.f32 %v1907, 0.0
    %v1944 = vmax.f32 %v1908, 0.0
    %v1945 = vmax.f32 %v1909, 0.0
    %v1946 = vmax.f32 %v1910, 0.0
    %v1947 = vmax.f32 %v1911, 0.0
    %v1948 = vmax.f32 %v1912, 0.0
    %v1949 = vmax.f32 %v1913, 0.0
    %v1950 = vmax.f32 %v1914, 0.0
    %v1951 = vmax.f32 %v1915, 0.0
    %v1952 = vmax.f32 %v1916, 0.0
    %v1953 = vmax.f32 %v1917, 0.0
    %v1954 = vmax.f32 %v1918, 0.0
    %v1955 = vmax.f32 %v1919, 0.0
    %v1956 = vmax.f32 %v1920, 0.0
    %v1957 = vmax.f32 %v1921, 0.0
    %v1958 = vmax.f32 %v1922, 0.0
    %v1959 = vmax.f32 %v1923, 0.0
    %v1960 = vmax.f32 %v1924, 0.0
    %v1961 = vmax.f32 %v1925, 0.0
    %v1962 = vmax.f32 %v1926, 0.0
    %v1963 = vmax.f32 %v1927, 0.0
    %v1964 = vmax.f32 %v1928, 0.0
    %v1965 = vmax.f32 %v1929, 0.0
    %v1966 = vmax.f32 %v1930, 0.0
    %v1967 = vmax.f32 %v1931, 0.0
    %v1968 = vmax.f32 %v1932, 0.0
    %v1969 = vmax.f32 %v1933, 0.0
    %v1970 = vmax.f32 %v1934, 0.0
    %v1971 = vmax.f32 %v1935, 0.0
    %v1972 = vmax.f32 %v1936, 0.0
    %v1973 = vmax.f32 %v1937, 0.0
    %v1974 = vmax.f32 %v1938, 0.0
    %v1975 = vmax.f32 %v1939, 0.0
    %v1976 = vmax.f32 %v1940, 0.0
    %v1977 = vmax.f32 %v1941, 0.0
    %1978 = vst [vmem:[#allocation2] sm:$0xff] %v1942
    %1979 = vst [vmem:[#allocation2 + $0x8] sm:$0xff] %v1943
    %1980 = vst [vmem:[#allocation2 + $0x10] sm:$0xff] %v1944
    %1981 = vst [vmem:[#allocation2 + $0x18] sm:$0xff] %v1945
    %1982 = vst [vmem:[#allocation2 + $0x20] sm:$0xff] %v1946
    %1983 = vst [vmem:[#allocation2 + $0x28] sm:$0xff] %v1947
    %1984 = vst [vmem:[#allocation2 + $0x30] sm:$0xff] %v1948
    %1985 = vst [vmem:[#allocation2 + $0x38] sm:$0xff] %v1949
    %1986 = vst [vmem:[#allocation2 + $0x40] sm:$0xff] %v1950
    %1987 = vst [vmem:[#allocation2 + $0x48] sm:$0xff] %v1951
    %1988 = vst [vmem:[#allocation2 + $0x50] sm:$0xff] %v1952
    %1989 = vst [vmem:[#allocation2 + $0x58] sm:$0xff] %v1953
    %1990 = vst [vmem:[#allocation2 + $0x60] sm:$0xff] %v1954
    %1991 = vst [vmem:[#allocation2 + $0x68] sm:$0xff] %v1955
    %1992 = vst [vmem:[#allocation2 + $0x70] sm:$0xff] %v1956
    %1993 = vst [vmem:[#allocation2 + $0x78] sm:$0xff] %v1957
    %1994 = vst [vmem:[#allocation2 + $0x80] sm:$0xff] %v1958
    %1995 = vst [vmem:[#allocation2 + $0x88] sm:$0xff] %v1959
    %1996 = vst [vmem:[#allocation2 + $0x90] sm:$0xff] %v1960
    %1997 = vst [vmem:[#allocation2 + $0x98] sm:$0xff] %v1961
    %1998 = vst [vmem:[#allocation2 + $0xa0] sm:$0xff] %v1962
    %1999 = vst [vmem:[#allocation2 + $0xa8] sm:$0xff] %v1963
    %2000 = vst [vmem:[#allocation2 + $0xb0] sm:$0xff] %v1964
    %2001 = vst [vmem:[#allocation2 + $0xb8] sm:$0xff] %v1965
    %2002 = vst [vmem:[#allocation2 + $0xc0] sm:$0xff] %v1966
    %2003 = vst [vmem:[#allocation2 + $0xc8] sm:$0xff] %v1967
    %2004 = vst [vmem:[#allocation2 + $0xd0] sm:$0xff] %v1968
    %2005 = vst [vmem:[#allocation2 + $0xd8] sm:$0xff] %v1969
    %2006 = vst [vmem:[#allocation2 + $0xe0] sm:$0xff] %v1970
    %2007 = vst [vmem:[#allocation2 + $0xe8] sm:$0xff] %v1971
    %2008 = vst [vmem:[#allocation2 + $0xf0] sm:$0xff] %v1972
    %2009 = vst [vmem:[#allocation2 + $0xf8] sm:$0xff] %v1973
    %2010 = vst [vmem:[#allocation2 + $0x100] sm:$0xff] %v1974
    %2011 = vst [vmem:[#allocation2 + $0x108] sm:$0xff] %v1975
    %2012 = vst [vmem:[#allocation2 + $0x110] sm:$0xff] %v1976
    %2013 = vst [vmem:[#allocation2 + $0x118] sm:$0xff] %v1977
    %v2014 = vld [vmem:[#allocation2] sm:$0xff]
    %v2015 = vld [vmem:[#allocation2 + $0x8] sm:$0xff]
    %v2016 = vld [vmem:[#allocation2 + $0x10] sm:$0xff]
    %v2017 = vld [vmem:[#allocation2 + $0x18] sm:$0xff]
    %v2018 = vld [vmem:[#allocation2 + $0x20] sm:$0xff]
    %v2019 = vld [vmem:[#allocation2 + $0x28] sm:$0xff]
    %v2020 = vld [vmem:[#allocation2 + $0x30] sm:$0xff]
    %v2021 = vld [vmem:[#allocation2 + $0x38] sm:$0xff]
    %v2022 = vld [vmem:[#allocation2 + $0x40] sm:$0xff]
    %v2023 = vld [vmem:[#allocation2 + $0x48] sm:$0xff]
    %v2024 = vld [vmem:[#allocation2 + $0x50] sm:$0xff]
    %v2025 = vld [vmem:[#allocation2 + $0x58] sm:$0xff]
    %v2026 = vld [vmem:[#allocation2 + $0x60] sm:$0xff]
    %v2027 = vld [vmem:[#allocation2 + $0x68] sm:$0xff]
    %v2028 = vld [vmem:[#allocation2 + $0x70] sm:$0xff]
    %v2029 = vld [vmem:[#allocation2 + $0x78] sm:$0xff]
    %v2030 = vld [vmem:[#allocation2 + $0x80] sm:$0xff]
    %v2031 = vld [vmem:[#allocation2 + $0x88] sm:$0xff]
    %v2032 = vld [vmem:[#allocation2 + $0x90] sm:$0xff]
    %v2033 = vld [vmem:[#allocation2 + $0x98] sm:$0xff]
    %v2034 = vld [vmem:[#allocation2 + $0xa0] sm:$0xff]
    %v2035 = vld [vmem:[#allocation2 + $0xa8] sm:$0xff]
    %v2036 = vld [vmem:[#allocation2 + $0xb0] sm:$0xff]
    %v2037 = vld [vmem:[#allocation2 + $0xb8] sm:$0xff]
    %v2038 = vpack.c.bf16 %v2017, %v2014
    %v2039 = vpack.c.bf16 %v2018, %v2015
    %v2040 = vpack.c.bf16 %v2019, %v2016
    %v2041 = vpack.c.bf16 %v2023, %v2020
    %v2042 = vpack.c.bf16 %v2024, %v2021
    %v2043 = vpack.c.bf16 %v2025, %v2022
    %v2044 = vpack.c.bf16 %v2029, %v2026
    %v2045 = vpack.c.bf16 %v2030, %v2027
    %v2046 = vpack.c.bf16 %v2031, %v2028
    %v2047 = vpack.c.bf16 %v2035, %v2032
    %v2048 = vpack.c.bf16 %v2036, %v2033
    %v2049 = vpack.c.bf16 %v2037, %v2034
    %v2050 = vld [vmem:[#allocation7] sm:$0xff]
    %v2051 = vld [vmem:[#allocation7 + $0x8] sm:$0xff]
    %v2052 = vld [vmem:[#allocation7 + $0x10] sm:$0xff]
    %v2053 = vld [vmem:[#allocation7 + $0x18] sm:$0xff]
    %v2054 = vld [vmem:[#allocation7 + $0x20] sm:$0xff]
    %v2055 = vld [vmem:[#allocation7 + $0x28] sm:$0xff]
    %v2056 = vld [vmem:[#allocation7 + $0x30] sm:$0xff]
    %v2057 = vld [vmem:[#allocation7 + $0x38] sm:$0xff]
    %v2058 = vld [vmem:[#allocation7 + $0x40] sm:$0xff]
    %v2059 = vld [vmem:[#allocation7 + $0x48] sm:$0xff]
    %v2060 = vld [vmem:[#allocation7 + $0x50] sm:$0xff]
    %v2061 = vld [vmem:[#allocation7 + $0x58] sm:$0xff]
    %v2062 = vld [vmem:[#allocation7 + $0x60] sm:$0xff]
    %v2063 = vld [vmem:[#allocation7 + $0x68] sm:$0xff]
    %v2064 = vld [vmem:[#allocation7 + $0x70] sm:$0xff]
    %v2065 = vld [vmem:[#allocation7 + $0x78] sm:$0xff]
    %v2066 = vld [vmem:[#allocation7 + $0x80] sm:$0xff]
    %v2067 = vld [vmem:[#allocation7 + $0x88] sm:$0xff]
    %v2068 = vld [vmem:[#allocation7 + $0x90] sm:$0xff]
    %v2069 = vld [vmem:[#allocation7 + $0x98] sm:$0xff]
    %v2070 = vld [vmem:[#allocation7 + $0xa0] sm:$0xff]
    %v2071 = vld [vmem:[#allocation7 + $0xa8] sm:$0xff]
    %v2072 = vld [vmem:[#allocation7 + $0xb0] sm:$0xff]
    %v2073 = vld [vmem:[#allocation7 + $0xb8] sm:$0xff]
    %v2074 = vld [vmem:[#allocation7 + $0xc0] sm:$0xff]
    %v2075 = vld [vmem:[#allocation7 + $0xc8] sm:$0xff]
    %v2076 = vld [vmem:[#allocation7 + $0xd0] sm:$0xff]
    %v2077 = vld [vmem:[#allocation7 + $0xd8] sm:$0xff]
    %v2078 = vld [vmem:[#allocation7 + $0xe0] sm:$0xff]
    %v2079 = vld [vmem:[#allocation7 + $0xe8] sm:$0xff]
    %v2080 = vld [vmem:[#allocation7 + $0xf0] sm:$0xff]
    %v2081 = vld [vmem:[#allocation7 + $0xf8] sm:$0xff]
    %v2082 = vld [vmem:[#allocation7 + $0x100] sm:$0xff]
    %v2083 = vld [vmem:[#allocation7 + $0x108] sm:$0xff]
    %v2084 = vld [vmem:[#allocation7 + $0x110] sm:$0xff]
    %v2085 = vld [vmem:[#allocation7 + $0x118] sm:$0xff]
    %v2086 = vld [vmem:[#allocation7 + $0x120] sm:$0xff]
    %v2087 = vld [vmem:[#allocation7 + $0x128] sm:$0xff]
    %v2088 = vld [vmem:[#allocation7 + $0x130] sm:$0xff]
    %v2089 = vld [vmem:[#allocation7 + $0x138] sm:$0xff]
    %v2090 = vld [vmem:[#allocation7 + $0x140] sm:$0xff]
    %v2091 = vld [vmem:[#allocation7 + $0x148] sm:$0xff]
    %v2092 = vld [vmem:[#allocation7 + $0x150] sm:$0xff]
    %v2093 = vld [vmem:[#allocation7 + $0x158] sm:$0xff]
    %v2094 = vld [vmem:[#allocation7 + $0x160] sm:$0xff]
    %v2095 = vld [vmem:[#allocation7 + $0x168] sm:$0xff]
    %v2096 = vld [vmem:[#allocation7 + $0x170] sm:$0xff]
    %v2097 = vld [vmem:[#allocation7 + $0x178] sm:$0xff]
    %v2098 = vld [vmem:[#allocation7 + $0x180] sm:$0xff]
    %v2099 = vld [vmem:[#allocation7 + $0x188] sm:$0xff]
    %v2100 = vld [vmem:[#allocation7 + $0x190] sm:$0xff]
    %v2101 = vld [vmem:[#allocation7 + $0x198] sm:$0xff]
    %v2102 = vld [vmem:[#allocation7 + $0x1a0] sm:$0xff]
    %v2103 = vld [vmem:[#allocation7 + $0x1a8] sm:$0xff]
    %v2104 = vld [vmem:[#allocation7 + $0x1b0] sm:$0xff]
    %v2105 = vld [vmem:[#allocation7 + $0x1b8] sm:$0xff]
    %v2106 = vld [vmem:[#allocation7 + $0x1c0] sm:$0xff]
    %v2107 = vld [vmem:[#allocation7 + $0x1c8] sm:$0xff]
    %v2108 = vld [vmem:[#allocation7 + $0x1d0] sm:$0xff]
    %v2109 = vld [vmem:[#allocation7 + $0x1d8] sm:$0xff]
    %v2110 = vld [vmem:[#allocation7 + $0x1e0] sm:$0xff]
    %v2111 = vld [vmem:[#allocation7 + $0x1e8] sm:$0xff]
    %v2112 = vld [vmem:[#allocation7 + $0x1f0] sm:$0xff]
    %v2113 = vld [vmem:[#allocation7 + $0x1f8] sm:$0xff]
    %v2114 = vld [vmem:[#allocation7 + $0x200] sm:$0xff]
    %v2115 = vld [vmem:[#allocation7 + $0x208] sm:$0xff]
    %v2116 = vld [vmem:[#allocation7 + $0x210] sm:$0xff]
    %v2117 = vld [vmem:[#allocation7 + $0x218] sm:$0xff]
    %v2118 = vld [vmem:[#allocation7 + $0x220] sm:$0xff]
    %v2119 = vld [vmem:[#allocation7 + $0x228] sm:$0xff]
    %v2120 = vld [vmem:[#allocation7 + $0x230] sm:$0xff]
    %v2121 = vld [vmem:[#allocation7 + $0x238] sm:$0xff]
    %v2122 = vld [vmem:[#allocation7 + $0x240] sm:$0xff]
    %v2123 = vld [vmem:[#allocation7 + $0x248] sm:$0xff]
    %v2124 = vld [vmem:[#allocation7 + $0x250] sm:$0xff]
    %v2125 = vld [vmem:[#allocation7 + $0x258] sm:$0xff]
    %v2126 = vld [vmem:[#allocation7 + $0x260] sm:$0xff]
    %v2127 = vld [vmem:[#allocation7 + $0x268] sm:$0xff]
    %v2128 = vld [vmem:[#allocation7 + $0x270] sm:$0xff]
    %v2129 = vld [vmem:[#allocation7 + $0x278] sm:$0xff]
    %v2130 = vld [vmem:[#allocation7 + $0x280] sm:$0xff]
    %v2131 = vld [vmem:[#allocation7 + $0x288] sm:$0xff]
    %v2132 = vld [vmem:[#allocation7 + $0x290] sm:$0xff]
    %v2133 = vld [vmem:[#allocation7 + $0x298] sm:$0xff]
    %v2134 = vld [vmem:[#allocation7 + $0x2a0] sm:$0xff]
    %v2135 = vld [vmem:[#allocation7 + $0x2a8] sm:$0xff]
    %v2136 = vld [vmem:[#allocation7 + $0x2b0] sm:$0xff]
    %v2137 = vld [vmem:[#allocation7 + $0x2b8] sm:$0xff]
    %v2138 = vld [vmem:[#allocation7 + $0x2c0] sm:$0xff]
    %v2139 = vld [vmem:[#allocation7 + $0x2c8] sm:$0xff]
    %v2140 = vld [vmem:[#allocation7 + $0x2d0] sm:$0xff]
    %v2141 = vld [vmem:[#allocation7 + $0x2d8] sm:$0xff]
    %v2142 = vld [vmem:[#allocation7 + $0x2e0] sm:$0xff]
    %v2143 = vld [vmem:[#allocation7 + $0x2e8] sm:$0xff]
    %v2144 = vld [vmem:[#allocation7 + $0x2f0] sm:$0xff]
    %v2145 = vld [vmem:[#allocation7 + $0x2f8] sm:$0xff]
    %v2146 = vld [vmem:[#allocation2 + $0xc0] sm:$0xff]
    %v2147 = vld [vmem:[#allocation2 + $0xc8] sm:$0xff]
    %v2148 = vld [vmem:[#allocation2 + $0xd0] sm:$0xff]
    %v2149 = vpack.c.bf16 %v2020, %v2017
    %v2150 = vpack.c.bf16 %v2021, %v2018
    %v2151 = vpack.c.bf16 %v2022, %v2019
    %v2152 = vpack.c.bf16 %v2026, %v2023
    %v2153 = vpack.c.bf16 %v2027, %v2024
    %v2154 = vpack.c.bf16 %v2028, %v2025
    %v2155 = vpack.c.bf16 %v2032, %v2029
    %v2156 = vpack.c.bf16 %v2033, %v2030
    %v2157 = vpack.c.bf16 %v2034, %v2031
    %v2158 = vpack.c.bf16 %v2146, %v2035
    %v2159 = vpack.c.bf16 %v2147, %v2036
    %v2160 = vpack.c.bf16 %v2148, %v2037
    %s2161 = scalar_lea.vmem [#allocation7], 768
    %v2162 = vld [vmem:[%s2161] sm:$0xff]
    %v2163 = vld [vmem:[%s2161 + $0x8] sm:$0xff]
    %v2164 = vld [vmem:[%s2161 + $0x10] sm:$0xff]
    %v2165 = vld [vmem:[%s2161 + $0x18] sm:$0xff]
    %v2166 = vld [vmem:[%s2161 + $0x20] sm:$0xff]
    %v2167 = vld [vmem:[%s2161 + $0x28] sm:$0xff]
    %v2168 = vld [vmem:[%s2161 + $0x30] sm:$0xff]
    %v2169 = vld [vmem:[%s2161 + $0x38] sm:$0xff]
    %v2170 = vld [vmem:[%s2161 + $0x40] sm:$0xff]
    %v2171 = vld [vmem:[%s2161 + $0x48] sm:$0xff]
    %v2172 = vld [vmem:[%s2161 + $0x50] sm:$0xff]
    %v2173 = vld [vmem:[%s2161 + $0x58] sm:$0xff]
    %v2174 = vld [vmem:[%s2161 + $0x60] sm:$0xff]
    %v2175 = vld [vmem:[%s2161 + $0x68] sm:$0xff]
    %v2176 = vld [vmem:[%s2161 + $0x70] sm:$0xff]
    %v2177 = vld [vmem:[%s2161 + $0x78] sm:$0xff]
    %v2178 = vld [vmem:[%s2161 + $0x80] sm:$0xff]
    %v2179 = vld [vmem:[%s2161 + $0x88] sm:$0xff]
    %v2180 = vld [vmem:[%s2161 + $0x90] sm:$0xff]
    %v2181 = vld [vmem:[%s2161 + $0x98] sm:$0xff]
    %v2182 = vld [vmem:[%s2161 + $0xa0] sm:$0xff]
    %v2183 = vld [vmem:[%s2161 + $0xa8] sm:$0xff]
    %v2184 = vld [vmem:[%s2161 + $0xb0] sm:$0xff]
    %v2185 = vld [vmem:[%s2161 + $0xb8] sm:$0xff]
    %v2186 = vld [vmem:[%s2161 + $0xc0] sm:$0xff]
    %v2187 = vld [vmem:[%s2161 + $0xc8] sm:$0xff]
    %v2188 = vld [vmem:[%s2161 + $0xd0] sm:$0xff]
    %v2189 = vld [vmem:[%s2161 + $0xd8] sm:$0xff]
    %v2190 = vld [vmem:[%s2161 + $0xe0] sm:$0xff]
    %v2191 = vld [vmem:[%s2161 + $0xe8] sm:$0xff]
    %v2192 = vld [vmem:[%s2161 + $0xf0] sm:$0xff]
    %v2193 = vld [vmem:[%s2161 + $0xf8] sm:$0xff]
    %v2194 = vld [vmem:[%s2161 + $0x100] sm:$0xff]
    %v2195 = vld [vmem:[%s2161 + $0x108] sm:$0xff]
    %v2196 = vld [vmem:[%s2161 + $0x110] sm:$0xff]
    %v2197 = vld [vmem:[%s2161 + $0x118] sm:$0xff]
    %v2198 = vld [vmem:[%s2161 + $0x120] sm:$0xff]
    %v2199 = vld [vmem:[%s2161 + $0x128] sm:$0xff]
    %v2200 = vld [vmem:[%s2161 + $0x130] sm:$0xff]
    %v2201 = vld [vmem:[%s2161 + $0x138] sm:$0xff]
    %v2202 = vld [vmem:[%s2161 + $0x140] sm:$0xff]
    %v2203 = vld [vmem:[%s2161 + $0x148] sm:$0xff]
    %v2204 = vld [vmem:[%s2161 + $0x150] sm:$0xff]
    %v2205 = vld [vmem:[%s2161 + $0x158] sm:$0xff]
    %v2206 = vld [vmem:[%s2161 + $0x160] sm:$0xff]
    %v2207 = vld [vmem:[%s2161 + $0x168] sm:$0xff]
    %v2208 = vld [vmem:[%s2161 + $0x170] sm:$0xff]
    %v2209 = vld [vmem:[%s2161 + $0x178] sm:$0xff]
    %v2210 = vld [vmem:[%s2161 + $0x180] sm:$0xff]
    %v2211 = vld [vmem:[%s2161 + $0x188] sm:$0xff]
    %v2212 = vld [vmem:[%s2161 + $0x190] sm:$0xff]
    %v2213 = vld [vmem:[%s2161 + $0x198] sm:$0xff]
    %v2214 = vld [vmem:[%s2161 + $0x1a0] sm:$0xff]
    %v2215 = vld [vmem:[%s2161 + $0x1a8] sm:$0xff]
    %v2216 = vld [vmem:[%s2161 + $0x1b0] sm:$0xff]
    %v2217 = vld [vmem:[%s2161 + $0x1b8] sm:$0xff]
    %v2218 = vld [vmem:[%s2161 + $0x1c0] sm:$0xff]
    %v2219 = vld [vmem:[%s2161 + $0x1c8] sm:$0xff]
    %v2220 = vld [vmem:[%s2161 + $0x1d0] sm:$0xff]
    %v2221 = vld [vmem:[%s2161 + $0x1d8] sm:$0xff]
    %v2222 = vld [vmem:[%s2161 + $0x1e0] sm:$0xff]
    %v2223 = vld [vmem:[%s2161 + $0x1e8] sm:$0xff]
    %v2224 = vld [vmem:[%s2161 + $0x1f0] sm:$0xff]
    %v2225 = vld [vmem:[%s2161 + $0x1f8] sm:$0xff]
    %v2226 = vld [vmem:[%s2161 + $0x200] sm:$0xff]
    %v2227 = vld [vmem:[%s2161 + $0x208] sm:$0xff]
    %v2228 = vld [vmem:[%s2161 + $0x210] sm:$0xff]
    %v2229 = vld [vmem:[%s2161 + $0x218] sm:$0xff]
    %v2230 = vld [vmem:[%s2161 + $0x220] sm:$0xff]
    %v2231 = vld [vmem:[%s2161 + $0x228] sm:$0xff]
    %v2232 = vld [vmem:[%s2161 + $0x230] sm:$0xff]
    %v2233 = vld [vmem:[%s2161 + $0x238] sm:$0xff]
    %v2234 = vld [vmem:[%s2161 + $0x240] sm:$0xff]
    %v2235 = vld [vmem:[%s2161 + $0x248] sm:$0xff]
    %v2236 = vld [vmem:[%s2161 + $0x250] sm:$0xff]
    %v2237 = vld [vmem:[%s2161 + $0x258] sm:$0xff]
    %v2238 = vld [vmem:[%s2161 + $0x260] sm:$0xff]
    %v2239 = vld [vmem:[%s2161 + $0x268] sm:$0xff]
    %v2240 = vld [vmem:[%s2161 + $0x270] sm:$0xff]
    %v2241 = vld [vmem:[%s2161 + $0x278] sm:$0xff]
    %v2242 = vld [vmem:[%s2161 + $0x280] sm:$0xff]
    %v2243 = vld [vmem:[%s2161 + $0x288] sm:$0xff]
    %v2244 = vld [vmem:[%s2161 + $0x290] sm:$0xff]
    %v2245 = vld [vmem:[%s2161 + $0x298] sm:$0xff]
    %v2246 = vld [vmem:[%s2161 + $0x2a0] sm:$0xff]
    %v2247 = vld [vmem:[%s2161 + $0x2a8] sm:$0xff]
    %v2248 = vld [vmem:[%s2161 + $0x2b0] sm:$0xff]
    %v2249 = vld [vmem:[%s2161 + $0x2b8] sm:$0xff]
    %v2250 = vld [vmem:[%s2161 + $0x2c0] sm:$0xff]
    %v2251 = vld [vmem:[%s2161 + $0x2c8] sm:$0xff]
    %v2252 = vld [vmem:[%s2161 + $0x2d0] sm:$0xff]
    %v2253 = vld [vmem:[%s2161 + $0x2d8] sm:$0xff]
    %v2254 = vld [vmem:[%s2161 + $0x2e0] sm:$0xff]
    %v2255 = vld [vmem:[%s2161 + $0x2e8] sm:$0xff]
    %v2256 = vld [vmem:[%s2161 + $0x2f0] sm:$0xff]
    %v2257 = vld [vmem:[%s2161 + $0x2f8] sm:$0xff]
    %v2354 = vunpack.c.l.b16 %v2162
    %v2355 = vunpack.c.h.b16 %v2162
    %v2356 = vunpack.c.l.b16 %v2163
    %v2357 = vunpack.c.h.b16 %v2163
    %v2358 = vunpack.c.l.b16 %v2164
    %v2359 = vunpack.c.h.b16 %v2164
    %v2360 = vunpack.c.l.b16 %v2165
    %v2361 = vunpack.c.h.b16 %v2165
    %v2362 = vunpack.c.l.b16 %v2166
    %v2363 = vunpack.c.h.b16 %v2166
    %v2364 = vunpack.c.l.b16 %v2167
    %v2365 = vunpack.c.h.b16 %v2167
    %v2366 = vunpack.c.l.b16 %v2168
    %v2367 = vunpack.c.h.b16 %v2168
    %v2368 = vunpack.c.l.b16 %v2169
    %v2369 = vunpack.c.h.b16 %v2169
    %v2370 = vunpack.c.l.b16 %v2170
    %v2371 = vunpack.c.h.b16 %v2170
    %v2372 = vunpack.c.l.b16 %v2171
    %v2373 = vunpack.c.h.b16 %v2171
    %v2374 = vunpack.c.l.b16 %v2172
    %v2375 = vunpack.c.h.b16 %v2172
    %v2376 = vunpack.c.l.b16 %v2173
    %v2377 = vunpack.c.h.b16 %v2173
    %v2378 = vunpack.c.l.b16 %v2174
    %v2379 = vunpack.c.h.b16 %v2174
    %v2380 = vunpack.c.l.b16 %v2175
    %v2381 = vunpack.c.h.b16 %v2175
    %v2382 = vunpack.c.l.b16 %v2176
    %v2383 = vunpack.c.h.b16 %v2176
    %v2384 = vunpack.c.l.b16 %v2177
    %v2385 = vunpack.c.h.b16 %v2177
    %v2386 = vunpack.c.l.b16 %v2178
    %v2387 = vunpack.c.h.b16 %v2178
    %v2388 = vunpack.c.l.b16 %v2179
    %v2389 = vunpack.c.h.b16 %v2179
    %v2390 = vunpack.c.l.b16 %v2180
    %v2391 = vunpack.c.h.b16 %v2180
    %v2392 = vunpack.c.l.b16 %v2181
    %v2393 = vunpack.c.h.b16 %v2181
    %v2394 = vunpack.c.l.b16 %v2182
    %v2395 = vunpack.c.h.b16 %v2182
    %v2396 = vunpack.c.l.b16 %v2183
    %v2397 = vunpack.c.h.b16 %v2183
    %v2398 = vunpack.c.l.b16 %v2184
    %v2399 = vunpack.c.h.b16 %v2184
    %v2400 = vunpack.c.l.b16 %v2185
    %v2401 = vunpack.c.h.b16 %v2185
    %v2402 = vunpack.c.l.b16 %v2186
    %v2403 = vunpack.c.h.b16 %v2186
    %v2404 = vunpack.c.l.b16 %v2187
    %v2405 = vunpack.c.h.b16 %v2187
    %v2406 = vunpack.c.l.b16 %v2188
    %v2407 = vunpack.c.h.b16 %v2188
    %v2408 = vunpack.c.l.b16 %v2189
    %v2409 = vunpack.c.h.b16 %v2189
    %v2410 = vunpack.c.l.b16 %v2190
    %v2411 = vunpack.c.h.b16 %v2190
    %v2412 = vunpack.c.l.b16 %v2191
    %v2413 = vunpack.c.h.b16 %v2191
    %v2414 = vunpack.c.l.b16 %v2192
    %v2415 = vunpack.c.h.b16 %v2192
    %v2416 = vunpack.c.l.b16 %v2193
    %v2417 = vunpack.c.h.b16 %v2193
    %v2418 = vunpack.c.l.b16 %v2194
    %v2419 = vunpack.c.h.b16 %v2194
    %v2420 = vunpack.c.l.b16 %v2195
    %v2421 = vunpack.c.h.b16 %v2195
    %v2422 = vunpack.c.l.b16 %v2196
    %v2423 = vunpack.c.h.b16 %v2196
    %v2424 = vunpack.c.l.b16 %v2197
    %v2425 = vunpack.c.h.b16 %v2197
    %v2426 = vunpack.c.l.b16 %v2198
    %v2427 = vunpack.c.h.b16 %v2198
    %v2428 = vunpack.c.l.b16 %v2199
    %v2429 = vunpack.c.h.b16 %v2199
    %v2430 = vunpack.c.l.b16 %v2200
    %v2431 = vunpack.c.h.b16 %v2200
    %v2432 = vunpack.c.l.b16 %v2201
    %v2433 = vunpack.c.h.b16 %v2201
    %v2434 = vunpack.c.l.b16 %v2202
    %v2435 = vunpack.c.h.b16 %v2202
    %v2436 = vunpack.c.l.b16 %v2203
    %v2437 = vunpack.c.h.b16 %v2203
    %v2438 = vunpack.c.l.b16 %v2204
    %v2439 = vunpack.c.h.b16 %v2204
    %v2440 = vunpack.c.l.b16 %v2205
    %v2441 = vunpack.c.h.b16 %v2205
    %v2442 = vunpack.c.l.b16 %v2206
    %v2443 = vunpack.c.h.b16 %v2206
    %v2444 = vunpack.c.l.b16 %v2207
    %v2445 = vunpack.c.h.b16 %v2207
    %v2446 = vunpack.c.l.b16 %v2208
    %v2447 = vunpack.c.h.b16 %v2208
    %v2448 = vunpack.c.l.b16 %v2209
    %v2449 = vunpack.c.h.b16 %v2209
    %v2450 = vunpack.c.l.b16 %v2210
    %v2451 = vunpack.c.h.b16 %v2210
    %v2452 = vunpack.c.l.b16 %v2211
    %v2453 = vunpack.c.h.b16 %v2211
    %v2454 = vunpack.c.l.b16 %v2212
    %v2455 = vunpack.c.h.b16 %v2212
    %v2456 = vunpack.c.l.b16 %v2213
    %v2457 = vunpack.c.h.b16 %v2213
    %v2458 = vunpack.c.l.b16 %v2214
    %v2459 = vunpack.c.h.b16 %v2214
    %v2460 = vunpack.c.l.b16 %v2215
    %v2461 = vunpack.c.h.b16 %v2215
    %v2462 = vunpack.c.l.b16 %v2216
    %v2463 = vunpack.c.h.b16 %v2216
    %v2464 = vunpack.c.l.b16 %v2217
    %v2465 = vunpack.c.h.b16 %v2217
    %v2466 = vunpack.c.l.b16 %v2218
    %v2467 = vunpack.c.h.b16 %v2218
    %v2468 = vunpack.c.l.b16 %v2219
    %v2469 = vunpack.c.h.b16 %v2219
    %v2470 = vunpack.c.l.b16 %v2220
    %v2471 = vunpack.c.h.b16 %v2220
    %v2472 = vunpack.c.l.b16 %v2221
    %v2473 = vunpack.c.h.b16 %v2221
    %v2474 = vunpack.c.l.b16 %v2222
    %v2475 = vunpack.c.h.b16 %v2222
    %v2476 = vunpack.c.l.b16 %v2223
    %v2477 = vunpack.c.h.b16 %v2223
    %v2478 = vunpack.c.l.b16 %v2224
    %v2479 = vunpack.c.h.b16 %v2224
    %v2480 = vunpack.c.l.b16 %v2225
    %v2481 = vunpack.c.h.b16 %v2225
    %v2482 = vunpack.c.l.b16 %v2226
    %v2483 = vunpack.c.h.b16 %v2226
    %v2484 = vunpack.c.l.b16 %v2227
    %v2485 = vunpack.c.h.b16 %v2227
    %v2486 = vunpack.c.l.b16 %v2228
    %v2487 = vunpack.c.h.b16 %v2228
    %v2488 = vunpack.c.l.b16 %v2229
    %v2489 = vunpack.c.h.b16 %v2229
    %v2490 = vunpack.c.l.b16 %v2230
    %v2491 = vunpack.c.h.b16 %v2230
    %v2492 = vunpack.c.l.b16 %v2231
    %v2493 = vunpack.c.h.b16 %v2231
    %v2494 = vunpack.c.l.b16 %v2232
    %v2495 = vunpack.c.h.b16 %v2232
    %v2496 = vunpack.c.l.b16 %v2233
    %v2497 = vunpack.c.h.b16 %v2233
    %v2498 = vunpack.c.l.b16 %v2234
    %v2499 = vunpack.c.h.b16 %v2234
    %v2500 = vunpack.c.l.b16 %v2235
    %v2501 = vunpack.c.h.b16 %v2235
    %v2502 = vunpack.c.l.b16 %v2236
    %v2503 = vunpack.c.h.b16 %v2236
    %v2504 = vunpack.c.l.b16 %v2237
    %v2505 = vunpack.c.h.b16 %v2237
    %v2506 = vunpack.c.l.b16 %v2238
    %v2507 = vunpack.c.h.b16 %v2238
    %v2508 = vunpack.c.l.b16 %v2239
    %v2509 = vunpack.c.h.b16 %v2239
    %v2510 = vunpack.c.l.b16 %v2240
    %v2511 = vunpack.c.h.b16 %v2240
    %v2512 = vunpack.c.l.b16 %v2241
    %v2513 = vunpack.c.h.b16 %v2241
    %v2514 = vunpack.c.l.b16 %v2242
    %v2515 = vunpack.c.h.b16 %v2242
    %v2516 = vunpack.c.l.b16 %v2243
    %v2517 = vunpack.c.h.b16 %v2243
    %v2518 = vunpack.c.l.b16 %v2244
    %v2519 = vunpack.c.h.b16 %v2244
    %v2520 = vunpack.c.l.b16 %v2245
    %v2521 = vunpack.c.h.b16 %v2245
    %v2522 = vunpack.c.l.b16 %v2246
    %v2523 = vunpack.c.h.b16 %v2246
    %v2524 = vunpack.c.l.b16 %v2247
    %v2525 = vunpack.c.h.b16 %v2247
    %v2526 = vunpack.c.l.b16 %v2248
    %v2527 = vunpack.c.h.b16 %v2248
    %v2528 = vunpack.c.l.b16 %v2249
    %v2529 = vunpack.c.h.b16 %v2249
    %v2530 = vunpack.c.l.b16 %v2250
    %v2531 = vunpack.c.h.b16 %v2250
    %v2532 = vunpack.c.l.b16 %v2251
    %v2533 = vunpack.c.h.b16 %v2251
    %v2534 = vunpack.c.l.b16 %v2252
    %v2535 = vunpack.c.h.b16 %v2252
    %v2536 = vunpack.c.l.b16 %v2253
    %v2537 = vunpack.c.h.b16 %v2253
    %v2538 = vunpack.c.l.b16 %v2254
    %v2539 = vunpack.c.h.b16 %v2254
    %v2540 = vunpack.c.l.b16 %v2255
    %v2541 = vunpack.c.h.b16 %v2255
    %v2542 = vunpack.c.l.b16 %v2256
    %v2543 = vunpack.c.h.b16 %v2256
    %v2544 = vunpack.c.l.b16 %v2257
    %v2545 = vunpack.c.h.b16 %v2257
    %v2546 = vpack.c.b16 %v2358, %v2354
    %v2547 = vpack.c.b16 %v2359, %v2355
    %v2548 = vpack.c.b16 %v2360, %v2356
    %v2549 = vpack.c.b16 %v2361, %v2357
    %v2550 = vpack.c.b16 %v2366, %v2362
    %v2551 = vpack.c.b16 %v2367, %v2363
    %v2552 = vpack.c.b16 %v2368, %v2364
    %v2553 = vpack.c.b16 %v2369, %v2365
    %v2554 = vpack.c.b16 %v2374, %v2370
    %v2555 = vpack.c.b16 %v2375, %v2371
    %v2556 = vpack.c.b16 %v2376, %v2372
    %v2557 = vpack.c.b16 %v2377, %v2373
    %v2558 = vpack.c.b16 %v2382, %v2378
    %v2559 = vpack.c.b16 %v2383, %v2379
    %v2560 = vpack.c.b16 %v2384, %v2380
    %v2561 = vpack.c.b16 %v2385, %v2381
    %v2562 = vpack.c.b16 %v2390, %v2386
    %v2563 = vpack.c.b16 %v2391, %v2387
    %v2564 = vpack.c.b16 %v2392, %v2388
    %v2565 = vpack.c.b16 %v2393, %v2389
    %v2566 = vpack.c.b16 %v2398, %v2394
    %v2567 = vpack.c.b16 %v2399, %v2395
    %v2568 = vpack.c.b16 %v2400, %v2396
    %v2569 = vpack.c.b16 %v2401, %v2397
    %v2570 = vpack.c.b16 %v2406, %v2402
    %v2571 = vpack.c.b16 %v2407, %v2403
    %v2572 = vpack.c.b16 %v2408, %v2404
    %v2573 = vpack.c.b16 %v2409, %v2405
    %v2574 = vpack.c.b16 %v2414, %v2410
    %v2575 = vpack.c.b16 %v2415, %v2411
    %v2576 = vpack.c.b16 %v2416, %v2412
    %v2577 = vpack.c.b16 %v2417, %v2413
    %v2578 = vpack.c.b16 %v2422, %v2418
    %v2579 = vpack.c.b16 %v2423, %v2419
    %v2580 = vpack.c.b16 %v2424, %v2420
    %v2581 = vpack.c.b16 %v2425, %v2421
    %v2582 = vpack.c.b16 %v2430, %v2426
    %v2583 = vpack.c.b16 %v2431, %v2427
    %v2584 = vpack.c.b16 %v2432, %v2428
    %v2585 = vpack.c.b16 %v2433, %v2429
    %v2586 = vpack.c.b16 %v2438, %v2434
    %v2587 = vpack.c.b16 %v2439, %v2435
    %v2588 = vpack.c.b16 %v2440, %v2436
    %v2589 = vpack.c.b16 %v2441, %v2437
    %v2590 = vpack.c.b16 %v2446, %v2442
    %v2591 = vpack.c.b16 %v2447, %v2443
    %v2592 = vpack.c.b16 %v2448, %v2444
    %v2593 = vpack.c.b16 %v2449, %v2445
    %v2594 = vpack.c.b16 %v2454, %v2450
    %v2595 = vpack.c.b16 %v2455, %v2451
    %v2596 = vpack.c.b16 %v2456, %v2452
    %v2597 = vpack.c.b16 %v2457, %v2453
    %v2598 = vpack.c.b16 %v2462, %v2458
    %v2599 = vpack.c.b16 %v2463, %v2459
    %v2600 = vpack.c.b16 %v2464, %v2460
    %v2601 = vpack.c.b16 %v2465, %v2461
    %v2602 = vpack.c.b16 %v2470, %v2466
    %v2603 = vpack.c.b16 %v2471, %v2467
    %v2604 = vpack.c.b16 %v2472, %v2468
    %v2605 = vpack.c.b16 %v2473, %v2469
    %v2606 = vpack.c.b16 %v2478, %v2474
    %v2607 = vpack.c.b16 %v2479, %v2475
    %v2608 = vpack.c.b16 %v2480, %v2476
    %v2609 = vpack.c.b16 %v2481, %v2477
    %v2610 = vpack.c.b16 %v2486, %v2482
    %v2611 = vpack.c.b16 %v2487, %v2483
    %v2612 = vpack.c.b16 %v2488, %v2484
    %v2613 = vpack.c.b16 %v2489, %v2485
    %v2614 = vpack.c.b16 %v2494, %v2490
    %v2615 = vpack.c.b16 %v2495, %v2491
    %v2616 = vpack.c.b16 %v2496, %v2492
    %v2617 = vpack.c.b16 %v2497, %v2493
    %v2618 = vpack.c.b16 %v2502, %v2498
    %v2619 = vpack.c.b16 %v2503, %v2499
    %v2620 = vpack.c.b16 %v2504, %v2500
    %v2621 = vpack.c.b16 %v2505, %v2501
    %v2622 = vpack.c.b16 %v2510, %v2506
    %v2623 = vpack.c.b16 %v2511, %v2507
    %v2624 = vpack.c.b16 %v2512, %v2508
    %v2625 = vpack.c.b16 %v2513, %v2509
    %v2626 = vpack.c.b16 %v2518, %v2514
    %v2627 = vpack.c.b16 %v2519, %v2515
    %v2628 = vpack.c.b16 %v2520, %v2516
    %v2629 = vpack.c.b16 %v2521, %v2517
    %v2630 = vpack.c.b16 %v2526, %v2522
    %v2631 = vpack.c.b16 %v2527, %v2523
    %v2632 = vpack.c.b16 %v2528, %v2524
    %v2633 = vpack.c.b16 %v2529, %v2525
    %v2634 = vpack.c.b16 %v2534, %v2530
    %v2635 = vpack.c.b16 %v2535, %v2531
    %v2636 = vpack.c.b16 %v2536, %v2532
    %v2637 = vpack.c.b16 %v2537, %v2533
    %v2638 = vpack.c.b16 %v2542, %v2538
    %v2639 = vpack.c.b16 %v2543, %v2539
    %v2640 = vpack.c.b16 %v2544, %v2540
    %v2641 = vpack.c.b16 %v2545, %v2541
    %2738 = vmatprep.subr.bf16.mxu0 %v2575
    %2739 = vmatpush1.bf16.msra.mxu0 %v2574
    %2740 = vmatprep.subr.bf16.mxu0 %v2571
    %2741 = vmatpush1.bf16.msra.mxu0 %v2570
    %2742 = vmatprep.subr.bf16.mxu0 %v2567
    %2743 = vmatpush1.bf16.msra.mxu0 %v2566
    %2744 = vmatprep.subr.bf16.mxu0 %v2563
    %2745 = vmatpush1.bf16.msra.mxu0 %v2562
    %2746 = vmatprep.subr.bf16.mxu0 %v2559
    %2747 = vmatpush1.bf16.msra.mxu0 %v2558
    %2748 = vmatprep.subr.bf16.mxu0 %v2555
    %2749 = vmatpush1.bf16.msra.mxu0 %v2554
    %2750 = vmatprep.subr.bf16.mxu0 %v2551
    %2751 = vmatpush1.bf16.msra.mxu0 %v2550
    %2752 = vmatprep.subr.bf16.mxu0 %v2547
    %2753 = vmatpush1.bf16.msra.mxu0 %v2546
    %2754 = vmatprep.subr.bf16.mxu0 %v2607
    %2755 = vmatpush2.bf16.msra.mxu0 %v2606
    %2756 = vmatprep.subr.bf16.mxu0 %v2603
    %2757 = vmatpush2.bf16.msra.mxu0 %v2602
    %2758 = vmatprep.subr.bf16.mxu0 %v2599
    %2759 = vmatpush2.bf16.msra.mxu0 %v2598
    %2760 = vmatprep.subr.bf16.mxu0 %v2595
    %2761 = vmatpush2.bf16.msra.mxu0 %v2594
    %2762 = vmatprep.subr.bf16.mxu0 %v2591
    %2763 = vmatpush2.bf16.msra.mxu0 %v2590
    %2764 = vmatprep.subr.bf16.mxu0 %v2587
    %2765 = vmatpush2.bf16.msra.mxu0 %v2586
    %2766 = vmatprep.subr.bf16.mxu0 %v2583
    %2767 = vmatpush2.bf16.msra.mxu0 %v2582
    %2768 = vmatprep.subr.bf16.mxu0 %v2579
    %2769 = vmatpush2.bf16.msra.mxu0 %v2578
    %2770 = vmatprep.mubr.bf16.mxu0 %v2150
    %2771 = vmatmul.mubr.bf16.gmra.mxu0 %v2149
    %v2772 = vpop.f32.mrf.mxu0
    %v2773 = vadd.f32 0.0, %v2772
    %v2774 = vpop.f32.mrf.mxu0
    %v2775 = vadd.f32 0.0, %v2774
    %v2776 = vpop.f32.mrf.mxu0
    %v2777 = vadd.f32 0.0, %v2776
    %v2778 = vpop.f32.mrf.mxu0
    %v2779 = vadd.f32 0.0, %v2778
    %2780 = vmatprep.mubr.bf16.mxu0 %v2153
    %2781 = vmatmul.mubr.bf16.gmra.mxu0 %v2152
    %v2782 = vpop.f32.mrf.mxu0
    %v2783 = vadd.f32 0.0, %v2782
    %v2784 = vpop.f32.mrf.mxu0
    %v2785 = vadd.f32 0.0, %v2784
    %v2786 = vpop.f32.mrf.mxu0
    %v2787 = vadd.f32 0.0, %v2786
    %v2788 = vpop.f32.mrf.mxu0
    %v2789 = vadd.f32 0.0, %v2788
    %2790 = vmatprep.mubr.bf16.mxu0 %v2156
    %2791 = vmatmul.mubr.bf16.gmra.mxu0 %v2155
    %v2792 = vpop.f32.mrf.mxu0
    %v2793 = vadd.f32 0.0, %v2792
    %v2794 = vpop.f32.mrf.mxu0
    %v2795 = vadd.f32 0.0, %v2794
    %v2796 = vpop.f32.mrf.mxu0
    %v2797 = vadd.f32 0.0, %v2796
    %v2798 = vpop.f32.mrf.mxu0
    %v2799 = vadd.f32 0.0, %v2798
    %2800 = vmatprep.mubr.bf16.mxu0 %v2159
    %2801 = vmatmul.mubr.bf16.gmra.mxu0 %v2158
    %v2802 = vpop.f32.mrf.mxu0
    %v2803 = vadd.f32 0.0, %v2802
    %v2804 = vpop.f32.mrf.mxu0
    %v2805 = vadd.f32 0.0, %v2804
    %v2806 = vpop.f32.mrf.mxu0
    %v2807 = vadd.f32 0.0, %v2806
    %v2808 = vpop.f32.mrf.mxu0
    %v2809 = vadd.f32 0.0, %v2808
    %2810 = vdwg.mxu0
    %2811 = vmatprep.subr.bf16.mxu0 %v2639
    %2812 = vmatpush1.bf16.msra.mxu0 %v2638
    %2813 = vmatprep.subr.bf16.mxu0 %v2635
    %2814 = vmatpush1.bf16.msra.mxu0 %v2634
    %2815 = vmatprep.subr.bf16.mxu0 %v2631
    %2816 = vmatpush1.bf16.msra.mxu0 %v2630
    %2817 = vmatprep.subr.bf16.mxu0 %v2627
    %2818 = vmatpush1.bf16.msra.mxu0 %v2626
    %2819 = vmatprep.subr.bf16.mxu0 %v2623
    %2820 = vmatpush1.bf16.msra.mxu0 %v2622
    %2821 = vmatprep.subr.bf16.mxu0 %v2619
    %2822 = vmatpush1.bf16.msra.mxu0 %v2618
    %2823 = vmatprep.subr.bf16.mxu0 %v2615
    %2824 = vmatpush1.bf16.msra.mxu0 %v2614
    %2825 = vmatprep.subr.bf16.mxu0 %v2611
    %2826 = vmatpush1.bf16.msra.mxu0 %v2610
    %2827 = vmatprep.subr.bf16.mxu0 0
    %2828 = vmatpush2.bf16.msra.mxu0 0
    %2829 = vmatprep.subr.bf16.mxu0 0
    %2830 = vmatpush2.bf16.msra.mxu0 0
    %2831 = vmatprep.subr.bf16.mxu0 0
    %2832 = vmatpush2.bf16.msra.mxu0 0
    %2833 = vmatprep.subr.bf16.mxu0 0
    %2834 = vmatpush2.bf16.msra.mxu0 0
    %2835 = vmatprep.subr.bf16.mxu0 0
    %2836 = vmatpush2.bf16.msra.mxu0 0
    %2837 = vmatprep.subr.bf16.mxu0 0
    %2838 = vmatpush2.bf16.msra.mxu0 0
    %2839 = vmatprep.subr.bf16.mxu0 0
    %2840 = vmatpush2.bf16.msra.mxu0 0
    %2841 = vmatprep.subr.bf16.mxu0 0
    %2842 = vmatpush2.bf16.msra.mxu0 0
    %2843 = vmatprep.mubr.bf16.mxu0 0
    %2844 = vmatmul.mubr.bf16.gmra.mxu0 %v2151
    %v2845 = vpop.f32.mrf.mxu0
    %v2846 = vadd.f32 %v2773, %v2845
    %v2847 = vpop.f32.mrf.mxu0
    %v2848 = vadd.f32 %v2775, %v2847
    %v2849 = vpop.f32.mrf.mxu0
    %v2850 = vadd.f32 %v2777, %v2849
    %v2851 = vpop.f32.mrf.mxu0
    %v2852 = vadd.f32 %v2779, %v2851
    %2853 = vmatprep.mubr.bf16.mxu0 0
    %2854 = vmatmul.mubr.bf16.gmra.mxu0 %v2154
    %v2855 = vpop.f32.mrf.mxu0
    %v2856 = vadd.f32 %v2783, %v2855
    %v2857 = vpop.f32.mrf.mxu0
    %v2858 = vadd.f32 %v2785, %v2857
    %v2859 = vpop.f32.mrf.mxu0
    %v2860 = vadd.f32 %v2787, %v2859
    %v2861 = vpop.f32.mrf.mxu0
    %v2862 = vadd.f32 %v2789, %v2861
    %2863 = vmatprep.mubr.bf16.mxu0 0
    %2864 = vmatmul.mubr.bf16.gmra.mxu0 %v2157
    %v2865 = vpop.f32.mrf.mxu0
    %v2866 = vadd.f32 %v2793, %v2865
    %v2867 = vpop.f32.mrf.mxu0
    %v2868 = vadd.f32 %v2795, %v2867
    %v2869 = vpop.f32.mrf.mxu0
    %v2870 = vadd.f32 %v2797, %v2869
    %v2871 = vpop.f32.mrf.mxu0
    %v2872 = vadd.f32 %v2799, %v2871
    %2873 = vmatprep.mubr.bf16.mxu0 0
    %2874 = vmatmul.mubr.bf16.gmra.mxu0 %v2160
    %v2875 = vpop.f32.mrf.mxu0
    %v2876 = vadd.f32 %v2803, %v2875
    %v2877 = vpop.f32.mrf.mxu0
    %v2878 = vadd.f32 %v2805, %v2877
    %v2879 = vpop.f32.mrf.mxu0
    %v2880 = vadd.f32 %v2807, %v2879
    %v2881 = vpop.f32.mrf.mxu0
    %v2882 = vadd.f32 %v2809, %v2881
    %2883 = vdwg.mxu0
    %2884 = vmatprep.subr.bf16.mxu0 %v2577
    %2885 = vmatpush1.bf16.msra.mxu0 %v2576
    %2886 = vmatprep.subr.bf16.mxu0 %v2573
    %2887 = vmatpush1.bf16.msra.mxu0 %v2572
    %2888 = vmatprep.subr.bf16.mxu0 %v2569
    %2889 = vmatpush1.bf16.msra.mxu0 %v2568
    %2890 = vmatprep.subr.bf16.mxu0 %v2565
    %2891 = vmatpush1.bf16.msra.mxu0 %v2564
    %2892 = vmatprep.subr.bf16.mxu0 %v2561
    %2893 = vmatpush1.bf16.msra.mxu0 %v2560
    %2894 = vmatprep.subr.bf16.mxu0 %v2557
    %2895 = vmatpush1.bf16.msra.mxu0 %v2556
    %2896 = vmatprep.subr.bf16.mxu0 %v2553
    %2897 = vmatpush1.bf16.msra.mxu0 %v2552
    %2898 = vmatprep.subr.bf16.mxu0 %v2549
    %2899 = vmatpush1.bf16.msra.mxu0 %v2548
    %2900 = vmatprep.subr.bf16.mxu0 %v2609
    %2901 = vmatpush2.bf16.msra.mxu0 %v2608
    %2902 = vmatprep.subr.bf16.mxu0 %v2605
    %2903 = vmatpush2.bf16.msra.mxu0 %v2604
    %2904 = vmatprep.subr.bf16.mxu0 %v2601
    %2905 = vmatpush2.bf16.msra.mxu0 %v2600
    %2906 = vmatprep.subr.bf16.mxu0 %v2597
    %2907 = vmatpush2.bf16.msra.mxu0 %v2596
    %2908 = vmatprep.subr.bf16.mxu0 %v2593
    %2909 = vmatpush2.bf16.msra.mxu0 %v2592
    %2910 = vmatprep.subr.bf16.mxu0 %v2589
    %2911 = vmatpush2.bf16.msra.mxu0 %v2588
    %2912 = vmatprep.subr.bf16.mxu0 %v2585
    %2913 = vmatpush2.bf16.msra.mxu0 %v2584
    %2914 = vmatprep.subr.bf16.mxu0 %v2581
    %2915 = vmatpush2.bf16.msra.mxu0 %v2580
    %2916 = vmatprep.mubr.bf16.mxu0 %v2150
    %2917 = vmatmul.mubr.bf16.gmra.mxu0 %v2149
    %v2918 = vpop.f32.mrf.mxu0
    %v2919 = vadd.f32 0.0, %v2918
    %v2920 = vpop.f32.mrf.mxu0
    %v2921 = vadd.f32 0.0, %v2920
    %v2922 = vpop.f32.mrf.mxu0
    %v2923 = vadd.f32 0.0, %v2922
    %v2924 = vpop.f32.mrf.mxu0
    %v2925 = vadd.f32 0.0, %v2924
    %2926 = vmatprep.mubr.bf16.mxu0 %v2153
    %2927 = vmatmul.mubr.bf16.gmra.mxu0 %v2152
    %v2928 = vpop.f32.mrf.mxu0
    %v2929 = vadd.f32 0.0, %v2928
    %v2930 = vpop.f32.mrf.mxu0
    %v2931 = vadd.f32 0.0, %v2930
    %v2932 = vpop.f32.mrf.mxu0
    %v2933 = vadd.f32 0.0, %v2932
    %v2934 = vpop.f32.mrf.mxu0
    %v2935 = vadd.f32 0.0, %v2934
    %2936 = vmatprep.mubr.bf16.mxu0 %v2156
    %2937 = vmatmul.mubr.bf16.gmra.mxu0 %v2155
    %v2938 = vpop.f32.mrf.mxu0
    %v2939 = vadd.f32 0.0, %v2938
    %v2940 = vpop.f32.mrf.mxu0
    %v2941 = vadd.f32 0.0, %v2940
    %v2942 = vpop.f32.mrf.mxu0
    %v2943 = vadd.f32 0.0, %v2942
    %v2944 = vpop.f32.mrf.mxu0
    %v2945 = vadd.f32 0.0, %v2944
    %2946 = vmatprep.mubr.bf16.mxu0 %v2159
    %2947 = vmatmul.mubr.bf16.gmra.mxu0 %v2158
    %v2948 = vpop.f32.mrf.mxu0
    %v2949 = vadd.f32 0.0, %v2948
    %v2950 = vpop.f32.mrf.mxu0
    %v2951 = vadd.f32 0.0, %v2950
    %v2952 = vpop.f32.mrf.mxu0
    %v2953 = vadd.f32 0.0, %v2952
    %v2954 = vpop.f32.mrf.mxu0
    %v2955 = vadd.f32 0.0, %v2954
    %2956 = vdwg.mxu0
    %2957 = vmatprep.subr.bf16.mxu0 %v2641
    %2958 = vmatpush1.bf16.msra.mxu0 %v2640
    %2959 = vmatprep.subr.bf16.mxu0 %v2637
    %2960 = vmatpush1.bf16.msra.mxu0 %v2636
    %2961 = vmatprep.subr.bf16.mxu0 %v2633
    %2962 = vmatpush1.bf16.msra.mxu0 %v2632
    %2963 = vmatprep.subr.bf16.mxu0 %v2629
    %2964 = vmatpush1.bf16.msra.mxu0 %v2628
    %2965 = vmatprep.subr.bf16.mxu0 %v2625
    %2966 = vmatpush1.bf16.msra.mxu0 %v2624
    %2967 = vmatprep.subr.bf16.mxu0 %v2621
    %2968 = vmatpush1.bf16.msra.mxu0 %v2620
    %2969 = vmatprep.subr.bf16.mxu0 %v2617
    %2970 = vmatpush1.bf16.msra.mxu0 %v2616
    %2971 = vmatprep.subr.bf16.mxu0 %v2613
    %2972 = vmatpush1.bf16.msra.mxu0 %v2612
    %2973 = vmatprep.subr.bf16.mxu0 0
    %2974 = vmatpush2.bf16.msra.mxu0 0
    %2975 = vmatprep.subr.bf16.mxu0 0
    %2976 = vmatpush2.bf16.msra.mxu0 0
    %2977 = vmatprep.subr.bf16.mxu0 0
    %2978 = vmatpush2.bf16.msra.mxu0 0
    %2979 = vmatprep.subr.bf16.mxu0 0
    %2980 = vmatpush2.bf16.msra.mxu0 0
    %2981 = vmatprep.subr.bf16.mxu0 0
    %2982 = vmatpush2.bf16.msra.mxu0 0
    %2983 = vmatprep.subr.bf16.mxu0 0
    %2984 = vmatpush2.bf16.msra.mxu0 0
    %2985 = vmatprep.subr.bf16.mxu0 0
    %2986 = vmatpush2.bf16.msra.mxu0 0
    %2987 = vmatprep.subr.bf16.mxu0 0
    %2988 = vmatpush2.bf16.msra.mxu0 0
    %2989 = vmatprep.mubr.bf16.mxu0 0
    %2990 = vmatmul.mubr.bf16.gmra.mxu0 %v2151
    %v2991 = vpop.f32.mrf.mxu0
    %v2992 = vadd.f32 %v2919, %v2991
    %v2993 = vpop.f32.mrf.mxu0
    %v2994 = vadd.f32 %v2921, %v2993
    %v2995 = vpop.f32.mrf.mxu0
    %v2996 = vadd.f32 %v2923, %v2995
    %v2997 = vpop.f32.mrf.mxu0
    %v2998 = vadd.f32 %v2925, %v2997
    %2999 = vmatprep.mubr.bf16.mxu0 0
    %3000 = vmatmul.mubr.bf16.gmra.mxu0 %v2154
    %v3001 = vpop.f32.mrf.mxu0
    %v3002 = vadd.f32 %v2929, %v3001
    %v3003 = vpop.f32.mrf.mxu0
    %v3004 = vadd.f32 %v2931, %v3003
    %v3005 = vpop.f32.mrf.mxu0
    %v3006 = vadd.f32 %v2933, %v3005
    %v3007 = vpop.f32.mrf.mxu0
    %v3008 = vadd.f32 %v2935, %v3007
    %3009 = vmatprep.mubr.bf16.mxu0 0
    %3010 = vmatmul.mubr.bf16.gmra.mxu0 %v2157
    %v3011 = vpop.f32.mrf.mxu0
    %v3012 = vadd.f32 %v2939, %v3011
    %v3013 = vpop.f32.mrf.mxu0
    %v3014 = vadd.f32 %v2941, %v3013
    %v3015 = vpop.f32.mrf.mxu0
    %v3016 = vadd.f32 %v2943, %v3015
    %v3017 = vpop.f32.mrf.mxu0
    %v3018 = vadd.f32 %v2945, %v3017
    %3019 = vmatprep.mubr.bf16.mxu0 0
    %3020 = vmatmul.mubr.bf16.gmra.mxu0 %v2160
    %v3021 = vpop.f32.mrf.mxu0
    %v3022 = vadd.f32 %v2949, %v3021
    %v3023 = vpop.f32.mrf.mxu0
    %v3024 = vadd.f32 %v2951, %v3023
    %v3025 = vpop.f32.mrf.mxu0
    %v3026 = vadd.f32 %v2953, %v3025
    %v3027 = vpop.f32.mrf.mxu0
    %v3028 = vadd.f32 %v2955, %v3027
    %3029 = vdwg.mxu0
    %v3126 = vunpack.c.l.b16 %v2050
    %v3127 = vunpack.c.h.b16 %v2050
    %v3128 = vunpack.c.l.b16 %v2051
    %v3129 = vunpack.c.h.b16 %v2051
    %v3130 = vunpack.c.l.b16 %v2052
    %v3131 = vunpack.c.h.b16 %v2052
    %v3132 = vunpack.c.l.b16 %v2053
    %v3133 = vunpack.c.h.b16 %v2053
    %v3134 = vunpack.c.l.b16 %v2054
    %v3135 = vunpack.c.h.b16 %v2054
    %v3136 = vunpack.c.l.b16 %v2055
    %v3137 = vunpack.c.h.b16 %v2055
    %v3138 = vunpack.c.l.b16 %v2056
    %v3139 = vunpack.c.h.b16 %v2056
    %v3140 = vunpack.c.l.b16 %v2057
    %v3141 = vunpack.c.h.b16 %v2057
    %v3142 = vunpack.c.l.b16 %v2058
    %v3143 = vunpack.c.h.b16 %v2058
    %v3144 = vunpack.c.l.b16 %v2059
    %v3145 = vunpack.c.h.b16 %v2059
    %v3146 = vunpack.c.l.b16 %v2060
    %v3147 = vunpack.c.h.b16 %v2060
    %v3148 = vunpack.c.l.b16 %v2061
    %v3149 = vunpack.c.h.b16 %v2061
    %v3150 = vunpack.c.l.b16 %v2062
    %v3151 = vunpack.c.h.b16 %v2062
    %v3152 = vunpack.c.l.b16 %v2063
    %v3153 = vunpack.c.h.b16 %v2063
    %v3154 = vunpack.c.l.b16 %v2064
    %v3155 = vunpack.c.h.b16 %v2064
    %v3156 = vunpack.c.l.b16 %v2065
    %v3157 = vunpack.c.h.b16 %v2065
    %v3158 = vunpack.c.l.b16 %v2066
    %v3159 = vunpack.c.h.b16 %v2066
    %v3160 = vunpack.c.l.b16 %v2067
    %v3161 = vunpack.c.h.b16 %v2067
    %v3162 = vunpack.c.l.b16 %v2068
    %v3163 = vunpack.c.h.b16 %v2068
    %v3164 = vunpack.c.l.b16 %v2069
    %v3165 = vunpack.c.h.b16 %v2069
    %v3166 = vunpack.c.l.b16 %v2070
    %v3167 = vunpack.c.h.b16 %v2070
    %v3168 = vunpack.c.l.b16 %v2071
    %v3169 = vunpack.c.h.b16 %v2071
    %v3170 = vunpack.c.l.b16 %v2072
    %v3171 = vunpack.c.h.b16 %v2072
    %v3172 = vunpack.c.l.b16 %v2073
    %v3173 = vunpack.c.h.b16 %v2073
    %v3174 = vunpack.c.l.b16 %v2074
    %v3175 = vunpack.c.h.b16 %v2074
    %v3176 = vunpack.c.l.b16 %v2075
    %v3177 = vunpack.c.h.b16 %v2075
    %v3178 = vunpack.c.l.b16 %v2076
    %v3179 = vunpack.c.h.b16 %v2076
    %v3180 = vunpack.c.l.b16 %v2077
    %v3181 = vunpack.c.h.b16 %v2077
    %v3182 = vunpack.c.l.b16 %v2078
    %v3183 = vunpack.c.h.b16 %v2078
    %v3184 = vunpack.c.l.b16 %v2079
    %v3185 = vunpack.c.h.b16 %v2079
    %v3186 = vunpack.c.l.b16 %v2080
    %v3187 = vunpack.c.h.b16 %v2080
    %v3188 = vunpack.c.l.b16 %v2081
    %v3189 = vunpack.c.h.b16 %v2081
    %v3190 = vunpack.c.l.b16 %v2082
    %v3191 = vunpack.c.h.b16 %v2082
    %v3192 = vunpack.c.l.b16 %v2083
    %v3193 = vunpack.c.h.b16 %v2083
    %v3194 = vunpack.c.l.b16 %v2084
    %v3195 = vunpack.c.h.b16 %v2084
    %v3196 = vunpack.c.l.b16 %v2085
    %v3197 = vunpack.c.h.b16 %v2085
    %v3198 = vunpack.c.l.b16 %v2086
    %v3199 = vunpack.c.h.b16 %v2086
    %v3200 = vunpack.c.l.b16 %v2087
    %v3201 = vunpack.c.h.b16 %v2087
    %v3202 = vunpack.c.l.b16 %v2088
    %v3203 = vunpack.c.h.b16 %v2088
    %v3204 = vunpack.c.l.b16 %v2089
    %v3205 = vunpack.c.h.b16 %v2089
    %v3206 = vunpack.c.l.b16 %v2090
    %v3207 = vunpack.c.h.b16 %v2090
    %v3208 = vunpack.c.l.b16 %v2091
    %v3209 = vunpack.c.h.b16 %v2091
    %v3210 = vunpack.c.l.b16 %v2092
    %v3211 = vunpack.c.h.b16 %v2092
    %v3212 = vunpack.c.l.b16 %v2093
    %v3213 = vunpack.c.h.b16 %v2093
    %v3214 = vunpack.c.l.b16 %v2094
    %v3215 = vunpack.c.h.b16 %v2094
    %v3216 = vunpack.c.l.b16 %v2095
    %v3217 = vunpack.c.h.b16 %v2095
    %v3218 = vunpack.c.l.b16 %v2096
    %v3219 = vunpack.c.h.b16 %v2096
    %v3220 = vunpack.c.l.b16 %v2097
    %v3221 = vunpack.c.h.b16 %v2097
    %v3222 = vunpack.c.l.b16 %v2098
    %v3223 = vunpack.c.h.b16 %v2098
    %v3224 = vunpack.c.l.b16 %v2099
    %v3225 = vunpack.c.h.b16 %v2099
    %v3226 = vunpack.c.l.b16 %v2100
    %v3227 = vunpack.c.h.b16 %v2100
    %v3228 = vunpack.c.l.b16 %v2101
    %v3229 = vunpack.c.h.b16 %v2101
    %v3230 = vunpack.c.l.b16 %v2102
    %v3231 = vunpack.c.h.b16 %v2102
    %v3232 = vunpack.c.l.b16 %v2103
    %v3233 = vunpack.c.h.b16 %v2103
    %v3234 = vunpack.c.l.b16 %v2104
    %v3235 = vunpack.c.h.b16 %v2104
    %v3236 = vunpack.c.l.b16 %v2105
    %v3237 = vunpack.c.h.b16 %v2105
    %v3238 = vunpack.c.l.b16 %v2106
    %v3239 = vunpack.c.h.b16 %v2106
    %v3240 = vunpack.c.l.b16 %v2107
    %v3241 = vunpack.c.h.b16 %v2107
    %v3242 = vunpack.c.l.b16 %v2108
    %v3243 = vunpack.c.h.b16 %v2108
    %v3244 = vunpack.c.l.b16 %v2109
    %v3245 = vunpack.c.h.b16 %v2109
    %v3246 = vunpack.c.l.b16 %v2110
    %v3247 = vunpack.c.h.b16 %v2110
    %v3248 = vunpack.c.l.b16 %v2111
    %v3249 = vunpack.c.h.b16 %v2111
    %v3250 = vunpack.c.l.b16 %v2112
    %v3251 = vunpack.c.h.b16 %v2112
    %v3252 = vunpack.c.l.b16 %v2113
    %v3253 = vunpack.c.h.b16 %v2113
    %v3254 = vunpack.c.l.b16 %v2114
    %v3255 = vunpack.c.h.b16 %v2114
    %v3256 = vunpack.c.l.b16 %v2115
    %v3257 = vunpack.c.h.b16 %v2115
    %v3258 = vunpack.c.l.b16 %v2116
    %v3259 = vunpack.c.h.b16 %v2116
    %v3260 = vunpack.c.l.b16 %v2117
    %v3261 = vunpack.c.h.b16 %v2117
    %v3262 = vunpack.c.l.b16 %v2118
    %v3263 = vunpack.c.h.b16 %v2118
    %v3264 = vunpack.c.l.b16 %v2119
    %v3265 = vunpack.c.h.b16 %v2119
    %v3266 = vunpack.c.l.b16 %v2120
    %v3267 = vunpack.c.h.b16 %v2120
    %v3268 = vunpack.c.l.b16 %v2121
    %v3269 = vunpack.c.h.b16 %v2121
    %v3270 = vunpack.c.l.b16 %v2122
    %v3271 = vunpack.c.h.b16 %v2122
    %v3272 = vunpack.c.l.b16 %v2123
    %v3273 = vunpack.c.h.b16 %v2123
    %v3274 = vunpack.c.l.b16 %v2124
    %v3275 = vunpack.c.h.b16 %v2124
    %v3276 = vunpack.c.l.b16 %v2125
    %v3277 = vunpack.c.h.b16 %v2125
    %v3278 = vunpack.c.l.b16 %v2126
    %v3279 = vunpack.c.h.b16 %v2126
    %v3280 = vunpack.c.l.b16 %v2127
    %v3281 = vunpack.c.h.b16 %v2127
    %v3282 = vunpack.c.l.b16 %v2128
    %v3283 = vunpack.c.h.b16 %v2128
    %v3284 = vunpack.c.l.b16 %v2129
    %v3285 = vunpack.c.h.b16 %v2129
    %v3286 = vunpack.c.l.b16 %v2130
    %v3287 = vunpack.c.h.b16 %v2130
    %v3288 = vunpack.c.l.b16 %v2131
    %v3289 = vunpack.c.h.b16 %v2131
    %v3290 = vunpack.c.l.b16 %v2132
    %v3291 = vunpack.c.h.b16 %v2132
    %v3292 = vunpack.c.l.b16 %v2133
    %v3293 = vunpack.c.h.b16 %v2133
    %v3294 = vunpack.c.l.b16 %v2134
    %v3295 = vunpack.c.h.b16 %v2134
    %v3296 = vunpack.c.l.b16 %v2135
    %v3297 = vunpack.c.h.b16 %v2135
    %v3298 = vunpack.c.l.b16 %v2136
    %v3299 = vunpack.c.h.b16 %v2136
    %v3300 = vunpack.c.l.b16 %v2137
    %v3301 = vunpack.c.h.b16 %v2137
    %v3302 = vunpack.c.l.b16 %v2138
    %v3303 = vunpack.c.h.b16 %v2138
    %v3304 = vunpack.c.l.b16 %v2139
    %v3305 = vunpack.c.h.b16 %v2139
    %v3306 = vunpack.c.l.b16 %v2140
    %v3307 = vunpack.c.h.b16 %v2140
    %v3308 = vunpack.c.l.b16 %v2141
    %v3309 = vunpack.c.h.b16 %v2141
    %v3310 = vunpack.c.l.b16 %v2142
    %v3311 = vunpack.c.h.b16 %v2142
    %v3312 = vunpack.c.l.b16 %v2143
    %v3313 = vunpack.c.h.b16 %v2143
    %v3314 = vunpack.c.l.b16 %v2144
    %v3315 = vunpack.c.h.b16 %v2144
    %v3316 = vunpack.c.l.b16 %v2145
    %v3317 = vunpack.c.h.b16 %v2145
    %v3318 = vpack.c.b16 %v3130, %v3126
    %v3319 = vpack.c.b16 %v3131, %v3127
    %v3320 = vpack.c.b16 %v3132, %v3128
    %v3321 = vpack.c.b16 %v3133, %v3129
    %v3322 = vpack.c.b16 %v3138, %v3134
    %v3323 = vpack.c.b16 %v3139, %v3135
    %v3324 = vpack.c.b16 %v3140, %v3136
    %v3325 = vpack.c.b16 %v3141, %v3137
    %v3326 = vpack.c.b16 %v3146, %v3142
    %v3327 = vpack.c.b16 %v3147, %v3143
    %v3328 = vpack.c.b16 %v3148, %v3144
    %v3329 = vpack.c.b16 %v3149, %v3145
    %v3330 = vpack.c.b16 %v3154, %v3150
    %v3331 = vpack.c.b16 %v3155, %v3151
    %v3332 = vpack.c.b16 %v3156, %v3152
    %v3333 = vpack.c.b16 %v3157, %v3153
    %v3334 = vpack.c.b16 %v3162, %v3158
    %v3335 = vpack.c.b16 %v3163, %v3159
    %v3336 = vpack.c.b16 %v3164, %v3160
    %v3337 = vpack.c.b16 %v3165, %v3161
    %v3338 = vpack.c.b16 %v3170, %v3166
    %v3339 = vpack.c.b16 %v3171, %v3167
    %v3340 = vpack.c.b16 %v3172, %v3168
    %v3341 = vpack.c.b16 %v3173, %v3169
    %v3342 = vpack.c.b16 %v3178, %v3174
    %v3343 = vpack.c.b16 %v3179, %v3175
    %v3344 = vpack.c.b16 %v3180, %v3176
    %v3345 = vpack.c.b16 %v3181, %v3177
    %v3346 = vpack.c.b16 %v3186, %v3182
    %v3347 = vpack.c.b16 %v3187, %v3183
    %v3348 = vpack.c.b16 %v3188, %v3184
    %v3349 = vpack.c.b16 %v3189, %v3185
    %v3350 = vpack.c.b16 %v3194, %v3190
    %v3351 = vpack.c.b16 %v3195, %v3191
    %v3352 = vpack.c.b16 %v3196, %v3192
    %v3353 = vpack.c.b16 %v3197, %v3193
    %v3354 = vpack.c.b16 %v3202, %v3198
    %v3355 = vpack.c.b16 %v3203, %v3199
    %v3356 = vpack.c.b16 %v3204, %v3200
    %v3357 = vpack.c.b16 %v3205, %v3201
    %v3358 = vpack.c.b16 %v3210, %v3206
    %v3359 = vpack.c.b16 %v3211, %v3207
    %v3360 = vpack.c.b16 %v3212, %v3208
    %v3361 = vpack.c.b16 %v3213, %v3209
    %v3362 = vpack.c.b16 %v3218, %v3214
    %v3363 = vpack.c.b16 %v3219, %v3215
    %v3364 = vpack.c.b16 %v3220, %v3216
    %v3365 = vpack.c.b16 %v3221, %v3217
    %v3366 = vpack.c.b16 %v3226, %v3222
    %v3367 = vpack.c.b16 %v3227, %v3223
    %v3368 = vpack.c.b16 %v3228, %v3224
    %v3369 = vpack.c.b16 %v3229, %v3225
    %v3370 = vpack.c.b16 %v3234, %v3230
    %v3371 = vpack.c.b16 %v3235, %v3231
    %v3372 = vpack.c.b16 %v3236, %v3232
    %v3373 = vpack.c.b16 %v3237, %v3233
    %v3374 = vpack.c.b16 %v3242, %v3238
    %v3375 = vpack.c.b16 %v3243, %v3239
    %v3376 = vpack.c.b16 %v3244, %v3240
    %v3377 = vpack.c.b16 %v3245, %v3241
    %v3378 = vpack.c.b16 %v3250, %v3246
    %v3379 = vpack.c.b16 %v3251, %v3247
    %v3380 = vpack.c.b16 %v3252, %v3248
    %v3381 = vpack.c.b16 %v3253, %v3249
    %v3382 = vpack.c.b16 %v3258, %v3254
    %v3383 = vpack.c.b16 %v3259, %v3255
    %v3384 = vpack.c.b16 %v3260, %v3256
    %v3385 = vpack.c.b16 %v3261, %v3257
    %v3386 = vpack.c.b16 %v3266, %v3262
    %v3387 = vpack.c.b16 %v3267, %v3263
    %v3388 = vpack.c.b16 %v3268, %v3264
    %v3389 = vpack.c.b16 %v3269, %v3265
    %v3390 = vpack.c.b16 %v3274, %v3270
    %v3391 = vpack.c.b16 %v3275, %v3271
    %v3392 = vpack.c.b16 %v3276, %v3272
    %v3393 = vpack.c.b16 %v3277, %v3273
    %v3394 = vpack.c.b16 %v3282, %v3278
    %v3395 = vpack.c.b16 %v3283, %v3279
    %v3396 = vpack.c.b16 %v3284, %v3280
    %v3397 = vpack.c.b16 %v3285, %v3281
    %v3398 = vpack.c.b16 %v3290, %v3286
    %v3399 = vpack.c.b16 %v3291, %v3287
    %v3400 = vpack.c.b16 %v3292, %v3288
    %v3401 = vpack.c.b16 %v3293, %v3289
    %v3402 = vpack.c.b16 %v3298, %v3294
    %v3403 = vpack.c.b16 %v3299, %v3295
    %v3404 = vpack.c.b16 %v3300, %v3296
    %v3405 = vpack.c.b16 %v3301, %v3297
    %v3406 = vpack.c.b16 %v3306, %v3302
    %v3407 = vpack.c.b16 %v3307, %v3303
    %v3408 = vpack.c.b16 %v3308, %v3304
    %v3409 = vpack.c.b16 %v3309, %v3305
    %v3410 = vpack.c.b16 %v3314, %v3310
    %v3411 = vpack.c.b16 %v3315, %v3311
    %v3412 = vpack.c.b16 %v3316, %v3312
    %v3413 = vpack.c.b16 %v3317, %v3313
    %3510 = vmatprep.subr.bf16.mxu0 %v3347
    %3511 = vmatpush1.bf16.msra.mxu0 %v3346
    %3512 = vmatprep.subr.bf16.mxu0 %v3343
    %3513 = vmatpush1.bf16.msra.mxu0 %v3342
    %3514 = vmatprep.subr.bf16.mxu0 %v3339
    %3515 = vmatpush1.bf16.msra.mxu0 %v3338
    %3516 = vmatprep.subr.bf16.mxu0 %v3335
    %3517 = vmatpush1.bf16.msra.mxu0 %v3334
    %3518 = vmatprep.subr.bf16.mxu0 %v3331
    %3519 = vmatpush1.bf16.msra.mxu0 %v3330
    %3520 = vmatprep.subr.bf16.mxu0 %v3327
    %3521 = vmatpush1.bf16.msra.mxu0 %v3326
    %3522 = vmatprep.subr.bf16.mxu0 %v3323
    %3523 = vmatpush1.bf16.msra.mxu0 %v3322
    %3524 = vmatprep.subr.bf16.mxu0 %v3319
    %3525 = vmatpush1.bf16.msra.mxu0 %v3318
    %3526 = vmatprep.subr.bf16.mxu0 %v3379
    %3527 = vmatpush2.bf16.msra.mxu0 %v3378
    %3528 = vmatprep.subr.bf16.mxu0 %v3375
    %3529 = vmatpush2.bf16.msra.mxu0 %v3374
    %3530 = vmatprep.subr.bf16.mxu0 %v3371
    %3531 = vmatpush2.bf16.msra.mxu0 %v3370
    %3532 = vmatprep.subr.bf16.mxu0 %v3367
    %3533 = vmatpush2.bf16.msra.mxu0 %v3366
    %3534 = vmatprep.subr.bf16.mxu0 %v3363
    %3535 = vmatpush2.bf16.msra.mxu0 %v3362
    %3536 = vmatprep.subr.bf16.mxu0 %v3359
    %3537 = vmatpush2.bf16.msra.mxu0 %v3358
    %3538 = vmatprep.subr.bf16.mxu0 %v3355
    %3539 = vmatpush2.bf16.msra.mxu0 %v3354
    %3540 = vmatprep.subr.bf16.mxu0 %v3351
    %3541 = vmatpush2.bf16.msra.mxu0 %v3350
    %3542 = vmatprep.mubr.bf16.mxu0 %v2039
    %3543 = vmatmul.mubr.bf16.gmra.mxu0 %v2038
    %v3544 = vpop.f32.mrf.mxu0
    %v3545 = vadd.f32 %v2846, %v3544
    %v3546 = vpop.f32.mrf.mxu0
    %v3547 = vadd.f32 %v2848, %v3546
    %v3548 = vpop.f32.mrf.mxu0
    %v3549 = vadd.f32 %v2850, %v3548
    %v3550 = vpop.f32.mrf.mxu0
    %v3551 = vadd.f32 %v2852, %v3550
    %3552 = vmatprep.mubr.bf16.mxu0 %v2042
    %3553 = vmatmul.mubr.bf16.gmra.mxu0 %v2041
    %v3554 = vpop.f32.mrf.mxu0
    %v3555 = vadd.f32 %v2856, %v3554
    %v3556 = vpop.f32.mrf.mxu0
    %v3557 = vadd.f32 %v2858, %v3556
    %v3558 = vpop.f32.mrf.mxu0
    %v3559 = vadd.f32 %v2860, %v3558
    %v3560 = vpop.f32.mrf.mxu0
    %v3561 = vadd.f32 %v2862, %v3560
    %3562 = vmatprep.mubr.bf16.mxu0 %v2045
    %3563 = vmatmul.mubr.bf16.gmra.mxu0 %v2044
    %v3564 = vpop.f32.mrf.mxu0
    %v3565 = vadd.f32 %v2866, %v3564
    %v3566 = vpop.f32.mrf.mxu0
    %v3567 = vadd.f32 %v2868, %v3566
    %v3568 = vpop.f32.mrf.mxu0
    %v3569 = vadd.f32 %v2870, %v3568
    %v3570 = vpop.f32.mrf.mxu0
    %v3571 = vadd.f32 %v2872, %v3570
    %3572 = vmatprep.mubr.bf16.mxu0 %v2048
    %3573 = vmatmul.mubr.bf16.gmra.mxu0 %v2047
    %v3574 = vpop.f32.mrf.mxu0
    %v3575 = vadd.f32 %v2876, %v3574
    %v3576 = vpop.f32.mrf.mxu0
    %v3577 = vadd.f32 %v2878, %v3576
    %v3578 = vpop.f32.mrf.mxu0
    %v3579 = vadd.f32 %v2880, %v3578
    %v3580 = vpop.f32.mrf.mxu0
    %v3581 = vadd.f32 %v2882, %v3580
    %3582 = vdwg.mxu0
    %3583 = vmatprep.subr.bf16.mxu0 %v3411
    %3584 = vmatpush1.bf16.msra.mxu0 %v3410
    %3585 = vmatprep.subr.bf16.mxu0 %v3407
    %3586 = vmatpush1.bf16.msra.mxu0 %v3406
    %3587 = vmatprep.subr.bf16.mxu0 %v3403
    %3588 = vmatpush1.bf16.msra.mxu0 %v3402
    %3589 = vmatprep.subr.bf16.mxu0 %v3399
    %3590 = vmatpush1.bf16.msra.mxu0 %v3398
    %3591 = vmatprep.subr.bf16.mxu0 %v3395
    %3592 = vmatpush1.bf16.msra.mxu0 %v3394
    %3593 = vmatprep.subr.bf16.mxu0 %v3391
    %3594 = vmatpush1.bf16.msra.mxu0 %v3390
    %3595 = vmatprep.subr.bf16.mxu0 %v3387
    %3596 = vmatpush1.bf16.msra.mxu0 %v3386
    %3597 = vmatprep.subr.bf16.mxu0 %v3383
    %3598 = vmatpush1.bf16.msra.mxu0 %v3382
    %3599 = vmatprep.subr.bf16.mxu0 0
    %3600 = vmatpush2.bf16.msra.mxu0 0
    %3601 = vmatprep.subr.bf16.mxu0 0
    %3602 = vmatpush2.bf16.msra.mxu0 0
    %3603 = vmatprep.subr.bf16.mxu0 0
    %3604 = vmatpush2.bf16.msra.mxu0 0
    %3605 = vmatprep.subr.bf16.mxu0 0
    %3606 = vmatpush2.bf16.msra.mxu0 0
    %3607 = vmatprep.subr.bf16.mxu0 0
    %3608 = vmatpush2.bf16.msra.mxu0 0
    %3609 = vmatprep.subr.bf16.mxu0 0
    %3610 = vmatpush2.bf16.msra.mxu0 0
    %3611 = vmatprep.subr.bf16.mxu0 0
    %3612 = vmatpush2.bf16.msra.mxu0 0
    %3613 = vmatprep.subr.bf16.mxu0 0
    %3614 = vmatpush2.bf16.msra.mxu0 0
    %3615 = vmatprep.mubr.bf16.mxu0 0
    %3616 = vmatmul.mubr.bf16.gmra.mxu0 %v2040
    %v3617 = vpop.f32.mrf.mxu0
    %v3618 = vadd.f32 %v3545, %v3617
    %v3619 = vpop.f32.mrf.mxu0
    %v3620 = vadd.f32 %v3547, %v3619
    %v3621 = vpop.f32.mrf.mxu0
    %v3622 = vadd.f32 %v3549, %v3621
    %v3623 = vpop.f32.mrf.mxu0
    %v3624 = vadd.f32 %v3551, %v3623
    %3625 = vmatprep.mubr.bf16.mxu0 0
    %3626 = vmatmul.mubr.bf16.gmra.mxu0 %v2043
    %v3627 = vpop.f32.mrf.mxu0
    %v3628 = vadd.f32 %v3555, %v3627
    %v3629 = vpop.f32.mrf.mxu0
    %v3630 = vadd.f32 %v3557, %v3629
    %v3631 = vpop.f32.mrf.mxu0
    %v3632 = vadd.f32 %v3559, %v3631
    %v3633 = vpop.f32.mrf.mxu0
    %v3634 = vadd.f32 %v3561, %v3633
    %3635 = vmatprep.mubr.bf16.mxu0 0
    %3636 = vmatmul.mubr.bf16.gmra.mxu0 %v2046
    %v3637 = vpop.f32.mrf.mxu0
    %v3638 = vadd.f32 %v3565, %v3637
    %v3639 = vpop.f32.mrf.mxu0
    %v3640 = vadd.f32 %v3567, %v3639
    %v3641 = vpop.f32.mrf.mxu0
    %v3642 = vadd.f32 %v3569, %v3641
    %v3643 = vpop.f32.mrf.mxu0
    %v3644 = vadd.f32 %v3571, %v3643
    %3645 = vmatprep.mubr.bf16.mxu0 0
    %3646 = vmatmul.mubr.bf16.gmra.mxu0 %v2049
    %v3647 = vpop.f32.mrf.mxu0
    %v3648 = vadd.f32 %v3575, %v3647
    %v3649 = vpop.f32.mrf.mxu0
    %v3650 = vadd.f32 %v3577, %v3649
    %v3651 = vpop.f32.mrf.mxu0
    %v3652 = vadd.f32 %v3579, %v3651
    %v3653 = vpop.f32.mrf.mxu0
    %v3654 = vadd.f32 %v3581, %v3653
    %3655 = vdwg.mxu0
    %3656 = vmatprep.subr.bf16.mxu0 %v3349
    %3657 = vmatpush1.bf16.msra.mxu0 %v3348
    %3658 = vmatprep.subr.bf16.mxu0 %v3345
    %3659 = vmatpush1.bf16.msra.mxu0 %v3344
    %3660 = vmatprep.subr.bf16.mxu0 %v3341
    %3661 = vmatpush1.bf16.msra.mxu0 %v3340
    %3662 = vmatprep.subr.bf16.mxu0 %v3337
    %3663 = vmatpush1.bf16.msra.mxu0 %v3336
    %3664 = vmatprep.subr.bf16.mxu0 %v3333
    %3665 = vmatpush1.bf16.msra.mxu0 %v3332
    %3666 = vmatprep.subr.bf16.mxu0 %v3329
    %3667 = vmatpush1.bf16.msra.mxu0 %v3328
    %3668 = vmatprep.subr.bf16.mxu0 %v3325
    %3669 = vmatpush1.bf16.msra.mxu0 %v3324
    %3670 = vmatprep.subr.bf16.mxu0 %v3321
    %3671 = vmatpush1.bf16.msra.mxu0 %v3320
    %3672 = vmatprep.subr.bf16.mxu0 %v3381
    %3673 = vmatpush2.bf16.msra.mxu0 %v3380
    %3674 = vmatprep.subr.bf16.mxu0 %v3377
    %3675 = vmatpush2.bf16.msra.mxu0 %v3376
    %3676 = vmatprep.subr.bf16.mxu0 %v3373
    %3677 = vmatpush2.bf16.msra.mxu0 %v3372
    %3678 = vmatprep.subr.bf16.mxu0 %v3369
    %3679 = vmatpush2.bf16.msra.mxu0 %v3368
    %3680 = vmatprep.subr.bf16.mxu0 %v3365
    %3681 = vmatpush2.bf16.msra.mxu0 %v3364
    %3682 = vmatprep.subr.bf16.mxu0 %v3361
    %3683 = vmatpush2.bf16.msra.mxu0 %v3360
    %3684 = vmatprep.subr.bf16.mxu0 %v3357
    %3685 = vmatpush2.bf16.msra.mxu0 %v3356
    %3686 = vmatprep.subr.bf16.mxu0 %v3353
    %3687 = vmatpush2.bf16.msra.mxu0 %v3352
    %3688 = vmatprep.mubr.bf16.mxu0 %v2039
    %3689 = vmatmul.mubr.bf16.gmra.mxu0 %v2038
    %v3690 = vpop.f32.mrf.mxu0
    %v3691 = vadd.f32 %v2992, %v3690
    %v3692 = vpop.f32.mrf.mxu0
    %v3693 = vadd.f32 %v2994, %v3692
    %v3694 = vpop.f32.mrf.mxu0
    %v3695 = vadd.f32 %v2996, %v3694
    %v3696 = vpop.f32.mrf.mxu0
    %v3697 = vadd.f32 %v2998, %v3696
    %3698 = vmatprep.mubr.bf16.mxu0 %v2042
    %3699 = vmatmul.mubr.bf16.gmra.mxu0 %v2041
    %v3700 = vpop.f32.mrf.mxu0
    %v3701 = vadd.f32 %v3002, %v3700
    %v3702 = vpop.f32.mrf.mxu0
    %v3703 = vadd.f32 %v3004, %v3702
    %v3704 = vpop.f32.mrf.mxu0
    %v3705 = vadd.f32 %v3006, %v3704
    %v3706 = vpop.f32.mrf.mxu0
    %v3707 = vadd.f32 %v3008, %v3706
    %3708 = vmatprep.mubr.bf16.mxu0 %v2045
    %3709 = vmatmul.mubr.bf16.gmra.mxu0 %v2044
    %v3710 = vpop.f32.mrf.mxu0
    %v3711 = vadd.f32 %v3012, %v3710
    %v3712 = vpop.f32.mrf.mxu0
    %v3713 = vadd.f32 %v3014, %v3712
    %v3714 = vpop.f32.mrf.mxu0
    %v3715 = vadd.f32 %v3016, %v3714
    %v3716 = vpop.f32.mrf.mxu0
    %v3717 = vadd.f32 %v3018, %v3716
    %3718 = vmatprep.mubr.bf16.mxu0 %v2048
    %3719 = vmatmul.mubr.bf16.gmra.mxu0 %v2047
    %v3720 = vpop.f32.mrf.mxu0
    %v3721 = vadd.f32 %v3022, %v3720
    %v3722 = vpop.f32.mrf.mxu0
    %v3723 = vadd.f32 %v3024, %v3722
    %v3724 = vpop.f32.mrf.mxu0
    %v3725 = vadd.f32 %v3026, %v3724
    %v3726 = vpop.f32.mrf.mxu0
    %v3727 = vadd.f32 %v3028, %v3726
    %3728 = vdwg.mxu0
    %3729 = vmatprep.subr.bf16.mxu0 %v3413
    %3730 = vmatpush1.bf16.msra.mxu0 %v3412
    %3731 = vmatprep.subr.bf16.mxu0 %v3409
    %3732 = vmatpush1.bf16.msra.mxu0 %v3408
    %3733 = vmatprep.subr.bf16.mxu0 %v3405
    %3734 = vmatpush1.bf16.msra.mxu0 %v3404
    %3735 = vmatprep.subr.bf16.mxu0 %v3401
    %3736 = vmatpush1.bf16.msra.mxu0 %v3400
    %3737 = vmatprep.subr.bf16.mxu0 %v3397
    %3738 = vmatpush1.bf16.msra.mxu0 %v3396
    %3739 = vmatprep.subr.bf16.mxu0 %v3393
    %3740 = vmatpush1.bf16.msra.mxu0 %v3392
    %3741 = vmatprep.subr.bf16.mxu0 %v3389
    %3742 = vmatpush1.bf16.msra.mxu0 %v3388
    %3743 = vmatprep.subr.bf16.mxu0 %v3385
    %3744 = vmatpush1.bf16.msra.mxu0 %v3384
    %3745 = vmatprep.subr.bf16.mxu0 0
    %3746 = vmatpush2.bf16.msra.mxu0 0
    %3747 = vmatprep.subr.bf16.mxu0 0
    %3748 = vmatpush2.bf16.msra.mxu0 0
    %3749 = vmatprep.subr.bf16.mxu0 0
    %3750 = vmatpush2.bf16.msra.mxu0 0
    %3751 = vmatprep.subr.bf16.mxu0 0
    %3752 = vmatpush2.bf16.msra.mxu0 0
    %3753 = vmatprep.subr.bf16.mxu0 0
    %3754 = vmatpush2.bf16.msra.mxu0 0
    %3755 = vmatprep.subr.bf16.mxu0 0
    %3756 = vmatpush2.bf16.msra.mxu0 0
    %3757 = vmatprep.subr.bf16.mxu0 0
    %3758 = vmatpush2.bf16.msra.mxu0 0
    %3759 = vmatprep.subr.bf16.mxu0 0
    %3760 = vmatpush2.bf16.msra.mxu0 0
    %3761 = vmatprep.mubr.bf16.mxu0 0
    %3762 = vmatmul.mubr.bf16.gmra.mxu0 %v2040
    %v3763 = vpop.f32.mrf.mxu0
    %v3764 = vadd.f32 %v3691, %v3763
    %v3765 = vpop.f32.mrf.mxu0
    %v3766 = vadd.f32 %v3693, %v3765
    %v3767 = vpop.f32.mrf.mxu0
    %v3768 = vadd.f32 %v3695, %v3767
    %v3769 = vpop.f32.mrf.mxu0
    %v3770 = vadd.f32 %v3697, %v3769
    %3771 = vmatprep.mubr.bf16.mxu0 0
    %3772 = vmatmul.mubr.bf16.gmra.mxu0 %v2043
    %v3773 = vpop.f32.mrf.mxu0
    %v3774 = vadd.f32 %v3701, %v3773
    %v3775 = vpop.f32.mrf.mxu0
    %v3776 = vadd.f32 %v3703, %v3775
    %v3777 = vpop.f32.mrf.mxu0
    %v3778 = vadd.f32 %v3705, %v3777
    %v3779 = vpop.f32.mrf.mxu0
    %v3780 = vadd.f32 %v3707, %v3779
    %3781 = vmatprep.mubr.bf16.mxu0 0
    %3782 = vmatmul.mubr.bf16.gmra.mxu0 %v2046
    %v3783 = vpop.f32.mrf.mxu0
    %v3784 = vadd.f32 %v3711, %v3783
    %v3785 = vpop.f32.mrf.mxu0
    %v3786 = vadd.f32 %v3713, %v3785
    %v3787 = vpop.f32.mrf.mxu0
    %v3788 = vadd.f32 %v3715, %v3787
    %v3789 = vpop.f32.mrf.mxu0
    %v3790 = vadd.f32 %v3717, %v3789
    %3791 = vmatprep.mubr.bf16.mxu0 0
    %3792 = vmatmul.mubr.bf16.gmra.mxu0 %v2049
    %v3793 = vpop.f32.mrf.mxu0
    %v3794 = vadd.f32 %v3721, %v3793
    %v3795 = vpop.f32.mrf.mxu0
    %v3796 = vadd.f32 %v3723, %v3795
    %v3797 = vpop.f32.mrf.mxu0
    %v3798 = vadd.f32 %v3725, %v3797
    %v3799 = vpop.f32.mrf.mxu0
    %v3800 = vadd.f32 %v3727, %v3799
    %3801 = vdwg.mxu0
    %v3802 = vld [vmem:[#allocation2 + $0x30] sm:$0xff]
    %v3803 = vld [vmem:[#allocation2 + $0x38] sm:$0xff]
    %v3804 = vld [vmem:[#allocation2 + $0x40] sm:$0xff]
    %v3805 = vld [vmem:[#allocation2 + $0x48] sm:$0xff]
    %v3806 = vld [vmem:[#allocation2 + $0x50] sm:$0xff]
    %v3807 = vld [vmem:[#allocation2 + $0x58] sm:$0xff]
    %v3808 = vld [vmem:[#allocation2 + $0x60] sm:$0xff]
    %v3809 = vld [vmem:[#allocation2 + $0x68] sm:$0xff]
    %v3810 = vld [vmem:[#allocation2 + $0x70] sm:$0xff]
    %v3811 = vld [vmem:[#allocation2 + $0x78] sm:$0xff]
    %v3812 = vld [vmem:[#allocation2 + $0x80] sm:$0xff]
    %v3813 = vld [vmem:[#allocation2 + $0x88] sm:$0xff]
    %v3814 = vld [vmem:[#allocation2 + $0x90] sm:$0xff]
    %v3815 = vld [vmem:[#allocation2 + $0x98] sm:$0xff]
    %v3816 = vld [vmem:[#allocation2 + $0xa0] sm:$0xff]
    %v3817 = vld [vmem:[#allocation2 + $0xa8] sm:$0xff]
    %v3818 = vld [vmem:[#allocation2 + $0xb0] sm:$0xff]
    %v3819 = vld [vmem:[#allocation2 + $0xb8] sm:$0xff]
    %v3820 = vld [vmem:[#allocation2 + $0xc0] sm:$0xff]
    %v3821 = vld [vmem:[#allocation2 + $0xc8] sm:$0xff]
    %v3822 = vld [vmem:[#allocation2 + $0xd0] sm:$0xff]
    %v3823 = vld [vmem:[#allocation2 + $0xd8] sm:$0xff]
    %v3824 = vld [vmem:[#allocation2 + $0xe0] sm:$0xff]
    %v3825 = vld [vmem:[#allocation2 + $0xe8] sm:$0xff]
    %v3826 = vpack.c.bf16 %v3805, %v3802
    %v3827 = vpack.c.bf16 %v3806, %v3803
    %v3828 = vpack.c.bf16 %v3807, %v3804
    %v3829 = vpack.c.bf16 %v3811, %v3808
    %v3830 = vpack.c.bf16 %v3812, %v3809
    %v3831 = vpack.c.bf16 %v3813, %v3810
    %v3832 = vpack.c.bf16 %v3817, %v3814
    %v3833 = vpack.c.bf16 %v3818, %v3815
    %v3834 = vpack.c.bf16 %v3819, %v3816
    %v3835 = vpack.c.bf16 %v3823, %v3820
    %v3836 = vpack.c.bf16 %v3824, %v3821
    %v3837 = vpack.c.bf16 %v3825, %v3822
    %s3838 = scalar_lea.vmem [#allocation7], 1536
    %v3839 = vld [vmem:[%s3838] sm:$0xff]
    %v3840 = vld [vmem:[%s3838 + $0x8] sm:$0xff]
    %v3841 = vld [vmem:[%s3838 + $0x10] sm:$0xff]
    %v3842 = vld [vmem:[%s3838 + $0x18] sm:$0xff]
    %v3843 = vld [vmem:[%s3838 + $0x20] sm:$0xff]
    %v3844 = vld [vmem:[%s3838 + $0x28] sm:$0xff]
    %v3845 = vld [vmem:[%s3838 + $0x30] sm:$0xff]
    %v3846 = vld [vmem:[%s3838 + $0x38] sm:$0xff]
    %v3847 = vld [vmem:[%s3838 + $0x40] sm:$0xff]
    %v3848 = vld [vmem:[%s3838 + $0x48] sm:$0xff]
    %v3849 = vld [vmem:[%s3838 + $0x50] sm:$0xff]
    %v3850 = vld [vmem:[%s3838 + $0x58] sm:$0xff]
    %v3851 = vld [vmem:[%s3838 + $0x60] sm:$0xff]
    %v3852 = vld [vmem:[%s3838 + $0x68] sm:$0xff]
    %v3853 = vld [vmem:[%s3838 + $0x70] sm:$0xff]
    %v3854 = vld [vmem:[%s3838 + $0x78] sm:$0xff]
    %v3855 = vld [vmem:[%s3838 + $0x80] sm:$0xff]
    %v3856 = vld [vmem:[%s3838 + $0x88] sm:$0xff]
    %v3857 = vld [vmem:[%s3838 + $0x90] sm:$0xff]
    %v3858 = vld [vmem:[%s3838 + $0x98] sm:$0xff]
    %v3859 = vld [vmem:[%s3838 + $0xa0] sm:$0xff]
    %v3860 = vld [vmem:[%s3838 + $0xa8] sm:$0xff]
    %v3861 = vld [vmem:[%s3838 + $0xb0] sm:$0xff]
    %v3862 = vld [vmem:[%s3838 + $0xb8] sm:$0xff]
    %v3863 = vld [vmem:[%s3838 + $0xc0] sm:$0xff]
    %v3864 = vld [vmem:[%s3838 + $0xc8] sm:$0xff]
    %v3865 = vld [vmem:[%s3838 + $0xd0] sm:$0xff]
    %v3866 = vld [vmem:[%s3838 + $0xd8] sm:$0xff]
    %v3867 = vld [vmem:[%s3838 + $0xe0] sm:$0xff]
    %v3868 = vld [vmem:[%s3838 + $0xe8] sm:$0xff]
    %v3869 = vld [vmem:[%s3838 + $0xf0] sm:$0xff]
    %v3870 = vld [vmem:[%s3838 + $0xf8] sm:$0xff]
    %v3871 = vld [vmem:[%s3838 + $0x100] sm:$0xff]
    %v3872 = vld [vmem:[%s3838 + $0x108] sm:$0xff]
    %v3873 = vld [vmem:[%s3838 + $0x110] sm:$0xff]
    %v3874 = vld [vmem:[%s3838 + $0x118] sm:$0xff]
    %v3875 = vld [vmem:[%s3838 + $0x120] sm:$0xff]
    %v3876 = vld [vmem:[%s3838 + $0x128] sm:$0xff]
    %v3877 = vld [vmem:[%s3838 + $0x130] sm:$0xff]
    %v3878 = vld [vmem:[%s3838 + $0x138] sm:$0xff]
    %v3879 = vld [vmem:[%s3838 + $0x140] sm:$0xff]
    %v3880 = vld [vmem:[%s3838 + $0x148] sm:$0xff]
    %v3881 = vld [vmem:[%s3838 + $0x150] sm:$0xff]
    %v3882 = vld [vmem:[%s3838 + $0x158] sm:$0xff]
    %v3883 = vld [vmem:[%s3838 + $0x160] sm:$0xff]
    %v3884 = vld [vmem:[%s3838 + $0x168] sm:$0xff]
    %v3885 = vld [vmem:[%s3838 + $0x170] sm:$0xff]
    %v3886 = vld [vmem:[%s3838 + $0x178] sm:$0xff]
    %v3887 = vld [vmem:[%s3838 + $0x180] sm:$0xff]
    %v3888 = vld [vmem:[%s3838 + $0x188] sm:$0xff]
    %v3889 = vld [vmem:[%s3838 + $0x190] sm:$0xff]
    %v3890 = vld [vmem:[%s3838 + $0x198] sm:$0xff]
    %v3891 = vld [vmem:[%s3838 + $0x1a0] sm:$0xff]
    %v3892 = vld [vmem:[%s3838 + $0x1a8] sm:$0xff]
    %v3893 = vld [vmem:[%s3838 + $0x1b0] sm:$0xff]
    %v3894 = vld [vmem:[%s3838 + $0x1b8] sm:$0xff]
    %v3895 = vld [vmem:[%s3838 + $0x1c0] sm:$0xff]
    %v3896 = vld [vmem:[%s3838 + $0x1c8] sm:$0xff]
    %v3897 = vld [vmem:[%s3838 + $0x1d0] sm:$0xff]
    %v3898 = vld [vmem:[%s3838 + $0x1d8] sm:$0xff]
    %v3899 = vld [vmem:[%s3838 + $0x1e0] sm:$0xff]
    %v3900 = vld [vmem:[%s3838 + $0x1e8] sm:$0xff]
    %v3901 = vld [vmem:[%s3838 + $0x1f0] sm:$0xff]
    %v3902 = vld [vmem:[%s3838 + $0x1f8] sm:$0xff]
    %v3903 = vld [vmem:[%s3838 + $0x200] sm:$0xff]
    %v3904 = vld [vmem:[%s3838 + $0x208] sm:$0xff]
    %v3905 = vld [vmem:[%s3838 + $0x210] sm:$0xff]
    %v3906 = vld [vmem:[%s3838 + $0x218] sm:$0xff]
    %v3907 = vld [vmem:[%s3838 + $0x220] sm:$0xff]
    %v3908 = vld [vmem:[%s3838 + $0x228] sm:$0xff]
    %v3909 = vld [vmem:[%s3838 + $0x230] sm:$0xff]
    %v3910 = vld [vmem:[%s3838 + $0x238] sm:$0xff]
    %v3911 = vld [vmem:[%s3838 + $0x240] sm:$0xff]
    %v3912 = vld [vmem:[%s3838 + $0x248] sm:$0xff]
    %v3913 = vld [vmem:[%s3838 + $0x250] sm:$0xff]
    %v3914 = vld [vmem:[%s3838 + $0x258] sm:$0xff]
    %v3915 = vld [vmem:[%s3838 + $0x260] sm:$0xff]
    %v3916 = vld [vmem:[%s3838 + $0x268] sm:$0xff]
    %v3917 = vld [vmem:[%s3838 + $0x270] sm:$0xff]
    %v3918 = vld [vmem:[%s3838 + $0x278] sm:$0xff]
    %v3919 = vld [vmem:[%s3838 + $0x280] sm:$0xff]
    %v3920 = vld [vmem:[%s3838 + $0x288] sm:$0xff]
    %v3921 = vld [vmem:[%s3838 + $0x290] sm:$0xff]
    %v3922 = vld [vmem:[%s3838 + $0x298] sm:$0xff]
    %v3923 = vld [vmem:[%s3838 + $0x2a0] sm:$0xff]
    %v3924 = vld [vmem:[%s3838 + $0x2a8] sm:$0xff]
    %v3925 = vld [vmem:[%s3838 + $0x2b0] sm:$0xff]
    %v3926 = vld [vmem:[%s3838 + $0x2b8] sm:$0xff]
    %v3927 = vld [vmem:[%s3838 + $0x2c0] sm:$0xff]
    %v3928 = vld [vmem:[%s3838 + $0x2c8] sm:$0xff]
    %v3929 = vld [vmem:[%s3838 + $0x2d0] sm:$0xff]
    %v3930 = vld [vmem:[%s3838 + $0x2d8] sm:$0xff]
    %v3931 = vld [vmem:[%s3838 + $0x2e0] sm:$0xff]
    %v3932 = vld [vmem:[%s3838 + $0x2e8] sm:$0xff]
    %v3933 = vld [vmem:[%s3838 + $0x2f0] sm:$0xff]
    %v3934 = vld [vmem:[%s3838 + $0x2f8] sm:$0xff]
    %v4031 = vunpack.c.l.b16 %v3839
    %v4032 = vunpack.c.h.b16 %v3839
    %v4033 = vunpack.c.l.b16 %v3840
    %v4034 = vunpack.c.h.b16 %v3840
    %v4035 = vunpack.c.l.b16 %v3841
    %v4036 = vunpack.c.h.b16 %v3841
    %v4037 = vunpack.c.l.b16 %v3842
    %v4038 = vunpack.c.h.b16 %v3842
    %v4039 = vunpack.c.l.b16 %v3843
    %v4040 = vunpack.c.h.b16 %v3843
    %v4041 = vunpack.c.l.b16 %v3844
    %v4042 = vunpack.c.h.b16 %v3844
    %v4043 = vunpack.c.l.b16 %v3845
    %v4044 = vunpack.c.h.b16 %v3845
    %v4045 = vunpack.c.l.b16 %v3846
    %v4046 = vunpack.c.h.b16 %v3846
    %v4047 = vunpack.c.l.b16 %v3847
    %v4048 = vunpack.c.h.b16 %v3847
    %v4049 = vunpack.c.l.b16 %v3848
    %v4050 = vunpack.c.h.b16 %v3848
    %v4051 = vunpack.c.l.b16 %v3849
    %v4052 = vunpack.c.h.b16 %v3849
    %v4053 = vunpack.c.l.b16 %v3850
    %v4054 = vunpack.c.h.b16 %v3850
    %v4055 = vunpack.c.l.b16 %v3851
    %v4056 = vunpack.c.h.b16 %v3851
    %v4057 = vunpack.c.l.b16 %v3852
    %v4058 = vunpack.c.h.b16 %v3852
    %v4059 = vunpack.c.l.b16 %v3853
    %v4060 = vunpack.c.h.b16 %v3853
    %v4061 = vunpack.c.l.b16 %v3854
    %v4062 = vunpack.c.h.b16 %v3854
    %v4063 = vunpack.c.l.b16 %v3855
    %v4064 = vunpack.c.h.b16 %v3855
    %v4065 = vunpack.c.l.b16 %v3856
    %v4066 = vunpack.c.h.b16 %v3856
    %v4067 = vunpack.c.l.b16 %v3857
    %v4068 = vunpack.c.h.b16 %v3857
    %v4069 = vunpack.c.l.b16 %v3858
    %v4070 = vunpack.c.h.b16 %v3858
    %v4071 = vunpack.c.l.b16 %v3859
    %v4072 = vunpack.c.h.b16 %v3859
    %v4073 = vunpack.c.l.b16 %v3860
    %v4074 = vunpack.c.h.b16 %v3860
    %v4075 = vunpack.c.l.b16 %v3861
    %v4076 = vunpack.c.h.b16 %v3861
    %v4077 = vunpack.c.l.b16 %v3862
    %v4078 = vunpack.c.h.b16 %v3862
    %v4079 = vunpack.c.l.b16 %v3863
    %v4080 = vunpack.c.h.b16 %v3863
    %v4081 = vunpack.c.l.b16 %v3864
    %v4082 = vunpack.c.h.b16 %v3864
    %v4083 = vunpack.c.l.b16 %v3865
    %v4084 = vunpack.c.h.b16 %v3865
    %v4085 = vunpack.c.l.b16 %v3866
    %v4086 = vunpack.c.h.b16 %v3866
    %v4087 = vunpack.c.l.b16 %v3867
    %v4088 = vunpack.c.h.b16 %v3867
    %v4089 = vunpack.c.l.b16 %v3868
    %v4090 = vunpack.c.h.b16 %v3868
    %v4091 = vunpack.c.l.b16 %v3869
    %v4092 = vunpack.c.h.b16 %v3869
    %v4093 = vunpack.c.l.b16 %v3870
    %v4094 = vunpack.c.h.b16 %v3870
    %v4095 = vunpack.c.l.b16 %v3871
    %v4096 = vunpack.c.h.b16 %v3871
    %v4097 = vunpack.c.l.b16 %v3872
    %v4098 = vunpack.c.h.b16 %v3872
    %v4099 = vunpack.c.l.b16 %v3873
    %v4100 = vunpack.c.h.b16 %v3873
    %v4101 = vunpack.c.l.b16 %v3874
    %v4102 = vunpack.c.h.b16 %v3874
    %v4103 = vunpack.c.l.b16 %v3875
    %v4104 = vunpack.c.h.b16 %v3875
    %v4105 = vunpack.c.l.b16 %v3876
    %v4106 = vunpack.c.h.b16 %v3876
    %v4107 = vunpack.c.l.b16 %v3877
    %v4108 = vunpack.c.h.b16 %v3877
    %v4109 = vunpack.c.l.b16 %v3878
    %v4110 = vunpack.c.h.b16 %v3878
    %v4111 = vunpack.c.l.b16 %v3879
    %v4112 = vunpack.c.h.b16 %v3879
    %v4113 = vunpack.c.l.b16 %v3880
    %v4114 = vunpack.c.h.b16 %v3880
    %v4115 = vunpack.c.l.b16 %v3881
    %v4116 = vunpack.c.h.b16 %v3881
    %v4117 = vunpack.c.l.b16 %v3882
    %v4118 = vunpack.c.h.b16 %v3882
    %v4119 = vunpack.c.l.b16 %v3883
    %v4120 = vunpack.c.h.b16 %v3883
    %v4121 = vunpack.c.l.b16 %v3884
    %v4122 = vunpack.c.h.b16 %v3884
    %v4123 = vunpack.c.l.b16 %v3885
    %v4124 = vunpack.c.h.b16 %v3885
    %v4125 = vunpack.c.l.b16 %v3886
    %v4126 = vunpack.c.h.b16 %v3886
    %v4127 = vunpack.c.l.b16 %v3887
    %v4128 = vunpack.c.h.b16 %v3887
    %v4129 = vunpack.c.l.b16 %v3888
    %v4130 = vunpack.c.h.b16 %v3888
    %v4131 = vunpack.c.l.b16 %v3889
    %v4132 = vunpack.c.h.b16 %v3889
    %v4133 = vunpack.c.l.b16 %v3890
    %v4134 = vunpack.c.h.b16 %v3890
    %v4135 = vunpack.c.l.b16 %v3891
    %v4136 = vunpack.c.h.b16 %v3891
    %v4137 = vunpack.c.l.b16 %v3892
    %v4138 = vunpack.c.h.b16 %v3892
    %v4139 = vunpack.c.l.b16 %v3893
    %v4140 = vunpack.c.h.b16 %v3893
    %v4141 = vunpack.c.l.b16 %v3894
    %v4142 = vunpack.c.h.b16 %v3894
    %v4143 = vunpack.c.l.b16 %v3895
    %v4144 = vunpack.c.h.b16 %v3895
    %v4145 = vunpack.c.l.b16 %v3896
    %v4146 = vunpack.c.h.b16 %v3896
    %v4147 = vunpack.c.l.b16 %v3897
    %v4148 = vunpack.c.h.b16 %v3897
    %v4149 = vunpack.c.l.b16 %v3898
    %v4150 = vunpack.c.h.b16 %v3898
    %v4151 = vunpack.c.l.b16 %v3899
    %v4152 = vunpack.c.h.b16 %v3899
    %v4153 = vunpack.c.l.b16 %v3900
    %v4154 = vunpack.c.h.b16 %v3900
    %v4155 = vunpack.c.l.b16 %v3901
    %v4156 = vunpack.c.h.b16 %v3901
    %v4157 = vunpack.c.l.b16 %v3902
    %v4158 = vunpack.c.h.b16 %v3902
    %v4159 = vunpack.c.l.b16 %v3903
    %v4160 = vunpack.c.h.b16 %v3903
    %v4161 = vunpack.c.l.b16 %v3904
    %v4162 = vunpack.c.h.b16 %v3904
    %v4163 = vunpack.c.l.b16 %v3905
    %v4164 = vunpack.c.h.b16 %v3905
    %v4165 = vunpack.c.l.b16 %v3906
    %v4166 = vunpack.c.h.b16 %v3906
    %v4167 = vunpack.c.l.b16 %v3907
    %v4168 = vunpack.c.h.b16 %v3907
    %v4169 = vunpack.c.l.b16 %v3908
    %v4170 = vunpack.c.h.b16 %v3908
    %v4171 = vunpack.c.l.b16 %v3909
    %v4172 = vunpack.c.h.b16 %v3909
    %v4173 = vunpack.c.l.b16 %v3910
    %v4174 = vunpack.c.h.b16 %v3910
    %v4175 = vunpack.c.l.b16 %v3911
    %v4176 = vunpack.c.h.b16 %v3911
    %v4177 = vunpack.c.l.b16 %v3912
    %v4178 = vunpack.c.h.b16 %v3912
    %v4179 = vunpack.c.l.b16 %v3913
    %v4180 = vunpack.c.h.b16 %v3913
    %v4181 = vunpack.c.l.b16 %v3914
    %v4182 = vunpack.c.h.b16 %v3914
    %v4183 = vunpack.c.l.b16 %v3915
    %v4184 = vunpack.c.h.b16 %v3915
    %v4185 = vunpack.c.l.b16 %v3916
    %v4186 = vunpack.c.h.b16 %v3916
    %v4187 = vunpack.c.l.b16 %v3917
    %v4188 = vunpack.c.h.b16 %v3917
    %v4189 = vunpack.c.l.b16 %v3918
    %v4190 = vunpack.c.h.b16 %v3918
    %v4191 = vunpack.c.l.b16 %v3919
    %v4192 = vunpack.c.h.b16 %v3919
    %v4193 = vunpack.c.l.b16 %v3920
    %v4194 = vunpack.c.h.b16 %v3920
    %v4195 = vunpack.c.l.b16 %v3921
    %v4196 = vunpack.c.h.b16 %v3921
    %v4197 = vunpack.c.l.b16 %v3922
    %v4198 = vunpack.c.h.b16 %v3922
    %v4199 = vunpack.c.l.b16 %v3923
    %v4200 = vunpack.c.h.b16 %v3923
    %v4201 = vunpack.c.l.b16 %v3924
    %v4202 = vunpack.c.h.b16 %v3924
    %v4203 = vunpack.c.l.b16 %v3925
    %v4204 = vunpack.c.h.b16 %v3925
    %v4205 = vunpack.c.l.b16 %v3926
    %v4206 = vunpack.c.h.b16 %v3926
    %v4207 = vunpack.c.l.b16 %v3927
    %v4208 = vunpack.c.h.b16 %v3927
    %v4209 = vunpack.c.l.b16 %v3928
    %v4210 = vunpack.c.h.b16 %v3928
    %v4211 = vunpack.c.l.b16 %v3929
    %v4212 = vunpack.c.h.b16 %v3929
    %v4213 = vunpack.c.l.b16 %v3930
    %v4214 = vunpack.c.h.b16 %v3930
    %v4215 = vunpack.c.l.b16 %v3931
    %v4216 = vunpack.c.h.b16 %v3931
    %v4217 = vunpack.c.l.b16 %v3932
    %v4218 = vunpack.c.h.b16 %v3932
    %v4219 = vunpack.c.l.b16 %v3933
    %v4220 = vunpack.c.h.b16 %v3933
    %v4221 = vunpack.c.l.b16 %v3934
    %v4222 = vunpack.c.h.b16 %v3934
    %v4223 = vpack.c.b16 %v4035, %v4031
    %v4224 = vpack.c.b16 %v4036, %v4032
    %v4225 = vpack.c.b16 %v4037, %v4033
    %v4226 = vpack.c.b16 %v4038, %v4034
    %v4227 = vpack.c.b16 %v4043, %v4039
    %v4228 = vpack.c.b16 %v4044, %v4040
    %v4229 = vpack.c.b16 %v4045, %v4041
    %v4230 = vpack.c.b16 %v4046, %v4042
    %v4231 = vpack.c.b16 %v4051, %v4047
    %v4232 = vpack.c.b16 %v4052, %v4048
    %v4233 = vpack.c.b16 %v4053, %v4049
    %v4234 = vpack.c.b16 %v4054, %v4050
    %v4235 = vpack.c.b16 %v4059, %v4055
    %v4236 = vpack.c.b16 %v4060, %v4056
    %v4237 = vpack.c.b16 %v4061, %v4057
    %v4238 = vpack.c.b16 %v4062, %v4058
    %v4239 = vpack.c.b16 %v4067, %v4063
    %v4240 = vpack.c.b16 %v4068, %v4064
    %v4241 = vpack.c.b16 %v4069, %v4065
    %v4242 = vpack.c.b16 %v4070, %v4066
    %v4243 = vpack.c.b16 %v4075, %v4071
    %v4244 = vpack.c.b16 %v4076, %v4072
    %v4245 = vpack.c.b16 %v4077, %v4073
    %v4246 = vpack.c.b16 %v4078, %v4074
    %v4247 = vpack.c.b16 %v4083, %v4079
    %v4248 = vpack.c.b16 %v4084, %v4080
    %v4249 = vpack.c.b16 %v4085, %v4081
    %v4250 = vpack.c.b16 %v4086, %v4082
    %v4251 = vpack.c.b16 %v4091, %v4087
    %v4252 = vpack.c.b16 %v4092, %v4088
    %v4253 = vpack.c.b16 %v4093, %v4089
    %v4254 = vpack.c.b16 %v4094, %v4090
    %v4255 = vpack.c.b16 %v4099, %v4095
    %v4256 = vpack.c.b16 %v4100, %v4096
    %v4257 = vpack.c.b16 %v4101, %v4097
    %v4258 = vpack.c.b16 %v4102, %v4098
    %v4259 = vpack.c.b16 %v4107, %v4103
    %v4260 = vpack.c.b16 %v4108, %v4104
    %v4261 = vpack.c.b16 %v4109, %v4105
    %v4262 = vpack.c.b16 %v4110, %v4106
    %v4263 = vpack.c.b16 %v4115, %v4111
    %v4264 = vpack.c.b16 %v4116, %v4112
    %v4265 = vpack.c.b16 %v4117, %v4113
    %v4266 = vpack.c.b16 %v4118, %v4114
    %v4267 = vpack.c.b16 %v4123, %v4119
    %v4268 = vpack.c.b16 %v4124, %v4120
    %v4269 = vpack.c.b16 %v4125, %v4121
    %v4270 = vpack.c.b16 %v4126, %v4122
    %v4271 = vpack.c.b16 %v4131, %v4127
    %v4272 = vpack.c.b16 %v4132, %v4128
    %v4273 = vpack.c.b16 %v4133, %v4129
    %v4274 = vpack.c.b16 %v4134, %v4130
    %v4275 = vpack.c.b16 %v4139, %v4135
    %v4276 = vpack.c.b16 %v4140, %v4136
    %v4277 = vpack.c.b16 %v4141, %v4137
    %v4278 = vpack.c.b16 %v4142, %v4138
    %v4279 = vpack.c.b16 %v4147, %v4143
    %v4280 = vpack.c.b16 %v4148, %v4144
    %v4281 = vpack.c.b16 %v4149, %v4145
    %v4282 = vpack.c.b16 %v4150, %v4146
    %v4283 = vpack.c.b16 %v4155, %v4151
    %v4284 = vpack.c.b16 %v4156, %v4152
    %v4285 = vpack.c.b16 %v4157, %v4153
    %v4286 = vpack.c.b16 %v4158, %v4154
    %v4287 = vpack.c.b16 %v4163, %v4159
    %v4288 = vpack.c.b16 %v4164, %v4160
    %v4289 = vpack.c.b16 %v4165, %v4161
    %v4290 = vpack.c.b16 %v4166, %v4162
    %v4291 = vpack.c.b16 %v4171, %v4167
    %v4292 = vpack.c.b16 %v4172, %v4168
    %v4293 = vpack.c.b16 %v4173, %v4169
    %v4294 = vpack.c.b16 %v4174, %v4170
    %v4295 = vpack.c.b16 %v4179, %v4175
    %v4296 = vpack.c.b16 %v4180, %v4176
    %v4297 = vpack.c.b16 %v4181, %v4177
    %v4298 = vpack.c.b16 %v4182, %v4178
    %v4299 = vpack.c.b16 %v4187, %v4183
    %v4300 = vpack.c.b16 %v4188, %v4184
    %v4301 = vpack.c.b16 %v4189, %v4185
    %v4302 = vpack.c.b16 %v4190, %v4186
    %v4303 = vpack.c.b16 %v4195, %v4191
    %v4304 = vpack.c.b16 %v4196, %v4192
    %v4305 = vpack.c.b16 %v4197, %v4193
    %v4306 = vpack.c.b16 %v4198, %v4194
    %v4307 = vpack.c.b16 %v4203, %v4199
    %v4308 = vpack.c.b16 %v4204, %v4200
    %v4309 = vpack.c.b16 %v4205, %v4201
    %v4310 = vpack.c.b16 %v4206, %v4202
    %v4311 = vpack.c.b16 %v4211, %v4207
    %v4312 = vpack.c.b16 %v4212, %v4208
    %v4313 = vpack.c.b16 %v4213, %v4209
    %v4314 = vpack.c.b16 %v4214, %v4210
    %v4315 = vpack.c.b16 %v4219, %v4215
    %v4316 = vpack.c.b16 %v4220, %v4216
    %v4317 = vpack.c.b16 %v4221, %v4217
    %v4318 = vpack.c.b16 %v4222, %v4218
    %4415 = vmatprep.subr.bf16.mxu0 %v4252
    %4416 = vmatpush1.bf16.msra.mxu0 %v4251
    %4417 = vmatprep.subr.bf16.mxu0 %v4248
    %4418 = vmatpush1.bf16.msra.mxu0 %v4247
    %4419 = vmatprep.subr.bf16.mxu0 %v4244
    %4420 = vmatpush1.bf16.msra.mxu0 %v4243
    %4421 = vmatprep.subr.bf16.mxu0 %v4240
    %4422 = vmatpush1.bf16.msra.mxu0 %v4239
    %4423 = vmatprep.subr.bf16.mxu0 %v4236
    %4424 = vmatpush1.bf16.msra.mxu0 %v4235
    %4425 = vmatprep.subr.bf16.mxu0 %v4232
    %4426 = vmatpush1.bf16.msra.mxu0 %v4231
    %4427 = vmatprep.subr.bf16.mxu0 %v4228
    %4428 = vmatpush1.bf16.msra.mxu0 %v4227
    %4429 = vmatprep.subr.bf16.mxu0 %v4224
    %4430 = vmatpush1.bf16.msra.mxu0 %v4223
    %4431 = vmatprep.subr.bf16.mxu0 %v4284
    %4432 = vmatpush2.bf16.msra.mxu0 %v4283
    %4433 = vmatprep.subr.bf16.mxu0 %v4280
    %4434 = vmatpush2.bf16.msra.mxu0 %v4279
    %4435 = vmatprep.subr.bf16.mxu0 %v4276
    %4436 = vmatpush2.bf16.msra.mxu0 %v4275
    %4437 = vmatprep.subr.bf16.mxu0 %v4272
    %4438 = vmatpush2.bf16.msra.mxu0 %v4271
    %4439 = vmatprep.subr.bf16.mxu0 %v4268
    %4440 = vmatpush2.bf16.msra.mxu0 %v4267
    %4441 = vmatprep.subr.bf16.mxu0 %v4264
    %4442 = vmatpush2.bf16.msra.mxu0 %v4263
    %4443 = vmatprep.subr.bf16.mxu0 %v4260
    %4444 = vmatpush2.bf16.msra.mxu0 %v4259
    %4445 = vmatprep.subr.bf16.mxu0 %v4256
    %4446 = vmatpush2.bf16.msra.mxu0 %v4255
    %4447 = vmatprep.mubr.bf16.mxu0 %v3827
    %4448 = vmatmul.mubr.bf16.gmra.mxu0 %v3826
    %v4449 = vpop.f32.mrf.mxu0
    %v4450 = vadd.f32 0.0, %v4449
    %v4451 = vpop.f32.mrf.mxu0
    %v4452 = vadd.f32 0.0, %v4451
    %v4453 = vpop.f32.mrf.mxu0
    %v4454 = vadd.f32 0.0, %v4453
    %v4455 = vpop.f32.mrf.mxu0
    %v4456 = vadd.f32 0.0, %v4455
    %4457 = vmatprep.mubr.bf16.mxu0 %v3830
    %4458 = vmatmul.mubr.bf16.gmra.mxu0 %v3829
    %v4459 = vpop.f32.mrf.mxu0
    %v4460 = vadd.f32 0.0, %v4459
    %v4461 = vpop.f32.mrf.mxu0
    %v4462 = vadd.f32 0.0, %v4461
    %v4463 = vpop.f32.mrf.mxu0
    %v4464 = vadd.f32 0.0, %v4463
    %v4465 = vpop.f32.mrf.mxu0
    %v4466 = vadd.f32 0.0, %v4465
    %4467 = vmatprep.mubr.bf16.mxu0 %v3833
    %4468 = vmatmul.mubr.bf16.gmra.mxu0 %v3832
    %v4469 = vpop.f32.mrf.mxu0
    %v4470 = vadd.f32 0.0, %v4469
    %v4471 = vpop.f32.mrf.mxu0
    %v4472 = vadd.f32 0.0, %v4471
    %v4473 = vpop.f32.mrf.mxu0
    %v4474 = vadd.f32 0.0, %v4473
    %v4475 = vpop.f32.mrf.mxu0
    %v4476 = vadd.f32 0.0, %v4475
    %4477 = vmatprep.mubr.bf16.mxu0 %v3836
    %4478 = vmatmul.mubr.bf16.gmra.mxu0 %v3835
    %v4479 = vpop.f32.mrf.mxu0
    %v4480 = vadd.f32 0.0, %v4479
    %v4481 = vpop.f32.mrf.mxu0
    %v4482 = vadd.f32 0.0, %v4481
    %v4483 = vpop.f32.mrf.mxu0
    %v4484 = vadd.f32 0.0, %v4483
    %v4485 = vpop.f32.mrf.mxu0
    %v4486 = vadd.f32 0.0, %v4485
    %4487 = vdwg.mxu0
    %4488 = vmatprep.subr.bf16.mxu0 %v4316
    %4489 = vmatpush1.bf16.msra.mxu0 %v4315
    %4490 = vmatprep.subr.bf16.mxu0 %v4312
    %4491 = vmatpush1.bf16.msra.mxu0 %v4311
    %4492 = vmatprep.subr.bf16.mxu0 %v4308
    %4493 = vmatpush1.bf16.msra.mxu0 %v4307
    %4494 = vmatprep.subr.bf16.mxu0 %v4304
    %4495 = vmatpush1.bf16.msra.mxu0 %v4303
    %4496 = vmatprep.subr.bf16.mxu0 %v4300
    %4497 = vmatpush1.bf16.msra.mxu0 %v4299
    %4498 = vmatprep.subr.bf16.mxu0 %v4296
    %4499 = vmatpush1.bf16.msra.mxu0 %v4295
    %4500 = vmatprep.subr.bf16.mxu0 %v4292
    %4501 = vmatpush1.bf16.msra.mxu0 %v4291
    %4502 = vmatprep.subr.bf16.mxu0 %v4288
    %4503 = vmatpush1.bf16.msra.mxu0 %v4287
    %4504 = vmatprep.subr.bf16.mxu0 0
    %4505 = vmatpush2.bf16.msra.mxu0 0
    %4506 = vmatprep.subr.bf16.mxu0 0
    %4507 = vmatpush2.bf16.msra.mxu0 0
    %4508 = vmatprep.subr.bf16.mxu0 0
    %4509 = vmatpush2.bf16.msra.mxu0 0
    %4510 = vmatprep.subr.bf16.mxu0 0
    %4511 = vmatpush2.bf16.msra.mxu0 0
    %4512 = vmatprep.subr.bf16.mxu0 0
    %4513 = vmatpush2.bf16.msra.mxu0 0
    %4514 = vmatprep.subr.bf16.mxu0 0
    %4515 = vmatpush2.bf16.msra.mxu0 0
    %4516 = vmatprep.subr.bf16.mxu0 0
    %4517 = vmatpush2.bf16.msra.mxu0 0
    %4518 = vmatprep.subr.bf16.mxu0 0
    %4519 = vmatpush2.bf16.msra.mxu0 0
    %4520 = vmatprep.mubr.bf16.mxu0 0
    %4521 = vmatmul.mubr.bf16.gmra.mxu0 %v3828
    %v4522 = vpop.f32.mrf.mxu0
    %v4523 = vadd.f32 %v4450, %v4522
    %v4524 = vpop.f32.mrf.mxu0
    %v4525 = vadd.f32 %v4452, %v4524
    %v4526 = vpop.f32.mrf.mxu0
    %v4527 = vadd.f32 %v4454, %v4526
    %v4528 = vpop.f32.mrf.mxu0
    %v4529 = vadd.f32 %v4456, %v4528
    %4530 = vmatprep.mubr.bf16.mxu0 0
    %4531 = vmatmul.mubr.bf16.gmra.mxu0 %v3831
    %v4532 = vpop.f32.mrf.mxu0
    %v4533 = vadd.f32 %v4460, %v4532
    %v4534 = vpop.f32.mrf.mxu0
    %v4535 = vadd.f32 %v4462, %v4534
    %v4536 = vpop.f32.mrf.mxu0
    %v4537 = vadd.f32 %v4464, %v4536
    %v4538 = vpop.f32.mrf.mxu0
    %v4539 = vadd.f32 %v4466, %v4538
    %4540 = vmatprep.mubr.bf16.mxu0 0
    %4541 = vmatmul.mubr.bf16.gmra.mxu0 %v3834
    %v4542 = vpop.f32.mrf.mxu0
    %v4543 = vadd.f32 %v4470, %v4542
    %v4544 = vpop.f32.mrf.mxu0
    %v4545 = vadd.f32 %v4472, %v4544
    %v4546 = vpop.f32.mrf.mxu0
    %v4547 = vadd.f32 %v4474, %v4546
    %v4548 = vpop.f32.mrf.mxu0
    %v4549 = vadd.f32 %v4476, %v4548
    %4550 = vmatprep.mubr.bf16.mxu0 0
    %4551 = vmatmul.mubr.bf16.gmra.mxu0 %v3837
    %v4552 = vpop.f32.mrf.mxu0
    %v4553 = vadd.f32 %v4480, %v4552
    %v4554 = vpop.f32.mrf.mxu0
    %v4555 = vadd.f32 %v4482, %v4554
    %v4556 = vpop.f32.mrf.mxu0
    %v4557 = vadd.f32 %v4484, %v4556
    %v4558 = vpop.f32.mrf.mxu0
    %v4559 = vadd.f32 %v4486, %v4558
    %4560 = vdwg.mxu0
    %4561 = vmatprep.subr.bf16.mxu0 %v4254
    %4562 = vmatpush1.bf16.msra.mxu0 %v4253
    %4563 = vmatprep.subr.bf16.mxu0 %v4250
    %4564 = vmatpush1.bf16.msra.mxu0 %v4249
    %4565 = vmatprep.subr.bf16.mxu0 %v4246
    %4566 = vmatpush1.bf16.msra.mxu0 %v4245
    %4567 = vmatprep.subr.bf16.mxu0 %v4242
    %4568 = vmatpush1.bf16.msra.mxu0 %v4241
    %4569 = vmatprep.subr.bf16.mxu0 %v4238
    %4570 = vmatpush1.bf16.msra.mxu0 %v4237
    %4571 = vmatprep.subr.bf16.mxu0 %v4234
    %4572 = vmatpush1.bf16.msra.mxu0 %v4233
    %4573 = vmatprep.subr.bf16.mxu0 %v4230
    %4574 = vmatpush1.bf16.msra.mxu0 %v4229
    %4575 = vmatprep.subr.bf16.mxu0 %v4226
    %4576 = vmatpush1.bf16.msra.mxu0 %v4225
    %4577 = vmatprep.subr.bf16.mxu0 %v4286
    %4578 = vmatpush2.bf16.msra.mxu0 %v4285
    %4579 = vmatprep.subr.bf16.mxu0 %v4282
    %4580 = vmatpush2.bf16.msra.mxu0 %v4281
    %4581 = vmatprep.subr.bf16.mxu0 %v4278
    %4582 = vmatpush2.bf16.msra.mxu0 %v4277
    %4583 = vmatprep.subr.bf16.mxu0 %v4274
    %4584 = vmatpush2.bf16.msra.mxu0 %v4273
    %4585 = vmatprep.subr.bf16.mxu0 %v4270
    %4586 = vmatpush2.bf16.msra.mxu0 %v4269
    %4587 = vmatprep.subr.bf16.mxu0 %v4266
    %4588 = vmatpush2.bf16.msra.mxu0 %v4265
    %4589 = vmatprep.subr.bf16.mxu0 %v4262
    %4590 = vmatpush2.bf16.msra.mxu0 %v4261
    %4591 = vmatprep.subr.bf16.mxu0 %v4258
    %4592 = vmatpush2.bf16.msra.mxu0 %v4257
    %4593 = vmatprep.mubr.bf16.mxu0 %v3827
    %4594 = vmatmul.mubr.bf16.gmra.mxu0 %v3826
    %v4595 = vpop.f32.mrf.mxu0
    %v4596 = vadd.f32 0.0, %v4595
    %v4597 = vpop.f32.mrf.mxu0
    %v4598 = vadd.f32 0.0, %v4597
    %v4599 = vpop.f32.mrf.mxu0
    %v4600 = vadd.f32 0.0, %v4599
    %v4601 = vpop.f32.mrf.mxu0
    %v4602 = vadd.f32 0.0, %v4601
    %4603 = vmatprep.mubr.bf16.mxu0 %v3830
    %4604 = vmatmul.mubr.bf16.gmra.mxu0 %v3829
    %v4605 = vpop.f32.mrf.mxu0
    %v4606 = vadd.f32 0.0, %v4605
    %v4607 = vpop.f32.mrf.mxu0
    %v4608 = vadd.f32 0.0, %v4607
    %v4609 = vpop.f32.mrf.mxu0
    %v4610 = vadd.f32 0.0, %v4609
    %v4611 = vpop.f32.mrf.mxu0
    %v4612 = vadd.f32 0.0, %v4611
    %4613 = vmatprep.mubr.bf16.mxu0 %v3833
    %4614 = vmatmul.mubr.bf16.gmra.mxu0 %v3832
    %v4615 = vpop.f32.mrf.mxu0
    %v4616 = vadd.f32 0.0, %v4615
    %v4617 = vpop.f32.mrf.mxu0
    %v4618 = vadd.f32 0.0, %v4617
    %v4619 = vpop.f32.mrf.mxu0
    %v4620 = vadd.f32 0.0, %v4619
    %v4621 = vpop.f32.mrf.mxu0
    %v4622 = vadd.f32 0.0, %v4621
    %4623 = vmatprep.mubr.bf16.mxu0 %v3836
    %4624 = vmatmul.mubr.bf16.gmra.mxu0 %v3835
    %v4625 = vpop.f32.mrf.mxu0
    %v4626 = vadd.f32 0.0, %v4625
    %v4627 = vpop.f32.mrf.mxu0
    %v4628 = vadd.f32 0.0, %v4627
    %v4629 = vpop.f32.mrf.mxu0
    %v4630 = vadd.f32 0.0, %v4629
    %v4631 = vpop.f32.mrf.mxu0
    %v4632 = vadd.f32 0.0, %v4631
    %4633 = vdwg.mxu0
    %4634 = vmatprep.subr.bf16.mxu0 %v4318
    %4635 = vmatpush1.bf16.msra.mxu0 %v4317
    %4636 = vmatprep.subr.bf16.mxu0 %v4314
    %4637 = vmatpush1.bf16.msra.mxu0 %v4313
    %4638 = vmatprep.subr.bf16.mxu0 %v4310
    %4639 = vmatpush1.bf16.msra.mxu0 %v4309
    %4640 = vmatprep.subr.bf16.mxu0 %v4306
    %4641 = vmatpush1.bf16.msra.mxu0 %v4305
    %4642 = vmatprep.subr.bf16.mxu0 %v4302
    %4643 = vmatpush1.bf16.msra.mxu0 %v4301
    %4644 = vmatprep.subr.bf16.mxu0 %v4298
    %4645 = vmatpush1.bf16.msra.mxu0 %v4297
    %4646 = vmatprep.subr.bf16.mxu0 %v4294
    %4647 = vmatpush1.bf16.msra.mxu0 %v4293
    %4648 = vmatprep.subr.bf16.mxu0 %v4290
    %4649 = vmatpush1.bf16.msra.mxu0 %v4289
    %4650 = vmatprep.subr.bf16.mxu0 0
    %4651 = vmatpush2.bf16.msra.mxu0 0
    %4652 = vmatprep.subr.bf16.mxu0 0
    %4653 = vmatpush2.bf16.msra.mxu0 0
    %4654 = vmatprep.subr.bf16.mxu0 0
    %4655 = vmatpush2.bf16.msra.mxu0 0
    %4656 = vmatprep.subr.bf16.mxu0 0
    %4657 = vmatpush2.bf16.msra.mxu0 0
    %4658 = vmatprep.subr.bf16.mxu0 0
    %4659 = vmatpush2.bf16.msra.mxu0 0
    %4660 = vmatprep.subr.bf16.mxu0 0
    %4661 = vmatpush2.bf16.msra.mxu0 0
    %4662 = vmatprep.subr.bf16.mxu0 0
    %4663 = vmatpush2.bf16.msra.mxu0 0
    %4664 = vmatprep.subr.bf16.mxu0 0
    %4665 = vmatpush2.bf16.msra.mxu0 0
    %4666 = vmatprep.mubr.bf16.mxu0 0
    %4667 = vmatmul.mubr.bf16.gmra.mxu0 %v3828
    %v4668 = vpop.f32.mrf.mxu0
    %v4669 = vadd.f32 %v4596, %v4668
    %v4670 = vpop.f32.mrf.mxu0
    %v4671 = vadd.f32 %v4598, %v4670
    %v4672 = vpop.f32.mrf.mxu0
    %v4673 = vadd.f32 %v4600, %v4672
    %v4674 = vpop.f32.mrf.mxu0
    %v4675 = vadd.f32 %v4602, %v4674
    %4676 = vmatprep.mubr.bf16.mxu0 0
    %4677 = vmatmul.mubr.bf16.gmra.mxu0 %v3831
    %v4678 = vpop.f32.mrf.mxu0
    %v4679 = vadd.f32 %v4606, %v4678
    %v4680 = vpop.f32.mrf.mxu0
    %v4681 = vadd.f32 %v4608, %v4680
    %v4682 = vpop.f32.mrf.mxu0
    %v4683 = vadd.f32 %v4610, %v4682
    %v4684 = vpop.f32.mrf.mxu0
    %v4685 = vadd.f32 %v4612, %v4684
    %4686 = vmatprep.mubr.bf16.mxu0 0
    %4687 = vmatmul.mubr.bf16.gmra.mxu0 %v3834
    %v4688 = vpop.f32.mrf.mxu0
    %v4689 = vadd.f32 %v4616, %v4688
    %v4690 = vpop.f32.mrf.mxu0
    %v4691 = vadd.f32 %v4618, %v4690
    %v4692 = vpop.f32.mrf.mxu0
    %v4693 = vadd.f32 %v4620, %v4692
    %v4694 = vpop.f32.mrf.mxu0
    %v4695 = vadd.f32 %v4622, %v4694
    %4696 = vmatprep.mubr.bf16.mxu0 0
    %4697 = vmatmul.mubr.bf16.gmra.mxu0 %v3837
    %v4698 = vpop.f32.mrf.mxu0
    %v4699 = vadd.f32 %v4626, %v4698
    %v4700 = vpop.f32.mrf.mxu0
    %v4701 = vadd.f32 %v4628, %v4700
    %v4702 = vpop.f32.mrf.mxu0
    %v4703 = vadd.f32 %v4630, %v4702
    %v4704 = vpop.f32.mrf.mxu0
    %v4705 = vadd.f32 %v4632, %v4704
    %4706 = vdwg.mxu0
    %v4707 = vadd.f32 %v3618, %v4523
    %v4708 = vadd.f32 %v3620, %v4525
    %v4709 = vadd.f32 %v3764, %v4669
    %v4710 = vadd.f32 %v3766, %v4671
    %v4711 = vadd.f32 %v3622, %v4527
    %v4712 = vadd.f32 %v3624, %v4529
    %v4713 = vadd.f32 %v3768, %v4673
    %v4714 = vadd.f32 %v3770, %v4675
    %v4715 = vadd.f32 %v3628, %v4533
    %v4716 = vadd.f32 %v3630, %v4535
    %v4717 = vadd.f32 %v3774, %v4679
    %v4718 = vadd.f32 %v3776, %v4681
    %v4719 = vadd.f32 %v3632, %v4537
    %v4720 = vadd.f32 %v3634, %v4539
    %v4721 = vadd.f32 %v3778, %v4683
    %v4722 = vadd.f32 %v3780, %v4685
    %v4723 = vadd.f32 %v3638, %v4543
    %v4724 = vadd.f32 %v3640, %v4545
    %v4725 = vadd.f32 %v3784, %v4689
    %v4726 = vadd.f32 %v3786, %v4691
    %v4727 = vadd.f32 %v3642, %v4547
    %v4728 = vadd.f32 %v3644, %v4549
    %v4729 = vadd.f32 %v3788, %v4693
    %v4730 = vadd.f32 %v3790, %v4695
    %v4731 = vadd.f32 %v3648, %v4553
    %v4732 = vadd.f32 %v3650, %v4555
    %v4733 = vadd.f32 %v3794, %v4699
    %v4734 = vadd.f32 %v3796, %v4701
    %v4735 = vadd.f32 %v3652, %v4557
    %v4736 = vadd.f32 %v3654, %v4559
    %v4737 = vadd.f32 %v3798, %v4703
    %v4738 = vadd.f32 %v3800, %v4705
    %v4739 = vld [vmem:[#allocation2 + $0x48] sm:$0xff]
    %v4740 = vld [vmem:[#allocation2 + $0x50] sm:$0xff]
    %v4741 = vld [vmem:[#allocation2 + $0x58] sm:$0xff]
    %v4742 = vld [vmem:[#allocation2 + $0x60] sm:$0xff]
    %v4743 = vld [vmem:[#allocation2 + $0x68] sm:$0xff]
    %v4744 = vld [vmem:[#allocation2 + $0x70] sm:$0xff]
    %v4745 = vld [vmem:[#allocation2 + $0x78] sm:$0xff]
    %v4746 = vld [vmem:[#allocation2 + $0x80] sm:$0xff]
    %v4747 = vld [vmem:[#allocation2 + $0x88] sm:$0xff]
    %v4748 = vld [vmem:[#allocation2 + $0x90] sm:$0xff]
    %v4749 = vld [vmem:[#allocation2 + $0x98] sm:$0xff]
    %v4750 = vld [vmem:[#allocation2 + $0xa0] sm:$0xff]
    %v4751 = vld [vmem:[#allocation2 + $0xa8] sm:$0xff]
    %v4752 = vld [vmem:[#allocation2 + $0xb0] sm:$0xff]
    %v4753 = vld [vmem:[#allocation2 + $0xb8] sm:$0xff]
    %v4754 = vld [vmem:[#allocation2 + $0xc0] sm:$0xff]
    %v4755 = vld [vmem:[#allocation2 + $0xc8] sm:$0xff]
    %v4756 = vld [vmem:[#allocation2 + $0xd0] sm:$0xff]
    %v4757 = vld [vmem:[#allocation2 + $0xd8] sm:$0xff]
    %v4758 = vld [vmem:[#allocation2 + $0xe0] sm:$0xff]
    %v4759 = vld [vmem:[#allocation2 + $0xe8] sm:$0xff]
    %v4760 = vld [vmem:[#allocation2 + $0xf0] sm:$0xff]
    %v4761 = vld [vmem:[#allocation2 + $0xf8] sm:$0xff]
    %v4762 = vld [vmem:[#allocation2 + $0x100] sm:$0xff]
    %v4763 = vpack.c.bf16 %v4742, %v4739
    %v4764 = vpack.c.bf16 %v4743, %v4740
    %v4765 = vpack.c.bf16 %v4744, %v4741
    %v4766 = vpack.c.bf16 %v4748, %v4745
    %v4767 = vpack.c.bf16 %v4749, %v4746
    %v4768 = vpack.c.bf16 %v4750, %v4747
    %v4769 = vpack.c.bf16 %v4754, %v4751
    %v4770 = vpack.c.bf16 %v4755, %v4752
    %v4771 = vpack.c.bf16 %v4756, %v4753
    %v4772 = vpack.c.bf16 %v4760, %v4757
    %v4773 = vpack.c.bf16 %v4761, %v4758
    %v4774 = vpack.c.bf16 %v4762, %v4759
    %s4775 = scalar_lea.vmem [#allocation7], 2304
    %v4776 = vld [vmem:[%s4775] sm:$0xff]
    %v4777 = vld [vmem:[%s4775 + $0x8] sm:$0xff]
    %v4778 = vld [vmem:[%s4775 + $0x10] sm:$0xff]
    %v4779 = vld [vmem:[%s4775 + $0x18] sm:$0xff]
    %v4780 = vld [vmem:[%s4775 + $0x20] sm:$0xff]
    %v4781 = vld [vmem:[%s4775 + $0x28] sm:$0xff]
    %v4782 = vld [vmem:[%s4775 + $0x30] sm:$0xff]
    %v4783 = vld [vmem:[%s4775 + $0x38] sm:$0xff]
    %v4784 = vld [vmem:[%s4775 + $0x40] sm:$0xff]
    %v4785 = vld [vmem:[%s4775 + $0x48] sm:$0xff]
    %v4786 = vld [vmem:[%s4775 + $0x50] sm:$0xff]
    %v4787 = vld [vmem:[%s4775 + $0x58] sm:$0xff]
    %v4788 = vld [vmem:[%s4775 + $0x60] sm:$0xff]
    %v4789 = vld [vmem:[%s4775 + $0x68] sm:$0xff]
    %v4790 = vld [vmem:[%s4775 + $0x70] sm:$0xff]
    %v4791 = vld [vmem:[%s4775 + $0x78] sm:$0xff]
    %v4792 = vld [vmem:[%s4775 + $0x80] sm:$0xff]
    %v4793 = vld [vmem:[%s4775 + $0x88] sm:$0xff]
    %v4794 = vld [vmem:[%s4775 + $0x90] sm:$0xff]
    %v4795 = vld [vmem:[%s4775 + $0x98] sm:$0xff]
    %v4796 = vld [vmem:[%s4775 + $0xa0] sm:$0xff]
    %v4797 = vld [vmem:[%s4775 + $0xa8] sm:$0xff]
    %v4798 = vld [vmem:[%s4775 + $0xb0] sm:$0xff]
    %v4799 = vld [vmem:[%s4775 + $0xb8] sm:$0xff]
    %v4800 = vld [vmem:[%s4775 + $0xc0] sm:$0xff]
    %v4801 = vld [vmem:[%s4775 + $0xc8] sm:$0xff]
    %v4802 = vld [vmem:[%s4775 + $0xd0] sm:$0xff]
    %v4803 = vld [vmem:[%s4775 + $0xd8] sm:$0xff]
    %v4804 = vld [vmem:[%s4775 + $0xe0] sm:$0xff]
    %v4805 = vld [vmem:[%s4775 + $0xe8] sm:$0xff]
    %v4806 = vld [vmem:[%s4775 + $0xf0] sm:$0xff]
    %v4807 = vld [vmem:[%s4775 + $0xf8] sm:$0xff]
    %v4808 = vld [vmem:[%s4775 + $0x100] sm:$0xff]
    %v4809 = vld [vmem:[%s4775 + $0x108] sm:$0xff]
    %v4810 = vld [vmem:[%s4775 + $0x110] sm:$0xff]
    %v4811 = vld [vmem:[%s4775 + $0x118] sm:$0xff]
    %v4812 = vld [vmem:[%s4775 + $0x120] sm:$0xff]
    %v4813 = vld [vmem:[%s4775 + $0x128] sm:$0xff]
    %v4814 = vld [vmem:[%s4775 + $0x130] sm:$0xff]
    %v4815 = vld [vmem:[%s4775 + $0x138] sm:$0xff]
    %v4816 = vld [vmem:[%s4775 + $0x140] sm:$0xff]
    %v4817 = vld [vmem:[%s4775 + $0x148] sm:$0xff]
    %v4818 = vld [vmem:[%s4775 + $0x150] sm:$0xff]
    %v4819 = vld [vmem:[%s4775 + $0x158] sm:$0xff]
    %v4820 = vld [vmem:[%s4775 + $0x160] sm:$0xff]
    %v4821 = vld [vmem:[%s4775 + $0x168] sm:$0xff]
    %v4822 = vld [vmem:[%s4775 + $0x170] sm:$0xff]
    %v4823 = vld [vmem:[%s4775 + $0x178] sm:$0xff]
    %v4824 = vld [vmem:[%s4775 + $0x180] sm:$0xff]
    %v4825 = vld [vmem:[%s4775 + $0x188] sm:$0xff]
    %v4826 = vld [vmem:[%s4775 + $0x190] sm:$0xff]
    %v4827 = vld [vmem:[%s4775 + $0x198] sm:$0xff]
    %v4828 = vld [vmem:[%s4775 + $0x1a0] sm:$0xff]
    %v4829 = vld [vmem:[%s4775 + $0x1a8] sm:$0xff]
    %v4830 = vld [vmem:[%s4775 + $0x1b0] sm:$0xff]
    %v4831 = vld [vmem:[%s4775 + $0x1b8] sm:$0xff]
    %v4832 = vld [vmem:[%s4775 + $0x1c0] sm:$0xff]
    %v4833 = vld [vmem:[%s4775 + $0x1c8] sm:$0xff]
    %v4834 = vld [vmem:[%s4775 + $0x1d0] sm:$0xff]
    %v4835 = vld [vmem:[%s4775 + $0x1d8] sm:$0xff]
    %v4836 = vld [vmem:[%s4775 + $0x1e0] sm:$0xff]
    %v4837 = vld [vmem:[%s4775 + $0x1e8] sm:$0xff]
    %v4838 = vld [vmem:[%s4775 + $0x1f0] sm:$0xff]
    %v4839 = vld [vmem:[%s4775 + $0x1f8] sm:$0xff]
    %v4840 = vld [vmem:[%s4775 + $0x200] sm:$0xff]
    %v4841 = vld [vmem:[%s4775 + $0x208] sm:$0xff]
    %v4842 = vld [vmem:[%s4775 + $0x210] sm:$0xff]
    %v4843 = vld [vmem:[%s4775 + $0x218] sm:$0xff]
    %v4844 = vld [vmem:[%s4775 + $0x220] sm:$0xff]
    %v4845 = vld [vmem:[%s4775 + $0x228] sm:$0xff]
    %v4846 = vld [vmem:[%s4775 + $0x230] sm:$0xff]
    %v4847 = vld [vmem:[%s4775 + $0x238] sm:$0xff]
    %v4848 = vld [vmem:[%s4775 + $0x240] sm:$0xff]
    %v4849 = vld [vmem:[%s4775 + $0x248] sm:$0xff]
    %v4850 = vld [vmem:[%s4775 + $0x250] sm:$0xff]
    %v4851 = vld [vmem:[%s4775 + $0x258] sm:$0xff]
    %v4852 = vld [vmem:[%s4775 + $0x260] sm:$0xff]
    %v4853 = vld [vmem:[%s4775 + $0x268] sm:$0xff]
    %v4854 = vld [vmem:[%s4775 + $0x270] sm:$0xff]
    %v4855 = vld [vmem:[%s4775 + $0x278] sm:$0xff]
    %v4856 = vld [vmem:[%s4775 + $0x280] sm:$0xff]
    %v4857 = vld [vmem:[%s4775 + $0x288] sm:$0xff]
    %v4858 = vld [vmem:[%s4775 + $0x290] sm:$0xff]
    %v4859 = vld [vmem:[%s4775 + $0x298] sm:$0xff]
    %v4860 = vld [vmem:[%s4775 + $0x2a0] sm:$0xff]
    %v4861 = vld [vmem:[%s4775 + $0x2a8] sm:$0xff]
    %v4862 = vld [vmem:[%s4775 + $0x2b0] sm:$0xff]
    %v4863 = vld [vmem:[%s4775 + $0x2b8] sm:$0xff]
    %v4864 = vld [vmem:[%s4775 + $0x2c0] sm:$0xff]
    %v4865 = vld [vmem:[%s4775 + $0x2c8] sm:$0xff]
    %v4866 = vld [vmem:[%s4775 + $0x2d0] sm:$0xff]
    %v4867 = vld [vmem:[%s4775 + $0x2d8] sm:$0xff]
    %v4868 = vld [vmem:[%s4775 + $0x2e0] sm:$0xff]
    %v4869 = vld [vmem:[%s4775 + $0x2e8] sm:$0xff]
    %v4870 = vld [vmem:[%s4775 + $0x2f0] sm:$0xff]
    %v4871 = vld [vmem:[%s4775 + $0x2f8] sm:$0xff]
    %v4968 = vunpack.c.l.b16 %v4776
    %v4969 = vunpack.c.h.b16 %v4776
    %v4970 = vunpack.c.l.b16 %v4777
    %v4971 = vunpack.c.h.b16 %v4777
    %v4972 = vunpack.c.l.b16 %v4778
    %v4973 = vunpack.c.h.b16 %v4778
    %v4974 = vunpack.c.l.b16 %v4779
    %v4975 = vunpack.c.h.b16 %v4779
    %v4976 = vunpack.c.l.b16 %v4780
    %v4977 = vunpack.c.h.b16 %v4780
    %v4978 = vunpack.c.l.b16 %v4781
    %v4979 = vunpack.c.h.b16 %v4781
    %v4980 = vunpack.c.l.b16 %v4782
    %v4981 = vunpack.c.h.b16 %v4782
    %v4982 = vunpack.c.l.b16 %v4783
    %v4983 = vunpack.c.h.b16 %v4783
    %v4984 = vunpack.c.l.b16 %v4784
    %v4985 = vunpack.c.h.b16 %v4784
    %v4986 = vunpack.c.l.b16 %v4785
    %v4987 = vunpack.c.h.b16 %v4785
    %v4988 = vunpack.c.l.b16 %v4786
    %v4989 = vunpack.c.h.b16 %v4786
    %v4990 = vunpack.c.l.b16 %v4787
    %v4991 = vunpack.c.h.b16 %v4787
    %v4992 = vunpack.c.l.b16 %v4788
    %v4993 = vunpack.c.h.b16 %v4788
    %v4994 = vunpack.c.l.b16 %v4789
    %v4995 = vunpack.c.h.b16 %v4789
    %v4996 = vunpack.c.l.b16 %v4790
    %v4997 = vunpack.c.h.b16 %v4790
    %v4998 = vunpack.c.l.b16 %v4791
    %v4999 = vunpack.c.h.b16 %v4791
    %v5000 = vunpack.c.l.b16 %v4792
    %v5001 = vunpack.c.h.b16 %v4792
    %v5002 = vunpack.c.l.b16 %v4793
    %v5003 = vunpack.c.h.b16 %v4793
    %v5004 = vunpack.c.l.b16 %v4794
    %v5005 = vunpack.c.h.b16 %v4794
    %v5006 = vunpack.c.l.b16 %v4795
    %v5007 = vunpack.c.h.b16 %v4795
    %v5008 = vunpack.c.l.b16 %v4796
    %v5009 = vunpack.c.h.b16 %v4796
    %v5010 = vunpack.c.l.b16 %v4797
    %v5011 = vunpack.c.h.b16 %v4797
    %v5012 = vunpack.c.l.b16 %v4798
    %v5013 = vunpack.c.h.b16 %v4798
    %v5014 = vunpack.c.l.b16 %v4799
    %v5015 = vunpack.c.h.b16 %v4799
    %v5016 = vunpack.c.l.b16 %v4800
    %v5017 = vunpack.c.h.b16 %v4800
    %v5018 = vunpack.c.l.b16 %v4801
    %v5019 = vunpack.c.h.b16 %v4801
    %v5020 = vunpack.c.l.b16 %v4802
    %v5021 = vunpack.c.h.b16 %v4802
    %v5022 = vunpack.c.l.b16 %v4803
    %v5023 = vunpack.c.h.b16 %v4803
    %v5024 = vunpack.c.l.b16 %v4804
    %v5025 = vunpack.c.h.b16 %v4804
    %v5026 = vunpack.c.l.b16 %v4805
    %v5027 = vunpack.c.h.b16 %v4805
    %v5028 = vunpack.c.l.b16 %v4806
    %v5029 = vunpack.c.h.b16 %v4806
    %v5030 = vunpack.c.l.b16 %v4807
    %v5031 = vunpack.c.h.b16 %v4807
    %v5032 = vunpack.c.l.b16 %v4808
    %v5033 = vunpack.c.h.b16 %v4808
    %v5034 = vunpack.c.l.b16 %v4809
    %v5035 = vunpack.c.h.b16 %v4809
    %v5036 = vunpack.c.l.b16 %v4810
    %v5037 = vunpack.c.h.b16 %v4810
    %v5038 = vunpack.c.l.b16 %v4811
    %v5039 = vunpack.c.h.b16 %v4811
    %v5040 = vunpack.c.l.b16 %v4812
    %v5041 = vunpack.c.h.b16 %v4812
    %v5042 = vunpack.c.l.b16 %v4813
    %v5043 = vunpack.c.h.b16 %v4813
    %v5044 = vunpack.c.l.b16 %v4814
    %v5045 = vunpack.c.h.b16 %v4814
    %v5046 = vunpack.c.l.b16 %v4815
    %v5047 = vunpack.c.h.b16 %v4815
    %v5048 = vunpack.c.l.b16 %v4816
    %v5049 = vunpack.c.h.b16 %v4816
    %v5050 = vunpack.c.l.b16 %v4817
    %v5051 = vunpack.c.h.b16 %v4817
    %v5052 = vunpack.c.l.b16 %v4818
    %v5053 = vunpack.c.h.b16 %v4818
    %v5054 = vunpack.c.l.b16 %v4819
    %v5055 = vunpack.c.h.b16 %v4819
    %v5056 = vunpack.c.l.b16 %v4820
    %v5057 = vunpack.c.h.b16 %v4820
    %v5058 = vunpack.c.l.b16 %v4821
    %v5059 = vunpack.c.h.b16 %v4821
    %v5060 = vunpack.c.l.b16 %v4822
    %v5061 = vunpack.c.h.b16 %v4822
    %v5062 = vunpack.c.l.b16 %v4823
    %v5063 = vunpack.c.h.b16 %v4823
    %v5064 = vunpack.c.l.b16 %v4824
    %v5065 = vunpack.c.h.b16 %v4824
    %v5066 = vunpack.c.l.b16 %v4825
    %v5067 = vunpack.c.h.b16 %v4825
    %v5068 = vunpack.c.l.b16 %v4826
    %v5069 = vunpack.c.h.b16 %v4826
    %v5070 = vunpack.c.l.b16 %v4827
    %v5071 = vunpack.c.h.b16 %v4827
    %v5072 = vunpack.c.l.b16 %v4828
    %v5073 = vunpack.c.h.b16 %v4828
    %v5074 = vunpack.c.l.b16 %v4829
    %v5075 = vunpack.c.h.b16 %v4829
    %v5076 = vunpack.c.l.b16 %v4830
    %v5077 = vunpack.c.h.b16 %v4830
    %v5078 = vunpack.c.l.b16 %v4831
    %v5079 = vunpack.c.h.b16 %v4831
    %v5080 = vunpack.c.l.b16 %v4832
    %v5081 = vunpack.c.h.b16 %v4832
    %v5082 = vunpack.c.l.b16 %v4833
    %v5083 = vunpack.c.h.b16 %v4833
    %v5084 = vunpack.c.l.b16 %v4834
    %v5085 = vunpack.c.h.b16 %v4834
    %v5086 = vunpack.c.l.b16 %v4835
    %v5087 = vunpack.c.h.b16 %v4835
    %v5088 = vunpack.c.l.b16 %v4836
    %v5089 = vunpack.c.h.b16 %v4836
    %v5090 = vunpack.c.l.b16 %v4837
    %v5091 = vunpack.c.h.b16 %v4837
    %v5092 = vunpack.c.l.b16 %v4838
    %v5093 = vunpack.c.h.b16 %v4838
    %v5094 = vunpack.c.l.b16 %v4839
    %v5095 = vunpack.c.h.b16 %v4839
    %v5096 = vunpack.c.l.b16 %v4840
    %v5097 = vunpack.c.h.b16 %v4840
    %v5098 = vunpack.c.l.b16 %v4841
    %v5099 = vunpack.c.h.b16 %v4841
    %v5100 = vunpack.c.l.b16 %v4842
    %v5101 = vunpack.c.h.b16 %v4842
    %v5102 = vunpack.c.l.b16 %v4843
    %v5103 = vunpack.c.h.b16 %v4843
    %v5104 = vunpack.c.l.b16 %v4844
    %v5105 = vunpack.c.h.b16 %v4844
    %v5106 = vunpack.c.l.b16 %v4845
    %v5107 = vunpack.c.h.b16 %v4845
    %v5108 = vunpack.c.l.b16 %v4846
    %v5109 = vunpack.c.h.b16 %v4846
    %v5110 = vunpack.c.l.b16 %v4847
    %v5111 = vunpack.c.h.b16 %v4847
    %v5112 = vunpack.c.l.b16 %v4848
    %v5113 = vunpack.c.h.b16 %v4848
    %v5114 = vunpack.c.l.b16 %v4849
    %v5115 = vunpack.c.h.b16 %v4849
    %v5116 = vunpack.c.l.b16 %v4850
    %v5117 = vunpack.c.h.b16 %v4850
    %v5118 = vunpack.c.l.b16 %v4851
    %v5119 = vunpack.c.h.b16 %v4851
    %v5120 = vunpack.c.l.b16 %v4852
    %v5121 = vunpack.c.h.b16 %v4852
    %v5122 = vunpack.c.l.b16 %v4853
    %v5123 = vunpack.c.h.b16 %v4853
    %v5124 = vunpack.c.l.b16 %v4854
    %v5125 = vunpack.c.h.b16 %v4854
    %v5126 = vunpack.c.l.b16 %v4855
    %v5127 = vunpack.c.h.b16 %v4855
    %v5128 = vunpack.c.l.b16 %v4856
    %v5129 = vunpack.c.h.b16 %v4856
    %v5130 = vunpack.c.l.b16 %v4857
    %v5131 = vunpack.c.h.b16 %v4857
    %v5132 = vunpack.c.l.b16 %v4858
    %v5133 = vunpack.c.h.b16 %v4858
    %v5134 = vunpack.c.l.b16 %v4859
    %v5135 = vunpack.c.h.b16 %v4859
    %v5136 = vunpack.c.l.b16 %v4860
    %v5137 = vunpack.c.h.b16 %v4860
    %v5138 = vunpack.c.l.b16 %v4861
    %v5139 = vunpack.c.h.b16 %v4861
    %v5140 = vunpack.c.l.b16 %v4862
    %v5141 = vunpack.c.h.b16 %v4862
    %v5142 = vunpack.c.l.b16 %v4863
    %v5143 = vunpack.c.h.b16 %v4863
    %v5144 = vunpack.c.l.b16 %v4864
    %v5145 = vunpack.c.h.b16 %v4864
    %v5146 = vunpack.c.l.b16 %v4865
    %v5147 = vunpack.c.h.b16 %v4865
    %v5148 = vunpack.c.l.b16 %v4866
    %v5149 = vunpack.c.h.b16 %v4866
    %v5150 = vunpack.c.l.b16 %v4867
    %v5151 = vunpack.c.h.b16 %v4867
    %v5152 = vunpack.c.l.b16 %v4868
    %v5153 = vunpack.c.h.b16 %v4868
    %v5154 = vunpack.c.l.b16 %v4869
    %v5155 = vunpack.c.h.b16 %v4869
    %v5156 = vunpack.c.l.b16 %v4870
    %v5157 = vunpack.c.h.b16 %v4870
    %v5158 = vunpack.c.l.b16 %v4871
    %v5159 = vunpack.c.h.b16 %v4871
    %v5160 = vpack.c.b16 %v4972, %v4968
    %v5161 = vpack.c.b16 %v4973, %v4969
    %v5162 = vpack.c.b16 %v4974, %v4970
    %v5163 = vpack.c.b16 %v4975, %v4971
    %v5164 = vpack.c.b16 %v4980, %v4976
    %v5165 = vpack.c.b16 %v4981, %v4977
    %v5166 = vpack.c.b16 %v4982, %v4978
    %v5167 = vpack.c.b16 %v4983, %v4979
    %v5168 = vpack.c.b16 %v4988, %v4984
    %v5169 = vpack.c.b16 %v4989, %v4985
    %v5170 = vpack.c.b16 %v4990, %v4986
    %v5171 = vpack.c.b16 %v4991, %v4987
    %v5172 = vpack.c.b16 %v4996, %v4992
    %v5173 = vpack.c.b16 %v4997, %v4993
    %v5174 = vpack.c.b16 %v4998, %v4994
    %v5175 = vpack.c.b16 %v4999, %v4995
    %v5176 = vpack.c.b16 %v5004, %v5000
    %v5177 = vpack.c.b16 %v5005, %v5001
    %v5178 = vpack.c.b16 %v5006, %v5002
    %v5179 = vpack.c.b16 %v5007, %v5003
    %v5180 = vpack.c.b16 %v5012, %v5008
    %v5181 = vpack.c.b16 %v5013, %v5009
    %v5182 = vpack.c.b16 %v5014, %v5010
    %v5183 = vpack.c.b16 %v5015, %v5011
    %v5184 = vpack.c.b16 %v5020, %v5016
    %v5185 = vpack.c.b16 %v5021, %v5017
    %v5186 = vpack.c.b16 %v5022, %v5018
    %v5187 = vpack.c.b16 %v5023, %v5019
    %v5188 = vpack.c.b16 %v5028, %v5024
    %v5189 = vpack.c.b16 %v5029, %v5025
    %v5190 = vpack.c.b16 %v5030, %v5026
    %v5191 = vpack.c.b16 %v5031, %v5027
    %v5192 = vpack.c.b16 %v5036, %v5032
    %v5193 = vpack.c.b16 %v5037, %v5033
    %v5194 = vpack.c.b16 %v5038, %v5034
    %v5195 = vpack.c.b16 %v5039, %v5035
    %v5196 = vpack.c.b16 %v5044, %v5040
    %v5197 = vpack.c.b16 %v5045, %v5041
    %v5198 = vpack.c.b16 %v5046, %v5042
    %v5199 = vpack.c.b16 %v5047, %v5043
    %v5200 = vpack.c.b16 %v5052, %v5048
    %v5201 = vpack.c.b16 %v5053, %v5049
    %v5202 = vpack.c.b16 %v5054, %v5050
    %v5203 = vpack.c.b16 %v5055, %v5051
    %v5204 = vpack.c.b16 %v5060, %v5056
    %v5205 = vpack.c.b16 %v5061, %v5057
    %v5206 = vpack.c.b16 %v5062, %v5058
    %v5207 = vpack.c.b16 %v5063, %v5059
    %v5208 = vpack.c.b16 %v5068, %v5064
    %v5209 = vpack.c.b16 %v5069, %v5065
    %v5210 = vpack.c.b16 %v5070, %v5066
    %v5211 = vpack.c.b16 %v5071, %v5067
    %v5212 = vpack.c.b16 %v5076, %v5072
    %v5213 = vpack.c.b16 %v5077, %v5073
    %v5214 = vpack.c.b16 %v5078, %v5074
    %v5215 = vpack.c.b16 %v5079, %v5075
    %v5216 = vpack.c.b16 %v5084, %v5080
    %v5217 = vpack.c.b16 %v5085, %v5081
    %v5218 = vpack.c.b16 %v5086, %v5082
    %v5219 = vpack.c.b16 %v5087, %v5083
    %v5220 = vpack.c.b16 %v5092, %v5088
    %v5221 = vpack.c.b16 %v5093, %v5089
    %v5222 = vpack.c.b16 %v5094, %v5090
    %v5223 = vpack.c.b16 %v5095, %v5091
    %v5224 = vpack.c.b16 %v5100, %v5096
    %v5225 = vpack.c.b16 %v5101, %v5097
    %v5226 = vpack.c.b16 %v5102, %v5098
    %v5227 = vpack.c.b16 %v5103, %v5099
    %v5228 = vpack.c.b16 %v5108, %v5104
    %v5229 = vpack.c.b16 %v5109, %v5105
    %v5230 = vpack.c.b16 %v5110, %v5106
    %v5231 = vpack.c.b16 %v5111, %v5107
    %v5232 = vpack.c.b16 %v5116, %v5112
    %v5233 = vpack.c.b16 %v5117, %v5113
    %v5234 = vpack.c.b16 %v5118, %v5114
    %v5235 = vpack.c.b16 %v5119, %v5115
    %v5236 = vpack.c.b16 %v5124, %v5120
    %v5237 = vpack.c.b16 %v5125, %v5121
    %v5238 = vpack.c.b16 %v5126, %v5122
    %v5239 = vpack.c.b16 %v5127, %v5123
    %v5240 = vpack.c.b16 %v5132, %v5128
    %v5241 = vpack.c.b16 %v5133, %v5129
    %v5242 = vpack.c.b16 %v5134, %v5130
    %v5243 = vpack.c.b16 %v5135, %v5131
    %v5244 = vpack.c.b16 %v5140, %v5136
    %v5245 = vpack.c.b16 %v5141, %v5137
    %v5246 = vpack.c.b16 %v5142, %v5138
    %v5247 = vpack.c.b16 %v5143, %v5139
    %v5248 = vpack.c.b16 %v5148, %v5144
    %v5249 = vpack.c.b16 %v5149, %v5145
    %v5250 = vpack.c.b16 %v5150, %v5146
    %v5251 = vpack.c.b16 %v5151, %v5147
    %v5252 = vpack.c.b16 %v5156, %v5152
    %v5253 = vpack.c.b16 %v5157, %v5153
    %v5254 = vpack.c.b16 %v5158, %v5154
    %v5255 = vpack.c.b16 %v5159, %v5155
    %5352 = vmatprep.subr.bf16.mxu0 %v5189
    %5353 = vmatpush1.bf16.msra.mxu0 %v5188
    %5354 = vmatprep.subr.bf16.mxu0 %v5185
    %5355 = vmatpush1.bf16.msra.mxu0 %v5184
    %5356 = vmatprep.subr.bf16.mxu0 %v5181
    %5357 = vmatpush1.bf16.msra.mxu0 %v5180
    %5358 = vmatprep.subr.bf16.mxu0 %v5177
    %5359 = vmatpush1.bf16.msra.mxu0 %v5176
    %5360 = vmatprep.subr.bf16.mxu0 %v5173
    %5361 = vmatpush1.bf16.msra.mxu0 %v5172
    %5362 = vmatprep.subr.bf16.mxu0 %v5169
    %5363 = vmatpush1.bf16.msra.mxu0 %v5168
    %5364 = vmatprep.subr.bf16.mxu0 %v5165
    %5365 = vmatpush1.bf16.msra.mxu0 %v5164
    %5366 = vmatprep.subr.bf16.mxu0 %v5161
    %5367 = vmatpush1.bf16.msra.mxu0 %v5160
    %5368 = vmatprep.subr.bf16.mxu0 %v5221
    %5369 = vmatpush2.bf16.msra.mxu0 %v5220
    %5370 = vmatprep.subr.bf16.mxu0 %v5217
    %5371 = vmatpush2.bf16.msra.mxu0 %v5216
    %5372 = vmatprep.subr.bf16.mxu0 %v5213
    %5373 = vmatpush2.bf16.msra.mxu0 %v5212
    %5374 = vmatprep.subr.bf16.mxu0 %v5209
    %5375 = vmatpush2.bf16.msra.mxu0 %v5208
    %5376 = vmatprep.subr.bf16.mxu0 %v5205
    %5377 = vmatpush2.bf16.msra.mxu0 %v5204
    %5378 = vmatprep.subr.bf16.mxu0 %v5201
    %5379 = vmatpush2.bf16.msra.mxu0 %v5200
    %5380 = vmatprep.subr.bf16.mxu0 %v5197
    %5381 = vmatpush2.bf16.msra.mxu0 %v5196
    %5382 = vmatprep.subr.bf16.mxu0 %v5193
    %5383 = vmatpush2.bf16.msra.mxu0 %v5192
    %5384 = vmatprep.mubr.bf16.mxu0 %v4764
    %5385 = vmatmul.mubr.bf16.gmra.mxu0 %v4763
    %v5386 = vpop.f32.mrf.mxu0
    %v5387 = vadd.f32 0.0, %v5386
    %v5388 = vpop.f32.mrf.mxu0
    %v5389 = vadd.f32 0.0, %v5388
    %v5390 = vpop.f32.mrf.mxu0
    %v5391 = vadd.f32 0.0, %v5390
    %v5392 = vpop.f32.mrf.mxu0
    %v5393 = vadd.f32 0.0, %v5392
    %5394 = vmatprep.mubr.bf16.mxu0 %v4767
    %5395 = vmatmul.mubr.bf16.gmra.mxu0 %v4766
    %v5396 = vpop.f32.mrf.mxu0
    %v5397 = vadd.f32 0.0, %v5396
    %v5398 = vpop.f32.mrf.mxu0
    %v5399 = vadd.f32 0.0, %v5398
    %v5400 = vpop.f32.mrf.mxu0
    %v5401 = vadd.f32 0.0, %v5400
    %v5402 = vpop.f32.mrf.mxu0
    %v5403 = vadd.f32 0.0, %v5402
    %5404 = vmatprep.mubr.bf16.mxu0 %v4770
    %5405 = vmatmul.mubr.bf16.gmra.mxu0 %v4769
    %v5406 = vpop.f32.mrf.mxu0
    %v5407 = vadd.f32 0.0, %v5406
    %v5408 = vpop.f32.mrf.mxu0
    %v5409 = vadd.f32 0.0, %v5408
    %v5410 = vpop.f32.mrf.mxu0
    %v5411 = vadd.f32 0.0, %v5410
    %v5412 = vpop.f32.mrf.mxu0
    %v5413 = vadd.f32 0.0, %v5412
    %5414 = vmatprep.mubr.bf16.mxu0 %v4773
    %5415 = vmatmul.mubr.bf16.gmra.mxu0 %v4772
    %v5416 = vpop.f32.mrf.mxu0
    %v5417 = vadd.f32 0.0, %v5416
    %v5418 = vpop.f32.mrf.mxu0
    %v5419 = vadd.f32 0.0, %v5418
    %v5420 = vpop.f32.mrf.mxu0
    %v5421 = vadd.f32 0.0, %v5420
    %v5422 = vpop.f32.mrf.mxu0
    %v5423 = vadd.f32 0.0, %v5422
    %5424 = vdwg.mxu0
    %5425 = vmatprep.subr.bf16.mxu0 %v5253
    %5426 = vmatpush1.bf16.msra.mxu0 %v5252
    %5427 = vmatprep.subr.bf16.mxu0 %v5249
    %5428 = vmatpush1.bf16.msra.mxu0 %v5248
    %5429 = vmatprep.subr.bf16.mxu0 %v5245
    %5430 = vmatpush1.bf16.msra.mxu0 %v5244
    %5431 = vmatprep.subr.bf16.mxu0 %v5241
    %5432 = vmatpush1.bf16.msra.mxu0 %v5240
    %5433 = vmatprep.subr.bf16.mxu0 %v5237
    %5434 = vmatpush1.bf16.msra.mxu0 %v5236
    %5435 = vmatprep.subr.bf16.mxu0 %v5233
    %5436 = vmatpush1.bf16.msra.mxu0 %v5232
    %5437 = vmatprep.subr.bf16.mxu0 %v5229
    %5438 = vmatpush1.bf16.msra.mxu0 %v5228
    %5439 = vmatprep.subr.bf16.mxu0 %v5225
    %5440 = vmatpush1.bf16.msra.mxu0 %v5224
    %5441 = vmatprep.subr.bf16.mxu0 0
    %5442 = vmatpush2.bf16.msra.mxu0 0
    %5443 = vmatprep.subr.bf16.mxu0 0
    %5444 = vmatpush2.bf16.msra.mxu0 0
    %5445 = vmatprep.subr.bf16.mxu0 0
    %5446 = vmatpush2.bf16.msra.mxu0 0
    %5447 = vmatprep.subr.bf16.mxu0 0
    %5448 = vmatpush2.bf16.msra.mxu0 0
    %5449 = vmatprep.subr.bf16.mxu0 0
    %5450 = vmatpush2.bf16.msra.mxu0 0
    %5451 = vmatprep.subr.bf16.mxu0 0
    %5452 = vmatpush2.bf16.msra.mxu0 0
    %5453 = vmatprep.subr.bf16.mxu0 0
    %5454 = vmatpush2.bf16.msra.mxu0 0
    %5455 = vmatprep.subr.bf16.mxu0 0
    %5456 = vmatpush2.bf16.msra.mxu0 0
    %5457 = vmatprep.mubr.bf16.mxu0 0
    %5458 = vmatmul.mubr.bf16.gmra.mxu0 %v4765
    %v5459 = vpop.f32.mrf.mxu0
    %v5460 = vadd.f32 %v5387, %v5459
    %v5461 = vpop.f32.mrf.mxu0
    %v5462 = vadd.f32 %v5389, %v5461
    %v5463 = vpop.f32.mrf.mxu0
    %v5464 = vadd.f32 %v5391, %v5463
    %v5465 = vpop.f32.mrf.mxu0
    %v5466 = vadd.f32 %v5393, %v5465
    %5467 = vmatprep.mubr.bf16.mxu0 0
    %5468 = vmatmul.mubr.bf16.gmra.mxu0 %v4768
    %v5469 = vpop.f32.mrf.mxu0
    %v5470 = vadd.f32 %v5397, %v5469
    %v5471 = vpop.f32.mrf.mxu0
    %v5472 = vadd.f32 %v5399, %v5471
    %v5473 = vpop.f32.mrf.mxu0
    %v5474 = vadd.f32 %v5401, %v5473
    %v5475 = vpop.f32.mrf.mxu0
    %v5476 = vadd.f32 %v5403, %v5475
    %5477 = vmatprep.mubr.bf16.mxu0 0
    %5478 = vmatmul.mubr.bf16.gmra.mxu0 %v4771
    %v5479 = vpop.f32.mrf.mxu0
    %v5480 = vadd.f32 %v5407, %v5479
    %v5481 = vpop.f32.mrf.mxu0
    %v5482 = vadd.f32 %v5409, %v5481
    %v5483 = vpop.f32.mrf.mxu0
    %v5484 = vadd.f32 %v5411, %v5483
    %v5485 = vpop.f32.mrf.mxu0
    %v5486 = vadd.f32 %v5413, %v5485
    %5487 = vmatprep.mubr.bf16.mxu0 0
    %5488 = vmatmul.mubr.bf16.gmra.mxu0 %v4774
    %v5489 = vpop.f32.mrf.mxu0
    %v5490 = vadd.f32 %v5417, %v5489
    %v5491 = vpop.f32.mrf.mxu0
    %v5492 = vadd.f32 %v5419, %v5491
    %v5493 = vpop.f32.mrf.mxu0
    %v5494 = vadd.f32 %v5421, %v5493
    %v5495 = vpop.f32.mrf.mxu0
    %v5496 = vadd.f32 %v5423, %v5495
    %5497 = vdwg.mxu0
    %5498 = vmatprep.subr.bf16.mxu0 %v5191
    %5499 = vmatpush1.bf16.msra.mxu0 %v5190
    %5500 = vmatprep.subr.bf16.mxu0 %v5187
    %5501 = vmatpush1.bf16.msra.mxu0 %v5186
    %5502 = vmatprep.subr.bf16.mxu0 %v5183
    %5503 = vmatpush1.bf16.msra.mxu0 %v5182
    %5504 = vmatprep.subr.bf16.mxu0 %v5179
    %5505 = vmatpush1.bf16.msra.mxu0 %v5178
    %5506 = vmatprep.subr.bf16.mxu0 %v5175
    %5507 = vmatpush1.bf16.msra.mxu0 %v5174
    %5508 = vmatprep.subr.bf16.mxu0 %v5171
    %5509 = vmatpush1.bf16.msra.mxu0 %v5170
    %5510 = vmatprep.subr.bf16.mxu0 %v5167
    %5511 = vmatpush1.bf16.msra.mxu0 %v5166
    %5512 = vmatprep.subr.bf16.mxu0 %v5163
    %5513 = vmatpush1.bf16.msra.mxu0 %v5162
    %5514 = vmatprep.subr.bf16.mxu0 %v5223
    %5515 = vmatpush2.bf16.msra.mxu0 %v5222
    %5516 = vmatprep.subr.bf16.mxu0 %v5219
    %5517 = vmatpush2.bf16.msra.mxu0 %v5218
    %5518 = vmatprep.subr.bf16.mxu0 %v5215
    %5519 = vmatpush2.bf16.msra.mxu0 %v5214
    %5520 = vmatprep.subr.bf16.mxu0 %v5211
    %5521 = vmatpush2.bf16.msra.mxu0 %v5210
    %5522 = vmatprep.subr.bf16.mxu0 %v5207
    %5523 = vmatpush2.bf16.msra.mxu0 %v5206
    %5524 = vmatprep.subr.bf16.mxu0 %v5203
    %5525 = vmatpush2.bf16.msra.mxu0 %v5202
    %5526 = vmatprep.subr.bf16.mxu0 %v5199
    %5527 = vmatpush2.bf16.msra.mxu0 %v5198
    %5528 = vmatprep.subr.bf16.mxu0 %v5195
    %5529 = vmatpush2.bf16.msra.mxu0 %v5194
    %5530 = vmatprep.mubr.bf16.mxu0 %v4764
    %5531 = vmatmul.mubr.bf16.gmra.mxu0 %v4763
    %v5532 = vpop.f32.mrf.mxu0
    %v5533 = vadd.f32 0.0, %v5532
    %v5534 = vpop.f32.mrf.mxu0
    %v5535 = vadd.f32 0.0, %v5534
    %v5536 = vpop.f32.mrf.mxu0
    %v5537 = vadd.f32 0.0, %v5536
    %v5538 = vpop.f32.mrf.mxu0
    %v5539 = vadd.f32 0.0, %v5538
    %5540 = vmatprep.mubr.bf16.mxu0 %v4767
    %5541 = vmatmul.mubr.bf16.gmra.mxu0 %v4766
    %v5542 = vpop.f32.mrf.mxu0
    %v5543 = vadd.f32 0.0, %v5542
    %v5544 = vpop.f32.mrf.mxu0
    %v5545 = vadd.f32 0.0, %v5544
    %v5546 = vpop.f32.mrf.mxu0
    %v5547 = vadd.f32 0.0, %v5546
    %v5548 = vpop.f32.mrf.mxu0
    %v5549 = vadd.f32 0.0, %v5548
    %5550 = vmatprep.mubr.bf16.mxu0 %v4770
    %5551 = vmatmul.mubr.bf16.gmra.mxu0 %v4769
    %v5552 = vpop.f32.mrf.mxu0
    %v5553 = vadd.f32 0.0, %v5552
    %v5554 = vpop.f32.mrf.mxu0
    %v5555 = vadd.f32 0.0, %v5554
    %v5556 = vpop.f32.mrf.mxu0
    %v5557 = vadd.f32 0.0, %v5556
    %v5558 = vpop.f32.mrf.mxu0
    %v5559 = vadd.f32 0.0, %v5558
    %5560 = vmatprep.mubr.bf16.mxu0 %v4773
    %5561 = vmatmul.mubr.bf16.gmra.mxu0 %v4772
    %v5562 = vpop.f32.mrf.mxu0
    %v5563 = vadd.f32 0.0, %v5562
    %v5564 = vpop.f32.mrf.mxu0
    %v5565 = vadd.f32 0.0, %v5564
    %v5566 = vpop.f32.mrf.mxu0
    %v5567 = vadd.f32 0.0, %v5566
    %v5568 = vpop.f32.mrf.mxu0
    %v5569 = vadd.f32 0.0, %v5568
    %5570 = vdwg.mxu0
    %5571 = vmatprep.subr.bf16.mxu0 %v5255
    %5572 = vmatpush1.bf16.msra.mxu0 %v5254
    %5573 = vmatprep.subr.bf16.mxu0 %v5251
    %5574 = vmatpush1.bf16.msra.mxu0 %v5250
    %5575 = vmatprep.subr.bf16.mxu0 %v5247
    %5576 = vmatpush1.bf16.msra.mxu0 %v5246
    %5577 = vmatprep.subr.bf16.mxu0 %v5243
    %5578 = vmatpush1.bf16.msra.mxu0 %v5242
    %5579 = vmatprep.subr.bf16.mxu0 %v5239
    %5580 = vmatpush1.bf16.msra.mxu0 %v5238
    %5581 = vmatprep.subr.bf16.mxu0 %v5235
    %5582 = vmatpush1.bf16.msra.mxu0 %v5234
    %5583 = vmatprep.subr.bf16.mxu0 %v5231
    %5584 = vmatpush1.bf16.msra.mxu0 %v5230
    %5585 = vmatprep.subr.bf16.mxu0 %v5227
    %5586 = vmatpush1.bf16.msra.mxu0 %v5226
    %5587 = vmatprep.subr.bf16.mxu0 0
    %5588 = vmatpush2.bf16.msra.mxu0 0
    %5589 = vmatprep.subr.bf16.mxu0 0
    %5590 = vmatpush2.bf16.msra.mxu0 0
    %5591 = vmatprep.subr.bf16.mxu0 0
    %5592 = vmatpush2.bf16.msra.mxu0 0
    %5593 = vmatprep.subr.bf16.mxu0 0
    %5594 = vmatpush2.bf16.msra.mxu0 0
    %5595 = vmatprep.subr.bf16.mxu0 0
    %5596 = vmatpush2.bf16.msra.mxu0 0
    %5597 = vmatprep.subr.bf16.mxu0 0
    %5598 = vmatpush2.bf16.msra.mxu0 0
    %5599 = vmatprep.subr.bf16.mxu0 0
    %5600 = vmatpush2.bf16.msra.mxu0 0
    %5601 = vmatprep.subr.bf16.mxu0 0
    %5602 = vmatpush2.bf16.msra.mxu0 0
    %5603 = vmatprep.mubr.bf16.mxu0 0
    %5604 = vmatmul.mubr.bf16.gmra.mxu0 %v4765
    %v5605 = vpop.f32.mrf.mxu0
    %v5606 = vadd.f32 %v5533, %v5605
    %v5607 = vpop.f32.mrf.mxu0
    %v5608 = vadd.f32 %v5535, %v5607
    %v5609 = vpop.f32.mrf.mxu0
    %v5610 = vadd.f32 %v5537, %v5609
    %v5611 = vpop.f32.mrf.mxu0
    %v5612 = vadd.f32 %v5539, %v5611
    %5613 = vmatprep.mubr.bf16.mxu0 0
    %5614 = vmatmul.mubr.bf16.gmra.mxu0 %v4768
    %v5615 = vpop.f32.mrf.mxu0
    %v5616 = vadd.f32 %v5543, %v5615
    %v5617 = vpop.f32.mrf.mxu0
    %v5618 = vadd.f32 %v5545, %v5617
    %v5619 = vpop.f32.mrf.mxu0
    %v5620 = vadd.f32 %v5547, %v5619
    %v5621 = vpop.f32.mrf.mxu0
    %v5622 = vadd.f32 %v5549, %v5621
    %5623 = vmatprep.mubr.bf16.mxu0 0
    %5624 = vmatmul.mubr.bf16.gmra.mxu0 %v4771
    %v5625 = vpop.f32.mrf.mxu0
    %v5626 = vadd.f32 %v5553, %v5625
    %v5627 = vpop.f32.mrf.mxu0
    %v5628 = vadd.f32 %v5555, %v5627
    %v5629 = vpop.f32.mrf.mxu0
    %v5630 = vadd.f32 %v5557, %v5629
    %v5631 = vpop.f32.mrf.mxu0
    %v5632 = vadd.f32 %v5559, %v5631
    %5633 = vmatprep.mubr.bf16.mxu0 0
    %5634 = vmatmul.mubr.bf16.gmra.mxu0 %v4774
    %v5635 = vpop.f32.mrf.mxu0
    %v5636 = vadd.f32 %v5563, %v5635
    %v5637 = vpop.f32.mrf.mxu0
    %v5638 = vadd.f32 %v5565, %v5637
    %v5639 = vpop.f32.mrf.mxu0
    %v5640 = vadd.f32 %v5567, %v5639
    %v5641 = vpop.f32.mrf.mxu0
    %v5642 = vadd.f32 %v5569, %v5641
    %5643 = vdwg.mxu0
    %v5644 = vadd.f32 %v4707, %v5460
    %v5645 = vadd.f32 %v4708, %v5462
    %v5646 = vadd.f32 %v4709, %v5606
    %v5647 = vadd.f32 %v4710, %v5608
    %v5648 = vadd.f32 %v4711, %v5464
    %v5649 = vadd.f32 %v4712, %v5466
    %v5650 = vadd.f32 %v4713, %v5610
    %v5651 = vadd.f32 %v4714, %v5612
    %v5652 = vadd.f32 %v4715, %v5470
    %v5653 = vadd.f32 %v4716, %v5472
    %v5654 = vadd.f32 %v4717, %v5616
    %v5655 = vadd.f32 %v4718, %v5618
    %v5656 = vadd.f32 %v4719, %v5474
    %v5657 = vadd.f32 %v4720, %v5476
    %v5658 = vadd.f32 %v4721, %v5620
    %v5659 = vadd.f32 %v4722, %v5622
    %v5660 = vadd.f32 %v4723, %v5480
    %v5661 = vadd.f32 %v4724, %v5482
    %v5662 = vadd.f32 %v4725, %v5626
    %v5663 = vadd.f32 %v4726, %v5628
    %v5664 = vadd.f32 %v4727, %v5484
    %v5665 = vadd.f32 %v4728, %v5486
    %v5666 = vadd.f32 %v4729, %v5630
    %v5667 = vadd.f32 %v4730, %v5632
    %v5668 = vadd.f32 %v4731, %v5490
    %v5669 = vadd.f32 %v4732, %v5492
    %v5670 = vadd.f32 %v4733, %v5636
    %v5671 = vadd.f32 %v4734, %v5638
    %v5672 = vadd.f32 %v4735, %v5494
    %v5673 = vadd.f32 %v4736, %v5496
    %v5674 = vadd.f32 %v4737, %v5640
    %v5675 = vadd.f32 %v4738, %v5642
    %v5676 = vld [vmem:[#allocation2 + $0x60] sm:$0xff]
    %v5677 = vld [vmem:[#allocation2 + $0x68] sm:$0xff]
    %v5678 = vld [vmem:[#allocation2 + $0x70] sm:$0xff]
    %v5679 = vld [vmem:[#allocation2 + $0x78] sm:$0xff]
    %v5680 = vld [vmem:[#allocation2 + $0x80] sm:$0xff]
    %v5681 = vld [vmem:[#allocation2 + $0x88] sm:$0xff]
    %v5682 = vld [vmem:[#allocation2 + $0x90] sm:$0xff]
    %v5683 = vld [vmem:[#allocation2 + $0x98] sm:$0xff]
    %v5684 = vld [vmem:[#allocation2 + $0xa0] sm:$0xff]
    %v5685 = vld [vmem:[#allocation2 + $0xa8] sm:$0xff]
    %v5686 = vld [vmem:[#allocation2 + $0xb0] sm:$0xff]
    %v5687 = vld [vmem:[#allocation2 + $0xb8] sm:$0xff]
    %v5688 = vld [vmem:[#allocation2 + $0xc0] sm:$0xff]
    %v5689 = vld [vmem:[#allocation2 + $0xc8] sm:$0xff]
    %v5690 = vld [vmem:[#allocation2 + $0xd0] sm:$0xff]
    %v5691 = vld [vmem:[#allocation2 + $0xd8] sm:$0xff]
    %v5692 = vld [vmem:[#allocation2 + $0xe0] sm:$0xff]
    %v5693 = vld [vmem:[#allocation2 + $0xe8] sm:$0xff]
    %v5694 = vld [vmem:[#allocation2 + $0xf0] sm:$0xff]
    %v5695 = vld [vmem:[#allocation2 + $0xf8] sm:$0xff]
    %v5696 = vld [vmem:[#allocation2 + $0x100] sm:$0xff]
    %v5697 = vld [vmem:[#allocation2 + $0x108] sm:$0xff]
    %v5698 = vld [vmem:[#allocation2 + $0x110] sm:$0xff]
    %v5699 = vld [vmem:[#allocation2 + $0x118] sm:$0xff]
    %v5700 = vpack.c.bf16 %v5679, %v5676
    %v5701 = vpack.c.bf16 %v5680, %v5677
    %v5702 = vpack.c.bf16 %v5681, %v5678
    %v5703 = vpack.c.bf16 %v5685, %v5682
    %v5704 = vpack.c.bf16 %v5686, %v5683
    %v5705 = vpack.c.bf16 %v5687, %v5684
    %v5706 = vpack.c.bf16 %v5691, %v5688
    %v5707 = vpack.c.bf16 %v5692, %v5689
    %v5708 = vpack.c.bf16 %v5693, %v5690
    %v5709 = vpack.c.bf16 %v5697, %v5694
    %v5710 = vpack.c.bf16 %v5698, %v5695
    %v5711 = vpack.c.bf16 %v5699, %v5696
    %s5712 = scalar_lea.vmem [#allocation7], 3072
    %v5713 = vld [vmem:[%s5712] sm:$0xff]
    %v5714 = vld [vmem:[%s5712 + $0x8] sm:$0xff]
    %v5715 = vld [vmem:[%s5712 + $0x10] sm:$0xff]
    %v5716 = vld [vmem:[%s5712 + $0x18] sm:$0xff]
    %v5717 = vld [vmem:[%s5712 + $0x20] sm:$0xff]
    %v5718 = vld [vmem:[%s5712 + $0x28] sm:$0xff]
    %v5719 = vld [vmem:[%s5712 + $0x30] sm:$0xff]
    %v5720 = vld [vmem:[%s5712 + $0x38] sm:$0xff]
    %v5721 = vld [vmem:[%s5712 + $0x40] sm:$0xff]
    %v5722 = vld [vmem:[%s5712 + $0x48] sm:$0xff]
    %v5723 = vld [vmem:[%s5712 + $0x50] sm:$0xff]
    %v5724 = vld [vmem:[%s5712 + $0x58] sm:$0xff]
    %v5725 = vld [vmem:[%s5712 + $0x60] sm:$0xff]
    %v5726 = vld [vmem:[%s5712 + $0x68] sm:$0xff]
    %v5727 = vld [vmem:[%s5712 + $0x70] sm:$0xff]
    %v5728 = vld [vmem:[%s5712 + $0x78] sm:$0xff]
    %v5729 = vld [vmem:[%s5712 + $0x80] sm:$0xff]
    %v5730 = vld [vmem:[%s5712 + $0x88] sm:$0xff]
    %v5731 = vld [vmem:[%s5712 + $0x90] sm:$0xff]
    %v5732 = vld [vmem:[%s5712 + $0x98] sm:$0xff]
    %v5733 = vld [vmem:[%s5712 + $0xa0] sm:$0xff]
    %v5734 = vld [vmem:[%s5712 + $0xa8] sm:$0xff]
    %v5735 = vld [vmem:[%s5712 + $0xb0] sm:$0xff]
    %v5736 = vld [vmem:[%s5712 + $0xb8] sm:$0xff]
    %v5737 = vld [vmem:[%s5712 + $0xc0] sm:$0xff]
    %v5738 = vld [vmem:[%s5712 + $0xc8] sm:$0xff]
    %v5739 = vld [vmem:[%s5712 + $0xd0] sm:$0xff]
    %v5740 = vld [vmem:[%s5712 + $0xd8] sm:$0xff]
    %v5741 = vld [vmem:[%s5712 + $0xe0] sm:$0xff]
    %v5742 = vld [vmem:[%s5712 + $0xe8] sm:$0xff]
    %v5743 = vld [vmem:[%s5712 + $0xf0] sm:$0xff]
    %v5744 = vld [vmem:[%s5712 + $0xf8] sm:$0xff]
    %v5745 = vld [vmem:[%s5712 + $0x100] sm:$0xff]
    %v5746 = vld [vmem:[%s5712 + $0x108] sm:$0xff]
    %v5747 = vld [vmem:[%s5712 + $0x110] sm:$0xff]
    %v5748 = vld [vmem:[%s5712 + $0x118] sm:$0xff]
    %v5749 = vld [vmem:[%s5712 + $0x120] sm:$0xff]
    %v5750 = vld [vmem:[%s5712 + $0x128] sm:$0xff]
    %v5751 = vld [vmem:[%s5712 + $0x130] sm:$0xff]
    %v5752 = vld [vmem:[%s5712 + $0x138] sm:$0xff]
    %v5753 = vld [vmem:[%s5712 + $0x140] sm:$0xff]
    %v5754 = vld [vmem:[%s5712 + $0x148] sm:$0xff]
    %v5755 = vld [vmem:[%s5712 + $0x150] sm:$0xff]
    %v5756 = vld [vmem:[%s5712 + $0x158] sm:$0xff]
    %v5757 = vld [vmem:[%s5712 + $0x160] sm:$0xff]
    %v5758 = vld [vmem:[%s5712 + $0x168] sm:$0xff]
    %v5759 = vld [vmem:[%s5712 + $0x170] sm:$0xff]
    %v5760 = vld [vmem:[%s5712 + $0x178] sm:$0xff]
    %v5761 = vld [vmem:[%s5712 + $0x180] sm:$0xff]
    %v5762 = vld [vmem:[%s5712 + $0x188] sm:$0xff]
    %v5763 = vld [vmem:[%s5712 + $0x190] sm:$0xff]
    %v5764 = vld [vmem:[%s5712 + $0x198] sm:$0xff]
    %v5765 = vld [vmem:[%s5712 + $0x1a0] sm:$0xff]
    %v5766 = vld [vmem:[%s5712 + $0x1a8] sm:$0xff]
    %v5767 = vld [vmem:[%s5712 + $0x1b0] sm:$0xff]
    %v5768 = vld [vmem:[%s5712 + $0x1b8] sm:$0xff]
    %v5769 = vld [vmem:[%s5712 + $0x1c0] sm:$0xff]
    %v5770 = vld [vmem:[%s5712 + $0x1c8] sm:$0xff]
    %v5771 = vld [vmem:[%s5712 + $0x1d0] sm:$0xff]
    %v5772 = vld [vmem:[%s5712 + $0x1d8] sm:$0xff]
    %v5773 = vld [vmem:[%s5712 + $0x1e0] sm:$0xff]
    %v5774 = vld [vmem:[%s5712 + $0x1e8] sm:$0xff]
    %v5775 = vld [vmem:[%s5712 + $0x1f0] sm:$0xff]
    %v5776 = vld [vmem:[%s5712 + $0x1f8] sm:$0xff]
    %v5777 = vld [vmem:[%s5712 + $0x200] sm:$0xff]
    %v5778 = vld [vmem:[%s5712 + $0x208] sm:$0xff]
    %v5779 = vld [vmem:[%s5712 + $0x210] sm:$0xff]
    %v5780 = vld [vmem:[%s5712 + $0x218] sm:$0xff]
    %v5781 = vld [vmem:[%s5712 + $0x220] sm:$0xff]
    %v5782 = vld [vmem:[%s5712 + $0x228] sm:$0xff]
    %v5783 = vld [vmem:[%s5712 + $0x230] sm:$0xff]
    %v5784 = vld [vmem:[%s5712 + $0x238] sm:$0xff]
    %v5785 = vld [vmem:[%s5712 + $0x240] sm:$0xff]
    %v5786 = vld [vmem:[%s5712 + $0x248] sm:$0xff]
    %v5787 = vld [vmem:[%s5712 + $0x250] sm:$0xff]
    %v5788 = vld [vmem:[%s5712 + $0x258] sm:$0xff]
    %v5789 = vld [vmem:[%s5712 + $0x260] sm:$0xff]
    %v5790 = vld [vmem:[%s5712 + $0x268] sm:$0xff]
    %v5791 = vld [vmem:[%s5712 + $0x270] sm:$0xff]
    %v5792 = vld [vmem:[%s5712 + $0x278] sm:$0xff]
    %v5793 = vld [vmem:[%s5712 + $0x280] sm:$0xff]
    %v5794 = vld [vmem:[%s5712 + $0x288] sm:$0xff]
    %v5795 = vld [vmem:[%s5712 + $0x290] sm:$0xff]
    %v5796 = vld [vmem:[%s5712 + $0x298] sm:$0xff]
    %v5797 = vld [vmem:[%s5712 + $0x2a0] sm:$0xff]
    %v5798 = vld [vmem:[%s5712 + $0x2a8] sm:$0xff]
    %v5799 = vld [vmem:[%s5712 + $0x2b0] sm:$0xff]
    %v5800 = vld [vmem:[%s5712 + $0x2b8] sm:$0xff]
    %v5801 = vld [vmem:[%s5712 + $0x2c0] sm:$0xff]
    %v5802 = vld [vmem:[%s5712 + $0x2c8] sm:$0xff]
    %v5803 = vld [vmem:[%s5712 + $0x2d0] sm:$0xff]
    %v5804 = vld [vmem:[%s5712 + $0x2d8] sm:$0xff]
    %v5805 = vld [vmem:[%s5712 + $0x2e0] sm:$0xff]
    %v5806 = vld [vmem:[%s5712 + $0x2e8] sm:$0xff]
    %v5807 = vld [vmem:[%s5712 + $0x2f0] sm:$0xff]
    %v5808 = vld [vmem:[%s5712 + $0x2f8] sm:$0xff]
    %v5905 = vunpack.c.l.b16 %v5713
    %v5906 = vunpack.c.h.b16 %v5713
    %v5907 = vunpack.c.l.b16 %v5714
    %v5908 = vunpack.c.h.b16 %v5714
    %v5909 = vunpack.c.l.b16 %v5715
    %v5910 = vunpack.c.h.b16 %v5715
    %v5911 = vunpack.c.l.b16 %v5716
    %v5912 = vunpack.c.h.b16 %v5716
    %v5913 = vunpack.c.l.b16 %v5717
    %v5914 = vunpack.c.h.b16 %v5717
    %v5915 = vunpack.c.l.b16 %v5718
    %v5916 = vunpack.c.h.b16 %v5718
    %v5917 = vunpack.c.l.b16 %v5719
    %v5918 = vunpack.c.h.b16 %v5719
    %v5919 = vunpack.c.l.b16 %v5720
    %v5920 = vunpack.c.h.b16 %v5720
    %v5921 = vunpack.c.l.b16 %v5721
    %v5922 = vunpack.c.h.b16 %v5721
    %v5923 = vunpack.c.l.b16 %v5722
    %v5924 = vunpack.c.h.b16 %v5722
    %v5925 = vunpack.c.l.b16 %v5723
    %v5926 = vunpack.c.h.b16 %v5723
    %v5927 = vunpack.c.l.b16 %v5724
    %v5928 = vunpack.c.h.b16 %v5724
    %v5929 = vunpack.c.l.b16 %v5725
    %v5930 = vunpack.c.h.b16 %v5725
    %v5931 = vunpack.c.l.b16 %v5726
    %v5932 = vunpack.c.h.b16 %v5726
    %v5933 = vunpack.c.l.b16 %v5727
    %v5934 = vunpack.c.h.b16 %v5727
    %v5935 = vunpack.c.l.b16 %v5728
    %v5936 = vunpack.c.h.b16 %v5728
    %v5937 = vunpack.c.l.b16 %v5729
    %v5938 = vunpack.c.h.b16 %v5729
    %v5939 = vunpack.c.l.b16 %v5730
    %v5940 = vunpack.c.h.b16 %v5730
    %v5941 = vunpack.c.l.b16 %v5731
    %v5942 = vunpack.c.h.b16 %v5731
    %v5943 = vunpack.c.l.b16 %v5732
    %v5944 = vunpack.c.h.b16 %v5732
    %v5945 = vunpack.c.l.b16 %v5733
    %v5946 = vunpack.c.h.b16 %v5733
    %v5947 = vunpack.c.l.b16 %v5734
    %v5948 = vunpack.c.h.b16 %v5734
    %v5949 = vunpack.c.l.b16 %v5735
    %v5950 = vunpack.c.h.b16 %v5735
    %v5951 = vunpack.c.l.b16 %v5736
    %v5952 = vunpack.c.h.b16 %v5736
    %v5953 = vunpack.c.l.b16 %v5737
    %v5954 = vunpack.c.h.b16 %v5737
    %v5955 = vunpack.c.l.b16 %v5738
    %v5956 = vunpack.c.h.b16 %v5738
    %v5957 = vunpack.c.l.b16 %v5739
    %v5958 = vunpack.c.h.b16 %v5739
    %v5959 = vunpack.c.l.b16 %v5740
    %v5960 = vunpack.c.h.b16 %v5740
    %v5961 = vunpack.c.l.b16 %v5741
    %v5962 = vunpack.c.h.b16 %v5741
    %v5963 = vunpack.c.l.b16 %v5742
    %v5964 = vunpack.c.h.b16 %v5742
    %v5965 = vunpack.c.l.b16 %v5743
    %v5966 = vunpack.c.h.b16 %v5743
    %v5967 = vunpack.c.l.b16 %v5744
    %v5968 = vunpack.c.h.b16 %v5744
    %v5969 = vunpack.c.l.b16 %v5745
    %v5970 = vunpack.c.h.b16 %v5745
    %v5971 = vunpack.c.l.b16 %v5746
    %v5972 = vunpack.c.h.b16 %v5746
    %v5973 = vunpack.c.l.b16 %v5747
    %v5974 = vunpack.c.h.b16 %v5747
    %v5975 = vunpack.c.l.b16 %v5748
    %v5976 = vunpack.c.h.b16 %v5748
    %v5977 = vunpack.c.l.b16 %v5749
    %v5978 = vunpack.c.h.b16 %v5749
    %v5979 = vunpack.c.l.b16 %v5750
    %v5980 = vunpack.c.h.b16 %v5750
    %v5981 = vunpack.c.l.b16 %v5751
    %v5982 = vunpack.c.h.b16 %v5751
    %v5983 = vunpack.c.l.b16 %v5752
    %v5984 = vunpack.c.h.b16 %v5752
    %v5985 = vunpack.c.l.b16 %v5753
    %v5986 = vunpack.c.h.b16 %v5753
    %v5987 = vunpack.c.l.b16 %v5754
    %v5988 = vunpack.c.h.b16 %v5754
    %v5989 = vunpack.c.l.b16 %v5755
    %v5990 = vunpack.c.h.b16 %v5755
    %v5991 = vunpack.c.l.b16 %v5756
    %v5992 = vunpack.c.h.b16 %v5756
    %v5993 = vunpack.c.l.b16 %v5757
    %v5994 = vunpack.c.h.b16 %v5757
    %v5995 = vunpack.c.l.b16 %v5758
    %v5996 = vunpack.c.h.b16 %v5758
    %v5997 = vunpack.c.l.b16 %v5759
    %v5998 = vunpack.c.h.b16 %v5759
    %v5999 = vunpack.c.l.b16 %v5760
    %v6000 = vunpack.c.h.b16 %v5760
    %v6001 = vunpack.c.l.b16 %v5761
    %v6002 = vunpack.c.h.b16 %v5761
    %v6003 = vunpack.c.l.b16 %v5762
    %v6004 = vunpack.c.h.b16 %v5762
    %v6005 = vunpack.c.l.b16 %v5763
    %v6006 = vunpack.c.h.b16 %v5763
    %v6007 = vunpack.c.l.b16 %v5764
    %v6008 = vunpack.c.h.b16 %v5764
    %v6009 = vunpack.c.l.b16 %v5765
    %v6010 = vunpack.c.h.b16 %v5765
    %v6011 = vunpack.c.l.b16 %v5766
    %v6012 = vunpack.c.h.b16 %v5766
    %v6013 = vunpack.c.l.b16 %v5767
    %v6014 = vunpack.c.h.b16 %v5767
    %v6015 = vunpack.c.l.b16 %v5768
    %v6016 = vunpack.c.h.b16 %v5768
    %v6017 = vunpack.c.l.b16 %v5769
    %v6018 = vunpack.c.h.b16 %v5769
    %v6019 = vunpack.c.l.b16 %v5770
    %v6020 = vunpack.c.h.b16 %v5770
    %v6021 = vunpack.c.l.b16 %v5771
    %v6022 = vunpack.c.h.b16 %v5771
    %v6023 = vunpack.c.l.b16 %v5772
    %v6024 = vunpack.c.h.b16 %v5772
    %v6025 = vunpack.c.l.b16 %v5773
    %v6026 = vunpack.c.h.b16 %v5773
    %v6027 = vunpack.c.l.b16 %v5774
    %v6028 = vunpack.c.h.b16 %v5774
    %v6029 = vunpack.c.l.b16 %v5775
    %v6030 = vunpack.c.h.b16 %v5775
    %v6031 = vunpack.c.l.b16 %v5776
    %v6032 = vunpack.c.h.b16 %v5776
    %v6033 = vunpack.c.l.b16 %v5777
    %v6034 = vunpack.c.h.b16 %v5777
    %v6035 = vunpack.c.l.b16 %v5778
    %v6036 = vunpack.c.h.b16 %v5778
    %v6037 = vunpack.c.l.b16 %v5779
    %v6038 = vunpack.c.h.b16 %v5779
    %v6039 = vunpack.c.l.b16 %v5780
    %v6040 = vunpack.c.h.b16 %v5780
    %v6041 = vunpack.c.l.b16 %v5781
    %v6042 = vunpack.c.h.b16 %v5781
    %v6043 = vunpack.c.l.b16 %v5782
    %v6044 = vunpack.c.h.b16 %v5782
    %v6045 = vunpack.c.l.b16 %v5783
    %v6046 = vunpack.c.h.b16 %v5783
    %v6047 = vunpack.c.l.b16 %v5784
    %v6048 = vunpack.c.h.b16 %v5784
    %v6049 = vunpack.c.l.b16 %v5785
    %v6050 = vunpack.c.h.b16 %v5785
    %v6051 = vunpack.c.l.b16 %v5786
    %v6052 = vunpack.c.h.b16 %v5786
    %v6053 = vunpack.c.l.b16 %v5787
    %v6054 = vunpack.c.h.b16 %v5787
    %v6055 = vunpack.c.l.b16 %v5788
    %v6056 = vunpack.c.h.b16 %v5788
    %v6057 = vunpack.c.l.b16 %v5789
    %v6058 = vunpack.c.h.b16 %v5789
    %v6059 = vunpack.c.l.b16 %v5790
    %v6060 = vunpack.c.h.b16 %v5790
    %v6061 = vunpack.c.l.b16 %v5791
    %v6062 = vunpack.c.h.b16 %v5791
    %v6063 = vunpack.c.l.b16 %v5792
    %v6064 = vunpack.c.h.b16 %v5792
    %v6065 = vunpack.c.l.b16 %v5793
    %v6066 = vunpack.c.h.b16 %v5793
    %v6067 = vunpack.c.l.b16 %v5794
    %v6068 = vunpack.c.h.b16 %v5794
    %v6069 = vunpack.c.l.b16 %v5795
    %v6070 = vunpack.c.h.b16 %v5795
    %v6071 = vunpack.c.l.b16 %v5796
    %v6072 = vunpack.c.h.b16 %v5796
    %v6073 = vunpack.c.l.b16 %v5797
    %v6074 = vunpack.c.h.b16 %v5797
    %v6075 = vunpack.c.l.b16 %v5798
    %v6076 = vunpack.c.h.b16 %v5798
    %v6077 = vunpack.c.l.b16 %v5799
    %v6078 = vunpack.c.h.b16 %v5799
    %v6079 = vunpack.c.l.b16 %v5800
    %v6080 = vunpack.c.h.b16 %v5800
    %v6081 = vunpack.c.l.b16 %v5801
    %v6082 = vunpack.c.h.b16 %v5801
    %v6083 = vunpack.c.l.b16 %v5802
    %v6084 = vunpack.c.h.b16 %v5802
    %v6085 = vunpack.c.l.b16 %v5803
    %v6086 = vunpack.c.h.b16 %v5803
    %v6087 = vunpack.c.l.b16 %v5804
    %v6088 = vunpack.c.h.b16 %v5804
    %v6089 = vunpack.c.l.b16 %v5805
    %v6090 = vunpack.c.h.b16 %v5805
    %v6091 = vunpack.c.l.b16 %v5806
    %v6092 = vunpack.c.h.b16 %v5806
    %v6093 = vunpack.c.l.b16 %v5807
    %v6094 = vunpack.c.h.b16 %v5807
    %v6095 = vunpack.c.l.b16 %v5808
    %v6096 = vunpack.c.h.b16 %v5808
    %v6097 = vpack.c.b16 %v5909, %v5905
    %v6098 = vpack.c.b16 %v5910, %v5906
    %v6099 = vpack.c.b16 %v5911, %v5907
    %v6100 = vpack.c.b16 %v5912, %v5908
    %v6101 = vpack.c.b16 %v5917, %v5913
    %v6102 = vpack.c.b16 %v5918, %v5914
    %v6103 = vpack.c.b16 %v5919, %v5915
    %v6104 = vpack.c.b16 %v5920, %v5916
    %v6105 = vpack.c.b16 %v5925, %v5921
    %v6106 = vpack.c.b16 %v5926, %v5922
    %v6107 = vpack.c.b16 %v5927, %v5923
    %v6108 = vpack.c.b16 %v5928, %v5924
    %v6109 = vpack.c.b16 %v5933, %v5929
    %v6110 = vpack.c.b16 %v5934, %v5930
    %v6111 = vpack.c.b16 %v5935, %v5931
    %v6112 = vpack.c.b16 %v5936, %v5932
    %v6113 = vpack.c.b16 %v5941, %v5937
    %v6114 = vpack.c.b16 %v5942, %v5938
    %v6115 = vpack.c.b16 %v5943, %v5939
    %v6116 = vpack.c.b16 %v5944, %v5940
    %v6117 = vpack.c.b16 %v5949, %v5945
    %v6118 = vpack.c.b16 %v5950, %v5946
    %v6119 = vpack.c.b16 %v5951, %v5947
    %v6120 = vpack.c.b16 %v5952, %v5948
    %v6121 = vpack.c.b16 %v5957, %v5953
    %v6122 = vpack.c.b16 %v5958, %v5954
    %v6123 = vpack.c.b16 %v5959, %v5955
    %v6124 = vpack.c.b16 %v5960, %v5956
    %v6125 = vpack.c.b16 %v5965, %v5961
    %v6126 = vpack.c.b16 %v5966, %v5962
    %v6127 = vpack.c.b16 %v5967, %v5963
    %v6128 = vpack.c.b16 %v5968, %v5964
    %v6129 = vpack.c.b16 %v5973, %v5969
    %v6130 = vpack.c.b16 %v5974, %v5970
    %v6131 = vpack.c.b16 %v5975, %v5971
    %v6132 = vpack.c.b16 %v5976, %v5972
    %v6133 = vpack.c.b16 %v5981, %v5977
    %v6134 = vpack.c.b16 %v5982, %v5978
    %v6135 = vpack.c.b16 %v5983, %v5979
    %v6136 = vpack.c.b16 %v5984, %v5980
    %v6137 = vpack.c.b16 %v5989, %v5985
    %v6138 = vpack.c.b16 %v5990, %v5986
    %v6139 = vpack.c.b16 %v5991, %v5987
    %v6140 = vpack.c.b16 %v5992, %v5988
    %v6141 = vpack.c.b16 %v5997, %v5993
    %v6142 = vpack.c.b16 %v5998, %v5994
    %v6143 = vpack.c.b16 %v5999, %v5995
    %v6144 = vpack.c.b16 %v6000, %v5996
    %v6145 = vpack.c.b16 %v6005, %v6001
    %v6146 = vpack.c.b16 %v6006, %v6002
    %v6147 = vpack.c.b16 %v6007, %v6003
    %v6148 = vpack.c.b16 %v6008, %v6004
    %v6149 = vpack.c.b16 %v6013, %v6009
    %v6150 = vpack.c.b16 %v6014, %v6010
    %v6151 = vpack.c.b16 %v6015, %v6011
    %v6152 = vpack.c.b16 %v6016, %v6012
    %v6153 = vpack.c.b16 %v6021, %v6017
    %v6154 = vpack.c.b16 %v6022, %v6018
    %v6155 = vpack.c.b16 %v6023, %v6019
    %v6156 = vpack.c.b16 %v6024, %v6020
    %v6157 = vpack.c.b16 %v6029, %v6025
    %v6158 = vpack.c.b16 %v6030, %v6026
    %v6159 = vpack.c.b16 %v6031, %v6027
    %v6160 = vpack.c.b16 %v6032, %v6028
    %v6161 = vpack.c.b16 %v6037, %v6033
    %v6162 = vpack.c.b16 %v6038, %v6034
    %v6163 = vpack.c.b16 %v6039, %v6035
    %v6164 = vpack.c.b16 %v6040, %v6036
    %v6165 = vpack.c.b16 %v6045, %v6041
    %v6166 = vpack.c.b16 %v6046, %v6042
    %v6167 = vpack.c.b16 %v6047, %v6043
    %v6168 = vpack.c.b16 %v6048, %v6044
    %v6169 = vpack.c.b16 %v6053, %v6049
    %v6170 = vpack.c.b16 %v6054, %v6050
    %v6171 = vpack.c.b16 %v6055, %v6051
    %v6172 = vpack.c.b16 %v6056, %v6052
    %v6173 = vpack.c.b16 %v6061, %v6057
    %v6174 = vpack.c.b16 %v6062, %v6058
    %v6175 = vpack.c.b16 %v6063, %v6059
    %v6176 = vpack.c.b16 %v6064, %v6060
    %v6177 = vpack.c.b16 %v6069, %v6065
    %v6178 = vpack.c.b16 %v6070, %v6066
    %v6179 = vpack.c.b16 %v6071, %v6067
    %v6180 = vpack.c.b16 %v6072, %v6068
    %v6181 = vpack.c.b16 %v6077, %v6073
    %v6182 = vpack.c.b16 %v6078, %v6074
    %v6183 = vpack.c.b16 %v6079, %v6075
    %v6184 = vpack.c.b16 %v6080, %v6076
    %v6185 = vpack.c.b16 %v6085, %v6081
    %v6186 = vpack.c.b16 %v6086, %v6082
    %v6187 = vpack.c.b16 %v6087, %v6083
    %v6188 = vpack.c.b16 %v6088, %v6084
    %v6189 = vpack.c.b16 %v6093, %v6089
    %v6190 = vpack.c.b16 %v6094, %v6090
    %v6191 = vpack.c.b16 %v6095, %v6091
    %v6192 = vpack.c.b16 %v6096, %v6092
    %6289 = vmatprep.subr.bf16.mxu0 %v6126
    %6290 = vmatpush1.bf16.msra.mxu0 %v6125
    %6291 = vmatprep.subr.bf16.mxu0 %v6122
    %6292 = vmatpush1.bf16.msra.mxu0 %v6121
    %6293 = vmatprep.subr.bf16.mxu0 %v6118
    %6294 = vmatpush1.bf16.msra.mxu0 %v6117
    %6295 = vmatprep.subr.bf16.mxu0 %v6114
    %6296 = vmatpush1.bf16.msra.mxu0 %v6113
    %6297 = vmatprep.subr.bf16.mxu0 %v6110
    %6298 = vmatpush1.bf16.msra.mxu0 %v6109
    %6299 = vmatprep.subr.bf16.mxu0 %v6106
    %6300 = vmatpush1.bf16.msra.mxu0 %v6105
    %6301 = vmatprep.subr.bf16.mxu0 %v6102
    %6302 = vmatpush1.bf16.msra.mxu0 %v6101
    %6303 = vmatprep.subr.bf16.mxu0 %v6098
    %6304 = vmatpush1.bf16.msra.mxu0 %v6097
    %6305 = vmatprep.subr.bf16.mxu0 %v6158
    %6306 = vmatpush2.bf16.msra.mxu0 %v6157
    %6307 = vmatprep.subr.bf16.mxu0 %v6154
    %6308 = vmatpush2.bf16.msra.mxu0 %v6153
    %6309 = vmatprep.subr.bf16.mxu0 %v6150
    %6310 = vmatpush2.bf16.msra.mxu0 %v6149
    %6311 = vmatprep.subr.bf16.mxu0 %v6146
    %6312 = vmatpush2.bf16.msra.mxu0 %v6145
    %6313 = vmatprep.subr.bf16.mxu0 %v6142
    %6314 = vmatpush2.bf16.msra.mxu0 %v6141
    %6315 = vmatprep.subr.bf16.mxu0 %v6138
    %6316 = vmatpush2.bf16.msra.mxu0 %v6137
    %6317 = vmatprep.subr.bf16.mxu0 %v6134
    %6318 = vmatpush2.bf16.msra.mxu0 %v6133
    %6319 = vmatprep.subr.bf16.mxu0 %v6130
    %6320 = vmatpush2.bf16.msra.mxu0 %v6129
    %6321 = vmatprep.mubr.bf16.mxu0 %v5701
    %6322 = vmatmul.mubr.bf16.gmra.mxu0 %v5700
    %v6323 = vpop.f32.mrf.mxu0
    %v6324 = vadd.f32 0.0, %v6323
    %v6325 = vpop.f32.mrf.mxu0
    %v6326 = vadd.f32 0.0, %v6325
    %v6327 = vpop.f32.mrf.mxu0
    %v6328 = vadd.f32 0.0, %v6327
    %v6329 = vpop.f32.mrf.mxu0
    %v6330 = vadd.f32 0.0, %v6329
    %6331 = vmatprep.mubr.bf16.mxu0 %v5704
    %6332 = vmatmul.mubr.bf16.gmra.mxu0 %v5703
    %v6333 = vpop.f32.mrf.mxu0
    %v6334 = vadd.f32 0.0, %v6333
    %v6335 = vpop.f32.mrf.mxu0
    %v6336 = vadd.f32 0.0, %v6335
    %v6337 = vpop.f32.mrf.mxu0
    %v6338 = vadd.f32 0.0, %v6337
    %v6339 = vpop.f32.mrf.mxu0
    %v6340 = vadd.f32 0.0, %v6339
    %6341 = vmatprep.mubr.bf16.mxu0 %v5707
    %6342 = vmatmul.mubr.bf16.gmra.mxu0 %v5706
    %v6343 = vpop.f32.mrf.mxu0
    %v6344 = vadd.f32 0.0, %v6343
    %v6345 = vpop.f32.mrf.mxu0
    %v6346 = vadd.f32 0.0, %v6345
    %v6347 = vpop.f32.mrf.mxu0
    %v6348 = vadd.f32 0.0, %v6347
    %v6349 = vpop.f32.mrf.mxu0
    %v6350 = vadd.f32 0.0, %v6349
    %6351 = vmatprep.mubr.bf16.mxu0 %v5710
    %6352 = vmatmul.mubr.bf16.gmra.mxu0 %v5709
    %v6353 = vpop.f32.mrf.mxu0
    %v6354 = vadd.f32 0.0, %v6353
    %v6355 = vpop.f32.mrf.mxu0
    %v6356 = vadd.f32 0.0, %v6355
    %v6357 = vpop.f32.mrf.mxu0
    %v6358 = vadd.f32 0.0, %v6357
    %v6359 = vpop.f32.mrf.mxu0
    %v6360 = vadd.f32 0.0, %v6359
    %6361 = vdwg.mxu0
    %6362 = vmatprep.subr.bf16.mxu0 %v6190
    %6363 = vmatpush1.bf16.msra.mxu0 %v6189
    %6364 = vmatprep.subr.bf16.mxu0 %v6186
    %6365 = vmatpush1.bf16.msra.mxu0 %v6185
    %6366 = vmatprep.subr.bf16.mxu0 %v6182
    %6367 = vmatpush1.bf16.msra.mxu0 %v6181
    %6368 = vmatprep.subr.bf16.mxu0 %v6178
    %6369 = vmatpush1.bf16.msra.mxu0 %v6177
    %6370 = vmatprep.subr.bf16.mxu0 %v6174
    %6371 = vmatpush1.bf16.msra.mxu0 %v6173
    %6372 = vmatprep.subr.bf16.mxu0 %v6170
    %6373 = vmatpush1.bf16.msra.mxu0 %v6169
    %6374 = vmatprep.subr.bf16.mxu0 %v6166
    %6375 = vmatpush1.bf16.msra.mxu0 %v6165
    %6376 = vmatprep.subr.bf16.mxu0 %v6162
    %6377 = vmatpush1.bf16.msra.mxu0 %v6161
    %6378 = vmatprep.subr.bf16.mxu0 0
    %6379 = vmatpush2.bf16.msra.mxu0 0
    %6380 = vmatprep.subr.bf16.mxu0 0
    %6381 = vmatpush2.bf16.msra.mxu0 0
    %6382 = vmatprep.subr.bf16.mxu0 0
    %6383 = vmatpush2.bf16.msra.mxu0 0
    %6384 = vmatprep.subr.bf16.mxu0 0
    %6385 = vmatpush2.bf16.msra.mxu0 0
    %6386 = vmatprep.subr.bf16.mxu0 0
    %6387 = vmatpush2.bf16.msra.mxu0 0
    %6388 = vmatprep.subr.bf16.mxu0 0
    %6389 = vmatpush2.bf16.msra.mxu0 0
    %6390 = vmatprep.subr.bf16.mxu0 0
    %6391 = vmatpush2.bf16.msra.mxu0 0
    %6392 = vmatprep.subr.bf16.mxu0 0
    %6393 = vmatpush2.bf16.msra.mxu0 0
    %6394 = vmatprep.mubr.bf16.mxu0 0
    %6395 = vmatmul.mubr.bf16.gmra.mxu0 %v5702
    %v6396 = vpop.f32.mrf.mxu0
    %v6397 = vadd.f32 %v6324, %v6396
    %v6398 = vpop.f32.mrf.mxu0
    %v6399 = vadd.f32 %v6326, %v6398
    %v6400 = vpop.f32.mrf.mxu0
    %v6401 = vadd.f32 %v6328, %v6400
    %v6402 = vpop.f32.mrf.mxu0
    %v6403 = vadd.f32 %v6330, %v6402
    %6404 = vmatprep.mubr.bf16.mxu0 0
    %6405 = vmatmul.mubr.bf16.gmra.mxu0 %v5705
    %v6406 = vpop.f32.mrf.mxu0
    %v6407 = vadd.f32 %v6334, %v6406
    %v6408 = vpop.f32.mrf.mxu0
    %v6409 = vadd.f32 %v6336, %v6408
    %v6410 = vpop.f32.mrf.mxu0
    %v6411 = vadd.f32 %v6338, %v6410
    %v6412 = vpop.f32.mrf.mxu0
    %v6413 = vadd.f32 %v6340, %v6412
    %6414 = vmatprep.mubr.bf16.mxu0 0
    %6415 = vmatmul.mubr.bf16.gmra.mxu0 %v5708
    %v6416 = vpop.f32.mrf.mxu0
    %v6417 = vadd.f32 %v6344, %v6416
    %v6418 = vpop.f32.mrf.mxu0
    %v6419 = vadd.f32 %v6346, %v6418
    %v6420 = vpop.f32.mrf.mxu0
    %v6421 = vadd.f32 %v6348, %v6420
    %v6422 = vpop.f32.mrf.mxu0
    %v6423 = vadd.f32 %v6350, %v6422
    %6424 = vmatprep.mubr.bf16.mxu0 0
    %6425 = vmatmul.mubr.bf16.gmra.mxu0 %v5711
    %v6426 = vpop.f32.mrf.mxu0
    %v6427 = vadd.f32 %v6354, %v6426
    %v6428 = vpop.f32.mrf.mxu0
    %v6429 = vadd.f32 %v6356, %v6428
    %v6430 = vpop.f32.mrf.mxu0
    %v6431 = vadd.f32 %v6358, %v6430
    %v6432 = vpop.f32.mrf.mxu0
    %v6433 = vadd.f32 %v6360, %v6432
    %6434 = vdwg.mxu0
    %6435 = vmatprep.subr.bf16.mxu0 %v6128
    %6436 = vmatpush1.bf16.msra.mxu0 %v6127
    %6437 = vmatprep.subr.bf16.mxu0 %v6124
    %6438 = vmatpush1.bf16.msra.mxu0 %v6123
    %6439 = vmatprep.subr.bf16.mxu0 %v6120
    %6440 = vmatpush1.bf16.msra.mxu0 %v6119
    %6441 = vmatprep.subr.bf16.mxu0 %v6116
    %6442 = vmatpush1.bf16.msra.mxu0 %v6115
    %6443 = vmatprep.subr.bf16.mxu0 %v6112
    %6444 = vmatpush1.bf16.msra.mxu0 %v6111
    %6445 = vmatprep.subr.bf16.mxu0 %v6108
    %6446 = vmatpush1.bf16.msra.mxu0 %v6107
    %6447 = vmatprep.subr.bf16.mxu0 %v6104
    %6448 = vmatpush1.bf16.msra.mxu0 %v6103
    %6449 = vmatprep.subr.bf16.mxu0 %v6100
    %6450 = vmatpush1.bf16.msra.mxu0 %v6099
    %6451 = vmatprep.subr.bf16.mxu0 %v6160
    %6452 = vmatpush2.bf16.msra.mxu0 %v6159
    %6453 = vmatprep.subr.bf16.mxu0 %v6156
    %6454 = vmatpush2.bf16.msra.mxu0 %v6155
    %6455 = vmatprep.subr.bf16.mxu0 %v6152
    %6456 = vmatpush2.bf16.msra.mxu0 %v6151
    %6457 = vmatprep.subr.bf16.mxu0 %v6148
    %6458 = vmatpush2.bf16.msra.mxu0 %v6147
    %6459 = vmatprep.subr.bf16.mxu0 %v6144
    %6460 = vmatpush2.bf16.msra.mxu0 %v6143
    %6461 = vmatprep.subr.bf16.mxu0 %v6140
    %6462 = vmatpush2.bf16.msra.mxu0 %v6139
    %6463 = vmatprep.subr.bf16.mxu0 %v6136
    %6464 = vmatpush2.bf16.msra.mxu0 %v6135
    %6465 = vmatprep.subr.bf16.mxu0 %v6132
    %6466 = vmatpush2.bf16.msra.mxu0 %v6131
    %6467 = vmatprep.mubr.bf16.mxu0 %v5701
    %6468 = vmatmul.mubr.bf16.gmra.mxu0 %v5700
    %v6469 = vpop.f32.mrf.mxu0
    %v6470 = vadd.f32 0.0, %v6469
    %v6471 = vpop.f32.mrf.mxu0
    %v6472 = vadd.f32 0.0, %v6471
    %v6473 = vpop.f32.mrf.mxu0
    %v6474 = vadd.f32 0.0, %v6473
    %v6475 = vpop.f32.mrf.mxu0
    %v6476 = vadd.f32 0.0, %v6475
    %6477 = vmatprep.mubr.bf16.mxu0 %v5704
    %6478 = vmatmul.mubr.bf16.gmra.mxu0 %v5703
    %v6479 = vpop.f32.mrf.mxu0
    %v6480 = vadd.f32 0.0, %v6479
    %v6481 = vpop.f32.mrf.mxu0
    %v6482 = vadd.f32 0.0, %v6481
    %v6483 = vpop.f32.mrf.mxu0
    %v6484 = vadd.f32 0.0, %v6483
    %v6485 = vpop.f32.mrf.mxu0
    %v6486 = vadd.f32 0.0, %v6485
    %6487 = vmatprep.mubr.bf16.mxu0 %v5707
    %6488 = vmatmul.mubr.bf16.gmra.mxu0 %v5706
    %v6489 = vpop.f32.mrf.mxu0
    %v6490 = vadd.f32 0.0, %v6489
    %v6491 = vpop.f32.mrf.mxu0
    %v6492 = vadd.f32 0.0, %v6491
    %v6493 = vpop.f32.mrf.mxu0
    %v6494 = vadd.f32 0.0, %v6493
    %v6495 = vpop.f32.mrf.mxu0
    %v6496 = vadd.f32 0.0, %v6495
    %6497 = vmatprep.mubr.bf16.mxu0 %v5710
    %6498 = vmatmul.mubr.bf16.gmra.mxu0 %v5709
    %v6499 = vpop.f32.mrf.mxu0
    %v6500 = vadd.f32 0.0, %v6499
    %v6501 = vpop.f32.mrf.mxu0
    %v6502 = vadd.f32 0.0, %v6501
    %v6503 = vpop.f32.mrf.mxu0
    %v6504 = vadd.f32 0.0, %v6503
    %v6505 = vpop.f32.mrf.mxu0
    %v6506 = vadd.f32 0.0, %v6505
    %6507 = vdwg.mxu0
    %6508 = vmatprep.subr.bf16.mxu0 %v6192
    %6509 = vmatpush1.bf16.msra.mxu0 %v6191
    %6510 = vmatprep.subr.bf16.mxu0 %v6188
    %6511 = vmatpush1.bf16.msra.mxu0 %v6187
    %6512 = vmatprep.subr.bf16.mxu0 %v6184
    %6513 = vmatpush1.bf16.msra.mxu0 %v6183
    %6514 = vmatprep.subr.bf16.mxu0 %v6180
    %6515 = vmatpush1.bf16.msra.mxu0 %v6179
    %6516 = vmatprep.subr.bf16.mxu0 %v6176
    %6517 = vmatpush1.bf16.msra.mxu0 %v6175
    %6518 = vmatprep.subr.bf16.mxu0 %v6172
    %6519 = vmatpush1.bf16.msra.mxu0 %v6171
    %6520 = vmatprep.subr.bf16.mxu0 %v6168
    %6521 = vmatpush1.bf16.msra.mxu0 %v6167
    %6522 = vmatprep.subr.bf16.mxu0 %v6164
    %6523 = vmatpush1.bf16.msra.mxu0 %v6163
    %6524 = vmatprep.subr.bf16.mxu0 0
    %6525 = vmatpush2.bf16.msra.mxu0 0
    %6526 = vmatprep.subr.bf16.mxu0 0
    %6527 = vmatpush2.bf16.msra.mxu0 0
    %6528 = vmatprep.subr.bf16.mxu0 0
    %6529 = vmatpush2.bf16.msra.mxu0 0
    %6530 = vmatprep.subr.bf16.mxu0 0
    %6531 = vmatpush2.bf16.msra.mxu0 0
    %6532 = vmatprep.subr.bf16.mxu0 0
    %6533 = vmatpush2.bf16.msra.mxu0 0
    %6534 = vmatprep.subr.bf16.mxu0 0
    %6535 = vmatpush2.bf16.msra.mxu0 0
    %6536 = vmatprep.subr.bf16.mxu0 0
    %6537 = vmatpush2.bf16.msra.mxu0 0
    %6538 = vmatprep.subr.bf16.mxu0 0
    %6539 = vmatpush2.bf16.msra.mxu0 0
    %6540 = vmatprep.mubr.bf16.mxu0 0
    %6541 = vmatmul.mubr.bf16.gmra.mxu0 %v5702
    %v6542 = vpop.f32.mrf.mxu0
    %v6543 = vadd.f32 %v6470, %v6542
    %v6544 = vpop.f32.mrf.mxu0
    %v6545 = vadd.f32 %v6472, %v6544
    %v6546 = vpop.f32.mrf.mxu0
    %v6547 = vadd.f32 %v6474, %v6546
    %v6548 = vpop.f32.mrf.mxu0
    %v6549 = vadd.f32 %v6476, %v6548
    %6550 = vmatprep.mubr.bf16.mxu0 0
    %6551 = vmatmul.mubr.bf16.gmra.mxu0 %v5705
    %v6552 = vpop.f32.mrf.mxu0
    %v6553 = vadd.f32 %v6480, %v6552
    %v6554 = vpop.f32.mrf.mxu0
    %v6555 = vadd.f32 %v6482, %v6554
    %v6556 = vpop.f32.mrf.mxu0
    %v6557 = vadd.f32 %v6484, %v6556
    %v6558 = vpop.f32.mrf.mxu0
    %v6559 = vadd.f32 %v6486, %v6558
    %6560 = vmatprep.mubr.bf16.mxu0 0
    %6561 = vmatmul.mubr.bf16.gmra.mxu0 %v5708
    %v6562 = vpop.f32.mrf.mxu0
    %v6563 = vadd.f32 %v6490, %v6562
    %v6564 = vpop.f32.mrf.mxu0
    %v6565 = vadd.f32 %v6492, %v6564
    %v6566 = vpop.f32.mrf.mxu0
    %v6567 = vadd.f32 %v6494, %v6566
    %v6568 = vpop.f32.mrf.mxu0
    %v6569 = vadd.f32 %v6496, %v6568
    %6570 = vmatprep.mubr.bf16.mxu0 0
    %6571 = vmatmul.mubr.bf16.gmra.mxu0 %v5711
    %v6572 = vpop.f32.mrf.mxu0
    %v6573 = vadd.f32 %v6500, %v6572
    %v6574 = vpop.f32.mrf.mxu0
    %v6575 = vadd.f32 %v6502, %v6574
    %v6576 = vpop.f32.mrf.mxu0
    %v6577 = vadd.f32 %v6504, %v6576
    %v6578 = vpop.f32.mrf.mxu0
    %v6579 = vadd.f32 %v6506, %v6578
    %6580 = vdwg.mxu0
    %v6581 = vadd.f32 %v5644, %v6397
    %v6582 = vadd.f32 %v5645, %v6399
    %v6583 = vadd.f32 %v5646, %v6543
    %v6584 = vadd.f32 %v5647, %v6545
    %v6585 = vadd.f32 %v5648, %v6401
    %v6586 = vadd.f32 %v5649, %v6403
    %v6587 = vadd.f32 %v5650, %v6547
    %v6588 = vadd.f32 %v5651, %v6549
    %v6589 = vadd.f32 %v5652, %v6407
    %v6590 = vadd.f32 %v5653, %v6409
    %v6591 = vadd.f32 %v5654, %v6553
    %v6592 = vadd.f32 %v5655, %v6555
    %v6593 = vadd.f32 %v5656, %v6411
    %v6594 = vadd.f32 %v5657, %v6413
    %v6595 = vadd.f32 %v5658, %v6557
    %v6596 = vadd.f32 %v5659, %v6559
    %v6597 = vadd.f32 %v5660, %v6417
    %v6598 = vadd.f32 %v5661, %v6419
    %v6599 = vadd.f32 %v5662, %v6563
    %v6600 = vadd.f32 %v5663, %v6565
    %v6601 = vadd.f32 %v5664, %v6421
    %v6602 = vadd.f32 %v5665, %v6423
    %v6603 = vadd.f32 %v5666, %v6567
    %v6604 = vadd.f32 %v5667, %v6569
    %v6605 = vadd.f32 %v5668, %v6427
    %v6606 = vadd.f32 %v5669, %v6429
    %v6607 = vadd.f32 %v5670, %v6573
    %v6608 = vadd.f32 %v5671, %v6575
    %v6609 = vadd.f32 %v5672, %v6431
    %v6610 = vadd.f32 %v5673, %v6433
    %v6611 = vadd.f32 %v5674, %v6577
    %v6612 = vadd.f32 %v5675, %v6579
    %v6613 = vmax.f32 %v6581, %v6585
    %v6614 = vmax.f32 %v6582, %v6586
    %v6615 = vmax.f32 %v6583, %v6587
    %v6616 = vmax.f32 %v6584, %v6588
    %v6617 = vmax.f32 %v6613, %v6615
    %v6618 = vmax.f32 %v6614, %v6616
    %v6619 = vld [vmem:[#allocation8] sm:$0x3]
    %v6621 = vlaneseq
    %v6622 = vshrl.u32 %v6621, 7
    %v6623 = vsub.s32 0, %v6622
    %v6624 = vrot.slane %v6619, %v6623
    %v6625 = vlaneseq
    %v6626 = vshrl.u32 %v6625, 7
    %v6627 = vsub.s32 1, %v6626
    %v6628 = vrot.slane %v6619, %v6627
    %v6631 = vadd.f32 %v6617, %v6624
    %v6632 = vadd.f32 %v6618, %v6628
    %v6633 = vmax.f32 %v6631, 0.0
    %v6634 = vmax.f32 %v6632, 0.0
    %v6635 = vpack.c.bf16 %v6633, %v6633
    %v6636 = vpack.c.bf16 %v6634, %v6634
    %v6637 = vld [vmem:[#allocation10] sm:$0xf]
    %v6638 = vld [vmem:[#allocation10 + $0x4] sm:$0xf]
    %v6639 = vld [vmem:[#allocation10 + $0x8] sm:$0xf]
    %v6640 = vld [vmem:[#allocation10 + $0xc] sm:$0xf]
    %v6641 = vld [vmem:[#allocation10 + $0x10] sm:$0xf]
    %v6642 = vld [vmem:[#allocation10 + $0x14] sm:$0xf]
    %v6643 = vld [vmem:[#allocation10 + $0x18] sm:$0xf]
    %v6644 = vld [vmem:[#allocation10 + $0x1c] sm:$0xf]
    %v6645 = vld [vmem:[#allocation10 + $0x20] sm:$0xf]
    %v6646 = vld [vmem:[#allocation10 + $0x24] sm:$0xf]
    %v6647 = vld [vmem:[#allocation10 + $0x28] sm:$0xf]
    %v6648 = vld [vmem:[#allocation10 + $0x2c] sm:$0xf]
    %v6649 = vld [vmem:[#allocation10 + $0x30] sm:$0xf]
    %v6650 = vld [vmem:[#allocation10 + $0x34] sm:$0xf]
    %v6651 = vld [vmem:[#allocation10 + $0x38] sm:$0xf]
    %v6652 = vld [vmem:[#allocation10 + $0x3c] sm:$0xf]
    %v6653 = vld [vmem:[#allocation10 + $0x40] sm:$0xf]
    %v6654 = vld [vmem:[#allocation10 + $0x44] sm:$0xf]
    %v6655 = vld [vmem:[#allocation10 + $0x48] sm:$0xf]
    %v6656 = vld [vmem:[#allocation10 + $0x4c] sm:$0xf]
    %v6657 = vld [vmem:[#allocation10 + $0x50] sm:$0xf]
    %v6658 = vld [vmem:[#allocation10 + $0x54] sm:$0xf]
    %v6659 = vld [vmem:[#allocation10 + $0x58] sm:$0xf]
    %v6660 = vld [vmem:[#allocation10 + $0x5c] sm:$0xf]
    %v6661 = vld [vmem:[#allocation10 + $0x60] sm:$0xf]
    %v6662 = vld [vmem:[#allocation10 + $0x64] sm:$0xf]
    %v6663 = vld [vmem:[#allocation10 + $0x68] sm:$0xf]
    %v6664 = vld [vmem:[#allocation10 + $0x6c] sm:$0xf]
    %v6665 = vld [vmem:[#allocation10 + $0x70] sm:$0xf]
    %v6666 = vld [vmem:[#allocation10 + $0x74] sm:$0xf]
    %v6667 = vld [vmem:[#allocation10 + $0x78] sm:$0xf]
    %v6668 = vld [vmem:[#allocation10 + $0x7c] sm:$0xf]
    %v6669 = vmax.f32 %v6589, %v6593
    %v6670 = vmax.f32 %v6590, %v6594
    %v6671 = vmax.f32 %v6591, %v6595
    %v6672 = vmax.f32 %v6592, %v6596
    %v6673 = vmax.f32 %v6669, %v6671
    %v6674 = vmax.f32 %v6670, %v6672
    %v6675 = vadd.f32 %v6673, %v6624
    %v6676 = vadd.f32 %v6674, %v6628
    %v6677 = vmax.f32 %v6675, 0.0
    %v6678 = vmax.f32 %v6676, 0.0
    %v6679 = vpack.c.bf16 %v6677, %v6677
    %v6680 = vpack.c.bf16 %v6678, %v6678
    %s6681 = scalar_lea.vmem [#allocation10], 128
    %v6682 = vld [vmem:[%s6681] sm:$0xf]
    %v6683 = vld [vmem:[%s6681 + $0x4] sm:$0xf]
    %v6684 = vld [vmem:[%s6681 + $0x8] sm:$0xf]
    %v6685 = vld [vmem:[%s6681 + $0xc] sm:$0xf]
    %v6686 = vld [vmem:[%s6681 + $0x10] sm:$0xf]
    %v6687 = vld [vmem:[%s6681 + $0x14] sm:$0xf]
    %v6688 = vld [vmem:[%s6681 + $0x18] sm:$0xf]
    %v6689 = vld [vmem:[%s6681 + $0x1c] sm:$0xf]
    %v6690 = vld [vmem:[%s6681 + $0x20] sm:$0xf]
    %v6691 = vld [vmem:[%s6681 + $0x24] sm:$0xf]
    %v6692 = vld [vmem:[%s6681 + $0x28] sm:$0xf]
    %v6693 = vld [vmem:[%s6681 + $0x2c] sm:$0xf]
    %v6694 = vld [vmem:[%s6681 + $0x30] sm:$0xf]
    %v6695 = vld [vmem:[%s6681 + $0x34] sm:$0xf]
    %v6696 = vld [vmem:[%s6681 + $0x38] sm:$0xf]
    %v6697 = vld [vmem:[%s6681 + $0x3c] sm:$0xf]
    %v6698 = vld [vmem:[%s6681 + $0x40] sm:$0xf]
    %v6699 = vld [vmem:[%s6681 + $0x44] sm:$0xf]
    %v6700 = vld [vmem:[%s6681 + $0x48] sm:$0xf]
    %v6701 = vld [vmem:[%s6681 + $0x4c] sm:$0xf]
    %v6702 = vld [vmem:[%s6681 + $0x50] sm:$0xf]
    %v6703 = vld [vmem:[%s6681 + $0x54] sm:$0xf]
    %v6704 = vld [vmem:[%s6681 + $0x58] sm:$0xf]
    %v6705 = vld [vmem:[%s6681 + $0x5c] sm:$0xf]
    %v6706 = vld [vmem:[%s6681 + $0x60] sm:$0xf]
    %v6707 = vld [vmem:[%s6681 + $0x64] sm:$0xf]
    %v6708 = vld [vmem:[%s6681 + $0x68] sm:$0xf]
    %v6709 = vld [vmem:[%s6681 + $0x6c] sm:$0xf]
    %v6710 = vld [vmem:[%s6681 + $0x70] sm:$0xf]
    %v6711 = vld [vmem:[%s6681 + $0x74] sm:$0xf]
    %v6712 = vld [vmem:[%s6681 + $0x78] sm:$0xf]
    %v6713 = vld [vmem:[%s6681 + $0x7c] sm:$0xf]
    %v6746 = vunpack.c.l.b16 %v6682
    %v6747 = vunpack.c.l.b16 %v6683
    %v6748 = vunpack.c.l.b16 %v6684
    %v6749 = vunpack.c.l.b16 %v6685
    %v6750 = vunpack.c.l.b16 %v6686
    %v6751 = vunpack.c.l.b16 %v6687
    %v6752 = vunpack.c.l.b16 %v6688
    %v6753 = vunpack.c.l.b16 %v6689
    %v6754 = vunpack.c.l.b16 %v6690
    %v6755 = vunpack.c.l.b16 %v6691
    %v6756 = vunpack.c.l.b16 %v6692
    %v6757 = vunpack.c.l.b16 %v6693
    %v6758 = vunpack.c.l.b16 %v6694
    %v6759 = vunpack.c.l.b16 %v6695
    %v6760 = vunpack.c.l.b16 %v6696
    %v6761 = vunpack.c.l.b16 %v6697
    %v6762 = vunpack.c.l.b16 %v6698
    %v6763 = vunpack.c.l.b16 %v6699
    %v6764 = vunpack.c.l.b16 %v6700
    %v6765 = vunpack.c.l.b16 %v6701
    %v6766 = vunpack.c.l.b16 %v6702
    %v6767 = vunpack.c.l.b16 %v6703
    %v6768 = vunpack.c.l.b16 %v6704
    %v6769 = vunpack.c.l.b16 %v6705
    %v6770 = vunpack.c.l.b16 %v6706
    %v6771 = vunpack.c.l.b16 %v6707
    %v6772 = vunpack.c.l.b16 %v6708
    %v6773 = vunpack.c.l.b16 %v6709
    %v6774 = vunpack.c.l.b16 %v6710
    %v6775 = vunpack.c.l.b16 %v6711
    %v6776 = vunpack.c.l.b16 %v6712
    %v6777 = vunpack.c.l.b16 %v6713
    %v6778 = vpack.c.b16 %v6747, %v6746
    %v6779 = vpack.c.b16 %v6749, %v6748
    %v6780 = vpack.c.b16 %v6751, %v6750
    %v6781 = vpack.c.b16 %v6753, %v6752
    %v6782 = vpack.c.b16 %v6755, %v6754
    %v6783 = vpack.c.b16 %v6757, %v6756
    %v6784 = vpack.c.b16 %v6759, %v6758
    %v6785 = vpack.c.b16 %v6761, %v6760
    %v6786 = vpack.c.b16 %v6763, %v6762
    %v6787 = vpack.c.b16 %v6765, %v6764
    %v6788 = vpack.c.b16 %v6767, %v6766
    %v6789 = vpack.c.b16 %v6769, %v6768
    %v6790 = vpack.c.b16 %v6771, %v6770
    %v6791 = vpack.c.b16 %v6773, %v6772
    %v6792 = vpack.c.b16 %v6775, %v6774
    %v6793 = vpack.c.b16 %v6777, %v6776
    %6810 = vmatprep.subr.bf16.mxu0 0
    %6811 = vmatpush1.bf16.msra.mxu0 %v6785
    %6812 = vmatprep.subr.bf16.mxu0 0
    %6813 = vmatpush1.bf16.msra.mxu0 %v6784
    %6814 = vmatprep.subr.bf16.mxu0 0
    %6815 = vmatpush1.bf16.msra.mxu0 %v6783
    %6816 = vmatprep.subr.bf16.mxu0 0
    %6817 = vmatpush1.bf16.msra.mxu0 %v6782
    %6818 = vmatprep.subr.bf16.mxu0 0
    %6819 = vmatpush1.bf16.msra.mxu0 %v6781
    %6820 = vmatprep.subr.bf16.mxu0 0
    %6821 = vmatpush1.bf16.msra.mxu0 %v6780
    %6822 = vmatprep.subr.bf16.mxu0 0
    %6823 = vmatpush1.bf16.msra.mxu0 %v6779
    %6824 = vmatprep.subr.bf16.mxu0 0
    %6825 = vmatpush1.bf16.msra.mxu0 %v6778
    %6826 = vmatprep.subr.bf16.mxu0 0
    %6827 = vmatpush2.bf16.msra.mxu0 %v6793
    %6828 = vmatprep.subr.bf16.mxu0 0
    %6829 = vmatpush2.bf16.msra.mxu0 %v6792
    %6830 = vmatprep.subr.bf16.mxu0 0
    %6831 = vmatpush2.bf16.msra.mxu0 %v6791
    %6832 = vmatprep.subr.bf16.mxu0 0
    %6833 = vmatpush2.bf16.msra.mxu0 %v6790
    %6834 = vmatprep.subr.bf16.mxu0 0
    %6835 = vmatpush2.bf16.msra.mxu0 %v6789
    %6836 = vmatprep.subr.bf16.mxu0 0
    %6837 = vmatpush2.bf16.msra.mxu0 %v6788
    %6838 = vmatprep.subr.bf16.mxu0 0
    %6839 = vmatpush2.bf16.msra.mxu0 %v6787
    %6840 = vmatprep.subr.bf16.mxu0 0
    %6841 = vmatpush2.bf16.msra.mxu0 %v6786
    %6842 = vmatprep.mubr.bf16.mxu0 %v6680
    %6843 = vmatmul.mubr.bf16.gmra.mxu0 %v6679
    %v6844 = vpop.f32.mrf.mxu0
    %v6845 = vadd.f32 0.0, %v6844
    %v6846 = vpop.f32.mrf.mxu0
    %v6847 = vpop.f32.mrf.mxu0
    %v6848 = vpop.f32.mrf.mxu0
    %6849 = vdwg.mxu0
    %v6882 = vunpack.c.l.b16 %v6637
    %v6883 = vunpack.c.l.b16 %v6638
    %v6884 = vunpack.c.l.b16 %v6639
    %v6885 = vunpack.c.l.b16 %v6640
    %v6886 = vunpack.c.l.b16 %v6641
    %v6887 = vunpack.c.l.b16 %v6642
    %v6888 = vunpack.c.l.b16 %v6643
    %v6889 = vunpack.c.l.b16 %v6644
    %v6890 = vunpack.c.l.b16 %v6645
    %v6891 = vunpack.c.l.b16 %v6646
    %v6892 = vunpack.c.l.b16 %v6647
    %v6893 = vunpack.c.l.b16 %v6648
    %v6894 = vunpack.c.l.b16 %v6649
    %v6895 = vunpack.c.l.b16 %v6650
    %v6896 = vunpack.c.l.b16 %v6651
    %v6897 = vunpack.c.l.b16 %v6652
    %v6898 = vunpack.c.l.b16 %v6653
    %v6899 = vunpack.c.l.b16 %v6654
    %v6900 = vunpack.c.l.b16 %v6655
    %v6901 = vunpack.c.l.b16 %v6656
    %v6902 = vunpack.c.l.b16 %v6657
    %v6903 = vunpack.c.l.b16 %v6658
    %v6904 = vunpack.c.l.b16 %v6659
    %v6905 = vunpack.c.l.b16 %v6660
    %v6906 = vunpack.c.l.b16 %v6661
    %v6907 = vunpack.c.l.b16 %v6662
    %v6908 = vunpack.c.l.b16 %v6663
    %v6909 = vunpack.c.l.b16 %v6664
    %v6910 = vunpack.c.l.b16 %v6665
    %v6911 = vunpack.c.l.b16 %v6666
    %v6912 = vunpack.c.l.b16 %v6667
    %v6913 = vunpack.c.l.b16 %v6668
    %v6914 = vpack.c.b16 %v6883, %v6882
    %v6915 = vpack.c.b16 %v6885, %v6884
    %v6916 = vpack.c.b16 %v6887, %v6886
    %v6917 = vpack.c.b16 %v6889, %v6888
    %v6918 = vpack.c.b16 %v6891, %v6890
    %v6919 = vpack.c.b16 %v6893, %v6892
    %v6920 = vpack.c.b16 %v6895, %v6894
    %v6921 = vpack.c.b16 %v6897, %v6896
    %v6922 = vpack.c.b16 %v6899, %v6898
    %v6923 = vpack.c.b16 %v6901, %v6900
    %v6924 = vpack.c.b16 %v6903, %v6902
    %v6925 = vpack.c.b16 %v6905, %v6904
    %v6926 = vpack.c.b16 %v6907, %v6906
    %v6927 = vpack.c.b16 %v6909, %v6908
    %v6928 = vpack.c.b16 %v6911, %v6910
    %v6929 = vpack.c.b16 %v6913, %v6912
    %6946 = vmatprep.subr.bf16.mxu0 0
    %6947 = vmatpush1.bf16.msra.mxu0 %v6921
    %6948 = vmatprep.subr.bf16.mxu0 0
    %6949 = vmatpush1.bf16.msra.mxu0 %v6920
    %6950 = vmatprep.subr.bf16.mxu0 0
    %6951 = vmatpush1.bf16.msra.mxu0 %v6919
    %6952 = vmatprep.subr.bf16.mxu0 0
    %6953 = vmatpush1.bf16.msra.mxu0 %v6918
    %6954 = vmatprep.subr.bf16.mxu0 0
    %6955 = vmatpush1.bf16.msra.mxu0 %v6917
    %6956 = vmatprep.subr.bf16.mxu0 0
    %6957 = vmatpush1.bf16.msra.mxu0 %v6916
    %6958 = vmatprep.subr.bf16.mxu0 0
    %6959 = vmatpush1.bf16.msra.mxu0 %v6915
    %6960 = vmatprep.subr.bf16.mxu0 0
    %6961 = vmatpush1.bf16.msra.mxu0 %v6914
    %6962 = vmatprep.subr.bf16.mxu0 0
    %6963 = vmatpush2.bf16.msra.mxu0 %v6929
    %6964 = vmatprep.subr.bf16.mxu0 0
    %6965 = vmatpush2.bf16.msra.mxu0 %v6928
    %6966 = vmatprep.subr.bf16.mxu0 0
    %6967 = vmatpush2.bf16.msra.mxu0 %v6927
    %6968 = vmatprep.subr.bf16.mxu0 0
    %6969 = vmatpush2.bf16.msra.mxu0 %v6926
    %6970 = vmatprep.subr.bf16.mxu0 0
    %6971 = vmatpush2.bf16.msra.mxu0 %v6925
    %6972 = vmatprep.subr.bf16.mxu0 0
    %6973 = vmatpush2.bf16.msra.mxu0 %v6924
    %6974 = vmatprep.subr.bf16.mxu0 0
    %6975 = vmatpush2.bf16.msra.mxu0 %v6923
    %6976 = vmatprep.subr.bf16.mxu0 0
    %6977 = vmatpush2.bf16.msra.mxu0 %v6922
    %6978 = vmatprep.mubr.bf16.mxu0 %v6636
    %6979 = vmatmul.mubr.bf16.gmra.mxu0 %v6635
    %v6980 = vpop.f32.mrf.mxu0
    %v6981 = vadd.f32 %v6845, %v6980
    %v6982 = vpop.f32.mrf.mxu0
    %v6983 = vpop.f32.mrf.mxu0
    %v6984 = vpop.f32.mrf.mxu0
    %6985 = vdwg.mxu0
    %v6986 = vmax.f32 %v6597, %v6601
    %v6987 = vmax.f32 %v6598, %v6602
    %v6988 = vmax.f32 %v6599, %v6603
    %v6989 = vmax.f32 %v6600, %v6604
    %v6990 = vmax.f32 %v6986, %v6988
    %v6991 = vmax.f32 %v6987, %v6989
    %v6992 = vadd.f32 %v6990, %v6624
    %v6993 = vadd.f32 %v6991, %v6628
    %v6994 = vmax.f32 %v6992, 0.0
    %v6995 = vmax.f32 %v6993, 0.0
    %v6996 = vpack.c.bf16 %v6994, %v6994
    %v6997 = vpack.c.bf16 %v6995, %v6995
    %s6998 = scalar_lea.vmem [#allocation10], 256
    %v6999 = vld [vmem:[%s6998] sm:$0xf]
    %v7000 = vld [vmem:[%s6998 + $0x4] sm:$0xf]
    %v7001 = vld [vmem:[%s6998 + $0x8] sm:$0xf]
    %v7002 = vld [vmem:[%s6998 + $0xc] sm:$0xf]
    %v7003 = vld [vmem:[%s6998 + $0x10] sm:$0xf]
    %v7004 = vld [vmem:[%s6998 + $0x14] sm:$0xf]
    %v7005 = vld [vmem:[%s6998 + $0x18] sm:$0xf]
    %v7006 = vld [vmem:[%s6998 + $0x1c] sm:$0xf]
    %v7007 = vld [vmem:[%s6998 + $0x20] sm:$0xf]
    %v7008 = vld [vmem:[%s6998 + $0x24] sm:$0xf]
    %v7009 = vld [vmem:[%s6998 + $0x28] sm:$0xf]
    %v7010 = vld [vmem:[%s6998 + $0x2c] sm:$0xf]
    %v7011 = vld [vmem:[%s6998 + $0x30] sm:$0xf]
    %v7012 = vld [vmem:[%s6998 + $0x34] sm:$0xf]
    %v7013 = vld [vmem:[%s6998 + $0x38] sm:$0xf]
    %v7014 = vld [vmem:[%s6998 + $0x3c] sm:$0xf]
    %v7015 = vld [vmem:[%s6998 + $0x40] sm:$0xf]
    %v7016 = vld [vmem:[%s6998 + $0x44] sm:$0xf]
    %v7017 = vld [vmem:[%s6998 + $0x48] sm:$0xf]
    %v7018 = vld [vmem:[%s6998 + $0x4c] sm:$0xf]
    %v7019 = vld [vmem:[%s6998 + $0x50] sm:$0xf]
    %v7020 = vld [vmem:[%s6998 + $0x54] sm:$0xf]
    %v7021 = vld [vmem:[%s6998 + $0x58] sm:$0xf]
    %v7022 = vld [vmem:[%s6998 + $0x5c] sm:$0xf]
    %v7023 = vld [vmem:[%s6998 + $0x60] sm:$0xf]
    %v7024 = vld [vmem:[%s6998 + $0x64] sm:$0xf]
    %v7025 = vld [vmem:[%s6998 + $0x68] sm:$0xf]
    %v7026 = vld [vmem:[%s6998 + $0x6c] sm:$0xf]
    %v7027 = vld [vmem:[%s6998 + $0x70] sm:$0xf]
    %v7028 = vld [vmem:[%s6998 + $0x74] sm:$0xf]
    %v7029 = vld [vmem:[%s6998 + $0x78] sm:$0xf]
    %v7030 = vld [vmem:[%s6998 + $0x7c] sm:$0xf]
    %v7063 = vunpack.c.l.b16 %v6999
    %v7064 = vunpack.c.l.b16 %v7000
    %v7065 = vunpack.c.l.b16 %v7001
    %v7066 = vunpack.c.l.b16 %v7002
    %v7067 = vunpack.c.l.b16 %v7003
    %v7068 = vunpack.c.l.b16 %v7004
    %v7069 = vunpack.c.l.b16 %v7005
    %v7070 = vunpack.c.l.b16 %v7006
    %v7071 = vunpack.c.l.b16 %v7007
    %v7072 = vunpack.c.l.b16 %v7008
    %v7073 = vunpack.c.l.b16 %v7009
    %v7074 = vunpack.c.l.b16 %v7010
    %v7075 = vunpack.c.l.b16 %v7011
    %v7076 = vunpack.c.l.b16 %v7012
    %v7077 = vunpack.c.l.b16 %v7013
    %v7078 = vunpack.c.l.b16 %v7014
    %v7079 = vunpack.c.l.b16 %v7015
    %v7080 = vunpack.c.l.b16 %v7016
    %v7081 = vunpack.c.l.b16 %v7017
    %v7082 = vunpack.c.l.b16 %v7018
    %v7083 = vunpack.c.l.b16 %v7019
    %v7084 = vunpack.c.l.b16 %v7020
    %v7085 = vunpack.c.l.b16 %v7021
    %v7086 = vunpack.c.l.b16 %v7022
    %v7087 = vunpack.c.l.b16 %v7023
    %v7088 = vunpack.c.l.b16 %v7024
    %v7089 = vunpack.c.l.b16 %v7025
    %v7090 = vunpack.c.l.b16 %v7026
    %v7091 = vunpack.c.l.b16 %v7027
    %v7092 = vunpack.c.l.b16 %v7028
    %v7093 = vunpack.c.l.b16 %v7029
    %v7094 = vunpack.c.l.b16 %v7030
    %v7095 = vpack.c.b16 %v7064, %v7063
    %v7096 = vpack.c.b16 %v7066, %v7065
    %v7097 = vpack.c.b16 %v7068, %v7067
    %v7098 = vpack.c.b16 %v7070, %v7069
    %v7099 = vpack.c.b16 %v7072, %v7071
    %v7100 = vpack.c.b16 %v7074, %v7073
    %v7101 = vpack.c.b16 %v7076, %v7075
    %v7102 = vpack.c.b16 %v7078, %v7077
    %v7103 = vpack.c.b16 %v7080, %v7079
    %v7104 = vpack.c.b16 %v7082, %v7081
    %v7105 = vpack.c.b16 %v7084, %v7083
    %v7106 = vpack.c.b16 %v7086, %v7085
    %v7107 = vpack.c.b16 %v7088, %v7087
    %v7108 = vpack.c.b16 %v7090, %v7089
    %v7109 = vpack.c.b16 %v7092, %v7091
    %v7110 = vpack.c.b16 %v7094, %v7093
    %7127 = vmatprep.subr.bf16.mxu0 0
    %7128 = vmatpush1.bf16.msra.mxu0 %v7102
    %7129 = vmatprep.subr.bf16.mxu0 0
    %7130 = vmatpush1.bf16.msra.mxu0 %v7101
    %7131 = vmatprep.subr.bf16.mxu0 0
    %7132 = vmatpush1.bf16.msra.mxu0 %v7100
    %7133 = vmatprep.subr.bf16.mxu0 0
    %7134 = vmatpush1.bf16.msra.mxu0 %v7099
    %7135 = vmatprep.subr.bf16.mxu0 0
    %7136 = vmatpush1.bf16.msra.mxu0 %v7098
    %7137 = vmatprep.subr.bf16.mxu0 0
    %7138 = vmatpush1.bf16.msra.mxu0 %v7097
    %7139 = vmatprep.subr.bf16.mxu0 0
    %7140 = vmatpush1.bf16.msra.mxu0 %v7096
    %7141 = vmatprep.subr.bf16.mxu0 0
    %7142 = vmatpush1.bf16.msra.mxu0 %v7095
    %7143 = vmatprep.subr.bf16.mxu0 0
    %7144 = vmatpush2.bf16.msra.mxu0 %v7110
    %7145 = vmatprep.subr.bf16.mxu0 0
    %7146 = vmatpush2.bf16.msra.mxu0 %v7109
    %7147 = vmatprep.subr.bf16.mxu0 0
    %7148 = vmatpush2.bf16.msra.mxu0 %v7108
    %7149 = vmatprep.subr.bf16.mxu0 0
    %7150 = vmatpush2.bf16.msra.mxu0 %v7107
    %7151 = vmatprep.subr.bf16.mxu0 0
    %7152 = vmatpush2.bf16.msra.mxu0 %v7106
    %7153 = vmatprep.subr.bf16.mxu0 0
    %7154 = vmatpush2.bf16.msra.mxu0 %v7105
    %7155 = vmatprep.subr.bf16.mxu0 0
    %7156 = vmatpush2.bf16.msra.mxu0 %v7104
    %7157 = vmatprep.subr.bf16.mxu0 0
    %7158 = vmatpush2.bf16.msra.mxu0 %v7103
    %7159 = vmatprep.mubr.bf16.mxu0 %v6997
    %7160 = vmatmul.mubr.bf16.gmra.mxu0 %v6996
    %v7161 = vpop.f32.mrf.mxu0
    %v7162 = vadd.f32 0.0, %v7161
    %v7163 = vpop.f32.mrf.mxu0
    %v7164 = vpop.f32.mrf.mxu0
    %v7165 = vpop.f32.mrf.mxu0
    %7166 = vdwg.mxu0
    %v7167 = vadd.f32 %v6981, %v7162
    %v7168 = vmax.f32 %v6605, %v6609
    %v7169 = vmax.f32 %v6606, %v6610
    %v7170 = vmax.f32 %v6607, %v6611
    %v7171 = vmax.f32 %v6608, %v6612
    %v7172 = vmax.f32 %v7168, %v7170
    %v7173 = vmax.f32 %v7169, %v7171
    %v7174 = vadd.f32 %v7172, %v6624
    %v7175 = vadd.f32 %v7173, %v6628
    %v7176 = vmax.f32 %v7174, 0.0
    %v7177 = vmax.f32 %v7175, 0.0
    %v7178 = vpack.c.bf16 %v7176, %v7176
    %v7179 = vpack.c.bf16 %v7177, %v7177
    %s7180 = scalar_lea.vmem [#allocation10], 384
    %v7181 = vld [vmem:[%s7180] sm:$0xf]
    %v7182 = vld [vmem:[%s7180 + $0x4] sm:$0xf]
    %v7183 = vld [vmem:[%s7180 + $0x8] sm:$0xf]
    %v7184 = vld [vmem:[%s7180 + $0xc] sm:$0xf]
    %v7185 = vld [vmem:[%s7180 + $0x10] sm:$0xf]
    %v7186 = vld [vmem:[%s7180 + $0x14] sm:$0xf]
    %v7187 = vld [vmem:[%s7180 + $0x18] sm:$0xf]
    %v7188 = vld [vmem:[%s7180 + $0x1c] sm:$0xf]
    %v7189 = vld [vmem:[%s7180 + $0x20] sm:$0xf]
    %v7190 = vld [vmem:[%s7180 + $0x24] sm:$0xf]
    %v7191 = vld [vmem:[%s7180 + $0x28] sm:$0xf]
    %v7192 = vld [vmem:[%s7180 + $0x2c] sm:$0xf]
    %v7193 = vld [vmem:[%s7180 + $0x30] sm:$0xf]
    %v7194 = vld [vmem:[%s7180 + $0x34] sm:$0xf]
    %v7195 = vld [vmem:[%s7180 + $0x38] sm:$0xf]
    %v7196 = vld [vmem:[%s7180 + $0x3c] sm:$0xf]
    %v7197 = vld [vmem:[%s7180 + $0x40] sm:$0xf]
    %v7198 = vld [vmem:[%s7180 + $0x44] sm:$0xf]
    %v7199 = vld [vmem:[%s7180 + $0x48] sm:$0xf]
    %v7200 = vld [vmem:[%s7180 + $0x4c] sm:$0xf]
    %v7201 = vld [vmem:[%s7180 + $0x50] sm:$0xf]
    %v7202 = vld [vmem:[%s7180 + $0x54] sm:$0xf]
    %v7203 = vld [vmem:[%s7180 + $0x58] sm:$0xf]
    %v7204 = vld [vmem:[%s7180 + $0x5c] sm:$0xf]
    %v7205 = vld [vmem:[%s7180 + $0x60] sm:$0xf]
    %v7206 = vld [vmem:[%s7180 + $0x64] sm:$0xf]
    %v7207 = vld [vmem:[%s7180 + $0x68] sm:$0xf]
    %v7208 = vld [vmem:[%s7180 + $0x6c] sm:$0xf]
    %v7209 = vld [vmem:[%s7180 + $0x70] sm:$0xf]
    %v7210 = vld [vmem:[%s7180 + $0x74] sm:$0xf]
    %v7211 = vld [vmem:[%s7180 + $0x78] sm:$0xf]
    %v7212 = vld [vmem:[%s7180 + $0x7c] sm:$0xf]
    %v7245 = vunpack.c.l.b16 %v7181
    %v7246 = vunpack.c.l.b16 %v7182
    %v7247 = vunpack.c.l.b16 %v7183
    %v7248 = vunpack.c.l.b16 %v7184
    %v7249 = vunpack.c.l.b16 %v7185
    %v7250 = vunpack.c.l.b16 %v7186
    %v7251 = vunpack.c.l.b16 %v7187
    %v7252 = vunpack.c.l.b16 %v7188
    %v7253 = vunpack.c.l.b16 %v7189
    %v7254 = vunpack.c.l.b16 %v7190
    %v7255 = vunpack.c.l.b16 %v7191
    %v7256 = vunpack.c.l.b16 %v7192
    %v7257 = vunpack.c.l.b16 %v7193
    %v7258 = vunpack.c.l.b16 %v7194
    %v7259 = vunpack.c.l.b16 %v7195
    %v7260 = vunpack.c.l.b16 %v7196
    %v7261 = vunpack.c.l.b16 %v7197
    %v7262 = vunpack.c.l.b16 %v7198
    %v7263 = vunpack.c.l.b16 %v7199
    %v7264 = vunpack.c.l.b16 %v7200
    %v7265 = vunpack.c.l.b16 %v7201
    %v7266 = vunpack.c.l.b16 %v7202
    %v7267 = vunpack.c.l.b16 %v7203
    %v7268 = vunpack.c.l.b16 %v7204
    %v7269 = vunpack.c.l.b16 %v7205
    %v7270 = vunpack.c.l.b16 %v7206
    %v7271 = vunpack.c.l.b16 %v7207
    %v7272 = vunpack.c.l.b16 %v7208
    %v7273 = vunpack.c.l.b16 %v7209
    %v7274 = vunpack.c.l.b16 %v7210
    %v7275 = vunpack.c.l.b16 %v7211
    %v7276 = vunpack.c.l.b16 %v7212
    %v7277 = vpack.c.b16 %v7246, %v7245
    %v7278 = vpack.c.b16 %v7248, %v7247
    %v7279 = vpack.c.b16 %v7250, %v7249
    %v7280 = vpack.c.b16 %v7252, %v7251
    %v7281 = vpack.c.b16 %v7254, %v7253
    %v7282 = vpack.c.b16 %v7256, %v7255
    %v7283 = vpack.c.b16 %v7258, %v7257
    %v7284 = vpack.c.b16 %v7260, %v7259
    %v7285 = vpack.c.b16 %v7262, %v7261
    %v7286 = vpack.c.b16 %v7264, %v7263
    %v7287 = vpack.c.b16 %v7266, %v7265
    %v7288 = vpack.c.b16 %v7268, %v7267
    %v7289 = vpack.c.b16 %v7270, %v7269
    %v7290 = vpack.c.b16 %v7272, %v7271
    %v7291 = vpack.c.b16 %v7274, %v7273
    %v7292 = vpack.c.b16 %v7276, %v7275
    %7309 = vmatprep.subr.bf16.mxu0 0
    %7310 = vmatpush1.bf16.msra.mxu0 %v7284
    %7311 = vmatprep.subr.bf16.mxu0 0
    %7312 = vmatpush1.bf16.msra.mxu0 %v7283
    %7313 = vmatprep.subr.bf16.mxu0 0
    %7314 = vmatpush1.bf16.msra.mxu0 %v7282
    %7315 = vmatprep.subr.bf16.mxu0 0
    %7316 = vmatpush1.bf16.msra.mxu0 %v7281
    %7317 = vmatprep.subr.bf16.mxu0 0
    %7318 = vmatpush1.bf16.msra.mxu0 %v7280
    %7319 = vmatprep.subr.bf16.mxu0 0
    %7320 = vmatpush1.bf16.msra.mxu0 %v7279
    %7321 = vmatprep.subr.bf16.mxu0 0
    %7322 = vmatpush1.bf16.msra.mxu0 %v7278
    %7323 = vmatprep.subr.bf16.mxu0 0
    %7324 = vmatpush1.bf16.msra.mxu0 %v7277
    %7325 = vmatprep.subr.bf16.mxu0 0
    %7326 = vmatpush2.bf16.msra.mxu0 %v7292
    %7327 = vmatprep.subr.bf16.mxu0 0
    %7328 = vmatpush2.bf16.msra.mxu0 %v7291
    %7329 = vmatprep.subr.bf16.mxu0 0
    %7330 = vmatpush2.bf16.msra.mxu0 %v7290
    %7331 = vmatprep.subr.bf16.mxu0 0
    %7332 = vmatpush2.bf16.msra.mxu0 %v7289
    %7333 = vmatprep.subr.bf16.mxu0 0
    %7334 = vmatpush2.bf16.msra.mxu0 %v7288
    %7335 = vmatprep.subr.bf16.mxu0 0
    %7336 = vmatpush2.bf16.msra.mxu0 %v7287
    %7337 = vmatprep.subr.bf16.mxu0 0
    %7338 = vmatpush2.bf16.msra.mxu0 %v7286
    %7339 = vmatprep.subr.bf16.mxu0 0
    %7340 = vmatpush2.bf16.msra.mxu0 %v7285
    %7341 = vmatprep.mubr.bf16.mxu0 %v7179
    %7342 = vmatmul.mubr.bf16.gmra.mxu0 %v7178
    %v7343 = vpop.f32.mrf.mxu0
    %v7344 = vadd.f32 0.0, %v7343
    %v7345 = vpop.f32.mrf.mxu0
    %v7346 = vpop.f32.mrf.mxu0
    %v7347 = vpop.f32.mrf.mxu0
    %7348 = vdwg.mxu0
    %v7349 = vadd.f32 %v7167, %v7344
    %v7350 = vld [vmem:[#allocation11] sm:$0x1]
    %v7352 = vlaneseq
    %v7353 = vshrl.u32 %v7352, 7
    %v7354 = vsub.s32 0, %v7353
    %v7355 = vrot.slane %v7350, %v7354
    %v7357 = vadd.f32 %v7349, %v7355
    %7358 = vst [vmem:[%s9] sm:$0xff] %v7357
    %v7359 = vpack.c.bf16 %v7357, %v7357
    %v7360 = vld [vmem:[%s7] sm:$0xf]
    %v7361 = vld [vmem:[%s7 + $0x4] sm:$0xf]
    %v7362 = vld [vmem:[%s7 + $0x8] sm:$0xf]
    %v7363 = vld [vmem:[%s7 + $0xc] sm:$0xf]
    %v7364 = vld [vmem:[%s7 + $0x10] sm:$0xf]
    %v7365 = vld [vmem:[%s7 + $0x14] sm:$0xf]
    %v7366 = vld [vmem:[%s7 + $0x18] sm:$0xf]
    %v7367 = vld [vmem:[%s7 + $0x1c] sm:$0xf]
    %v7368 = vld [vmem:[%s7 + $0x20] sm:$0xf]
    %v7369 = vld [vmem:[%s7 + $0x24] sm:$0xf]
    %v7370 = vld [vmem:[%s7 + $0x28] sm:$0xf]
    %v7371 = vld [vmem:[%s7 + $0x2c] sm:$0xf]
    %v7372 = vld [vmem:[%s7 + $0x30] sm:$0xf]
    %v7373 = vld [vmem:[%s7 + $0x34] sm:$0xf]
    %v7374 = vld [vmem:[%s7 + $0x38] sm:$0xf]
    %v7375 = vld [vmem:[%s7 + $0x3c] sm:$0xf]
    %v7376 = vld [vmem:[#allocation13] sm:$0x1]
    %v7378 = vlaneseq
    %v7379 = vshrl.u32 %v7378, 7
    %v7380 = vsub.s32 0, %v7379
    %v7381 = vrot.slane %v7376, %v7380
    %v7399 = vunpack.c.l.b16 %v7360
    %v7400 = vunpack.c.l.b16 %v7361
    %v7401 = vunpack.c.l.b16 %v7362
    %v7402 = vunpack.c.l.b16 %v7363
    %v7403 = vunpack.c.l.b16 %v7364
    %v7404 = vunpack.c.l.b16 %v7365
    %v7405 = vunpack.c.l.b16 %v7366
    %v7406 = vunpack.c.l.b16 %v7367
    %v7407 = vunpack.c.l.b16 %v7368
    %v7408 = vunpack.c.l.b16 %v7369
    %v7409 = vunpack.c.l.b16 %v7370
    %v7410 = vunpack.c.l.b16 %v7371
    %v7411 = vunpack.c.l.b16 %v7372
    %v7412 = vunpack.c.l.b16 %v7373
    %v7413 = vunpack.c.l.b16 %v7374
    %v7414 = vunpack.c.l.b16 %v7375
    %v7415 = vpack.c.b16 %v7400, %v7399
    %v7416 = vpack.c.b16 %v7402, %v7401
    %v7417 = vpack.c.b16 %v7404, %v7403
    %v7418 = vpack.c.b16 %v7406, %v7405
    %v7419 = vpack.c.b16 %v7408, %v7407
    %v7420 = vpack.c.b16 %v7410, %v7409
    %v7421 = vpack.c.b16 %v7412, %v7411
    %v7422 = vpack.c.b16 %v7414, %v7413
    %7431 = vmatprep.subr.bf16.mxu0 0
    %7432 = vmatpush1.bf16.msra.mxu0 %v7422
    %7433 = vmatprep.subr.bf16.mxu0 0
    %7434 = vmatpush1.bf16.msra.mxu0 %v7421
    %7435 = vmatprep.subr.bf16.mxu0 0
    %7436 = vmatpush1.bf16.msra.mxu0 %v7420
    %7437 = vmatprep.subr.bf16.mxu0 0
    %7438 = vmatpush1.bf16.msra.mxu0 %v7419
    %7439 = vmatprep.subr.bf16.mxu0 0
    %7440 = vmatpush1.bf16.msra.mxu0 %v7418
    %7441 = vmatprep.subr.bf16.mxu0 0
    %7442 = vmatpush1.bf16.msra.mxu0 %v7417
    %7443 = vmatprep.subr.bf16.mxu0 0
    %7444 = vmatpush1.bf16.msra.mxu0 %v7416
    %7445 = vmatprep.subr.bf16.mxu0 0
    %7446 = vmatpush1.bf16.msra.mxu0 %v7415
    %7447 = vmatprep.subr.bf16.mxu0 0
    %7448 = vmatpush2.bf16.msra.mxu0 0
    %7449 = vmatprep.subr.bf16.mxu0 0
    %7450 = vmatpush2.bf16.msra.mxu0 0
    %7451 = vmatprep.subr.bf16.mxu0 0
    %7452 = vmatpush2.bf16.msra.mxu0 0
    %7453 = vmatprep.subr.bf16.mxu0 0
    %7454 = vmatpush2.bf16.msra.mxu0 0
    %7455 = vmatprep.subr.bf16.mxu0 0
    %7456 = vmatpush2.bf16.msra.mxu0 0
    %7457 = vmatprep.subr.bf16.mxu0 0
    %7458 = vmatpush2.bf16.msra.mxu0 0
    %7459 = vmatprep.subr.bf16.mxu0 0
    %7460 = vmatpush2.bf16.msra.mxu0 0
    %7461 = vmatprep.subr.bf16.mxu0 0
    %7462 = vmatpush2.bf16.msra.mxu0 0
    %7463 = vmatprep.mubr.bf16.mxu0 0
    %7464 = vmatmul.mubr.bf16.gmra.mxu0 %v7359
    %v7465 = vpop.f32.mrf.mxu0
    %v7466 = vadd.f32 %v7381, %v7465
    %v7467 = vpop.f32.mrf.mxu0
    %v7468 = vpop.f32.mrf.mxu0
    %v7469 = vpop.f32.mrf.mxu0
    %7470 = vdwg.mxu0
    %7471 = vst [vmem:[%s9 + $0x8] sm:$0xff] %v7466
    // Predicated region
    $region66: #{mnist_net_forward.1} parent=1 // pred_check
      _
    $region67: #{mnist_net_forward.1} parent=1 // pred_check_branch
      %7473 = sbr.rel (0) target = $region69
    $region68: #{mnist_net_forward.1} parent=1 // pred_region
      _
    $region69: #{mnist_net_forward.1} parent=1 // pred_fallthru
      _
    // Predicated region
    $region70: #{mnist_net_forward.1} parent=1 // pred_check
      _
    $region71: #{mnist_net_forward.1} parent=1 // pred_check_branch
      %7475 = sbr.rel (0) target = $region73
    $region72: #{mnist_net_forward.1} parent=1 // pred_region
      _
    $region73: #{mnist_net_forward.1} parent=1 // pred_fallthru
      _
    %7476 = vsyncpa [#allocation4], 1
    %7477 = vsyncpa [#allocation6], 1
    %7478 = vsyncpa [#allocation9], 1
    %7479 = vsyncpa [#allocation12], 1

</llo_original>
